<compile_context>
chip_gen: v7x
topology: tpu7x:2x2x1
jax: 0.10.0
libtpu: 0.0.40
codegen_flags: <defaults>
</compile_context>

<pallas_src>
import functools

import jax
import jax.numpy as jnp
from jax import lax
from jax.experimental import pallas as pl
from jax.experimental.pallas import tpu as pltpu


# ---------------------------------------------------------------------------
# Pallas kernel: fused 3x3 conv (+ bias + ReLU, + optional fused 1x1 head).
#   x_refs[i]: (H*W + 2*W + 2, Cin_i) bf16  -- row-padded, flattened activation
#   w_ref:     (9*Cin_total, Cout)     bf16 -- resident (constant index_map)
#   b_ref:     (1, Cout)               f32
#   wh_ref/bh_ref (optional): (1, Cout) / (1, 1) f32 -- fused 1x1 head
#   o_ref:     (H*W, Cout_out)         -- real channel count, no lane padding
# ---------------------------------------------------------------------------
def _conv3x3_kernel(*refs, H, W, n_inputs, relu, fuse_head):
    HW = H * W
    x_refs = refs[:n_inputs]
    w_ref, b_ref = refs[n_inputs], refs[n_inputs + 1]
    if fuse_head:
        wh_ref, bh_ref = refs[n_inputs + 2], refs[n_inputs + 3]
        o_ref = refs[n_inputs + 4]
    else:
        o_ref = refs[n_inputs + 2]

    xs = [x_ref[...] for x_ref in x_refs]   # single HBM read of the raw image

    # Output column index (w) of every flattened spatial position.
    col = lax.broadcasted_iota(jnp.int32, (HW, 1), 0) % W

    taps = []
    for ky in range(3):
        for kx in range(3):
            s = ky * W + kx                  # flat shift of this tap
            parts = [x[s:s + HW, :] for x in xs]
            tap = parts[0] if n_inputs == 1 else jnp.concatenate(parts, axis=-1)
            # Row padding is real (wrapper-built); the column "padding" is a
            # flat wrap-around, so zero the wrapped border column of the
            # shifted-column taps.
            if kx == 0:
                tap = jnp.where(col == 0, jnp.zeros_like(tap), tap)
            elif kx == 2:
                tap = jnp.where(col == W - 1, jnp.zeros_like(tap), tap)
            taps.append(tap)

    patches = jnp.concatenate(taps, axis=-1)        # (HW, 9*Cin_total) bf16
    acc = jnp.dot(patches, w_ref[...], preferred_element_type=jnp.float32)
    acc = acc + b_ref[...]                          # f32 epilogue (v5e-safe)
    if relu:
        acc = jnp.maximum(acc, 0.0)

    if fuse_head:
        # Fused 1x1 head conv (Cmid -> 1) on the f32 accumulator; d1 never
        # touches HBM and the logits are emitted as a single f32 channel.
        logits = jnp.sum(acc * wh_ref[...], axis=-1, keepdims=True) + bh_ref[...]
        o_ref[...] = logits.astype(o_ref.dtype)
    else:
        o_ref[...] = acc.astype(o_ref.dtype)


@functools.lru_cache(maxsize=1)
def _vmem_capacity_bytes():
    try:
        return int(pltpu.get_tpu_info().vmem_capacity_bytes)
    except Exception:
        return 64 * 1024 * 1024   # v7x per-TC physical VMEM (smallest gen)


def _flatten_padded(x):
    """(B, H, W, C) -> (B, H*W + 2*W + 2, C) bf16: one zero row above/below,
    row-major flattened, plus one zero element front/back so every 3x3 tap of
    the flat image is a contiguous H*W-length slice (wrapped border columns
    are masked inside the kernel)."""
    B, H, W, C = x.shape
    xp = jnp.pad(x.astype(jnp.bfloat16), ((0, 0), (1, 1), (0, 0), (0, 0)))
    xf = xp.reshape(B, (H + 2) * W, C)
    return jnp.pad(xf, ((0, 0), (1, 1), (0, 0)))


def conv3x3(xs, w, b, *, relu=True, head=None, out_dtype=jnp.bfloat16):
    """3x3 conv, stride 1, 'same' padding, fused bias + optional ReLU.

    xs: one NHWC tensor, or a list of NHWC tensors whose channels are fused
        inside the kernel (decoder skip connection -- no HBM concat pass).
    w:  (3, 3, Cin_total, Cout), b: (Cout,)
    head: optional ((1,1,Cout,1) w, (1,) b) fused 1x1 conv on the f32 output.
    """
    if not isinstance(xs, (list, tuple)):
        xs = [xs]
    B, H, W, _ = xs[0].shape
    for x in xs:
        assert x.shape[:3] == (B, H, W)
    cins = tuple(int(x.shape[-1]) for x in xs)
    cin = sum(cins)
    cout = int(w.shape[3])
    assert w.shape[:3] == (3, 3, cin), w.shape
    HW = H * W
    flat_len = HW + 2 * W + 2

    xfs = [_flatten_padded(x) for x in xs]
    w2 = w.reshape(9 * cin, cout).astype(jnp.bfloat16)      # (ky,kx,cin) order
    b2 = b.astype(jnp.float32).reshape(1, cout)

    operands = list(xfs) + [w2, b2]
    in_specs = (
        [pl.BlockSpec((None, flat_len, c), lambda bi: (bi, 0, 0)) for c in cins]
        + [pl.BlockSpec((9 * cin, cout), lambda bi: (0, 0)),    # resident weight
           pl.BlockSpec((1, cout), lambda bi: (0, 0))])         # resident bias

    fuse_head = head is not None
    cout_out = cout
    flops = 2 * B * HW * (9 * cin) * cout
    if fuse_head:
        wh, bh = head
        assert wh.shape == (1, 1, cout, 1) and bh.shape == (1,)
        operands += [wh.reshape(cout, 1).T.astype(jnp.float32),     # (1, cout)
                     bh.astype(jnp.float32).reshape(1, 1)]
        in_specs += [pl.BlockSpec((1, cout), lambda bi: (0, 0)),
                     pl.BlockSpec((1, 1), lambda bi: (0, 0))]
        cout_out = 1
        out_dtype = jnp.float32
        flops += 2 * B * HW * cout

    itemsize = jnp.dtype(out_dtype).itemsize
    bytes_accessed = (sum(B * flat_len * c * 2 for c in cins)
                      + 9 * cin * cout * 2 + cout * 4
                      + (cout * 4 + 4 if fuse_head else 0)
                      + B * HW * cout_out * itemsize)

    # VMEM budget: double-buffered inputs/outputs + resident weights + the
    # in-kernel patch/accumulator working set; cap at 75% of physical VMEM.
    blk_in = sum(flat_len * c * 2 for c in cins)
    blk_w = 9 * cin * cout * 2 + cout * 4 + (cout * 4 + 4 if fuse_head else 0)
    blk_out = HW * cout_out * itemsize
    scratch = HW * 9 * cin * 2 + HW * cout * 4
    need = 2 * blk_in + blk_w + 2 * blk_out + scratch
    vmem_limit = int(min(0.75 * _vmem_capacity_bytes(),
                         max(32 * 1024 * 1024, 2 * need)))

    kernel = functools.partial(_conv3x3_kernel, H=H, W=W, n_inputs=len(cins),
                               relu=relu, fuse_head=fuse_head)
    out = pl.pallas_call(
        kernel,
        out_shape=jax.ShapeDtypeStruct((B, HW, cout_out), out_dtype),
        grid=(B,),
        in_specs=in_specs,
        out_specs=pl.BlockSpec((None, HW, cout_out), lambda bi: (bi, 0, 0)),
        compiler_params=pltpu.CompilerParams(
            dimension_semantics=("parallel",),
            vmem_limit_bytes=vmem_limit),
        cost_estimate=pl.CostEstimate(flops=flops, transcendentals=0,
                                      bytes_accessed=bytes_accessed),
    )(*operands)
    return out.reshape(B, H, W, cout_out)


# ---------------------------------------------------------------------------
# Pure data-movement glue (pool / upsample) left to XLA for now (see TODOs).
# ---------------------------------------------------------------------------
def maxpool2x2(x):
    B, H, W, C = x.shape
    return x.reshape(B, H // 2, 2, W // 2, 2, C).max(axis=(2, 4))


def upsample2x(x):
    return jnp.repeat(jnp.repeat(x, 2, axis=1), 2, axis=2)


# ---------------------------------------------------------------------------
# Model: tiny U-Net mirroring smp.Unet(resnet34, in=3, classes=1, activation=
# None) semantics: NCHW in, full-resolution NCHW logits out.
# ---------------------------------------------------------------------------
def init_params(key):
    def conv_init(k, K, cin, cout):
        kw, kb = jax.random.split(k)
        scale = (2.0 / (K * K * cin)) ** 0.5
        w = scale * jax.random.normal(kw, (K, K, cin, cout), jnp.float32)
        b = 0.01 * jax.random.normal(kb, (cout,), jnp.float32)
        return w, b

    keys = jax.random.split(key, 6)
    return {
        "enc1": conv_init(keys[0], 3, 3, 16),
        "enc2": conv_init(keys[1], 3, 16, 32),
        "bott": conv_init(keys[2], 3, 32, 64),
        "dec2": conv_init(keys[3], 3, 64 + 32, 32),
        "dec1": conv_init(keys[4], 3, 32 + 16, 16),
        "head": conv_init(keys[5], 1, 16, 1),
    }


def segmentation_forward(params, images_nchw):
    """images: (B, 3, H, W) float32  ->  logits: (B, 1, H, W) float32."""
    _, _, H, W = images_nchw.shape
    assert H % 4 == 0 and W % 4 == 0, "H and W must be divisible by 4"
    x = jnp.transpose(images_nchw, (0, 2, 3, 1))                  # NHWC

    e1 = conv3x3(x, *params["enc1"], relu=True)                   # (B, H,   W,   16)
    p1 = maxpool2x2(e1)                                           # (B, H/2, W/2, 16)
    e2 = conv3x3(p1, *params["enc2"], relu=True)                  # (B, H/2, W/2, 32)
    p2 = maxpool2x2(e2)                                           # (B, H/4, W/4, 32)
    bo = conv3x3(p2, *params["bott"], relu=True)                  # (B, H/4, W/4, 64)

    u2 = upsample2x(bo)                                           # (B, H/2, W/2, 64)
    d2 = conv3x3([u2, e2], *params["dec2"], relu=True)            # skip fused in-kernel
    u1 = upsample2x(d2)                                           # (B, H,   W,   32)
    logits = conv3x3([u1, e1], *params["dec1"], relu=True,
                     head=params["head"])                         # dec1 + 1x1 head fused
    return jnp.transpose(logits, (0, 3, 1, 2))                    # (B, 1, H, W)


# ---------------------------------------------------------------------------
# Pure-XLA reference (same bf16 storage casts as the kernel path).
# ---------------------------------------------------------------------------
def _reference_forward(params, images_nchw):
    def conv(x, w, b, relu=True):
        y = lax.conv_general_dilated(
            x.astype(jnp.bfloat16), w.astype(jnp.bfloat16),
            window_strides=(1, 1), padding="SAME",
            dimension_numbers=("NHWC", "HWIO", "NHWC"),
            preferred_element_type=jnp.float32)
        y = y + b.astype(jnp.float32)
        return jnp.maximum(y, 0.0) if relu else y

    x = jnp.transpose(images_nchw, (0, 2, 3, 1))
    e1 = conv(x, *params["enc1"]).astype(jnp.bfloat16)
    p1 = maxpool2x2(e1)
    e2 = conv(p1, *params["enc2"]).astype(jnp.bfloat16)
    p2 = maxpool2x2(e2)
    bo = conv(p2, *params["bott"]).astype(jnp.bfloat16)
    u2 = upsample2x(bo)
    d2 = conv(jnp.concatenate([u2, e2], -1), *params["dec2"]).astype(jnp.bfloat16)
    u1 = upsample2x(d2)
    d1 = conv(jnp.concatenate([u1, e1], -1), *params["dec1"])     # f32 (pre-head)
    wh, bh = params["head"]
    logits = lax.conv_general_dilated(
        d1, wh.astype(jnp.float32), (1, 1), "SAME",
        dimension_numbers=("NHWC", "HWIO", "NHWC"),
        preferred_element_type=jnp.float32) + bh.astype(jnp.float32)
    return jnp.transpose(logits, (0, 3, 1, 2))


if __name__ == "__main__":
    images = jax.random.normal(jax.random.PRNGKey(0), (2, 3, 16, 16), jnp.float32)
    params = init_params(jax.random.PRNGKey(42))

    fwd = jax.jit(functools.partial(segmentation_forward, params))
    logits = jax.block_until_ready(fwd(images))

    assert logits.shape == (2, 1, 16, 16), logits.shape
    assert logits.dtype == jnp.float32
    assert bool(jnp.all(jnp.isfinite(logits)))

    ref = jax.block_until_ready(
        jax.jit(functools.partial(_reference_forward, params))(images))
    err = float(jnp.max(jnp.abs(logits - ref)))
    tol = 5e-2 * (1.0 + float(jnp.max(jnp.abs(ref))))   # bf16-matmul tolerance
    assert err <= tol, (err, tol)

    print("KERNEL_OK")
</pallas_src>

<mosaic_0001>
module attributes {stable_mosaic.version = 11 : i64} {
  func.func @_conv3x3_kernel(%arg0: i32, %arg1: memref<1x290x3xbf16, #tpu.memory_space<vmem>>, %arg2: memref<27x16xbf16, #tpu.memory_space<vmem>>, %arg3: memref<1x16xf32, #tpu.memory_space<vmem>>, %arg4: memref<1x256x16xbf16, #tpu.memory_space<vmem>>) attributes {dimension_semantics = [#tpu.dimension_semantics<parallel>], iteration_bounds = array<i64: 2>, scalar_prefetch = 0 : i64, scratch_operands = 0 : i64, tpu.core_type = #tpu.core_type<tc>, window_params = [{transform_indices = @transform_0, window_bounds = array<i64: 1, 290, 3>}, {pipeline_mode = #tpu.pipeline_mode<synchronous>, transform_indices = @transform_1, window_bounds = array<i64: 27, 16>}, {pipeline_mode = #tpu.pipeline_mode<synchronous>, transform_indices = @transform_2, window_bounds = array<i64: 1, 16>}, {transform_indices = @transform_3, window_bounds = array<i64: 1, 256, 16>}]} {
    %c0 = arith.constant 0 : index
    %c0_0 = arith.constant 0 : index
    %c0_1 = arith.constant 0 : index
    %0 = vector.load %arg1[%c0, %c0_0, %c0_1] : memref<1x290x3xbf16, #tpu.memory_space<vmem>>, vector<1x290x3xbf16>
    %1 = vector.shape_cast %0 : vector<1x290x3xbf16> to vector<290x3xbf16>
    %2 = tpu.iota {dimensions = array<i32: 0>} : vector<256x1xi32>
    %c16_i32 = arith.constant 16 : i32
    %c0_i32 = arith.constant 0 : i32
    %3 = arith.cmpi eq, %c16_i32, %c0_i32 : i32
    %c1_i32 = arith.constant 1 : i32
    %4 = arith.select %3, %c1_i32, %c16_i32 : i32
    %5 = vector.broadcast %4 : i32 to vector<256x1xi32>
    %6 = arith.remsi %2, %5 : vector<256x1xi32>
    %c0_i32_2 = arith.constant 0 : i32
    %7 = vector.broadcast %c0_i32_2 : i32 to vector<256x1xi32>
    %8 = arith.cmpi ne, %6, %7 : vector<256x1xi32>
    %c0_i32_3 = arith.constant 0 : i32
    %9 = vector.broadcast %c0_i32_3 : i32 to vector<256x1xi32>
    %10 = arith.cmpi slt, %6, %9 : vector<256x1xi32>
    %c0_i32_4 = arith.constant 0 : i32
    %11 = arith.cmpi slt, %4, %c0_i32_4 : i32
    %12 = vector.broadcast %11 : i1 to vector<256x1xi1>
    %13 = vector.broadcast %12 : vector<256x1xi1> to vector<256x1xi1>
    %14 = arith.xori %10, %13 : vector<256x1xi1>
    %15 = arith.andi %14, %8 : vector<256x1xi1>
    %16 = vector.broadcast %4 : i32 to vector<256x1xi32>
    %17 = arith.addi %6, %16 : vector<256x1xi32>
    %18 = arith.select %15, %17, %6 : vector<256x1xi1>, vector<256x1xi32>
    %19 = vector.extract_strided_slice %1 {offsets = [0, 0], sizes = [256, 3], strides = [1, 1]} : vector<290x3xbf16> to vector<256x3xbf16>
    %c0_i32_5 = arith.constant 0 : i32
    %20 = vector.broadcast %c0_i32_5 : i32 to vector<256x1xi32>
    %21 = arith.cmpi eq, %18, %20 : vector<256x1xi32>
    %cst = arith.constant 0.000000e+00 : bf16
    %22 = vector.broadcast %cst : bf16 to vector<256x3xbf16>
    %23 = vector.shape_cast %21 : vector<256x1xi1> to vector<256x1xi1>
    %24 = vector.broadcast %23 : vector<256x1xi1> to vector<256x3xi1>
    %25 = arith.select %24, %22, %19 : vector<256x3xi1>, vector<256x3xbf16>
    %26 = vector.extract_strided_slice %1 {offsets = [1, 0], sizes = [256, 3], strides = [1, 1]} : vector<290x3xbf16> to vector<256x3xbf16>
    %27 = vector.extract_strided_slice %1 {offsets = [2, 0], sizes = [256, 3], strides = [1, 1]} : vector<290x3xbf16> to vector<256x3xbf16>
    %c15_i32 = arith.constant 15 : i32
    %28 = vector.broadcast %c15_i32 : i32 to vector<256x1xi32>
    %29 = arith.cmpi eq, %18, %28 : vector<256x1xi32>
    %cst_6 = arith.constant 0.000000e+00 : bf16
    %30 = vector.broadcast %cst_6 : bf16 to vector<256x3xbf16>
    %31 = vector.shape_cast %29 : vector<256x1xi1> to vector<256x1xi1>
    %32 = vector.broadcast %31 : vector<256x1xi1> to vector<256x3xi1>
    %33 = arith.select %32, %30, %27 : vector<256x3xi1>, vector<256x3xbf16>
    %34 = vector.extract_strided_slice %1 {offsets = [16, 0], sizes = [256, 3], strides = [1, 1]} : vector<290x3xbf16> to vector<256x3xbf16>
    %c0_i32_7 = arith.constant 0 : i32
    %35 = vector.broadcast %c0_i32_7 : i32 to vector<256x1xi32>
    %36 = arith.cmpi eq, %18, %35 : vector<256x1xi32>
    %cst_8 = arith.constant 0.000000e+00 : bf16
    %37 = vector.broadcast %cst_8 : bf16 to vector<256x3xbf16>
    %38 = vector.shape_cast %36 : vector<256x1xi1> to vector<256x1xi1>
    %39 = vector.broadcast %38 : vector<256x1xi1> to vector<256x3xi1>
    %40 = arith.select %39, %37, %34 : vector<256x3xi1>, vector<256x3xbf16>
    %41 = vector.extract_strided_slice %1 {offsets = [17, 0], sizes = [256, 3], strides = [1, 1]} : vector<290x3xbf16> to vector<256x3xbf16>
    %42 = vector.extract_strided_slice %1 {offsets = [18, 0], sizes = [256, 3], strides = [1, 1]} : vector<290x3xbf16> to vector<256x3xbf16>
    %c15_i32_9 = arith.constant 15 : i32
    %43 = vector.broadcast %c15_i32_9 : i32 to vector<256x1xi32>
    %44 = arith.cmpi eq, %18, %43 : vector<256x1xi32>
    %cst_10 = arith.constant 0.000000e+00 : bf16
    %45 = vector.broadcast %cst_10 : bf16 to vector<256x3xbf16>
    %46 = vector.shape_cast %44 : vector<256x1xi1> to vector<256x1xi1>
    %47 = vector.broadcast %46 : vector<256x1xi1> to vector<256x3xi1>
    %48 = arith.select %47, %45, %42 : vector<256x3xi1>, vector<256x3xbf16>
    %49 = vector.extract_strided_slice %1 {offsets = [32, 0], sizes = [256, 3], strides = [1, 1]} : vector<290x3xbf16> to vector<256x3xbf16>
    %c0_i32_11 = arith.constant 0 : i32
    %50 = vector.broadcast %c0_i32_11 : i32 to vector<256x1xi32>
    %51 = arith.cmpi eq, %18, %50 : vector<256x1xi32>
    %cst_12 = arith.constant 0.000000e+00 : bf16
    %52 = vector.broadcast %cst_12 : bf16 to vector<256x3xbf16>
    %53 = vector.shape_cast %51 : vector<256x1xi1> to vector<256x1xi1>
    %54 = vector.broadcast %53 : vector<256x1xi1> to vector<256x3xi1>
    %55 = arith.select %54, %52, %49 : vector<256x3xi1>, vector<256x3xbf16>
    %56 = vector.extract_strided_slice %1 {offsets = [33, 0], sizes = [256, 3], strides = [1, 1]} : vector<290x3xbf16> to vector<256x3xbf16>
    %57 = vector.extract_strided_slice %1 {offsets = [34, 0], sizes = [256, 3], strides = [1, 1]} : vector<290x3xbf16> to vector<256x3xbf16>
    %c15_i32_13 = arith.constant 15 : i32
    %58 = vector.broadcast %c15_i32_13 : i32 to vector<256x1xi32>
    %59 = arith.cmpi eq, %18, %58 : vector<256x1xi32>
    %cst_14 = arith.constant 0.000000e+00 : bf16
    %60 = vector.broadcast %cst_14 : bf16 to vector<256x3xbf16>
    %61 = vector.shape_cast %59 : vector<256x1xi1> to vector<256x1xi1>
    %62 = vector.broadcast %61 : vector<256x1xi1> to vector<256x3xi1>
    %63 = arith.select %62, %60, %57 : vector<256x3xi1>, vector<256x3xbf16>
    %64 = tpu.concatenate %25, %26, %33, %40, %41, %48, %55, %56, %63 in 1 : vector<256x3xbf16>, vector<256x3xbf16>, vector<256x3xbf16>, vector<256x3xbf16>, vector<256x3xbf16>, vector<256x3xbf16>, vector<256x3xbf16>, vector<256x3xbf16>, vector<256x3xbf16> -> vector<256x27xbf16>
    %c0_15 = arith.constant 0 : index
    %c0_16 = arith.constant 0 : index
    %65 = vector.load %arg2[%c0_15, %c0_16] : memref<27x16xbf16, #tpu.memory_space<vmem>>, vector<27x16xbf16>
    %cst_17 = arith.constant dense<0.000000e+00> : vector<256x16xf32>
    %66 = tpu.matmul %64, %65, %cst_17 {dimension_numbers = #tpu.dot_dimension_numbers<[1], [0], [0], [1], [0, 0, 1, 1], [], []>} : vector<256x27xbf16>, vector<27x16xbf16>, vector<256x16xf32> -> vector<256x16xf32>
    %c0_18 = arith.constant 0 : index
    %c0_19 = arith.constant 0 : index
    %67 = vector.load %arg3[%c0_18, %c0_19] : memref<1x16xf32, #tpu.memory_space<vmem>>, vector<1x16xf32>
    %68 = vector.broadcast %67 : vector<1x16xf32> to vector<256x16xf32>
    %69 = arith.addf %66, %68 : vector<256x16xf32>
    %cst_20 = arith.constant 0.000000e+00 : f32
    %70 = vector.broadcast %cst_20 : f32 to vector<256x16xf32>
    %71 = arith.maximumf %69, %70 : vector<256x16xf32>
    %72 = arith.truncf %71 : vector<256x16xf32> to vector<256x16xbf16>
    %c0_21 = arith.constant 0 : index
    %c0_22 = arith.constant 0 : index
    %c0_23 = arith.constant 0 : index
    %73 = vector.load %arg4[%c0_21, %c0_22, %c0_23] : memref<1x256x16xbf16, #tpu.memory_space<vmem>>, vector<1x256x16xbf16>
    %74 = vector.shape_cast %73 : vector<1x256x16xbf16> to vector<256x16xbf16>
    %75 = vector.shape_cast %72 : vector<256x16xbf16> to vector<1x256x16xbf16>
    tpu.vector_store %arg4[%c0_21, %c0_22, %c0_23], %75 {strides = array<i32>} : memref<1x256x16xbf16, #tpu.memory_space<vmem>>, vector<1x256x16xbf16>,
    return
  }
  func.func @transform_0(%arg0: i32) -> (i32, i32, i32) {
    %c0_i32 = arith.constant 0 : i32
    %c0_i32_0 = arith.constant 0 : i32
    %c0_i32_1 = arith.constant 0 : i32
    return %arg0, %c0_i32, %c0_i32_0 : i32, i32, i32
  }
  func.func @transform_1(%arg0: i32) -> (i32, i32) {
    %c0_i32 = arith.constant 0 : i32
    %c0_i32_0 = arith.constant 0 : i32
    %c0_i32_1 = arith.constant 0 : i32
    return %c0_i32, %c0_i32_0 : i32, i32
  }
  func.func @transform_2(%arg0: i32) -> (i32, i32) {
    %c0_i32 = arith.constant 0 : i32
    %c0_i32_0 = arith.constant 0 : i32
    %c0_i32_1 = arith.constant 0 : i32
    return %c0_i32, %c0_i32_0 : i32, i32
  }
  func.func @transform_3(%arg0: i32) -> (i32, i32, i32) {
    %c0_i32 = arith.constant 0 : i32
    %c0_i32_0 = arith.constant 0 : i32
    %c0_i32_1 = arith.constant 0 : i32
    return %arg0, %c0_i32, %c0_i32_0 : i32, i32, i32
  }
}

module attributes {stable_mosaic.version = 11 : i64} {
  func.func @_conv3x3_kernel(%arg0: i32, %arg1: memref<1x82x16xbf16, #tpu.memory_space<vmem>>, %arg2: memref<144x32xbf16, #tpu.memory_space<vmem>>, %arg3: memref<1x32xf32, #tpu.memory_space<vmem>>, %arg4: memref<1x64x32xbf16, #tpu.memory_space<vmem>>) attributes {dimension_semantics = [#tpu.dimension_semantics<parallel>], iteration_bounds = array<i64: 2>, scalar_prefetch = 0 : i64, scratch_operands = 0 : i64, tpu.core_type = #tpu.core_type<tc>, window_params = [{transform_indices = @transform_0, window_bounds = array<i64: 1, 82, 16>}, {pipeline_mode = #tpu.pipeline_mode<synchronous>, transform_indices = @transform_1, window_bounds = array<i64: 144, 32>}, {pipeline_mode = #tpu.pipeline_mode<synchronous>, transform_indices = @transform_2, window_bounds = array<i64: 1, 32>}, {transform_indices = @transform_3, window_bounds = array<i64: 1, 64, 32>}]} {
    %c0 = arith.constant 0 : index
    %c0_0 = arith.constant 0 : index
    %c0_1 = arith.constant 0 : index
    %0 = vector.load %arg1[%c0, %c0_0, %c0_1] : memref<1x82x16xbf16, #tpu.memory_space<vmem>>, vector<1x82x16xbf16>
    %1 = vector.shape_cast %0 : vector<1x82x16xbf16> to vector<82x16xbf16>
    %2 = tpu.iota {dimensions = array<i32: 0>} : vector<64x1xi32>
    %c8_i32 = arith.constant 8 : i32
    %c0_i32 = arith.constant 0 : i32
    %3 = arith.cmpi eq, %c8_i32, %c0_i32 : i32
    %c1_i32 = arith.constant 1 : i32
    %4 = arith.select %3, %c1_i32, %c8_i32 : i32
    %5 = vector.broadcast %4 : i32 to vector<64x1xi32>
    %6 = arith.remsi %2, %5 : vector<64x1xi32>
    %c0_i32_2 = arith.constant 0 : i32
    %7 = vector.broadcast %c0_i32_2 : i32 to vector<64x1xi32>
    %8 = arith.cmpi ne, %6, %7 : vector<64x1xi32>
    %c0_i32_3 = arith.constant 0 : i32
    %9 = vector.broadcast %c0_i32_3 : i32 to vector<64x1xi32>
    %10 = arith.cmpi slt, %6, %9 : vector<64x1xi32>
    %c0_i32_4 = arith.constant 0 : i32
    %11 = arith.cmpi slt, %4, %c0_i32_4 : i32
    %12 = vector.broadcast %11 : i1 to vector<64x1xi1>
    %13 = vector.broadcast %12 : vector<64x1xi1> to vector<64x1xi1>
    %14 = arith.xori %10, %13 : vector<64x1xi1>
    %15 = arith.andi %14, %8 : vector<64x1xi1>
    %16 = vector.broadcast %4 : i32 to vector<64x1xi32>
    %17 = arith.addi %6, %16 : vector<64x1xi32>
    %18 = arith.select %15, %17, %6 : vector<64x1xi1>, vector<64x1xi32>
    %19 = vector.extract_strided_slice %1 {offsets = [0, 0], sizes = [64, 16], strides = [1, 1]} : vector<82x16xbf16> to vector<64x16xbf16>
    %c0_i32_5 = arith.constant 0 : i32
    %20 = vector.broadcast %c0_i32_5 : i32 to vector<64x1xi32>
    %21 = arith.cmpi eq, %18, %20 : vector<64x1xi32>
    %cst = arith.constant 0.000000e+00 : bf16
    %22 = vector.broadcast %cst : bf16 to vector<64x16xbf16>
    %23 = vector.shape_cast %21 : vector<64x1xi1> to vector<64x1xi1>
    %24 = vector.broadcast %23 : vector<64x1xi1> to vector<64x16xi1>
    %25 = arith.select %24, %22, %19 : vector<64x16xi1>, vector<64x16xbf16>
    %26 = vector.extract_strided_slice %1 {offsets = [1, 0], sizes = [64, 16], strides = [1, 1]} : vector<82x16xbf16> to vector<64x16xbf16>
    %27 = vector.extract_strided_slice %1 {offsets = [2, 0], sizes = [64, 16], strides = [1, 1]} : vector<82x16xbf16> to vector<64x16xbf16>
    %c7_i32 = arith.constant 7 : i32
    %28 = vector.broadcast %c7_i32 : i32 to vector<64x1xi32>
    %29 = arith.cmpi eq, %18, %28 : vector<64x1xi32>
    %cst_6 = arith.constant 0.000000e+00 : bf16
    %30 = vector.broadcast %cst_6 : bf16 to vector<64x16xbf16>
    %31 = vector.shape_cast %29 : vector<64x1xi1> to vector<64x1xi1>
    %32 = vector.broadcast %31 : vector<64x1xi1> to vector<64x16xi1>
    %33 = arith.select %32, %30, %27 : vector<64x16xi1>, vector<64x16xbf16>
    %34 = vector.extract_strided_slice %1 {offsets = [8, 0], sizes = [64, 16], strides = [1, 1]} : vector<82x16xbf16> to vector<64x16xbf16>
    %c0_i32_7 = arith.constant 0 : i32
    %35 = vector.broadcast %c0_i32_7 : i32 to vector<64x1xi32>
    %36 = arith.cmpi eq, %18, %35 : vector<64x1xi32>
    %cst_8 = arith.constant 0.000000e+00 : bf16
    %37 = vector.broadcast %cst_8 : bf16 to vector<64x16xbf16>
    %38 = vector.shape_cast %36 : vector<64x1xi1> to vector<64x1xi1>
    %39 = vector.broadcast %38 : vector<64x1xi1> to vector<64x16xi1>
    %40 = arith.select %39, %37, %34 : vector<64x16xi1>, vector<64x16xbf16>
    %41 = vector.extract_strided_slice %1 {offsets = [9, 0], sizes = [64, 16], strides = [1, 1]} : vector<82x16xbf16> to vector<64x16xbf16>
    %42 = vector.extract_strided_slice %1 {offsets = [10, 0], sizes = [64, 16], strides = [1, 1]} : vector<82x16xbf16> to vector<64x16xbf16>
    %c7_i32_9 = arith.constant 7 : i32
    %43 = vector.broadcast %c7_i32_9 : i32 to vector<64x1xi32>
    %44 = arith.cmpi eq, %18, %43 : vector<64x1xi32>
    %cst_10 = arith.constant 0.000000e+00 : bf16
    %45 = vector.broadcast %cst_10 : bf16 to vector<64x16xbf16>
    %46 = vector.shape_cast %44 : vector<64x1xi1> to vector<64x1xi1>
    %47 = vector.broadcast %46 : vector<64x1xi1> to vector<64x16xi1>
    %48 = arith.select %47, %45, %42 : vector<64x16xi1>, vector<64x16xbf16>
    %49 = vector.extract_strided_slice %1 {offsets = [16, 0], sizes = [64, 16], strides = [1, 1]} : vector<82x16xbf16> to vector<64x16xbf16>
    %c0_i32_11 = arith.constant 0 : i32
    %50 = vector.broadcast %c0_i32_11 : i32 to vector<64x1xi32>
    %51 = arith.cmpi eq, %18, %50 : vector<64x1xi32>
    %cst_12 = arith.constant 0.000000e+00 : bf16
    %52 = vector.broadcast %cst_12 : bf16 to vector<64x16xbf16>
    %53 = vector.shape_cast %51 : vector<64x1xi1> to vector<64x1xi1>
    %54 = vector.broadcast %53 : vector<64x1xi1> to vector<64x16xi1>
    %55 = arith.select %54, %52, %49 : vector<64x16xi1>, vector<64x16xbf16>
    %56 = vector.extract_strided_slice %1 {offsets = [17, 0], sizes = [64, 16], strides = [1, 1]} : vector<82x16xbf16> to vector<64x16xbf16>
    %57 = vector.extract_strided_slice %1 {offsets = [18, 0], sizes = [64, 16], strides = [1, 1]} : vector<82x16xbf16> to vector<64x16xbf16>
    %c7_i32_13 = arith.constant 7 : i32
    %58 = vector.broadcast %c7_i32_13 : i32 to vector<64x1xi32>
    %59 = arith.cmpi eq, %18, %58 : vector<64x1xi32>
    %cst_14 = arith.constant 0.000000e+00 : bf16
    %60 = vector.broadcast %cst_14 : bf16 to vector<64x16xbf16>
    %61 = vector.shape_cast %59 : vector<64x1xi1> to vector<64x1xi1>
    %62 = vector.broadcast %61 : vector<64x1xi1> to vector<64x16xi1>
    %63 = arith.select %62, %60, %57 : vector<64x16xi1>, vector<64x16xbf16>
    %64 = tpu.concatenate %25, %26, %33, %40, %41, %48, %55, %56, %63 in 1 : vector<64x16xbf16>, vector<64x16xbf16>, vector<64x16xbf16>, vector<64x16xbf16>, vector<64x16xbf16>, vector<64x16xbf16>, vector<64x16xbf16>, vector<64x16xbf16>, vector<64x16xbf16> -> vector<64x144xbf16>
    %c0_15 = arith.constant 0 : index
    %c0_16 = arith.constant 0 : index
    %65 = vector.load %arg2[%c0_15, %c0_16] : memref<144x32xbf16, #tpu.memory_space<vmem>>, vector<144x32xbf16>
    %cst_17 = arith.constant dense<0.000000e+00> : vector<64x32xf32>
    %66 = tpu.matmul %64, %65, %cst_17 {dimension_numbers = #tpu.dot_dimension_numbers<[1], [0], [0], [1], [0, 0, 1, 1], [], []>} : vector<64x144xbf16>, vector<144x32xbf16>, vector<64x32xf32> -> vector<64x32xf32>
    %c0_18 = arith.constant 0 : index
    %c0_19 = arith.constant 0 : index
    %67 = vector.load %arg3[%c0_18, %c0_19] : memref<1x32xf32, #tpu.memory_space<vmem>>, vector<1x32xf32>
    %68 = vector.broadcast %67 : vector<1x32xf32> to vector<64x32xf32>
    %69 = arith.addf %66, %68 : vector<64x32xf32>
    %cst_20 = arith.constant 0.000000e+00 : f32
    %70 = vector.broadcast %cst_20 : f32 to vector<64x32xf32>
    %71 = arith.maximumf %69, %70 : vector<64x32xf32>
    %72 = arith.truncf %71 : vector<64x32xf32> to vector<64x32xbf16>
    %c0_21 = arith.constant 0 : index
    %c0_22 = arith.constant 0 : index
    %c0_23 = arith.constant 0 : index
    %73 = vector.load %arg4[%c0_21, %c0_22, %c0_23] : memref<1x64x32xbf16, #tpu.memory_space<vmem>>, vector<1x64x32xbf16>
    %74 = vector.shape_cast %73 : vector<1x64x32xbf16> to vector<64x32xbf16>
    %75 = vector.shape_cast %72 : vector<64x32xbf16> to vector<1x64x32xbf16>
    tpu.vector_store %arg4[%c0_21, %c0_22, %c0_23], %75 {strides = array<i32>} : memref<1x64x32xbf16, #tpu.memory_space<vmem>>, vector<1x64x32xbf16>,
    return
  }
  func.func @transform_0(%arg0: i32) -> (i32, i32, i32) {
    %c0_i32 = arith.constant 0 : i32
    %c0_i32_0 = arith.constant 0 : i32
    %c0_i32_1 = arith.constant 0 : i32
    return %arg0, %c0_i32, %c0_i32_0 : i32, i32, i32
  }
  func.func @transform_1(%arg0: i32) -> (i32, i32) {
    %c0_i32 = arith.constant 0 : i32
    %c0_i32_0 = arith.constant 0 : i32
    %c0_i32_1 = arith.constant 0 : i32
    return %c0_i32, %c0_i32_0 : i32, i32
  }
  func.func @transform_2(%arg0: i32) -> (i32, i32) {
    %c0_i32 = arith.constant 0 : i32
    %c0_i32_0 = arith.constant 0 : i32
    %c0_i32_1 = arith.constant 0 : i32
    return %c0_i32, %c0_i32_0 : i32, i32
  }
  func.func @transform_3(%arg0: i32) -> (i32, i32, i32) {
    %c0_i32 = arith.constant 0 : i32
    %c0_i32_0 = arith.constant 0 : i32
    %c0_i32_1 = arith.constant 0 : i32
    return %arg0, %c0_i32, %c0_i32_0 : i32, i32, i32
  }
}

module attributes {stable_mosaic.version = 11 : i64} {
  func.func @_conv3x3_kernel(%arg0: i32, %arg1: memref<1x26x32xbf16, #tpu.memory_space<vmem>>, %arg2: memref<288x64xbf16, #tpu.memory_space<vmem>>, %arg3: memref<1x64xf32, #tpu.memory_space<vmem>>, %arg4: memref<1x16x64xbf16, #tpu.memory_space<vmem>>) attributes {dimension_semantics = [#tpu.dimension_semantics<parallel>], iteration_bounds = array<i64: 2>, scalar_prefetch = 0 : i64, scratch_operands = 0 : i64, tpu.core_type = #tpu.core_type<tc>, window_params = [{transform_indices = @transform_0, window_bounds = array<i64: 1, 26, 32>}, {pipeline_mode = #tpu.pipeline_mode<synchronous>, transform_indices = @transform_1, window_bounds = array<i64: 288, 64>}, {pipeline_mode = #tpu.pipeline_mode<synchronous>, transform_indices = @transform_2, window_bounds = array<i64: 1, 64>}, {transform_indices = @transform_3, window_bounds = array<i64: 1, 16, 64>}]} {
    %c0 = arith.constant 0 : index
    %c0_0 = arith.constant 0 : index
    %c0_1 = arith.constant 0 : index
    %0 = vector.load %arg1[%c0, %c0_0, %c0_1] : memref<1x26x32xbf16, #tpu.memory_space<vmem>>, vector<1x26x32xbf16>
    %1 = vector.shape_cast %0 : vector<1x26x32xbf16> to vector<26x32xbf16>
    %2 = tpu.iota {dimensions = array<i32: 0>} : vector<16x1xi32>
    %c4_i32 = arith.constant 4 : i32
    %c0_i32 = arith.constant 0 : i32
    %3 = arith.cmpi eq, %c4_i32, %c0_i32 : i32
    %c1_i32 = arith.constant 1 : i32
    %4 = arith.select %3, %c1_i32, %c4_i32 : i32
    %5 = vector.broadcast %4 : i32 to vector<16x1xi32>
    %6 = arith.remsi %2, %5 : vector<16x1xi32>
    %c0_i32_2 = arith.constant 0 : i32
    %7 = vector.broadcast %c0_i32_2 : i32 to vector<16x1xi32>
    %8 = arith.cmpi ne, %6, %7 : vector<16x1xi32>
    %c0_i32_3 = arith.constant 0 : i32
    %9 = vector.broadcast %c0_i32_3 : i32 to vector<16x1xi32>
    %10 = arith.cmpi slt, %6, %9 : vector<16x1xi32>
    %c0_i32_4 = arith.constant 0 : i32
    %11 = arith.cmpi slt, %4, %c0_i32_4 : i32
    %12 = vector.broadcast %11 : i1 to vector<16x1xi1>
    %13 = vector.broadcast %12 : vector<16x1xi1> to vector<16x1xi1>
    %14 = arith.xori %10, %13 : vector<16x1xi1>
    %15 = arith.andi %14, %8 : vector<16x1xi1>
    %16 = vector.broadcast %4 : i32 to vector<16x1xi32>
    %17 = arith.addi %6, %16 : vector<16x1xi32>
    %18 = arith.select %15, %17, %6 : vector<16x1xi1>, vector<16x1xi32>
    %19 = vector.extract_strided_slice %1 {offsets = [0, 0], sizes = [16, 32], strides = [1, 1]} : vector<26x32xbf16> to vector<16x32xbf16>
    %c0_i32_5 = arith.constant 0 : i32
    %20 = vector.broadcast %c0_i32_5 : i32 to vector<16x1xi32>
    %21 = arith.cmpi eq, %18, %20 : vector<16x1xi32>
    %cst = arith.constant 0.000000e+00 : bf16
    %22 = vector.broadcast %cst : bf16 to vector<16x32xbf16>
    %23 = vector.shape_cast %21 : vector<16x1xi1> to vector<16x1xi1>
    %24 = vector.broadcast %23 : vector<16x1xi1> to vector<16x32xi1>
    %25 = arith.select %24, %22, %19 : vector<16x32xi1>, vector<16x32xbf16>
    %26 = vector.extract_strided_slice %1 {offsets = [1, 0], sizes = [16, 32], strides = [1, 1]} : vector<26x32xbf16> to vector<16x32xbf16>
    %27 = vector.extract_strided_slice %1 {offsets = [2, 0], sizes = [16, 32], strides = [1, 1]} : vector<26x32xbf16> to vector<16x32xbf16>
    %c3_i32 = arith.constant 3 : i32
    %28 = vector.broadcast %c3_i32 : i32 to vector<16x1xi32>
    %29 = arith.cmpi eq, %18, %28 : vector<16x1xi32>
    %cst_6 = arith.constant 0.000000e+00 : bf16
    %30 = vector.broadcast %cst_6 : bf16 to vector<16x32xbf16>
    %31 = vector.shape_cast %29 : vector<16x1xi1> to vector<16x1xi1>
    %32 = vector.broadcast %31 : vector<16x1xi1> to vector<16x32xi1>
    %33 = arith.select %32, %30, %27 : vector<16x32xi1>, vector<16x32xbf16>
    %34 = vector.extract_strided_slice %1 {offsets = [4, 0], sizes = [16, 32], strides = [1, 1]} : vector<26x32xbf16> to vector<16x32xbf16>
    %c0_i32_7 = arith.constant 0 : i32
    %35 = vector.broadcast %c0_i32_7 : i32 to vector<16x1xi32>
    %36 = arith.cmpi eq, %18, %35 : vector<16x1xi32>
    %cst_8 = arith.constant 0.000000e+00 : bf16
    %37 = vector.broadcast %cst_8 : bf16 to vector<16x32xbf16>
    %38 = vector.shape_cast %36 : vector<16x1xi1> to vector<16x1xi1>
    %39 = vector.broadcast %38 : vector<16x1xi1> to vector<16x32xi1>
    %40 = arith.select %39, %37, %34 : vector<16x32xi1>, vector<16x32xbf16>
    %41 = vector.extract_strided_slice %1 {offsets = [5, 0], sizes = [16, 32], strides = [1, 1]} : vector<26x32xbf16> to vector<16x32xbf16>
    %42 = vector.extract_strided_slice %1 {offsets = [6, 0], sizes = [16, 32], strides = [1, 1]} : vector<26x32xbf16> to vector<16x32xbf16>
    %c3_i32_9 = arith.constant 3 : i32
    %43 = vector.broadcast %c3_i32_9 : i32 to vector<16x1xi32>
    %44 = arith.cmpi eq, %18, %43 : vector<16x1xi32>
    %cst_10 = arith.constant 0.000000e+00 : bf16
    %45 = vector.broadcast %cst_10 : bf16 to vector<16x32xbf16>
    %46 = vector.shape_cast %44 : vector<16x1xi1> to vector<16x1xi1>
    %47 = vector.broadcast %46 : vector<16x1xi1> to vector<16x32xi1>
    %48 = arith.select %47, %45, %42 : vector<16x32xi1>, vector<16x32xbf16>
    %49 = vector.extract_strided_slice %1 {offsets = [8, 0], sizes = [16, 32], strides = [1, 1]} : vector<26x32xbf16> to vector<16x32xbf16>
    %c0_i32_11 = arith.constant 0 : i32
    %50 = vector.broadcast %c0_i32_11 : i32 to vector<16x1xi32>
    %51 = arith.cmpi eq, %18, %50 : vector<16x1xi32>
    %cst_12 = arith.constant 0.000000e+00 : bf16
    %52 = vector.broadcast %cst_12 : bf16 to vector<16x32xbf16>
    %53 = vector.shape_cast %51 : vector<16x1xi1> to vector<16x1xi1>
    %54 = vector.broadcast %53 : vector<16x1xi1> to vector<16x32xi1>
    %55 = arith.select %54, %52, %49 : vector<16x32xi1>, vector<16x32xbf16>
    %56 = vector.extract_strided_slice %1 {offsets = [9, 0], sizes = [16, 32], strides = [1, 1]} : vector<26x32xbf16> to vector<16x32xbf16>
    %57 = vector.extract_strided_slice %1 {offsets = [10, 0], sizes = [16, 32], strides = [1, 1]} : vector<26x32xbf16> to vector<16x32xbf16>
    %c3_i32_13 = arith.constant 3 : i32
    %58 = vector.broadcast %c3_i32_13 : i32 to vector<16x1xi32>
    %59 = arith.cmpi eq, %18, %58 : vector<16x1xi32>
    %cst_14 = arith.constant 0.000000e+00 : bf16
    %60 = vector.broadcast %cst_14 : bf16 to vector<16x32xbf16>
    %61 = vector.shape_cast %59 : vector<16x1xi1> to vector<16x1xi1>
    %62 = vector.broadcast %61 : vector<16x1xi1> to vector<16x32xi1>
    %63 = arith.select %62, %60, %57 : vector<16x32xi1>, vector<16x32xbf16>
    %64 = tpu.concatenate %25, %26, %33, %40, %41, %48, %55, %56, %63 in 1 : vector<16x32xbf16>, vector<16x32xbf16>, vector<16x32xbf16>, vector<16x32xbf16>, vector<16x32xbf16>, vector<16x32xbf16>, vector<16x32xbf16>, vector<16x32xbf16>, vector<16x32xbf16> -> vector<16x288xbf16>
    %c0_15 = arith.constant 0 : index
    %c0_16 = arith.constant 0 : index
    %65 = vector.load %arg2[%c0_15, %c0_16] : memref<288x64xbf16, #tpu.memory_space<vmem>>, vector<288x64xbf16>
    %cst_17 = arith.constant dense<0.000000e+00> : vector<16x64xf32>
    %66 = tpu.matmul %64, %65, %cst_17 {dimension_numbers = #tpu.dot_dimension_numbers<[1], [0], [0], [1], [0, 0, 1, 1], [], []>} : vector<16x288xbf16>, vector<288x64xbf16>, vector<16x64xf32> -> vector<16x64xf32>
    %c0_18 = arith.constant 0 : index
    %c0_19 = arith.constant 0 : index
    %67 = vector.load %arg3[%c0_18, %c0_19] : memref<1x64xf32, #tpu.memory_space<vmem>>, vector<1x64xf32>
    %68 = vector.broadcast %67 : vector<1x64xf32> to vector<16x64xf32>
    %69 = arith.addf %66, %68 : vector<16x64xf32>
    %cst_20 = arith.constant 0.000000e+00 : f32
    %70 = vector.broadcast %cst_20 : f32 to vector<16x64xf32>
    %71 = arith.maximumf %69, %70 : vector<16x64xf32>
    %72 = arith.truncf %71 : vector<16x64xf32> to vector<16x64xbf16>
    %c0_21 = arith.constant 0 : index
    %c0_22 = arith.constant 0 : index
    %c0_23 = arith.constant 0 : index
    %73 = vector.load %arg4[%c0_21, %c0_22, %c0_23] : memref<1x16x64xbf16, #tpu.memory_space<vmem>>, vector<1x16x64xbf16>
    %74 = vector.shape_cast %73 : vector<1x16x64xbf16> to vector<16x64xbf16>
    %75 = vector.shape_cast %72 : vector<16x64xbf16> to vector<1x16x64xbf16>
    tpu.vector_store %arg4[%c0_21, %c0_22, %c0_23], %75 {strides = array<i32>} : memref<1x16x64xbf16, #tpu.memory_space<vmem>>, vector<1x16x64xbf16>,
    return
  }
  func.func @transform_0(%arg0: i32) -> (i32, i32, i32) {
    %c0_i32 = arith.constant 0 : i32
    %c0_i32_0 = arith.constant 0 : i32
    %c0_i32_1 = arith.constant 0 : i32
    return %arg0, %c0_i32, %c0_i32_0 : i32, i32, i32
  }
  func.func @transform_1(%arg0: i32) -> (i32, i32) {
    %c0_i32 = arith.constant 0 : i32
    %c0_i32_0 = arith.constant 0 : i32
    %c0_i32_1 = arith.constant 0 : i32
    return %c0_i32, %c0_i32_0 : i32, i32
  }
  func.func @transform_2(%arg0: i32) -> (i32, i32) {
    %c0_i32 = arith.constant 0 : i32
    %c0_i32_0 = arith.constant 0 : i32
    %c0_i32_1 = arith.constant 0 : i32
    return %c0_i32, %c0_i32_0 : i32, i32
  }
  func.func @transform_3(%arg0: i32) -> (i32, i32, i32) {
    %c0_i32 = arith.constant 0 : i32
    %c0_i32_0 = arith.constant 0 : i32
    %c0_i32_1 = arith.constant 0 : i32
    return %arg0, %c0_i32, %c0_i32_0 : i32, i32, i32
  }
}

module attributes {stable_mosaic.version = 11 : i64} {
  func.func @_conv3x3_kernel(%arg0: i32, %arg1: memref<1x82x64xbf16, #tpu.memory_space<vmem>>, %arg2: memref<1x82x32xbf16, #tpu.memory_space<vmem>>, %arg3: memref<864x32xbf16, #tpu.memory_space<vmem>>, %arg4: memref<1x32xf32, #tpu.memory_space<vmem>>, %arg5: memref<1x64x32xbf16, #tpu.memory_space<vmem>>) attributes {dimension_semantics = [#tpu.dimension_semantics<parallel>], iteration_bounds = array<i64: 2>, scalar_prefetch = 0 : i64, scratch_operands = 0 : i64, tpu.core_type = #tpu.core_type<tc>, window_params = [{transform_indices = @transform_0, window_bounds = array<i64: 1, 82, 64>}, {transform_indices = @transform_1, window_bounds = array<i64: 1, 82, 32>}, {pipeline_mode = #tpu.pipeline_mode<synchronous>, transform_indices = @transform_2, window_bounds = array<i64: 864, 32>}, {pipeline_mode = #tpu.pipeline_mode<synchronous>, transform_indices = @transform_3, window_bounds = array<i64: 1, 32>}, {transform_indices = @transform_4, window_bounds = array<i64: 1, 64, 32>}]} {
    %c0 = arith.constant 0 : index
    %c0_0 = arith.constant 0 : index
    %c0_1 = arith.constant 0 : index
    %0 = vector.load %arg1[%c0, %c0_0, %c0_1] : memref<1x82x64xbf16, #tpu.memory_space<vmem>>, vector<1x82x64xbf16>
    %1 = vector.shape_cast %0 : vector<1x82x64xbf16> to vector<82x64xbf16>
    %c0_2 = arith.constant 0 : index
    %c0_3 = arith.constant 0 : index
    %c0_4 = arith.constant 0 : index
    %2 = vector.load %arg2[%c0_2, %c0_3, %c0_4] : memref<1x82x32xbf16, #tpu.memory_space<vmem>>, vector<1x82x32xbf16>
    %3 = vector.shape_cast %2 : vector<1x82x32xbf16> to vector<82x32xbf16>
    %4 = tpu.iota {dimensions = array<i32: 0>} : vector<64x1xi32>
    %c8_i32 = arith.constant 8 : i32
    %c0_i32 = arith.constant 0 : i32
    %5 = arith.cmpi eq, %c8_i32, %c0_i32 : i32
    %c1_i32 = arith.constant 1 : i32
    %6 = arith.select %5, %c1_i32, %c8_i32 : i32
    %7 = vector.broadcast %6 : i32 to vector<64x1xi32>
    %8 = arith.remsi %4, %7 : vector<64x1xi32>
    %c0_i32_5 = arith.constant 0 : i32
    %9 = vector.broadcast %c0_i32_5 : i32 to vector<64x1xi32>
    %10 = arith.cmpi ne, %8, %9 : vector<64x1xi32>
    %c0_i32_6 = arith.constant 0 : i32
    %11 = vector.broadcast %c0_i32_6 : i32 to vector<64x1xi32>
    %12 = arith.cmpi slt, %8, %11 : vector<64x1xi32>
    %c0_i32_7 = arith.constant 0 : i32
    %13 = arith.cmpi slt, %6, %c0_i32_7 : i32
    %14 = vector.broadcast %13 : i1 to vector<64x1xi1>
    %15 = vector.broadcast %14 : vector<64x1xi1> to vector<64x1xi1>
    %16 = arith.xori %12, %15 : vector<64x1xi1>
    %17 = arith.andi %16, %10 : vector<64x1xi1>
    %18 = vector.broadcast %6 : i32 to vector<64x1xi32>
    %19 = arith.addi %8, %18 : vector<64x1xi32>
    %20 = arith.select %17, %19, %8 : vector<64x1xi1>, vector<64x1xi32>
    %21 = vector.extract_strided_slice %1 {offsets = [0, 0], sizes = [64, 64], strides = [1, 1]} : vector<82x64xbf16> to vector<64x64xbf16>
    %22 = vector.extract_strided_slice %3 {offsets = [0, 0], sizes = [64, 32], strides = [1, 1]} : vector<82x32xbf16> to vector<64x32xbf16>
    %23 = tpu.concatenate %21, %22 in 1 : vector<64x64xbf16>, vector<64x32xbf16> -> vector<64x96xbf16>
    %c0_i32_8 = arith.constant 0 : i32
    %24 = vector.broadcast %c0_i32_8 : i32 to vector<64x1xi32>
    %25 = arith.cmpi eq, %20, %24 : vector<64x1xi32>
    %cst = arith.constant 0.000000e+00 : bf16
    %26 = vector.broadcast %cst : bf16 to vector<64x96xbf16>
    %27 = vector.shape_cast %25 : vector<64x1xi1> to vector<64x1xi1>
    %28 = vector.broadcast %27 : vector<64x1xi1> to vector<64x96xi1>
    %29 = arith.select %28, %26, %23 : vector<64x96xi1>, vector<64x96xbf16>
    %30 = vector.extract_strided_slice %1 {offsets = [1, 0], sizes = [64, 64], strides = [1, 1]} : vector<82x64xbf16> to vector<64x64xbf16>
    %31 = vector.extract_strided_slice %3 {offsets = [1, 0], sizes = [64, 32], strides = [1, 1]} : vector<82x32xbf16> to vector<64x32xbf16>
    %32 = tpu.concatenate %30, %31 in 1 : vector<64x64xbf16>, vector<64x32xbf16> -> vector<64x96xbf16>
    %33 = vector.extract_strided_slice %1 {offsets = [2, 0], sizes = [64, 64], strides = [1, 1]} : vector<82x64xbf16> to vector<64x64xbf16>
    %34 = vector.extract_strided_slice %3 {offsets = [2, 0], sizes = [64, 32], strides = [1, 1]} : vector<82x32xbf16> to vector<64x32xbf16>
    %35 = tpu.concatenate %33, %34 in 1 : vector<64x64xbf16>, vector<64x32xbf16> -> vector<64x96xbf16>
    %c7_i32 = arith.constant 7 : i32
    %36 = vector.broadcast %c7_i32 : i32 to vector<64x1xi32>
    %37 = arith.cmpi eq, %20, %36 : vector<64x1xi32>
    %cst_9 = arith.constant 0.000000e+00 : bf16
    %38 = vector.broadcast %cst_9 : bf16 to vector<64x96xbf16>
    %39 = vector.shape_cast %37 : vector<64x1xi1> to vector<64x1xi1>
    %40 = vector.broadcast %39 : vector<64x1xi1> to vector<64x96xi1>
    %41 = arith.select %40, %38, %35 : vector<64x96xi1>, vector<64x96xbf16>
    %42 = vector.extract_strided_slice %1 {offsets = [8, 0], sizes = [64, 64], strides = [1, 1]} : vector<82x64xbf16> to vector<64x64xbf16>
    %43 = vector.extract_strided_slice %3 {offsets = [8, 0], sizes = [64, 32], strides = [1, 1]} : vector<82x32xbf16> to vector<64x32xbf16>
    %44 = tpu.concatenate %42, %43 in 1 : vector<64x64xbf16>, vector<64x32xbf16> -> vector<64x96xbf16>
    %c0_i32_10 = arith.constant 0 : i32
    %45 = vector.broadcast %c0_i32_10 : i32 to vector<64x1xi32>
    %46 = arith.cmpi eq, %20, %45 : vector<64x1xi32>
    %cst_11 = arith.constant 0.000000e+00 : bf16
    %47 = vector.broadcast %cst_11 : bf16 to vector<64x96xbf16>
    %48 = vector.shape_cast %46 : vector<64x1xi1> to vector<64x1xi1>
    %49 = vector.broadcast %48 : vector<64x1xi1> to vector<64x96xi1>
    %50 = arith.select %49, %47, %44 : vector<64x96xi1>, vector<64x96xbf16>
    %51 = vector.extract_strided_slice %1 {offsets = [9, 0], sizes = [64, 64], strides = [1, 1]} : vector<82x64xbf16> to vector<64x64xbf16>
    %52 = vector.extract_strided_slice %3 {offsets = [9, 0], sizes = [64, 32], strides = [1, 1]} : vector<82x32xbf16> to vector<64x32xbf16>
    %53 = tpu.concatenate %51, %52 in 1 : vector<64x64xbf16>, vector<64x32xbf16> -> vector<64x96xbf16>
    %54 = vector.extract_strided_slice %1 {offsets = [10, 0], sizes = [64, 64], strides = [1, 1]} : vector<82x64xbf16> to vector<64x64xbf16>
    %55 = vector.extract_strided_slice %3 {offsets = [10, 0], sizes = [64, 32], strides = [1, 1]} : vector<82x32xbf16> to vector<64x32xbf16>
    %56 = tpu.concatenate %54, %55 in 1 : vector<64x64xbf16>, vector<64x32xbf16> -> vector<64x96xbf16>
    %c7_i32_12 = arith.constant 7 : i32
    %57 = vector.broadcast %c7_i32_12 : i32 to vector<64x1xi32>
    %58 = arith.cmpi eq, %20, %57 : vector<64x1xi32>
    %cst_13 = arith.constant 0.000000e+00 : bf16
    %59 = vector.broadcast %cst_13 : bf16 to vector<64x96xbf16>
    %60 = vector.shape_cast %58 : vector<64x1xi1> to vector<64x1xi1>
    %61 = vector.broadcast %60 : vector<64x1xi1> to vector<64x96xi1>
    %62 = arith.select %61, %59, %56 : vector<64x96xi1>, vector<64x96xbf16>
    %63 = vector.extract_strided_slice %1 {offsets = [16, 0], sizes = [64, 64], strides = [1, 1]} : vector<82x64xbf16> to vector<64x64xbf16>
    %64 = vector.extract_strided_slice %3 {offsets = [16, 0], sizes = [64, 32], strides = [1, 1]} : vector<82x32xbf16> to vector<64x32xbf16>
    %65 = tpu.concatenate %63, %64 in 1 : vector<64x64xbf16>, vector<64x32xbf16> -> vector<64x96xbf16>
    %c0_i32_14 = arith.constant 0 : i32
    %66 = vector.broadcast %c0_i32_14 : i32 to vector<64x1xi32>
    %67 = arith.cmpi eq, %20, %66 : vector<64x1xi32>
    %cst_15 = arith.constant 0.000000e+00 : bf16
    %68 = vector.broadcast %cst_15 : bf16 to vector<64x96xbf16>
    %69 = vector.shape_cast %67 : vector<64x1xi1> to vector<64x1xi1>
    %70 = vector.broadcast %69 : vector<64x1xi1> to vector<64x96xi1>
    %71 = arith.select %70, %68, %65 : vector<64x96xi1>, vector<64x96xbf16>
    %72 = vector.extract_strided_slice %1 {offsets = [17, 0], sizes = [64, 64], strides = [1, 1]} : vector<82x64xbf16> to vector<64x64xbf16>
    %73 = vector.extract_strided_slice %3 {offsets = [17, 0], sizes = [64, 32], strides = [1, 1]} : vector<82x32xbf16> to vector<64x32xbf16>
    %74 = tpu.concatenate %72, %73 in 1 : vector<64x64xbf16>, vector<64x32xbf16> -> vector<64x96xbf16>
    %75 = vector.extract_strided_slice %1 {offsets = [18, 0], sizes = [64, 64], strides = [1, 1]} : vector<82x64xbf16> to vector<64x64xbf16>
    %76 = vector.extract_strided_slice %3 {offsets = [18, 0], sizes = [64, 32], strides = [1, 1]} : vector<82x32xbf16> to vector<64x32xbf16>
    %77 = tpu.concatenate %75, %76 in 1 : vector<64x64xbf16>, vector<64x32xbf16> -> vector<64x96xbf16>
    %c7_i32_16 = arith.constant 7 : i32
    %78 = vector.broadcast %c7_i32_16 : i32 to vector<64x1xi32>
    %79 = arith.cmpi eq, %20, %78 : vector<64x1xi32>
    %cst_17 = arith.constant 0.000000e+00 : bf16
    %80 = vector.broadcast %cst_17 : bf16 to vector<64x96xbf16>
    %81 = vector.shape_cast %79 : vector<64x1xi1> to vector<64x1xi1>
    %82 = vector.broadcast %81 : vector<64x1xi1> to vector<64x96xi1>
    %83 = arith.select %82, %80, %77 : vector<64x96xi1>, vector<64x96xbf16>
    %84 = tpu.concatenate %29, %32, %41, %50, %53, %62, %71, %74, %83 in 1 : vector<64x96xbf16>, vector<64x96xbf16>, vector<64x96xbf16>, vector<64x96xbf16>, vector<64x96xbf16>, vector<64x96xbf16>, vector<64x96xbf16>, vector<64x96xbf16>, vector<64x96xbf16> -> vector<64x864xbf16>
    %c0_18 = arith.constant 0 : index
    %c0_19 = arith.constant 0 : index
    %85 = vector.load %arg3[%c0_18, %c0_19] : memref<864x32xbf16, #tpu.memory_space<vmem>>, vector<864x32xbf16>
    %cst_20 = arith.constant dense<0.000000e+00> : vector<64x32xf32>
    %86 = tpu.matmul %84, %85, %cst_20 {dimension_numbers = #tpu.dot_dimension_numbers<[1], [0], [0], [1], [0, 0, 1, 1], [], []>} : vector<64x864xbf16>, vector<864x32xbf16>, vector<64x32xf32> -> vector<64x32xf32>
    %c0_21 = arith.constant 0 : index
    %c0_22 = arith.constant 0 : index
    %87 = vector.load %arg4[%c0_21, %c0_22] : memref<1x32xf32, #tpu.memory_space<vmem>>, vector<1x32xf32>
    %88 = vector.broadcast %87 : vector<1x32xf32> to vector<64x32xf32>
    %89 = arith.addf %86, %88 : vector<64x32xf32>
    %cst_23 = arith.constant 0.000000e+00 : f32
    %90 = vector.broadcast %cst_23 : f32 to vector<64x32xf32>
    %91 = arith.maximumf %89, %90 : vector<64x32xf32>
    %92 = arith.truncf %91 : vector<64x32xf32> to vector<64x32xbf16>
    %c0_24 = arith.constant 0 : index
    %c0_25 = arith.constant 0 : index
    %c0_26 = arith.constant 0 : index
    %93 = vector.load %arg5[%c0_24, %c0_25, %c0_26] : memref<1x64x32xbf16, #tpu.memory_space<vmem>>, vector<1x64x32xbf16>
    %94 = vector.shape_cast %93 : vector<1x64x32xbf16> to vector<64x32xbf16>
    %95 = vector.shape_cast %92 : vector<64x32xbf16> to vector<1x64x32xbf16>
    tpu.vector_store %arg5[%c0_24, %c0_25, %c0_26], %95 {strides = array<i32>} : memref<1x64x32xbf16, #tpu.memory_space<vmem>>, vector<1x64x32xbf16>,
    return
  }
  func.func @transform_0(%arg0: i32) -> (i32, i32, i32) {
    %c0_i32 = arith.constant 0 : i32
    %c0_i32_0 = arith.constant 0 : i32
    %c0_i32_1 = arith.constant 0 : i32
    return %arg0, %c0_i32, %c0_i32_0 : i32, i32, i32
  }
  func.func @transform_1(%arg0: i32) -> (i32, i32, i32) {
    %c0_i32 = arith.constant 0 : i32
    %c0_i32_0 = arith.constant 0 : i32
    %c0_i32_1 = arith.constant 0 : i32
    return %arg0, %c0_i32, %c0_i32_0 : i32, i32, i32
  }
  func.func @transform_2(%arg0: i32) -> (i32, i32) {
    %c0_i32 = arith.constant 0 : i32
    %c0_i32_0 = arith.constant 0 : i32
    %c0_i32_1 = arith.constant 0 : i32
    return %c0_i32, %c0_i32_0 : i32, i32
  }
  func.func @transform_3(%arg0: i32) -> (i32, i32) {
    %c0_i32 = arith.constant 0 : i32
    %c0_i32_0 = arith.constant 0 : i32
    %c0_i32_1 = arith.constant 0 : i32
    return %c0_i32, %c0_i32_0 : i32, i32
  }
  func.func @transform_4(%arg0: i32) -> (i32, i32, i32) {
    %c0_i32 = arith.constant 0 : i32
    %c0_i32_0 = arith.constant 0 : i32
    %c0_i32_1 = arith.constant 0 : i32
    return %arg0, %c0_i32, %c0_i32_0 : i32, i32, i32
  }
}

module attributes {stable_mosaic.version = 11 : i64} {
  func.func @_conv3x3_kernel(%arg0: i32, %arg1: memref<1x290x32xbf16, #tpu.memory_space<vmem>>, %arg2: memref<1x290x16xbf16, #tpu.memory_space<vmem>>, %arg3: memref<432x16xbf16, #tpu.memory_space<vmem>>, %arg4: memref<1x16xf32, #tpu.memory_space<vmem>>, %arg5: memref<1x16xf32, #tpu.memory_space<vmem>>, %arg6: memref<1x1xf32, #tpu.memory_space<vmem>>, %arg7: memref<1x256x1xf32, #tpu.memory_space<vmem>>) attributes {dimension_semantics = [#tpu.dimension_semantics<parallel>], iteration_bounds = array<i64: 2>, scalar_prefetch = 0 : i64, scratch_operands = 0 : i64, tpu.core_type = #tpu.core_type<tc>, window_params = [{transform_indices = @transform_0, window_bounds = array<i64: 1, 290, 32>}, {transform_indices = @transform_1, window_bounds = array<i64: 1, 290, 16>}, {pipeline_mode = #tpu.pipeline_mode<synchronous>, transform_indices = @transform_2, window_bounds = array<i64: 432, 16>}, {pipeline_mode = #tpu.pipeline_mode<synchronous>, transform_indices = @transform_3, window_bounds = array<i64: 1, 16>}, {pipeline_mode = #tpu.pipeline_mode<synchronous>, transform_indices = @transform_4, window_bounds = array<i64: 1, 16>}, {pipeline_mode = #tpu.pipeline_mode<synchronous>, transform_indices = @transform_5, window_bounds = array<i64: 1, 1>}, {transform_indices = @transform_6, window_bounds = array<i64: 1, 256, 1>}]} {
    %c0 = arith.constant 0 : index
    %c0_0 = arith.constant 0 : index
    %c0_1 = arith.constant 0 : index
    %0 = vector.load %arg1[%c0, %c0_0, %c0_1] : memref<1x290x32xbf16, #tpu.memory_space<vmem>>, vector<1x290x32xbf16>
    %1 = vector.shape_cast %0 : vector<1x290x32xbf16> to vector<290x32xbf16>
    %c0_2 = arith.constant 0 : index
    %c0_3 = arith.constant 0 : index
    %c0_4 = arith.constant 0 : index
    %2 = vector.load %arg2[%c0_2, %c0_3, %c0_4] : memref<1x290x16xbf16, #tpu.memory_space<vmem>>, vector<1x290x16xbf16>
    %3 = vector.shape_cast %2 : vector<1x290x16xbf16> to vector<290x16xbf16>
    %4 = tpu.iota {dimensions = array<i32: 0>} : vector<256x1xi32>
    %c16_i32 = arith.constant 16 : i32
    %c0_i32 = arith.constant 0 : i32
    %5 = arith.cmpi eq, %c16_i32, %c0_i32 : i32
    %c1_i32 = arith.constant 1 : i32
    %6 = arith.select %5, %c1_i32, %c16_i32 : i32
    %7 = vector.broadcast %6 : i32 to vector<256x1xi32>
    %8 = arith.remsi %4, %7 : vector<256x1xi32>
    %c0_i32_5 = arith.constant 0 : i32
    %9 = vector.broadcast %c0_i32_5 : i32 to vector<256x1xi32>
    %10 = arith.cmpi ne, %8, %9 : vector<256x1xi32>
    %c0_i32_6 = arith.constant 0 : i32
    %11 = vector.broadcast %c0_i32_6 : i32 to vector<256x1xi32>
    %12 = arith.cmpi slt, %8, %11 : vector<256x1xi32>
    %c0_i32_7 = arith.constant 0 : i32
    %13 = arith.cmpi slt, %6, %c0_i32_7 : i32
    %14 = vector.broadcast %13 : i1 to vector<256x1xi1>
    %15 = vector.broadcast %14 : vector<256x1xi1> to vector<256x1xi1>
    %16 = arith.xori %12, %15 : vector<256x1xi1>
    %17 = arith.andi %16, %10 : vector<256x1xi1>
    %18 = vector.broadcast %6 : i32 to vector<256x1xi32>
    %19 = arith.addi %8, %18 : vector<256x1xi32>
    %20 = arith.select %17, %19, %8 : vector<256x1xi1>, vector<256x1xi32>
    %21 = vector.extract_strided_slice %1 {offsets = [0, 0], sizes = [256, 32], strides = [1, 1]} : vector<290x32xbf16> to vector<256x32xbf16>
    %22 = vector.extract_strided_slice %3 {offsets = [0, 0], sizes = [256, 16], strides = [1, 1]} : vector<290x16xbf16> to vector<256x16xbf16>
    %23 = tpu.concatenate %21, %22 in 1 : vector<256x32xbf16>, vector<256x16xbf16> -> vector<256x48xbf16>
    %c0_i32_8 = arith.constant 0 : i32
    %24 = vector.broadcast %c0_i32_8 : i32 to vector<256x1xi32>
    %25 = arith.cmpi eq, %20, %24 : vector<256x1xi32>
    %cst = arith.constant 0.000000e+00 : bf16
    %26 = vector.broadcast %cst : bf16 to vector<256x48xbf16>
    %27 = vector.shape_cast %25 : vector<256x1xi1> to vector<256x1xi1>
    %28 = vector.broadcast %27 : vector<256x1xi1> to vector<256x48xi1>
    %29 = arith.select %28, %26, %23 : vector<256x48xi1>, vector<256x48xbf16>
    %30 = vector.extract_strided_slice %1 {offsets = [1, 0], sizes = [256, 32], strides = [1, 1]} : vector<290x32xbf16> to vector<256x32xbf16>
    %31 = vector.extract_strided_slice %3 {offsets = [1, 0], sizes = [256, 16], strides = [1, 1]} : vector<290x16xbf16> to vector<256x16xbf16>
    %32 = tpu.concatenate %30, %31 in 1 : vector<256x32xbf16>, vector<256x16xbf16> -> vector<256x48xbf16>
    %33 = vector.extract_strided_slice %1 {offsets = [2, 0], sizes = [256, 32], strides = [1, 1]} : vector<290x32xbf16> to vector<256x32xbf16>
    %34 = vector.extract_strided_slice %3 {offsets = [2, 0], sizes = [256, 16], strides = [1, 1]} : vector<290x16xbf16> to vector<256x16xbf16>
    %35 = tpu.concatenate %33, %34 in 1 : vector<256x32xbf16>, vector<256x16xbf16> -> vector<256x48xbf16>
    %c15_i32 = arith.constant 15 : i32
    %36 = vector.broadcast %c15_i32 : i32 to vector<256x1xi32>
    %37 = arith.cmpi eq, %20, %36 : vector<256x1xi32>
    %cst_9 = arith.constant 0.000000e+00 : bf16
    %38 = vector.broadcast %cst_9 : bf16 to vector<256x48xbf16>
    %39 = vector.shape_cast %37 : vector<256x1xi1> to vector<256x1xi1>
    %40 = vector.broadcast %39 : vector<256x1xi1> to vector<256x48xi1>
    %41 = arith.select %40, %38, %35 : vector<256x48xi1>, vector<256x48xbf16>
    %42 = vector.extract_strided_slice %1 {offsets = [16, 0], sizes = [256, 32], strides = [1, 1]} : vector<290x32xbf16> to vector<256x32xbf16>
    %43 = vector.extract_strided_slice %3 {offsets = [16, 0], sizes = [256, 16], strides = [1, 1]} : vector<290x16xbf16> to vector<256x16xbf16>
    %44 = tpu.concatenate %42, %43 in 1 : vector<256x32xbf16>, vector<256x16xbf16> -> vector<256x48xbf16>
    %c0_i32_10 = arith.constant 0 : i32
    %45 = vector.broadcast %c0_i32_10 : i32 to vector<256x1xi32>
    %46 = arith.cmpi eq, %20, %45 : vector<256x1xi32>
    %cst_11 = arith.constant 0.000000e+00 : bf16
    %47 = vector.broadcast %cst_11 : bf16 to vector<256x48xbf16>
    %48 = vector.shape_cast %46 : vector<256x1xi1> to vector<256x1xi1>
    %49 = vector.broadcast %48 : vector<256x1xi1> to vector<256x48xi1>
    %50 = arith.select %49, %47, %44 : vector<256x48xi1>, vector<256x48xbf16>
    %51 = vector.extract_strided_slice %1 {offsets = [17, 0], sizes = [256, 32], strides = [1, 1]} : vector<290x32xbf16> to vector<256x32xbf16>
    %52 = vector.extract_strided_slice %3 {offsets = [17, 0], sizes = [256, 16], strides = [1, 1]} : vector<290x16xbf16> to vector<256x16xbf16>
    %53 = tpu.concatenate %51, %52 in 1 : vector<256x32xbf16>, vector<256x16xbf16> -> vector<256x48xbf16>
    %54 = vector.extract_strided_slice %1 {offsets = [18, 0], sizes = [256, 32], strides = [1, 1]} : vector<290x32xbf16> to vector<256x32xbf16>
    %55 = vector.extract_strided_slice %3 {offsets = [18, 0], sizes = [256, 16], strides = [1, 1]} : vector<290x16xbf16> to vector<256x16xbf16>
    %56 = tpu.concatenate %54, %55 in 1 : vector<256x32xbf16>, vector<256x16xbf16> -> vector<256x48xbf16>
    %c15_i32_12 = arith.constant 15 : i32
    %57 = vector.broadcast %c15_i32_12 : i32 to vector<256x1xi32>
    %58 = arith.cmpi eq, %20, %57 : vector<256x1xi32>
    %cst_13 = arith.constant 0.000000e+00 : bf16
    %59 = vector.broadcast %cst_13 : bf16 to vector<256x48xbf16>
    %60 = vector.shape_cast %58 : vector<256x1xi1> to vector<256x1xi1>
    %61 = vector.broadcast %60 : vector<256x1xi1> to vector<256x48xi1>
    %62 = arith.select %61, %59, %56 : vector<256x48xi1>, vector<256x48xbf16>
    %63 = vector.extract_strided_slice %1 {offsets = [32, 0], sizes = [256, 32], strides = [1, 1]} : vector<290x32xbf16> to vector<256x32xbf16>
    %64 = vector.extract_strided_slice %3 {offsets = [32, 0], sizes = [256, 16], strides = [1, 1]} : vector<290x16xbf16> to vector<256x16xbf16>
    %65 = tpu.concatenate %63, %64 in 1 : vector<256x32xbf16>, vector<256x16xbf16> -> vector<256x48xbf16>
    %c0_i32_14 = arith.constant 0 : i32
    %66 = vector.broadcast %c0_i32_14 : i32 to vector<256x1xi32>
    %67 = arith.cmpi eq, %20, %66 : vector<256x1xi32>
    %cst_15 = arith.constant 0.000000e+00 : bf16
    %68 = vector.broadcast %cst_15 : bf16 to vector<256x48xbf16>
    %69 = vector.shape_cast %67 : vector<256x1xi1> to vector<256x1xi1>
    %70 = vector.broadcast %69 : vector<256x1xi1> to vector<256x48xi1>
    %71 = arith.select %70, %68, %65 : vector<256x48xi1>, vector<256x48xbf16>
    %72 = vector.extract_strided_slice %1 {offsets = [33, 0], sizes = [256, 32], strides = [1, 1]} : vector<290x32xbf16> to vector<256x32xbf16>
    %73 = vector.extract_strided_slice %3 {offsets = [33, 0], sizes = [256, 16], strides = [1, 1]} : vector<290x16xbf16> to vector<256x16xbf16>
    %74 = tpu.concatenate %72, %73 in 1 : vector<256x32xbf16>, vector<256x16xbf16> -> vector<256x48xbf16>
    %75 = vector.extract_strided_slice %1 {offsets = [34, 0], sizes = [256, 32], strides = [1, 1]} : vector<290x32xbf16> to vector<256x32xbf16>
    %76 = vector.extract_strided_slice %3 {offsets = [34, 0], sizes = [256, 16], strides = [1, 1]} : vector<290x16xbf16> to vector<256x16xbf16>
    %77 = tpu.concatenate %75, %76 in 1 : vector<256x32xbf16>, vector<256x16xbf16> -> vector<256x48xbf16>
    %c15_i32_16 = arith.constant 15 : i32
    %78 = vector.broadcast %c15_i32_16 : i32 to vector<256x1xi32>
    %79 = arith.cmpi eq, %20, %78 : vector<256x1xi32>
    %cst_17 = arith.constant 0.000000e+00 : bf16
    %80 = vector.broadcast %cst_17 : bf16 to vector<256x48xbf16>
    %81 = vector.shape_cast %79 : vector<256x1xi1> to vector<256x1xi1>
    %82 = vector.broadcast %81 : vector<256x1xi1> to vector<256x48xi1>
    %83 = arith.select %82, %80, %77 : vector<256x48xi1>, vector<256x48xbf16>
    %84 = tpu.concatenate %29, %32, %41, %50, %53, %62, %71, %74, %83 in 1 : vector<256x48xbf16>, vector<256x48xbf16>, vector<256x48xbf16>, vector<256x48xbf16>, vector<256x48xbf16>, vector<256x48xbf16>, vector<256x48xbf16>, vector<256x48xbf16>, vector<256x48xbf16> -> vector<256x432xbf16>
    %c0_18 = arith.constant 0 : index
    %c0_19 = arith.constant 0 : index
    %85 = vector.load %arg3[%c0_18, %c0_19] : memref<432x16xbf16, #tpu.memory_space<vmem>>, vector<432x16xbf16>
    %cst_20 = arith.constant dense<0.000000e+00> : vector<256x16xf32>
    %86 = tpu.matmul %84, %85, %cst_20 {dimension_numbers = #tpu.dot_dimension_numbers<[1], [0], [0], [1], [0, 0, 1, 1], [], []>} : vector<256x432xbf16>, vector<432x16xbf16>, vector<256x16xf32> -> vector<256x16xf32>
    %c0_21 = arith.constant 0 : index
    %c0_22 = arith.constant 0 : index
    %87 = vector.load %arg4[%c0_21, %c0_22] : memref<1x16xf32, #tpu.memory_space<vmem>>, vector<1x16xf32>
    %88 = vector.broadcast %87 : vector<1x16xf32> to vector<256x16xf32>
    %89 = arith.addf %86, %88 : vector<256x16xf32>
    %cst_23 = arith.constant 0.000000e+00 : f32
    %90 = vector.broadcast %cst_23 : f32 to vector<256x16xf32>
    %91 = arith.maximumf %89, %90 : vector<256x16xf32>
    %c0_24 = arith.constant 0 : index
    %c0_25 = arith.constant 0 : index
    %92 = vector.load %arg5[%c0_24, %c0_25] : memref<1x16xf32, #tpu.memory_space<vmem>>, vector<1x16xf32>
    %93 = vector.broadcast %92 : vector<1x16xf32> to vector<256x16xf32>
    %94 = arith.mulf %91, %93 : vector<256x16xf32>
    %cst_26 = arith.constant dense<0.000000e+00> : vector<256xf32>
    %95 = vector.multi_reduction <add>, %94, %cst_26 [1] : vector<256x16xf32> to vector<256xf32>
    %96 = vector.shape_cast %95 : vector<256xf32> to vector<256x1xf32>
    %c0_27 = arith.constant 0 : index
    %c0_28 = arith.constant 0 : index
    %97 = vector.load %arg6[%c0_27, %c0_28] : memref<1x1xf32, #tpu.memory_space<vmem>>, vector<1x1xf32>
    %98 = vector.broadcast %97 : vector<1x1xf32> to vector<256x1xf32>
    %99 = arith.addf %96, %98 : vector<256x1xf32>
    %c0_29 = arith.constant 0 : index
    %c0_30 = arith.constant 0 : index
    %c0_31 = arith.constant 0 : index
    %100 = vector.load %arg7[%c0_29, %c0_30, %c0_31] : memref<1x256x1xf32, #tpu.memory_space<vmem>>, vector<1x256x1xf32>
    %101 = vector.shape_cast %100 : vector<1x256x1xf32> to vector<256x1xf32>
    %102 = vector.shape_cast %99 : vector<256x1xf32> to vector<1x256x1xf32>
    tpu.vector_store %arg7[%c0_29, %c0_30, %c0_31], %102 {strides = array<i32>} : memref<1x256x1xf32, #tpu.memory_space<vmem>>, vector<1x256x1xf32>,
    return
  }
  func.func @transform_0(%arg0: i32) -> (i32, i32, i32) {
    %c0_i32 = arith.constant 0 : i32
    %c0_i32_0 = arith.constant 0 : i32
    %c0_i32_1 = arith.constant 0 : i32
    return %arg0, %c0_i32, %c0_i32_0 : i32, i32, i32
  }
  func.func @transform_1(%arg0: i32) -> (i32, i32, i32) {
    %c0_i32 = arith.constant 0 : i32
    %c0_i32_0 = arith.constant 0 : i32
    %c0_i32_1 = arith.constant 0 : i32
    return %arg0, %c0_i32, %c0_i32_0 : i32, i32, i32
  }
  func.func @transform_2(%arg0: i32) -> (i32, i32) {
    %c0_i32 = arith.constant 0 : i32
    %c0_i32_0 = arith.constant 0 : i32
    %c0_i32_1 = arith.constant 0 : i32
    return %c0_i32, %c0_i32_0 : i32, i32
  }
  func.func @transform_3(%arg0: i32) -> (i32, i32) {
    %c0_i32 = arith.constant 0 : i32
    %c0_i32_0 = arith.constant 0 : i32
    %c0_i32_1 = arith.constant 0 : i32
    return %c0_i32, %c0_i32_0 : i32, i32
  }
  func.func @transform_4(%arg0: i32) -> (i32, i32) {
    %c0_i32 = arith.constant 0 : i32
    %c0_i32_0 = arith.constant 0 : i32
    %c0_i32_1 = arith.constant 0 : i32
    return %c0_i32, %c0_i32_0 : i32, i32
  }
  func.func @transform_5(%arg0: i32) -> (i32, i32) {
    %c0_i32 = arith.constant 0 : i32
    %c0_i32_0 = arith.constant 0 : i32
    %c0_i32_1 = arith.constant 0 : i32
    return %c0_i32, %c0_i32_0 : i32, i32
  }
  func.func @transform_6(%arg0: i32) -> (i32, i32, i32) {
    %c0_i32 = arith.constant 0 : i32
    %c0_i32_0 = arith.constant 0 : i32
    %c0_i32_1 = arith.constant 0 : i32
    return %arg0, %c0_i32, %c0_i32_0 : i32, i32, i32
  }
}

</mosaic_0001>

<llo_original>
// kernel: segmentation_forward.6
$region0: #{segmentation_forward.6}
  #allocation0 [shape = 'u32[]', space=smem, size = 0x4, offset = 0x4, fixed_abs, tag = 'smem constant byte address 0x4 - core index']
  #allocation1 [shape = 'u32[144,128]{1,0:T(1,128)}', space=vmem, size = 0x12000, scoped, tag = 'internal scratch']
  %s0 = inlined_call_operand.vmem [shape: bf16[2,82,16], index: 0, kind: input, shape index: {}]
  %s1 = inlined_call_operand.vmem [shape: bf16[144,32], index: 1, kind: input, shape index: {}]
  %s2 = inlined_call_operand.vmem [shape: f32[1,32], index: 2, kind: input, shape index: {}]
  %s3 = inlined_call_operand.vmem [shape: bf16[2,64,32], index: 3, kind: output, shape index: {}]
  %s4 = sld [smem:[#allocation0]]
  $region45: #{segmentation_forward.6} parent=0
    _
  %s6 = ssub.s32 1, %s4
  %s7 = scalar_select 0, %s6, %s4
  loop: start=0, step=1, limit=4
  $region2: #{segmentation_forward.6} parent=0 // loop_pre_header
    _
  $region3: #{segmentation_forward.6} parent=0 // loop_header
    %s9 = sphi 0, %s13
    %p10 = scmp.ge.s32.totalorder %s9, 4
    %s19 = sphi 0, %s21
    %s22 = sphi 0, %s19
    %s23 = sphi 0, %s22
    %s39 = sphi 0, %s23
    %s43 = sphi 0, %s43
    %s45 = sphi 0, %s43
    %s46 = sphi 0, %s45
    %s60 = sphi 0, %s46
    %s64 = sphi 0, %s64
    %s66 = sphi 0, %s64
    %s67 = sphi 0, %s66
    %s81 = sphi 0, %s67
    %s87 = sphi 0, %s89
    %s90 = sphi 0, %s87
    %s91 = sphi 0, %s90
    %s107 = sphi 0, %s91
  $region4: #{segmentation_forward.6} parent=0 // loop_header_branch
    %12 = sbr.rel (%p10) target = $region8
  $region5: #{segmentation_forward.6} parent=0 // loop_body
    %s14 = ssub.s32 %s9, 1
    %s15 = ssub.s32 %s9, 2
    %s16 = sadd.s32 %s9, 1
    %s17 = ssub.s32 %s9, %s16
    %p18 = scmp.eq.s32.totalorder %s17, 0
    %s20 = sadd.s32 %s19, 1
    %s21 = scalar_select %p18, %s19, %s20
    %p24 = pneg %p18
    %p25 = scmp.eq.s32.totalorder %s9, 1
    %p26 = por %p24, %p25
    %p27 = scmp.ne.s32.totalorder %s19, %s22
    %p28 = scmp.eq.s32.totalorder %s9, 0
    %p29 = por %p27, %p28
    %p30 = scmp.ne.s32.totalorder %s19, %s22
    %p31 = scmp.eq.s32.totalorder %s14, 1
    %p32 = por %p30, %p31
    %p33 = scmp.ne.s32.totalorder %s22, %s23
    %p34 = scmp.eq.s32.totalorder %s14, 0
    %p35 = por %p33, %p34
    %p36 = scmp.ne.s32.totalorder %s22, %s23
    %p37 = scmp.eq.s32.totalorder %s15, 1
    %p38 = por %p36, %p37
    %p40 = scmp.ne.s32.totalorder %s23, %s39
    %p41 = scmp.eq.s32.totalorder %s15, 0
    %p42 = por %p40, %p41
    %s44 = sadd.s32 %s43, 1
    %p47 = scmp.eq.s32.totalorder %s9, 1
    %p48 = scmp.ne.s32.totalorder %s43, %s45
    %p49 = scmp.eq.s32.totalorder %s9, 0
    %p50 = por %p48, %p49
    %p51 = scmp.ne.s32.totalorder %s43, %s45
    %p52 = scmp.eq.s32.totalorder %s14, 1
    %p53 = por %p51, %p52
    %p54 = scmp.ne.s32.totalorder %s45, %s46
    %p55 = scmp.eq.s32.totalorder %s14, 0
    %p56 = por %p54, %p55
    %p57 = scmp.ne.s32.totalorder %s45, %s46
    %p58 = scmp.eq.s32.totalorder %s15, 1
    %p59 = por %p57, %p58
    %p61 = scmp.ne.s32.totalorder %s46, %s60
    %p62 = scmp.eq.s32.totalorder %s15, 0
    %p63 = por %p61, %p62
    %s65 = sadd.s32 %s64, 1
    %p68 = scmp.eq.s32.totalorder %s9, 1
    %p69 = scmp.ne.s32.totalorder %s64, %s66
    %p70 = scmp.eq.s32.totalorder %s9, 0
    %p71 = por %p69, %p70
    %p72 = scmp.ne.s32.totalorder %s64, %s66
    %p73 = scmp.eq.s32.totalorder %s14, 1
    %p74 = por %p72, %p73
    %p75 = scmp.ne.s32.totalorder %s66, %s67
    %p76 = scmp.eq.s32.totalorder %s14, 0
    %p77 = por %p75, %p76
    %p78 = scmp.ne.s32.totalorder %s66, %s67
    %p79 = scmp.eq.s32.totalorder %s15, 1
    %p80 = por %p78, %p79
    %p82 = scmp.ne.s32.totalorder %s67, %s81
    %p83 = scmp.eq.s32.totalorder %s15, 0
    %p84 = por %p82, %p83
    %s85 = ssub.s32 %s9, %s16
    %p86 = scmp.eq.s32.totalorder %s85, 0
    %s88 = sadd.s32 %s87, 1
    %s89 = scalar_select %p86, %s87, %s88
    %p92 = pneg %p86
    %p93 = scmp.eq.s32.totalorder %s9, 1
    %p94 = por %p92, %p93
    %p95 = scmp.ne.s32.totalorder %s87, %s90
    %p96 = scmp.eq.s32.totalorder %s9, 0
    %p97 = por %p95, %p96
    %p98 = scmp.ne.s32.totalorder %s87, %s90
    %p99 = scmp.eq.s32.totalorder %s14, 1
    %p100 = por %p98, %p99
    %p101 = scmp.ne.s32.totalorder %s90, %s91
    %p102 = scmp.eq.s32.totalorder %s14, 0
    %p103 = por %p101, %p102
    %p104 = scmp.ne.s32.totalorder %s90, %s91
    %p105 = scmp.eq.s32.totalorder %s15, 1
    %p106 = por %p104, %p105
    %p108 = scmp.ne.s32.totalorder %s91, %s107
    %p109 = scmp.eq.s32.totalorder %s15, 0
    %p110 = por %p108, %p109
    %p111 = scmp.le.s32.totalorder 1, %s9
    %p112 = scmp.lt.s32.totalorder %s9, 3
    %p113 = pnand %p111, %p112
    %p114 = pneg %p113
    // Predicated region
    $region9: #{segmentation_forward.6} parent=5 // pred_check
      _
    $region10: #{segmentation_forward.6} parent=5 // pred_check_branch
      %116 = sbr.rel (%p113) target = $region12
    $region11: #{segmentation_forward.6} parent=5 // pred_region
      %s117 = ssub.s32 %s9, 1
      // Predicated region
      $region13: #{segmentation_forward.6} parent=11 // pred_check
        %p118 = pneg %p56
      $region14: #{segmentation_forward.6} parent=11 // pred_check_branch
        %120 = sbr.rel (%p118) target = $region16
      $region15: #{segmentation_forward.6} parent=11 // pred_region
        _
      $region16: #{segmentation_forward.6} parent=11 // pred_fallthru
        _
      // Predicated region
      $region17: #{segmentation_forward.6} parent=11 // pred_check
        %p121 = pneg %p77
      $region18: #{segmentation_forward.6} parent=11 // pred_check_branch
        %123 = sbr.rel (%p121) target = $region20
      $region19: #{segmentation_forward.6} parent=11 // pred_region
        _
      $region20: #{segmentation_forward.6} parent=11 // pred_fallthru
        _
    $region12: #{segmentation_forward.6} parent=5 // pred_fallthru
      _
    %p124 = scmp.lt.s32.totalorder %s9, 2
    // Predicated region
    $region21: #{segmentation_forward.6} parent=5 // pred_check
      %p125 = pneg %p124
    $region22: #{segmentation_forward.6} parent=5 // pred_check_branch
      %127 = sbr.rel (%p125) target = $region24
    $region23: #{segmentation_forward.6} parent=5 // pred_region
      // Predicated region
      $region25: #{segmentation_forward.6} parent=23 // pred_check
        %p128 = pneg %p29
      $region26: #{segmentation_forward.6} parent=23 // pred_check_branch
        %130 = sbr.rel (%p128) target = $region28
      $region27: #{segmentation_forward.6} parent=23 // pred_region
        %p131 = scmp.lt.s32.totalorder %s9, 1
        %s132 = scalar_select %p131, %s9, 1
        %s133 = smul.addr %s132, 11
        %s134 = smul.addr %s133, 4
        %s135 = scalar_lea.vmem %s0, %s134
      $region28: #{segmentation_forward.6} parent=23 // pred_fallthru
        _
    $region24: #{segmentation_forward.6} parent=5 // pred_fallthru
      _
    %p136 = scmp.le.s32.totalorder 1, %s9
    %p137 = scmp.lt.s32.totalorder %s9, 3
    %p138 = pnand %p136, %p137
    %p139 = pneg %p138
    // Predicated region
    $region29: #{segmentation_forward.6} parent=5 // pred_check
      _
    $region30: #{segmentation_forward.6} parent=5 // pred_check_branch
      %141 = sbr.rel (%p138) target = $region32
    $region31: #{segmentation_forward.6} parent=5 // pred_region
      %s142 = ssub.s32 %s9, 1
      %p143 = scmp.lt.s32.totalorder %s14, 1
      %s144 = scalar_select %p143, %s14, 1
      %s145 = smul.addr %s144, 11
      %s146 = smul.addr %s145, 4
      %s147 = scalar_lea.vmem %s0, %s146
      %p148 = pneg %p35
      %p149 = pneg %p32
      %p150 = pneg %p56
      %p151 = pneg %p53
      %p152 = pneg %p77
      %p153 = pneg %p74
      %p154 = pneg %p103
      %p155 = pneg %p100
      %p156 = scmp.lt.s32.totalorder %s14, 1
      %s157 = scalar_select %p156, %s14, 1
      %s158 = smul.addr %s157, 8
      %s159 = smul.addr %s158, 4
      %s160 = scalar_lea.vmem %s3, %s159
      %p161 = scmp.lt.s32.totalorder %s14, 1
      %s162 = scalar_select %p161, %s14, 1
      %s163 = smul.addr %s162, 11
      %s164 = smul.addr %s163, 4
      %s165 = scalar_lea.vmem %s0, %s164
      %p166 = scmp.lt.s32.totalorder %s14, 1
      %s167 = scalar_select %p166, %s14, 1
      %s168 = smul.addr %s167, 8
      %s169 = smul.addr %s168, 4
      %s170 = scalar_lea.vmem %s3, %s169
      %v174 = vld [vmem:[%s165] sm:$0xf]
      %v175 = vld [vmem:[%s165 + $0x4] sm:$0xf]
      %v176 = vld [vmem:[%s165 + $0x8] sm:$0xf]
      %v177 = vld [vmem:[%s165 + $0xc] sm:$0xf]
      %v178 = vld [vmem:[%s165 + $0x10] sm:$0xf]
      %v179 = vld [vmem:[%s165 + $0x14] sm:$0xf]
      %v180 = vld [vmem:[%s165 + $0x18] sm:$0xf]
      %v181 = vld [vmem:[%s165 + $0x1c] sm:$0xf]
      %v182 = vld [vmem:[%s165 + $0x20] sm:$0xf]
      %v183 = vld [vmem:[%s165 + $0x24] sm:$0xf]
      %v184 = vld [vmem:[%s165 + $0x28] sm:$0x1]
      %v185 = vlaneseq
      %v186 = vshrl.u32 %v185, 7
      %v187 = vadd.s32 %v186, 8
      %v188 = vadd.s32 %v186, 16
      %v189 = vadd.s32 %v186, 24
      %v190 = vadd.s32 %v186, 32
      %v191 = vadd.s32 %v186, 40
      %v192 = vadd.s32 %v186, 48
      %v193 = vadd.s32 %v186, 56
      %vm194 = vcmp.lt.s32.totalorder %v186, 0
      %v195 = vsub.s32 0, %v186
      %v196 = vsel %vm194, %v195, %v186
      %v197 = vshrl.u32 %v196, 3
      %v198 = vand.u32 %v196, 7
      %v199 = vsub.s32 0, %v198
      %v200 = vsel %vm194, %v199, %v198
      %vm201 = vcmp.lt.s32.totalorder %v187, 0
      %v202 = vsub.s32 0, %v187
      %v203 = vsel %vm201, %v202, %v187
      %v204 = vshrl.u32 %v203, 3
      %v205 = vand.u32 %v203, 7
      %v206 = vsub.s32 0, %v205
      %v207 = vsel %vm201, %v206, %v205
      %vm208 = vcmp.lt.s32.totalorder %v188, 0
      %v209 = vsub.s32 0, %v188
      %v210 = vsel %vm208, %v209, %v188
      %v211 = vshrl.u32 %v210, 3
      %v212 = vand.u32 %v210, 7
      %v213 = vsub.s32 0, %v212
      %v214 = vsel %vm208, %v213, %v212
      %vm215 = vcmp.lt.s32.totalorder %v189, 0
      %v216 = vsub.s32 0, %v189
      %v217 = vsel %vm215, %v216, %v189
      %v218 = vshrl.u32 %v217, 3
      %v219 = vand.u32 %v217, 7
      %v220 = vsub.s32 0, %v219
      %v221 = vsel %vm215, %v220, %v219
      %vm222 = vcmp.lt.s32.totalorder %v190, 0
      %v223 = vsub.s32 0, %v190
      %v224 = vsel %vm222, %v223, %v190
      %v225 = vshrl.u32 %v224, 3
      %v226 = vand.u32 %v224, 7
      %v227 = vsub.s32 0, %v226
      %v228 = vsel %vm222, %v227, %v226
      %vm229 = vcmp.lt.s32.totalorder %v191, 0
      %v230 = vsub.s32 0, %v191
      %v231 = vsel %vm229, %v230, %v191
      %v232 = vshrl.u32 %v231, 3
      %v233 = vand.u32 %v231, 7
      %v234 = vsub.s32 0, %v233
      %v235 = vsel %vm229, %v234, %v233
      %vm236 = vcmp.lt.s32.totalorder %v192, 0
      %v237 = vsub.s32 0, %v192
      %v238 = vsel %vm236, %v237, %v192
      %v239 = vshrl.u32 %v238, 3
      %v240 = vand.u32 %v238, 7
      %v241 = vsub.s32 0, %v240
      %v242 = vsel %vm236, %v241, %v240
      %vm243 = vcmp.lt.s32.totalorder %v193, 0
      %v244 = vsub.s32 0, %v193
      %v245 = vsel %vm243, %v244, %v193
      %v246 = vshrl.u32 %v245, 3
      %v247 = vand.u32 %v245, 7
      %v248 = vsub.s32 0, %v247
      %v249 = vsel %vm243, %v248, %v247
      %vm250 = vcmp.ne.s32.totalorder %v200, 0
      %vm251 = vcmp.ne.s32.totalorder %v207, 0
      %vm252 = vcmp.ne.s32.totalorder %v214, 0
      %vm253 = vcmp.ne.s32.totalorder %v221, 0
      %vm254 = vcmp.ne.s32.totalorder %v228, 0
      %vm255 = vcmp.ne.s32.totalorder %v235, 0
      %vm256 = vcmp.ne.s32.totalorder %v242, 0
      %vm257 = vcmp.ne.s32.totalorder %v249, 0
      %vm258 = vcmp.lt.s32.totalorder %v200, 0
      %vm259 = vcmp.lt.s32.totalorder %v207, 0
      %vm260 = vcmp.lt.s32.totalorder %v214, 0
      %vm261 = vcmp.lt.s32.totalorder %v221, 0
      %vm262 = vcmp.lt.s32.totalorder %v228, 0
      %vm263 = vcmp.lt.s32.totalorder %v235, 0
      %vm264 = vcmp.lt.s32.totalorder %v242, 0
      %vm265 = vcmp.lt.s32.totalorder %v249, 0
      %vm266 = vmand %vm258, %vm250
      %vm267 = vmand %vm259, %vm251
      %vm268 = vmand %vm260, %vm252
      %vm269 = vmand %vm261, %vm253
      %vm270 = vmand %vm262, %vm254
      %vm271 = vmand %vm263, %vm255
      %vm272 = vmand %vm264, %vm256
      %vm273 = vmand %vm265, %vm257
      %v274 = vadd.s32 %v200, 8
      %v275 = vadd.s32 %v207, 8
      %v276 = vadd.s32 %v214, 8
      %v277 = vadd.s32 %v221, 8
      %v278 = vadd.s32 %v228, 8
      %v279 = vadd.s32 %v235, 8
      %v280 = vadd.s32 %v242, 8
      %v281 = vadd.s32 %v249, 8
      %v282 = vsel %vm266, %v274, %v200
      %v283 = vsel %vm267, %v275, %v207
      %v284 = vsel %vm268, %v276, %v214
      %v285 = vsel %vm269, %v277, %v221
      %v286 = vsel %vm270, %v278, %v228
      %v287 = vsel %vm271, %v279, %v235
      %v288 = vsel %vm272, %v280, %v242
      %v289 = vsel %vm273, %v281, %v249
      %vm290 = vcmp.eq.s32.totalorder %v282, 0
      %vm291 = vcmp.eq.s32.totalorder %v283, 0
      %vm292 = vcmp.eq.s32.totalorder %v284, 0
      %vm293 = vcmp.eq.s32.totalorder %v285, 0
      %vm294 = vcmp.eq.s32.totalorder %v286, 0
      %vm295 = vcmp.eq.s32.totalorder %v287, 0
      %vm296 = vcmp.eq.s32.totalorder %v288, 0
      %vm297 = vcmp.eq.s32.totalorder %v289, 0
      %v298 = vsel %vm290, 1, 0
      %v299 = vsel %vm291, 1, 0
      %v300 = vsel %vm292, 1, 0
      %v301 = vsel %vm293, 1, 0
      %v302 = vsel %vm294, 1, 0
      %v303 = vsel %vm295, 1, 0
      %v304 = vsel %vm296, 1, 0
      %v305 = vsel %vm297, 1, 0
      %vm306 = vcmp.eq.s32.totalorder %v298, 1
      %vm307 = vcmp.eq.s32.totalorder %v299, 1
      %vm308 = vcmp.eq.s32.totalorder %v300, 1
      %vm309 = vcmp.eq.s32.totalorder %v301, 1
      %vm310 = vcmp.eq.s32.totalorder %v302, 1
      %vm311 = vcmp.eq.s32.totalorder %v303, 1
      %vm312 = vcmp.eq.s32.totalorder %v304, 1
      %vm313 = vcmp.eq.s32.totalorder %v305, 1
      %vm314 = vmpackc.low %vm306, %vm306
      %vm315 = vmpackc.low %vm307, %vm307
      %vm316 = vmpackc.low %vm308, %vm308
      %vm317 = vmpackc.low %vm309, %vm309
      %vm318 = vmpackc.low %vm310, %vm310
      %vm319 = vmpackc.low %vm311, %vm311
      %vm320 = vmpackc.low %vm312, %vm312
      %vm321 = vmpackc.low %vm313, %vm313
      %v322 = vsel %vm314, 0, %v174
      %v323 = vsel %vm315, 0, %v175
      %v324 = vsel %vm316, 0, %v176
      %v325 = vsel %vm317, 0, %v177
      %v326 = vsel %vm318, 0, %v178
      %v327 = vsel %vm319, 0, %v179
      %v328 = vsel %vm320, 0, %v180
      %v329 = vsel %vm321, 0, %v181
      %vm330 = vcmp.eq.s32.totalorder %v282, 7
      %vm331 = vcmp.eq.s32.totalorder %v283, 7
      %vm332 = vcmp.eq.s32.totalorder %v284, 7
      %vm333 = vcmp.eq.s32.totalorder %v285, 7
      %vm334 = vcmp.eq.s32.totalorder %v286, 7
      %vm335 = vcmp.eq.s32.totalorder %v287, 7
      %vm336 = vcmp.eq.s32.totalorder %v288, 7
      %vm337 = vcmp.eq.s32.totalorder %v289, 7
      %v338 = vsel %vm330, 1, 0
      %v339 = vsel %vm331, 1, 0
      %v340 = vsel %vm332, 1, 0
      %v341 = vsel %vm333, 1, 0
      %v342 = vsel %vm334, 1, 0
      %v343 = vsel %vm335, 1, 0
      %v344 = vsel %vm336, 1, 0
      %v345 = vsel %vm337, 1, 0
      %vm346 = vcmp.eq.s32.totalorder %v338, 1
      %vm347 = vcmp.eq.s32.totalorder %v339, 1
      %vm348 = vcmp.eq.s32.totalorder %v340, 1
      %vm349 = vcmp.eq.s32.totalorder %v341, 1
      %vm350 = vcmp.eq.s32.totalorder %v342, 1
      %vm351 = vcmp.eq.s32.totalorder %v343, 1
      %vm352 = vcmp.eq.s32.totalorder %v344, 1
      %vm353 = vcmp.eq.s32.totalorder %v345, 1
      %vm354 = vmpackc.low %vm346, %vm346
      %vm355 = vmpackc.low %vm347, %vm347
      %vm356 = vmpackc.low %vm348, %vm348
      %vm357 = vmpackc.low %vm349, %vm349
      %vm358 = vmpackc.low %vm350, %vm350
      %vm359 = vmpackc.low %vm351, %vm351
      %vm360 = vmpackc.low %vm352, %vm352
      %vm361 = vmpackc.low %vm353, %vm353
      %v362 = vsel %vm354, 65537, 0
      %v363 = vsel %vm355, 65537, 0
      %v364 = vsel %vm356, 65537, 0
      %v365 = vsel %vm357, 65537, 0
      %v366 = vsel %vm358, 65537, 0
      %v367 = vsel %vm359, 65537, 0
      %v368 = vsel %vm360, 65537, 0
      %v369 = vsel %vm361, 65537, 0
      %vm370 = vcmask 1040384
      %vm371 = vcmask 1044484
      %vm372 = vmor %vm370, %vm371
      %v373 = vrot.slane %v362, 7
      %v374 = vrot.slane %v373, 4
      %v375 = vrot.slane %v363, 7
      %v376 = vsel %vm372, %v374, %v375
      %v377 = vrot.slane %v375, 4
      %v378 = vrot.slane %v364, 7
      %v379 = vsel %vm372, %v377, %v378
      %v380 = vrot.slane %v378, 4
      %v381 = vrot.slane %v365, 7
      %v382 = vsel %vm372, %v380, %v381
      %v383 = vrot.slane %v381, 4
      %v384 = vrot.slane %v366, 7
      %v385 = vsel %vm372, %v383, %v384
      %v386 = vrot.slane %v384, 4
      %v387 = vrot.slane %v367, 7
      %v388 = vsel %vm372, %v386, %v387
      %v389 = vrot.slane %v387, 4
      %v390 = vrot.slane %v368, 7
      %v391 = vsel %vm372, %v389, %v390
      %v392 = vrot.slane %v390, 4
      %v393 = vrot.slane %v369, 7
      %v394 = vsel %vm372, %v392, %v393
      %v395 = vrot.slane %v393, 4
      %vm396 = vcmp.ne.s16.totalorder %v373, 0
      %vm397 = vcmp.ne.s16.totalorder %v376, 0
      %vm398 = vcmp.ne.s16.totalorder %v379, 0
      %vm399 = vcmp.ne.s16.totalorder %v382, 0
      %vm400 = vcmp.ne.s16.totalorder %v385, 0
      %vm401 = vcmp.ne.s16.totalorder %v388, 0
      %vm402 = vcmp.ne.s16.totalorder %v391, 0
      %vm403 = vcmp.ne.s16.totalorder %v394, 0
      %vm404 = vcmp.ne.s16.totalorder %v395, 0
      %v405 = vsel %vm396, 0, %v174
      %v406 = vsel %vm397, 0, %v175
      %v407 = vsel %vm398, 0, %v176
      %v408 = vsel %vm399, 0, %v177
      %v409 = vsel %vm400, 0, %v178
      %v410 = vsel %vm401, 0, %v179
      %v411 = vsel %vm402, 0, %v180
      %v412 = vsel %vm403, 0, %v181
      %v413 = vsel %vm404, 0, %v182
      %v414 = vsel %vm314, 0, %v175
      %v415 = vsel %vm315, 0, %v176
      %v416 = vsel %vm316, 0, %v177
      %v417 = vsel %vm317, 0, %v178
      %v418 = vsel %vm318, 0, %v179
      %v419 = vsel %vm319, 0, %v180
      %v420 = vsel %vm320, 0, %v181
      %v421 = vsel %vm321, 0, %v182
      %v422 = vsel %vm396, 0, %v175
      %v423 = vsel %vm397, 0, %v176
      %v424 = vsel %vm398, 0, %v177
      %v425 = vsel %vm399, 0, %v178
      %v426 = vsel %vm400, 0, %v179
      %v427 = vsel %vm401, 0, %v180
      %v428 = vsel %vm402, 0, %v181
      %v429 = vsel %vm403, 0, %v182
      %v430 = vsel %vm404, 0, %v183
      %v431 = vsel %vm314, 0, %v176
      %v432 = vsel %vm315, 0, %v177
      %v433 = vsel %vm316, 0, %v178
      %v434 = vsel %vm317, 0, %v179
      %v435 = vsel %vm318, 0, %v180
      %v436 = vsel %vm319, 0, %v181
      %v437 = vsel %vm320, 0, %v182
      %v438 = vsel %vm321, 0, %v183
      %v439 = vsel %vm396, 0, %v176
      %v440 = vsel %vm397, 0, %v177
      %v441 = vsel %vm398, 0, %v178
      %v442 = vsel %vm399, 0, %v179
      %v443 = vsel %vm400, 0, %v180
      %v444 = vsel %vm401, 0, %v181
      %v445 = vsel %vm402, 0, %v182
      %v446 = vsel %vm403, 0, %v183
      %v447 = vsel %vm404, 0, %v184
      %v456 = vunpack.c.l.b16 %v322
      %v457 = vunpack.c.l.b16 %v323
      %v458 = vunpack.c.l.b16 %v324
      %v459 = vunpack.c.l.b16 %v325
      %v460 = vunpack.c.l.b16 %v326
      %v461 = vunpack.c.l.b16 %v327
      %v462 = vunpack.c.l.b16 %v328
      %v463 = vunpack.c.l.b16 %v329
      %v464 = vpack.c.b16 %v457, %v456
      %v465 = vpack.c.b16 %v459, %v458
      %v466 = vpack.c.b16 %v461, %v460
      %v467 = vpack.c.b16 %v463, %v462
      %v477 = vunpack.c.l.b16 %v174
      %v478 = vunpack.c.l.b16 %v175
      %v479 = vunpack.c.l.b16 %v176
      %v480 = vunpack.c.l.b16 %v177
      %v481 = vunpack.c.l.b16 %v178
      %v482 = vunpack.c.l.b16 %v179
      %v483 = vunpack.c.l.b16 %v180
      %v484 = vunpack.c.l.b16 %v181
      %v485 = vunpack.c.l.b16 %v182
      %v486 = vpack.c.b16 %v478, %v477
      %v487 = vpack.c.b16 %v480, %v479
      %v488 = vpack.c.b16 %v482, %v481
      %v489 = vpack.c.b16 %v484, %v483
      %v490 = vpack.c.b16 %v485, %v485
      %vm491 = vsmask.f32 7424
      %v493 = vshrl.u32 %v486, 16
      %v495 = vshll.u32 %v486, 16
      %v497 = vrot.slane %v495, 1
      %v498 = vor.u32 %v493, %v497
      %v500 = vshll.u32 %v487, 16
      %v502 = vrot.slane %v500, 1
      %v503 = vsel %vm491, %v498, %v502
      %v504 = vshrl.u32 %v487, 16
      %v506 = vor.u32 %v504, %v502
      %v508 = vshll.u32 %v488, 16
      %v510 = vrot.slane %v508, 1
      %v511 = vsel %vm491, %v506, %v510
      %v512 = vshrl.u32 %v488, 16
      %v514 = vor.u32 %v512, %v510
      %v516 = vshll.u32 %v489, 16
      %v518 = vrot.slane %v516, 1
      %v519 = vsel %vm491, %v514, %v518
      %v520 = vshrl.u32 %v489, 16
      %v522 = vor.u32 %v520, %v518
      %v524 = vshll.u32 %v490, 16
      %v526 = vrot.slane %v524, 1
      %v527 = vsel %vm491, %v522, %v526
      %528 = vrot.lane.b32.xlu0 %v503, 16
      %v529 = vpop.permute.xlu0 %528
      %530 = vrot.lane.b32.xlu0 %v511, 16
      %v531 = vpop.permute.xlu0 %530
      %532 = vrot.lane.b32.xlu0 %v519, 16
      %v533 = vpop.permute.xlu0 %532
      %534 = vrot.lane.b32.xlu0 %v527, 16
      %v535 = vpop.permute.xlu0 %534
      %v545 = vunpack.c.l.b16 %v405
      %v546 = vunpack.c.l.b16 %v406
      %v547 = vunpack.c.l.b16 %v407
      %v548 = vunpack.c.l.b16 %v408
      %v549 = vunpack.c.l.b16 %v409
      %v550 = vunpack.c.l.b16 %v410
      %v551 = vunpack.c.l.b16 %v411
      %v552 = vunpack.c.l.b16 %v412
      %v553 = vunpack.c.l.b16 %v413
      %v554 = vpack.c.b16 %v546, %v545
      %v555 = vpack.c.b16 %v548, %v547
      %v556 = vpack.c.b16 %v550, %v549
      %v557 = vpack.c.b16 %v552, %v551
      %v558 = vpack.c.b16 %v553, %v553
      %vm559 = vcmask 1046528
      %v560 = vrot.slane %v554, 1
      %v561 = vrot.slane %v555, 1
      %v562 = vsel %vm559, %v560, %v561
      %v563 = vrot.slane %v556, 1
      %v564 = vsel %vm559, %v561, %v563
      %v565 = vrot.slane %v557, 1
      %v566 = vsel %vm559, %v563, %v565
      %v567 = vrot.slane %v558, 1
      %v568 = vsel %vm559, %v565, %v567
      %569 = vrot.lane.b32.xlu0 %v562, 32
      %v570 = vpop.permute.xlu0 %569
      %571 = vrot.lane.b32.xlu0 %v564, 32
      %v572 = vpop.permute.xlu0 %571
      %573 = vrot.lane.b32.xlu0 %v566, 32
      %v574 = vpop.permute.xlu0 %573
      %575 = vrot.lane.b32.xlu0 %v568, 32
      %v576 = vpop.permute.xlu0 %575
      %v585 = vunpack.c.l.b16 %v414
      %v586 = vunpack.c.l.b16 %v415
      %v587 = vunpack.c.l.b16 %v416
      %v588 = vunpack.c.l.b16 %v417
      %v589 = vunpack.c.l.b16 %v418
      %v590 = vunpack.c.l.b16 %v419
      %v591 = vunpack.c.l.b16 %v420
      %v592 = vunpack.c.l.b16 %v421
      %v593 = vpack.c.b16 %v586, %v585
      %v594 = vpack.c.b16 %v588, %v587
      %v595 = vpack.c.b16 %v590, %v589
      %v596 = vpack.c.b16 %v592, %v591
      %597 = vrot.lane.b32.xlu0 %v593, 48
      %v598 = vpop.permute.xlu0 %597
      %599 = vrot.lane.b32.xlu0 %v594, 48
      %v600 = vpop.permute.xlu0 %599
      %601 = vrot.lane.b32.xlu0 %v595, 48
      %v602 = vpop.permute.xlu0 %601
      %603 = vrot.lane.b32.xlu0 %v596, 48
      %v604 = vpop.permute.xlu0 %603
      %v606 = vunpack.c.l.b16 %v183
      %v607 = vpack.c.b16 %v479, %v478
      %v608 = vpack.c.b16 %v481, %v480
      %v609 = vpack.c.b16 %v483, %v482
      %v610 = vpack.c.b16 %v485, %v484
      %v611 = vpack.c.b16 %v606, %v606
      %v613 = vshrl.u32 %v607, 16
      %v615 = vshll.u32 %v607, 16
      %v617 = vrot.slane %v615, 1
      %v618 = vor.u32 %v613, %v617
      %v620 = vshll.u32 %v608, 16
      %v622 = vrot.slane %v620, 1
      %v623 = vsel %vm491, %v618, %v622
      %v624 = vshrl.u32 %v608, 16
      %v626 = vor.u32 %v624, %v622
      %v628 = vshll.u32 %v609, 16
      %v630 = vrot.slane %v628, 1
      %v631 = vsel %vm491, %v626, %v630
      %v632 = vshrl.u32 %v609, 16
      %v634 = vor.u32 %v632, %v630
      %v636 = vshll.u32 %v610, 16
      %v638 = vrot.slane %v636, 1
      %v639 = vsel %vm491, %v634, %v638
      %v640 = vshrl.u32 %v610, 16
      %v642 = vor.u32 %v640, %v638
      %v644 = vshll.u32 %v611, 16
      %v646 = vrot.slane %v644, 1
      %v647 = vsel %vm491, %v642, %v646
      %648 = vrot.lane.b32.xlu0 %v623, 64
      %v649 = vpop.permute.xlu0 %648
      %650 = vrot.lane.b32.xlu0 %v631, 64
      %v651 = vpop.permute.xlu0 %650
      %652 = vrot.lane.b32.xlu0 %v639, 64
      %v653 = vpop.permute.xlu0 %652
      %654 = vrot.lane.b32.xlu0 %v647, 64
      %v655 = vpop.permute.xlu0 %654
      %v665 = vunpack.c.l.b16 %v422
      %v666 = vunpack.c.l.b16 %v423
      %v667 = vunpack.c.l.b16 %v424
      %v668 = vunpack.c.l.b16 %v425
      %v669 = vunpack.c.l.b16 %v426
      %v670 = vunpack.c.l.b16 %v427
      %v671 = vunpack.c.l.b16 %v428
      %v672 = vunpack.c.l.b16 %v429
      %v673 = vunpack.c.l.b16 %v430
      %v674 = vpack.c.b16 %v666, %v665
      %v675 = vpack.c.b16 %v668, %v667
      %v676 = vpack.c.b16 %v670, %v669
      %v677 = vpack.c.b16 %v672, %v671
      %v678 = vpack.c.b16 %v673, %v673
      %v679 = vrot.slane %v674, 1
      %v680 = vrot.slane %v675, 1
      %v681 = vsel %vm559, %v679, %v680
      %v682 = vrot.slane %v676, 1
      %v683 = vsel %vm559, %v680, %v682
      %v684 = vrot.slane %v677, 1
      %v685 = vsel %vm559, %v682, %v684
      %v686 = vrot.slane %v678, 1
      %v687 = vsel %vm559, %v684, %v686
      %688 = vrot.lane.b32.xlu0 %v681, 80
      %v689 = vpop.permute.xlu0 %688
      %690 = vrot.lane.b32.xlu0 %v683, 80
      %v691 = vpop.permute.xlu0 %690
      %692 = vrot.lane.b32.xlu0 %v685, 80
      %v693 = vpop.permute.xlu0 %692
      %694 = vrot.lane.b32.xlu0 %v687, 80
      %v695 = vpop.permute.xlu0 %694
      %v704 = vunpack.c.l.b16 %v431
      %v705 = vunpack.c.l.b16 %v432
      %v706 = vunpack.c.l.b16 %v433
      %v707 = vunpack.c.l.b16 %v434
      %v708 = vunpack.c.l.b16 %v435
      %v709 = vunpack.c.l.b16 %v436
      %v710 = vunpack.c.l.b16 %v437
      %v711 = vunpack.c.l.b16 %v438
      %v712 = vpack.c.b16 %v705, %v704
      %v713 = vpack.c.b16 %v707, %v706
      %v714 = vpack.c.b16 %v709, %v708
      %v715 = vpack.c.b16 %v711, %v710
      %716 = vrot.lane.b32.xlu0 %v712, 96
      %v717 = vpop.permute.xlu0 %716
      %718 = vrot.lane.b32.xlu0 %v713, 96
      %v719 = vpop.permute.xlu0 %718
      %720 = vrot.lane.b32.xlu0 %v714, 96
      %v721 = vpop.permute.xlu0 %720
      %722 = vrot.lane.b32.xlu0 %v715, 96
      %v723 = vpop.permute.xlu0 %722
      %v725 = vunpack.c.l.b16 %v184
      %v726 = vpack.c.b16 %v606, %v485
      %v727 = vpack.c.b16 %v725, %v725
      %v729 = vshll.u32 %v726, 16
      %v731 = vrot.slane %v729, 1
      %v732 = vsel %vm491, %v522, %v731
      %v733 = vshrl.u32 %v726, 16
      %v735 = vor.u32 %v733, %v731
      %v737 = vshll.u32 %v727, 16
      %v739 = vrot.slane %v737, 1
      %v740 = vsel %vm491, %v735, %v739
      %741 = vrot.lane.b32.xlu0 %v511, 112
      %v742 = vpop.permute.xlu0 %741
      %743 = vrot.lane.b32.xlu0 %v519, 112
      %v744 = vpop.permute.xlu0 %743
      %745 = vrot.lane.b32.xlu0 %v732, 112
      %v746 = vpop.permute.xlu0 %745
      %747 = vrot.lane.b32.xlu0 %v740, 112
      %v748 = vpop.permute.xlu0 %747
      %v758 = vunpack.c.l.b16 %v439
      %v759 = vunpack.c.l.b16 %v440
      %v760 = vunpack.c.l.b16 %v441
      %v761 = vunpack.c.l.b16 %v442
      %v762 = vunpack.c.l.b16 %v443
      %v763 = vunpack.c.l.b16 %v444
      %v764 = vunpack.c.l.b16 %v445
      %v765 = vunpack.c.l.b16 %v446
      %v766 = vunpack.c.l.b16 %v447
      %v767 = vpack.c.b16 %v759, %v758
      %v768 = vpack.c.b16 %v761, %v760
      %v769 = vpack.c.b16 %v763, %v762
      %v770 = vpack.c.b16 %v765, %v764
      %v771 = vpack.c.b16 %v766, %v766
      %v772 = vrot.slane %v767, 1
      %v773 = vrot.slane %v768, 1
      %v774 = vsel %vm559, %v772, %v773
      %v775 = vrot.slane %v769, 1
      %v776 = vsel %vm559, %v773, %v775
      %v777 = vrot.slane %v770, 1
      %v778 = vsel %vm559, %v775, %v777
      %v779 = vrot.slane %v771, 1
      %v780 = vsel %vm559, %v777, %v779
      %vm781 = vcmask 130048
      %v784 = vsel %vm781, %v464, %v529
      %v787 = vsel %vm781, %v465, %v531
      %v790 = vsel %vm781, %v466, %v533
      %v793 = vsel %vm781, %v467, %v535
      %vm794 = vcmask 261120
      %v796 = vsel %vm794, %v784, %v570
      %v798 = vsel %vm794, %v787, %v572
      %v800 = vsel %vm794, %v790, %v574
      %v802 = vsel %vm794, %v793, %v576
      %vm803 = vcmask 392192
      %v805 = vsel %vm803, %v796, %v598
      %v807 = vsel %vm803, %v798, %v600
      %v809 = vsel %vm803, %v800, %v602
      %v811 = vsel %vm803, %v802, %v604
      %vm812 = vcmask 523264
      %v814 = vsel %vm812, %v805, %v649
      %v816 = vsel %vm812, %v807, %v651
      %v818 = vsel %vm812, %v809, %v653
      %v820 = vsel %vm812, %v811, %v655
      %vm821 = vcmask 654336
      %v823 = vsel %vm821, %v814, %v689
      %v825 = vsel %vm821, %v816, %v691
      %v827 = vsel %vm821, %v818, %v693
      %v829 = vsel %vm821, %v820, %v695
      %vm830 = vcmask 785408
      %v832 = vsel %vm830, %v823, %v717
      %v834 = vsel %vm830, %v825, %v719
      %v836 = vsel %vm830, %v827, %v721
      %v838 = vsel %vm830, %v829, %v723
      %vm839 = vcmask 916480
      %v841 = vsel %vm839, %v832, %v742
      %v844 = vsel %vm839, %v834, %v744
      %v847 = vsel %vm839, %v836, %v746
      %v850 = vsel %vm839, %v838, %v748
      %v852 = vld [vmem:[%s1] sm:$0xf]
      %v853 = vld [vmem:[%s1 + $0x4] sm:$0xf]
      %v854 = vld [vmem:[%s1 + $0x8] sm:$0xf]
      %v855 = vld [vmem:[%s1 + $0xc] sm:$0xf]
      %v856 = vld [vmem:[%s1 + $0x10] sm:$0xf]
      %v857 = vld [vmem:[%s1 + $0x14] sm:$0xf]
      %v858 = vld [vmem:[%s1 + $0x18] sm:$0xf]
      %v859 = vld [vmem:[%s1 + $0x1c] sm:$0xf]
      %v860 = vld [vmem:[%s1 + $0x20] sm:$0xf]
      %v861 = vld [vmem:[%s1 + $0x24] sm:$0xf]
      %v862 = vld [vmem:[%s1 + $0x28] sm:$0xf]
      %v863 = vld [vmem:[%s1 + $0x2c] sm:$0xf]
      %v864 = vld [vmem:[%s1 + $0x30] sm:$0xf]
      %v865 = vld [vmem:[%s1 + $0x34] sm:$0xf]
      %v866 = vld [vmem:[%s1 + $0x38] sm:$0xf]
      %v867 = vld [vmem:[%s1 + $0x3c] sm:$0xf]
      %v868 = vld [vmem:[%s1 + $0x40] sm:$0xf]
      %v869 = vld [vmem:[%s1 + $0x44] sm:$0xf]
      %v870 = vld [vmem:[%s2] sm:$0x1]
      %v872 = vlaneseq
      %v873 = vshrl.u32 %v872, 7
      %v874 = vsub.s32 0, %v873
      %v875 = vrot.slane %v870, %v874
      %v895 = vunpack.c.l.b16 %v852
      %v896 = vunpack.c.l.b16 %v853
      %v897 = vunpack.c.l.b16 %v854
      %v898 = vunpack.c.l.b16 %v855
      %v899 = vunpack.c.l.b16 %v856
      %v900 = vunpack.c.l.b16 %v857
      %v901 = vunpack.c.l.b16 %v858
      %v902 = vunpack.c.l.b16 %v859
      %v903 = vunpack.c.l.b16 %v860
      %v904 = vunpack.c.l.b16 %v861
      %v905 = vunpack.c.l.b16 %v862
      %v906 = vunpack.c.l.b16 %v863
      %v907 = vunpack.c.l.b16 %v864
      %v908 = vunpack.c.l.b16 %v865
      %v909 = vunpack.c.l.b16 %v866
      %v910 = vunpack.c.l.b16 %v867
      %v911 = vunpack.c.l.b16 %v868
      %v912 = vunpack.c.l.b16 %v869
      %v913 = vpack.c.b16 %v896, %v895
      %v914 = vpack.c.b16 %v898, %v897
      %v915 = vpack.c.b16 %v900, %v899
      %v916 = vpack.c.b16 %v902, %v901
      %v917 = vpack.c.b16 %v904, %v903
      %v918 = vpack.c.b16 %v906, %v905
      %v919 = vpack.c.b16 %v908, %v907
      %v920 = vpack.c.b16 %v910, %v909
      %v921 = vpack.c.b16 %v912, %v911
      %v932 = vsel %vm781, %v774, 0
      %v935 = vsel %vm781, %v776, 0
      %v938 = vsel %vm781, %v778, 0
      %v941 = vsel %vm781, %v780, 0
      %943 = vmatprep.subr.bf16.mxu0 0
      %944 = vmatpush1.bf16.msra.mxu0 %v913
      %945 = vmatprep.subr.bf16.mxu0 0
      %946 = vmatpush1.bf16.msra.mxu0 %v914
      %947 = vmatprep.subr.bf16.mxu0 0
      %948 = vmatpush1.bf16.msra.mxu0 %v915
      %949 = vmatprep.subr.bf16.mxu0 0
      %950 = vmatpush1.bf16.msra.mxu0 %v916
      %951 = vmatprep.subr.bf16.mxu0 0
      %952 = vmatpush1.bf16.msra.mxu0 %v917
      %953 = vmatprep.subr.bf16.mxu0 0
      %954 = vmatpush1.bf16.msra.mxu0 %v918
      %955 = vmatprep.subr.bf16.mxu0 0
      %956 = vmatpush1.bf16.msra.mxu0 %v919
      %957 = vmatprep.subr.bf16.mxu0 0
      %958 = vmatpush1.bf16.msra.mxu0 %v920
      %959 = vmatprep.subr.bf16.mxu0 0
      %960 = vmatpush1.bf16.msra.mxu0 %v921
      %961 = vmatprep.subr.bf16.mxu0 0
      %962 = vmatpush1.bf16.msra.mxu0 0
      %963 = vmatprep.subr.bf16.mxu0 0
      %964 = vmatpush1.bf16.msra.mxu0 0
      %965 = vmatprep.subr.bf16.mxu0 0
      %966 = vmatpush1.bf16.msra.mxu0 0
      %967 = vmatprep.subr.bf16.mxu0 0
      %968 = vmatpush1.bf16.msra.mxu0 0
      %969 = vmatprep.subr.bf16.mxu0 0
      %970 = vmatpush1.bf16.msra.mxu0 0
      %971 = vmatprep.subr.bf16.mxu0 0
      %972 = vmatpush1.bf16.msra.mxu0 0
      %973 = vmatprep.subr.bf16.mxu0 0
      %974 = vmatpush1.bf16.msra.mxu0 0
      %975 = vmatprep.mubr.bf16.mxu0 %v932
      %976 = vmatmul.mubr.bf16.gmra.mrb[0].mxu0 %v841
      %v977 = vpop.f32.mrb[0].mxu0
      %v978 = vadd.f32 %v875, %v977
      %v979 = vpop.f32.mrb[0].mxu0
      %v980 = vpop.f32.mrb[0].mxu0
      %v981 = vadd.f32 %v875, %v980
      %v982 = vpop.f32.mrb[0].mxu0
      %983 = vmatprep.mubr.bf16.mxu0 %v935
      %984 = vmatmul.mubr.bf16.gmra.mrb[0].mxu0 %v844
      %v985 = vpop.f32.mrb[0].mxu0
      %v986 = vadd.f32 %v875, %v985
      %v987 = vpop.f32.mrb[0].mxu0
      %v988 = vpop.f32.mrb[0].mxu0
      %v989 = vadd.f32 %v875, %v988
      %v990 = vpop.f32.mrb[0].mxu0
      %991 = vmatprep.mubr.bf16.mxu0 %v938
      %992 = vmatmul.mubr.bf16.gmra.mrb[0].mxu0 %v847
      %v993 = vpop.f32.mrb[0].mxu0
      %v994 = vadd.f32 %v875, %v993
      %v995 = vpop.f32.mrb[0].mxu0
      %v996 = vpop.f32.mrb[0].mxu0
      %v997 = vadd.f32 %v875, %v996
      %v998 = vpop.f32.mrb[0].mxu0
      %999 = vmatprep.mubr.bf16.mxu0 %v941
      %1000 = vmatmul.mubr.bf16.gmra.mrb[0].mxu0 %v850
      %v1001 = vpop.f32.mrb[0].mxu0
      %v1002 = vadd.f32 %v875, %v1001
      %v1003 = vpop.f32.mrb[0].mxu0
      %v1004 = vpop.f32.mrb[0].mxu0
      %v1005 = vadd.f32 %v875, %v1004
      %v1006 = vpop.f32.mrb[0].mxu0
      %1007 = vdwg.mxu0
      %v1008 = vmax.f32 %v978, 0.0
      %v1009 = vmax.f32 %v981, 0.0
      %v1010 = vmax.f32 %v986, 0.0
      %v1011 = vmax.f32 %v989, 0.0
      %v1012 = vmax.f32 %v994, 0.0
      %v1013 = vmax.f32 %v997, 0.0
      %v1014 = vmax.f32 %v1002, 0.0
      %v1015 = vmax.f32 %v1005, 0.0
      %v1016 = vpack.c.bf16 %v1009, %v1008
      %v1017 = vpack.c.bf16 %v1011, %v1010
      %v1018 = vpack.c.bf16 %v1013, %v1012
      %v1019 = vpack.c.bf16 %v1015, %v1014
      %v1024 = vunpack.c.l.b16 %v1016
      %v1025 = vunpack.c.h.b16 %v1016
      %v1026 = vunpack.c.l.b16 %v1017
      %v1027 = vunpack.c.h.b16 %v1017
      %v1028 = vunpack.c.l.b16 %v1018
      %v1029 = vunpack.c.h.b16 %v1018
      %v1030 = vunpack.c.l.b16 %v1019
      %v1031 = vunpack.c.h.b16 %v1019
      %v1032 = vpack.c.b16 %v1024, %v1024
      %v1033 = vpack.c.b16 %v1025, %v1025
      %v1034 = vpack.c.b16 %v1026, %v1026
      %v1035 = vpack.c.b16 %v1027, %v1027
      %v1036 = vpack.c.b16 %v1028, %v1028
      %v1037 = vpack.c.b16 %v1029, %v1029
      %v1038 = vpack.c.b16 %v1030, %v1030
      %v1039 = vpack.c.b16 %v1031, %v1031
      %vm1048 = vcmask 257024
      %1049 = vst.msk [vmem:[%s170] sm:$0xf] %vm1048, %v1032
      %1050 = vst.msk [vmem:[%s170 + $0x4] sm:$0xf] %vm1048, %v1033
      %1051 = vst.msk [vmem:[%s170 + $0x8] sm:$0xf] %vm1048, %v1034
      %1052 = vst.msk [vmem:[%s170 + $0xc] sm:$0xf] %vm1048, %v1035
      %1053 = vst.msk [vmem:[%s170 + $0x10] sm:$0xf] %vm1048, %v1036
      %1054 = vst.msk [vmem:[%s170 + $0x14] sm:$0xf] %vm1048, %v1037
      %1055 = vst.msk [vmem:[%s170 + $0x18] sm:$0xf] %vm1048, %v1038
      %1056 = vst.msk [vmem:[%s170 + $0x1c] sm:$0xf] %vm1048, %v1039
      %p1057 = scmp.lt.s32.totalorder %s14, 1
      %s1058 = scalar_select %p1057, %s14, 1
      %s1059 = smul.addr %s1058, 8
      %s1060 = smul.addr %s1059, 4
      %s1061 = scalar_lea.vmem %s3, %s1060
      // Predicated region
      $region33: #{segmentation_forward.6} parent=31 // pred_check
        %p1062 = pneg %p100
      $region34: #{segmentation_forward.6} parent=31 // pred_check_branch
        %1064 = sbr.rel (%p1062) target = $region36
      $region35: #{segmentation_forward.6} parent=31 // pred_region
        _
      $region36: #{segmentation_forward.6} parent=31 // pred_fallthru
        _
    $region32: #{segmentation_forward.6} parent=5 // pred_fallthru
      _
    %p1065 = scmp.le.s32.totalorder 2, %s9
    // Predicated region
    $region37: #{segmentation_forward.6} parent=5 // pred_check
      %p1066 = pneg %p1065
    $region38: #{segmentation_forward.6} parent=5 // pred_check_branch
      %1068 = sbr.rel (%p1066) target = $region40
    $region39: #{segmentation_forward.6} parent=5 // pred_region
      %s1069 = ssub.s32 %s9, 2
      // Predicated region
      $region41: #{segmentation_forward.6} parent=39 // pred_check
        %p1070 = pneg %p106
      $region42: #{segmentation_forward.6} parent=39 // pred_check_branch
        %1072 = sbr.rel (%p1070) target = $region44
      $region43: #{segmentation_forward.6} parent=39 // pred_region
        %p1073 = scmp.lt.s32.totalorder %s15, 1
        %s1074 = scalar_select %p1073, %s15, 1
        %s1075 = smul.addr %s1074, 8
        %s1076 = smul.addr %s1075, 4
        %s1077 = scalar_lea.vmem %s3, %s1076
      $region44: #{segmentation_forward.6} parent=39 // pred_fallthru
        _
    $region40: #{segmentation_forward.6} parent=5 // pred_fallthru
      _
  $region6: #{segmentation_forward.6} parent=0 // loop_footer
    %s13 = sadd.s32 1, %s9
  $region7: #{segmentation_forward.6} parent=0 // loop_footer_branch
    %8 = sbr.rel target = $region3
  $region8: #{segmentation_forward.6} parent=0 // loop_exit
    _

// kernel: segmentation_forward.7
$region0: #{segmentation_forward.7}
  #allocation0 [shape = 'u32[]', space=smem, size = 0x4, offset = 0x4, fixed_abs, tag = 'smem constant byte address 0x4 - core index']
  #allocation1 [shape = 'u32[144,128]{1,0:T(1,128)}', space=vmem, size = 0x12000, scoped, tag = 'internal scratch']
  %s0 = inlined_call_operand.vmem [shape: bf16[2,26,32], index: 0, kind: input, shape index: {}]
  %s1 = inlined_call_operand.vmem [shape: bf16[288,64], index: 1, kind: input, shape index: {}]
  %s2 = inlined_call_operand.vmem [shape: f32[1,64], index: 2, kind: input, shape index: {}]
  %s3 = inlined_call_operand.vmem [shape: bf16[2,16,64], index: 3, kind: output, shape index: {}]
  %s4 = sld [smem:[#allocation0]]
  $region45: #{segmentation_forward.7} parent=0
    _
  %s6 = ssub.s32 1, %s4
  %s7 = scalar_select 0, %s6, %s4
  loop: start=0, step=1, limit=4
  $region2: #{segmentation_forward.7} parent=0 // loop_pre_header
    _
  $region3: #{segmentation_forward.7} parent=0 // loop_header
    %s9 = sphi 0, %s13
    %p10 = scmp.ge.s32.totalorder %s9, 4
    %s19 = sphi 0, %s21
    %s22 = sphi 0, %s19
    %s23 = sphi 0, %s22
    %s39 = sphi 0, %s23
    %s43 = sphi 0, %s43
    %s45 = sphi 0, %s43
    %s46 = sphi 0, %s45
    %s60 = sphi 0, %s46
    %s64 = sphi 0, %s64
    %s66 = sphi 0, %s64
    %s67 = sphi 0, %s66
    %s81 = sphi 0, %s67
    %s87 = sphi 0, %s89
    %s90 = sphi 0, %s87
    %s91 = sphi 0, %s90
    %s107 = sphi 0, %s91
  $region4: #{segmentation_forward.7} parent=0 // loop_header_branch
    %12 = sbr.rel (%p10) target = $region8
  $region5: #{segmentation_forward.7} parent=0 // loop_body
    %s14 = ssub.s32 %s9, 1
    %s15 = ssub.s32 %s9, 2
    %s16 = sadd.s32 %s9, 1
    %s17 = ssub.s32 %s9, %s16
    %p18 = scmp.eq.s32.totalorder %s17, 0
    %s20 = sadd.s32 %s19, 1
    %s21 = scalar_select %p18, %s19, %s20
    %p24 = pneg %p18
    %p25 = scmp.eq.s32.totalorder %s9, 1
    %p26 = por %p24, %p25
    %p27 = scmp.ne.s32.totalorder %s19, %s22
    %p28 = scmp.eq.s32.totalorder %s9, 0
    %p29 = por %p27, %p28
    %p30 = scmp.ne.s32.totalorder %s19, %s22
    %p31 = scmp.eq.s32.totalorder %s14, 1
    %p32 = por %p30, %p31
    %p33 = scmp.ne.s32.totalorder %s22, %s23
    %p34 = scmp.eq.s32.totalorder %s14, 0
    %p35 = por %p33, %p34
    %p36 = scmp.ne.s32.totalorder %s22, %s23
    %p37 = scmp.eq.s32.totalorder %s15, 1
    %p38 = por %p36, %p37
    %p40 = scmp.ne.s32.totalorder %s23, %s39
    %p41 = scmp.eq.s32.totalorder %s15, 0
    %p42 = por %p40, %p41
    %s44 = sadd.s32 %s43, 1
    %p47 = scmp.eq.s32.totalorder %s9, 1
    %p48 = scmp.ne.s32.totalorder %s43, %s45
    %p49 = scmp.eq.s32.totalorder %s9, 0
    %p50 = por %p48, %p49
    %p51 = scmp.ne.s32.totalorder %s43, %s45
    %p52 = scmp.eq.s32.totalorder %s14, 1
    %p53 = por %p51, %p52
    %p54 = scmp.ne.s32.totalorder %s45, %s46
    %p55 = scmp.eq.s32.totalorder %s14, 0
    %p56 = por %p54, %p55
    %p57 = scmp.ne.s32.totalorder %s45, %s46
    %p58 = scmp.eq.s32.totalorder %s15, 1
    %p59 = por %p57, %p58
    %p61 = scmp.ne.s32.totalorder %s46, %s60
    %p62 = scmp.eq.s32.totalorder %s15, 0
    %p63 = por %p61, %p62
    %s65 = sadd.s32 %s64, 1
    %p68 = scmp.eq.s32.totalorder %s9, 1
    %p69 = scmp.ne.s32.totalorder %s64, %s66
    %p70 = scmp.eq.s32.totalorder %s9, 0
    %p71 = por %p69, %p70
    %p72 = scmp.ne.s32.totalorder %s64, %s66
    %p73 = scmp.eq.s32.totalorder %s14, 1
    %p74 = por %p72, %p73
    %p75 = scmp.ne.s32.totalorder %s66, %s67
    %p76 = scmp.eq.s32.totalorder %s14, 0
    %p77 = por %p75, %p76
    %p78 = scmp.ne.s32.totalorder %s66, %s67
    %p79 = scmp.eq.s32.totalorder %s15, 1
    %p80 = por %p78, %p79
    %p82 = scmp.ne.s32.totalorder %s67, %s81
    %p83 = scmp.eq.s32.totalorder %s15, 0
    %p84 = por %p82, %p83
    %s85 = ssub.s32 %s9, %s16
    %p86 = scmp.eq.s32.totalorder %s85, 0
    %s88 = sadd.s32 %s87, 1
    %s89 = scalar_select %p86, %s87, %s88
    %p92 = pneg %p86
    %p93 = scmp.eq.s32.totalorder %s9, 1
    %p94 = por %p92, %p93
    %p95 = scmp.ne.s32.totalorder %s87, %s90
    %p96 = scmp.eq.s32.totalorder %s9, 0
    %p97 = por %p95, %p96
    %p98 = scmp.ne.s32.totalorder %s87, %s90
    %p99 = scmp.eq.s32.totalorder %s14, 1
    %p100 = por %p98, %p99
    %p101 = scmp.ne.s32.totalorder %s90, %s91
    %p102 = scmp.eq.s32.totalorder %s14, 0
    %p103 = por %p101, %p102
    %p104 = scmp.ne.s32.totalorder %s90, %s91
    %p105 = scmp.eq.s32.totalorder %s15, 1
    %p106 = por %p104, %p105
    %p108 = scmp.ne.s32.totalorder %s91, %s107
    %p109 = scmp.eq.s32.totalorder %s15, 0
    %p110 = por %p108, %p109
    %p111 = scmp.le.s32.totalorder 1, %s9
    %p112 = scmp.lt.s32.totalorder %s9, 3
    %p113 = pnand %p111, %p112
    %p114 = pneg %p113
    // Predicated region
    $region9: #{segmentation_forward.7} parent=5 // pred_check
      _
    $region10: #{segmentation_forward.7} parent=5 // pred_check_branch
      %116 = sbr.rel (%p113) target = $region12
    $region11: #{segmentation_forward.7} parent=5 // pred_region
      %s117 = ssub.s32 %s9, 1
      // Predicated region
      $region13: #{segmentation_forward.7} parent=11 // pred_check
        %p118 = pneg %p56
      $region14: #{segmentation_forward.7} parent=11 // pred_check_branch
        %120 = sbr.rel (%p118) target = $region16
      $region15: #{segmentation_forward.7} parent=11 // pred_region
        _
      $region16: #{segmentation_forward.7} parent=11 // pred_fallthru
        _
      // Predicated region
      $region17: #{segmentation_forward.7} parent=11 // pred_check
        %p121 = pneg %p77
      $region18: #{segmentation_forward.7} parent=11 // pred_check_branch
        %123 = sbr.rel (%p121) target = $region20
      $region19: #{segmentation_forward.7} parent=11 // pred_region
        _
      $region20: #{segmentation_forward.7} parent=11 // pred_fallthru
        _
    $region12: #{segmentation_forward.7} parent=5 // pred_fallthru
      _
    %p124 = scmp.lt.s32.totalorder %s9, 2
    // Predicated region
    $region21: #{segmentation_forward.7} parent=5 // pred_check
      %p125 = pneg %p124
    $region22: #{segmentation_forward.7} parent=5 // pred_check_branch
      %127 = sbr.rel (%p125) target = $region24
    $region23: #{segmentation_forward.7} parent=5 // pred_region
      // Predicated region
      $region25: #{segmentation_forward.7} parent=23 // pred_check
        %p128 = pneg %p29
      $region26: #{segmentation_forward.7} parent=23 // pred_check_branch
        %130 = sbr.rel (%p128) target = $region28
      $region27: #{segmentation_forward.7} parent=23 // pred_region
        %p131 = scmp.lt.s32.totalorder %s9, 1
        %s132 = scalar_select %p131, %s9, 1
        %s133 = smul.addr %s132, 4
        %s134 = smul.addr %s133, 4
        %s135 = scalar_lea.vmem %s0, %s134
      $region28: #{segmentation_forward.7} parent=23 // pred_fallthru
        _
    $region24: #{segmentation_forward.7} parent=5 // pred_fallthru
      _
    %p136 = scmp.le.s32.totalorder 1, %s9
    %p137 = scmp.lt.s32.totalorder %s9, 3
    %p138 = pnand %p136, %p137
    %p139 = pneg %p138
    // Predicated region
    $region29: #{segmentation_forward.7} parent=5 // pred_check
      _
    $region30: #{segmentation_forward.7} parent=5 // pred_check_branch
      %141 = sbr.rel (%p138) target = $region32
    $region31: #{segmentation_forward.7} parent=5 // pred_region
      %s142 = ssub.s32 %s9, 1
      %p143 = scmp.lt.s32.totalorder %s14, 1
      %s144 = scalar_select %p143, %s14, 1
      %s145 = smul.addr %s144, 4
      %s146 = smul.addr %s145, 4
      %s147 = scalar_lea.vmem %s0, %s146
      %p148 = pneg %p35
      %p149 = pneg %p32
      %p150 = pneg %p56
      %p151 = pneg %p53
      %p152 = pneg %p77
      %p153 = pneg %p74
      %p154 = pneg %p103
      %p155 = pneg %p100
      %p156 = scmp.lt.s32.totalorder %s14, 1
      %s157 = scalar_select %p156, %s14, 1
      %s158 = smul.addr %s157, 2
      %s159 = smul.addr %s158, 4
      %s160 = scalar_lea.vmem %s3, %s159
      %p161 = scmp.lt.s32.totalorder %s14, 1
      %s162 = scalar_select %p161, %s14, 1
      %s163 = smul.addr %s162, 4
      %s164 = smul.addr %s163, 4
      %s165 = scalar_lea.vmem %s0, %s164
      %p166 = scmp.lt.s32.totalorder %s14, 1
      %s167 = scalar_select %p166, %s14, 1
      %s168 = smul.addr %s167, 2
      %s169 = smul.addr %s168, 4
      %s170 = scalar_lea.vmem %s3, %s169
      %v174 = vld [vmem:[%s165] sm:$0xf]
      %v175 = vld [vmem:[%s165 + $0x4] sm:$0xf]
      %v176 = vld [vmem:[%s165 + $0x8] sm:$0xf]
      %v177 = vld [vmem:[%s165 + $0xc] sm:$0x1]
      %v178 = vlaneseq
      %v179 = vshrl.u32 %v178, 7
      %v180 = vadd.s32 %v179, 8
      %vm181 = vcmp.lt.s32.totalorder %v179, 0
      %v182 = vsub.s32 0, %v179
      %v183 = vsel %vm181, %v182, %v179
      %v184 = vshrl.u32 %v183, 2
      %v185 = vand.u32 %v183, 3
      %v186 = vsub.s32 0, %v185
      %v187 = vsel %vm181, %v186, %v185
      %vm188 = vcmp.lt.s32.totalorder %v180, 0
      %v189 = vsub.s32 0, %v180
      %v190 = vsel %vm188, %v189, %v180
      %v191 = vshrl.u32 %v190, 2
      %v192 = vand.u32 %v190, 3
      %v193 = vsub.s32 0, %v192
      %v194 = vsel %vm188, %v193, %v192
      %vm195 = vcmp.ne.s32.totalorder %v187, 0
      %vm196 = vcmp.ne.s32.totalorder %v194, 0
      %vm197 = vcmp.lt.s32.totalorder %v187, 0
      %vm198 = vcmp.lt.s32.totalorder %v194, 0
      %vm199 = vmand %vm197, %vm195
      %vm200 = vmand %vm198, %vm196
      %v201 = vadd.s32 %v187, 4
      %v202 = vadd.s32 %v194, 4
      %v203 = vsel %vm199, %v201, %v187
      %v204 = vsel %vm200, %v202, %v194
      %vm205 = vcmp.eq.s32.totalorder %v203, 0
      %vm206 = vcmp.eq.s32.totalorder %v204, 0
      %v207 = vsel %vm205, 1, 0
      %v208 = vsel %vm206, 1, 0
      %vm209 = vcmp.eq.s32.totalorder %v207, 1
      %vm210 = vcmp.eq.s32.totalorder %v208, 1
      %vm211 = vmpackc.low %vm209, %vm209
      %vm212 = vmpackc.low %vm210, %vm210
      %v213 = vsel %vm211, 0, %v174
      %v214 = vsel %vm212, 0, %v175
      %vm215 = vcmp.eq.s32.totalorder %v203, 3
      %vm216 = vcmp.eq.s32.totalorder %v204, 3
      %v217 = vsel %vm215, 1, 0
      %v218 = vsel %vm216, 1, 0
      %vm219 = vcmp.eq.s32.totalorder %v217, 1
      %vm220 = vcmp.eq.s32.totalorder %v218, 1
      %vm221 = vmpackc.low %vm219, %vm219
      %vm222 = vmpackc.low %vm220, %vm220
      %v223 = vsel %vm221, 65537, 0
      %v224 = vsel %vm222, 65537, 0
      %vm225 = vcmask 1040384
      %vm226 = vcmask 1044484
      %vm227 = vmor %vm225, %vm226
      %v228 = vrot.slane %v223, 7
      %v229 = vrot.slane %v228, 4
      %v230 = vrot.slane %v224, 7
      %v231 = vsel %vm227, %v229, %v230
      %v232 = vrot.slane %v230, 4
      %vm233 = vcmp.ne.s16.totalorder %v228, 0
      %vm234 = vcmp.ne.s16.totalorder %v231, 0
      %vm235 = vcmp.ne.s16.totalorder %v232, 0
      %v236 = vsel %vm233, 0, %v174
      %v237 = vsel %vm234, 0, %v175
      %v238 = vsel %vm235, 0, %v176
      %v239 = vsel %vm211, 65537, 0
      %v240 = vsel %vm212, 65537, 0
      %vm241 = vcmask 1041408
      %vm242 = vcmask 1045508
      %vm243 = vmor %vm241, %vm242
      %v244 = vrot.slane %v239, 6
      %v245 = vrot.slane %v244, 4
      %v246 = vrot.slane %v240, 6
      %v247 = vsel %vm243, %v245, %v246
      %v248 = vrot.slane %v246, 4
      %vm249 = vcmp.ne.s16.totalorder %v244, 0
      %vm250 = vcmp.ne.s16.totalorder %v247, 0
      %vm251 = vcmp.ne.s16.totalorder %v248, 0
      %v252 = vsel %vm249, 0, %v174
      %v253 = vsel %vm250, 0, %v175
      %v254 = vsel %vm251, 0, %v176
      %vm255 = vcmask 1042432
      %vm256 = vcmask 1046532
      %vm257 = vmor %vm255, %vm256
      %v258 = vrot.slane %v223, 5
      %v259 = vrot.slane %v258, 4
      %v260 = vrot.slane %v224, 5
      %v261 = vsel %vm257, %v259, %v260
      %v262 = vrot.slane %v260, 4
      %vm263 = vcmp.ne.s16.totalorder %v258, 0
      %vm264 = vcmp.ne.s16.totalorder %v261, 0
      %vm265 = vcmp.ne.s16.totalorder %v262, 0
      %v266 = vsel %vm263, 0, %v174
      %v267 = vsel %vm264, 0, %v175
      %v268 = vsel %vm265, 0, %v176
      %v269 = vsel %vm211, 0, %v175
      %v270 = vsel %vm212, 0, %v176
      %v271 = vsel %vm233, 0, %v175
      %v272 = vsel %vm234, 0, %v176
      %v273 = vsel %vm235, 0, %v177
      %v276 = vunpack.c.l.b16 %v213
      %v277 = vunpack.c.l.b16 %v214
      %v278 = vpack.c.b16 %v277, %v276
      %v282 = vunpack.c.l.b16 %v174
      %v283 = vunpack.c.l.b16 %v175
      %v284 = vunpack.c.l.b16 %v176
      %v285 = vpack.c.b16 %v283, %v282
      %v286 = vpack.c.b16 %v284, %v284
      %vm287 = vsmask.f32 7424
      %v289 = vshrl.u32 %v285, 16
      %v291 = vshll.u32 %v285, 16
      %v293 = vrot.slane %v291, 1
      %v294 = vor.u32 %v289, %v293
      %v296 = vshll.u32 %v286, 16
      %v298 = vrot.slane %v296, 1
      %v299 = vsel %vm287, %v294, %v298
      %300 = vrot.lane.b32.xlu0 %v299, 32
      %v301 = vpop.permute.xlu0 %300
      %v305 = vunpack.c.l.b16 %v236
      %v306 = vunpack.c.l.b16 %v237
      %v307 = vunpack.c.l.b16 %v238
      %v308 = vpack.c.b16 %v306, %v305
      %v309 = vpack.c.b16 %v307, %v307
      %vm310 = vcmask 1046528
      %v311 = vrot.slane %v308, 1
      %v312 = vrot.slane %v309, 1
      %v313 = vsel %vm310, %v311, %v312
      %314 = vrot.lane.b32.xlu0 %v313, 64
      %v315 = vpop.permute.xlu0 %314
      %v319 = vunpack.c.l.b16 %v252
      %v320 = vunpack.c.l.b16 %v253
      %v321 = vunpack.c.l.b16 %v254
      %v322 = vpack.c.b16 %v320, %v319
      %v323 = vpack.c.b16 %v321, %v321
      %vm324 = vcmask 1045504
      %v325 = vrot.slane %v322, 2
      %v326 = vrot.slane %v323, 2
      %v327 = vsel %vm324, %v325, %v326
      %328 = vrot.lane.b32.xlu0 %v327, 96
      %v329 = vpop.permute.xlu0 %328
      %vm330 = vsmask.f32 5376
      %v331 = vrot.slane %v289, 2
      %v332 = vrot.slane %v291, 3
      %v333 = vor.u32 %v331, %v332
      %v334 = vshrl.u32 %v286, 16
      %v336 = vrot.slane %v334, 2
      %v337 = vrot.slane %v296, 3
      %v338 = vor.u32 %v336, %v337
      %v339 = vsel %vm330, %v333, %v338
      %v343 = vunpack.c.l.b16 %v266
      %v344 = vunpack.c.l.b16 %v267
      %v345 = vunpack.c.l.b16 %v268
      %v346 = vpack.c.b16 %v344, %v343
      %v347 = vpack.c.b16 %v345, %v345
      %vm348 = vcmask 1044480
      %v349 = vrot.slane %v346, 3
      %v350 = vrot.slane %v347, 3
      %v351 = vsel %vm348, %v349, %v350
      %352 = vrot.lane.b32.xlu0 %v351, 32
      %v353 = vpop.permute.xlu0 %352
      %v356 = vunpack.c.l.b16 %v269
      %v357 = vunpack.c.l.b16 %v270
      %v358 = vpack.c.b16 %v357, %v356
      %359 = vrot.lane.b32.xlu0 %v358, 64
      %v360 = vpop.permute.xlu0 %359
      %v362 = vunpack.c.l.b16 %v177
      %v363 = vpack.c.b16 %v284, %v283
      %v364 = vpack.c.b16 %v362, %v362
      %v366 = vshrl.u32 %v363, 16
      %v368 = vshll.u32 %v363, 16
      %v370 = vrot.slane %v368, 1
      %v371 = vor.u32 %v366, %v370
      %v373 = vshll.u32 %v364, 16
      %v375 = vrot.slane %v373, 1
      %v376 = vsel %vm287, %v371, %v375
      %377 = vrot.lane.b32.xlu0 %v376, 96
      %v378 = vpop.permute.xlu0 %377
      %v382 = vunpack.c.l.b16 %v271
      %v383 = vunpack.c.l.b16 %v272
      %v384 = vunpack.c.l.b16 %v273
      %v385 = vpack.c.b16 %v383, %v382
      %v386 = vpack.c.b16 %v384, %v384
      %v387 = vrot.slane %v385, 1
      %v388 = vrot.slane %v386, 1
      %v389 = vsel %vm310, %v387, %v388
      %vm390 = vcmask 261120
      %v393 = vsel %vm390, %v278, %v301
      %vm394 = vcmask 523264
      %v396 = vsel %vm394, %v393, %v315
      %vm397 = vcmask 785408
      %v399 = vsel %vm397, %v396, %v329
      %v403 = vsel %vm390, %v339, %v353
      %v405 = vsel %vm394, %v403, %v360
      %v407 = vsel %vm397, %v405, %v378
      %v409 = vld [vmem:[%s1] sm:$0xf]
      %v410 = vld [vmem:[%s1 + $0x4] sm:$0xf]
      %v411 = vld [vmem:[%s1 + $0x8] sm:$0xf]
      %v412 = vld [vmem:[%s1 + $0xc] sm:$0xf]
      %v413 = vld [vmem:[%s1 + $0x10] sm:$0xf]
      %v414 = vld [vmem:[%s1 + $0x14] sm:$0xf]
      %v415 = vld [vmem:[%s1 + $0x18] sm:$0xf]
      %v416 = vld [vmem:[%s1 + $0x1c] sm:$0xf]
      %v417 = vld [vmem:[%s1 + $0x20] sm:$0xf]
      %v418 = vld [vmem:[%s1 + $0x24] sm:$0xf]
      %v419 = vld [vmem:[%s1 + $0x28] sm:$0xf]
      %v420 = vld [vmem:[%s1 + $0x2c] sm:$0xf]
      %v421 = vld [vmem:[%s1 + $0x30] sm:$0xf]
      %v422 = vld [vmem:[%s1 + $0x34] sm:$0xf]
      %v423 = vld [vmem:[%s1 + $0x38] sm:$0xf]
      %v424 = vld [vmem:[%s1 + $0x3c] sm:$0xf]
      %v425 = vld [vmem:[%s1 + $0x40] sm:$0xf]
      %v426 = vld [vmem:[%s1 + $0x44] sm:$0xf]
      %v427 = vld [vmem:[%s1 + $0x48] sm:$0xf]
      %v428 = vld [vmem:[%s1 + $0x4c] sm:$0xf]
      %v429 = vld [vmem:[%s1 + $0x50] sm:$0xf]
      %v430 = vld [vmem:[%s1 + $0x54] sm:$0xf]
      %v431 = vld [vmem:[%s1 + $0x58] sm:$0xf]
      %v432 = vld [vmem:[%s1 + $0x5c] sm:$0xf]
      %v433 = vld [vmem:[%s1 + $0x60] sm:$0xf]
      %v434 = vld [vmem:[%s1 + $0x64] sm:$0xf]
      %v435 = vld [vmem:[%s1 + $0x68] sm:$0xf]
      %v436 = vld [vmem:[%s1 + $0x6c] sm:$0xf]
      %v437 = vld [vmem:[%s1 + $0x70] sm:$0xf]
      %v438 = vld [vmem:[%s1 + $0x74] sm:$0xf]
      %v439 = vld [vmem:[%s1 + $0x78] sm:$0xf]
      %v440 = vld [vmem:[%s1 + $0x7c] sm:$0xf]
      %v441 = vld [vmem:[%s1 + $0x80] sm:$0xf]
      %v442 = vld [vmem:[%s1 + $0x84] sm:$0xf]
      %v443 = vld [vmem:[%s1 + $0x88] sm:$0xf]
      %v444 = vld [vmem:[%s1 + $0x8c] sm:$0xf]
      %v445 = vld [vmem:[%s2] sm:$0x1]
      %v447 = vlaneseq
      %v448 = vshrl.u32 %v447, 7
      %v449 = vsub.s32 0, %v448
      %v450 = vrot.slane %v445, %v449
      %v488 = vunpack.c.l.b16 %v409
      %v489 = vunpack.c.l.b16 %v410
      %v490 = vunpack.c.l.b16 %v411
      %v491 = vunpack.c.l.b16 %v412
      %v492 = vunpack.c.l.b16 %v413
      %v493 = vunpack.c.l.b16 %v414
      %v494 = vunpack.c.l.b16 %v415
      %v495 = vunpack.c.l.b16 %v416
      %v496 = vunpack.c.l.b16 %v417
      %v497 = vunpack.c.l.b16 %v418
      %v498 = vunpack.c.l.b16 %v419
      %v499 = vunpack.c.l.b16 %v420
      %v500 = vunpack.c.l.b16 %v421
      %v501 = vunpack.c.l.b16 %v422
      %v502 = vunpack.c.l.b16 %v423
      %v503 = vunpack.c.l.b16 %v424
      %v504 = vunpack.c.l.b16 %v425
      %v505 = vunpack.c.l.b16 %v426
      %v506 = vunpack.c.l.b16 %v427
      %v507 = vunpack.c.l.b16 %v428
      %v508 = vunpack.c.l.b16 %v429
      %v509 = vunpack.c.l.b16 %v430
      %v510 = vunpack.c.l.b16 %v431
      %v511 = vunpack.c.l.b16 %v432
      %v512 = vunpack.c.l.b16 %v433
      %v513 = vunpack.c.l.b16 %v434
      %v514 = vunpack.c.l.b16 %v435
      %v515 = vunpack.c.l.b16 %v436
      %v516 = vunpack.c.l.b16 %v437
      %v517 = vunpack.c.l.b16 %v438
      %v518 = vunpack.c.l.b16 %v439
      %v519 = vunpack.c.l.b16 %v440
      %v520 = vunpack.c.l.b16 %v441
      %v521 = vunpack.c.l.b16 %v442
      %v522 = vunpack.c.l.b16 %v443
      %v523 = vunpack.c.l.b16 %v444
      %v524 = vpack.c.b16 %v489, %v488
      %v525 = vpack.c.b16 %v491, %v490
      %v526 = vpack.c.b16 %v493, %v492
      %v527 = vpack.c.b16 %v495, %v494
      %v528 = vpack.c.b16 %v497, %v496
      %v529 = vpack.c.b16 %v499, %v498
      %v530 = vpack.c.b16 %v501, %v500
      %v531 = vpack.c.b16 %v503, %v502
      %v532 = vpack.c.b16 %v505, %v504
      %v533 = vpack.c.b16 %v507, %v506
      %v534 = vpack.c.b16 %v509, %v508
      %v535 = vpack.c.b16 %v511, %v510
      %v536 = vpack.c.b16 %v513, %v512
      %v537 = vpack.c.b16 %v515, %v514
      %v538 = vpack.c.b16 %v517, %v516
      %v539 = vpack.c.b16 %v519, %v518
      %v540 = vpack.c.b16 %v521, %v520
      %v541 = vpack.c.b16 %v523, %v522
      %v561 = vsel %vm390, %v389, 0
      %563 = vmatprep.subr.bf16.mxu0 0
      %564 = vmatpush1.bf16.msra.mxu0 %v524
      %565 = vmatprep.subr.bf16.mxu0 0
      %566 = vmatpush1.bf16.msra.mxu0 %v525
      %567 = vmatprep.subr.bf16.mxu0 0
      %568 = vmatpush1.bf16.msra.mxu0 %v526
      %569 = vmatprep.subr.bf16.mxu0 0
      %570 = vmatpush1.bf16.msra.mxu0 %v527
      %571 = vmatprep.subr.bf16.mxu0 0
      %572 = vmatpush1.bf16.msra.mxu0 %v528
      %573 = vmatprep.subr.bf16.mxu0 0
      %574 = vmatpush1.bf16.msra.mxu0 %v529
      %575 = vmatprep.subr.bf16.mxu0 0
      %576 = vmatpush1.bf16.msra.mxu0 %v530
      %577 = vmatprep.subr.bf16.mxu0 0
      %578 = vmatpush1.bf16.msra.mxu0 %v531
      %579 = vmatprep.subr.bf16.mxu0 0
      %580 = vmatpush1.bf16.msra.mxu0 %v532
      %581 = vmatprep.subr.bf16.mxu0 0
      %582 = vmatpush1.bf16.msra.mxu0 %v533
      %583 = vmatprep.subr.bf16.mxu0 0
      %584 = vmatpush1.bf16.msra.mxu0 %v534
      %585 = vmatprep.subr.bf16.mxu0 0
      %586 = vmatpush1.bf16.msra.mxu0 %v535
      %587 = vmatprep.subr.bf16.mxu0 0
      %588 = vmatpush1.bf16.msra.mxu0 %v536
      %589 = vmatprep.subr.bf16.mxu0 0
      %590 = vmatpush1.bf16.msra.mxu0 %v537
      %591 = vmatprep.subr.bf16.mxu0 0
      %592 = vmatpush1.bf16.msra.mxu0 %v538
      %593 = vmatprep.subr.bf16.mxu0 0
      %594 = vmatpush1.bf16.msra.mxu0 %v539
      %595 = vmatprep.mubr.bf16.mxu0 %v407
      %596 = vmatmul.mubr.bf16.gmra.mrb[0].mxu0 %v399
      %v597 = vpop.f32.mrb[0].mxu0
      %v598 = vadd.f32 %v450, %v597
      %v599 = vpop.f32.mrb[0].mxu0
      %v600 = vpop.f32.mrb[0].mxu0
      %v601 = vadd.f32 %v450, %v600
      %v602 = vpop.f32.mrb[0].mxu0
      %603 = vdwg.mxu0
      %604 = vmatprep.subr.bf16.mxu0 0
      %605 = vmatpush1.bf16.msra.mxu0 %v540
      %606 = vmatprep.subr.bf16.mxu0 0
      %607 = vmatpush1.bf16.msra.mxu0 %v541
      %608 = vmatprep.subr.bf16.mxu0 0
      %609 = vmatpush1.bf16.msra.mxu0 0
      %610 = vmatprep.subr.bf16.mxu0 0
      %611 = vmatpush1.bf16.msra.mxu0 0
      %612 = vmatprep.subr.bf16.mxu0 0
      %613 = vmatpush1.bf16.msra.mxu0 0
      %614 = vmatprep.subr.bf16.mxu0 0
      %615 = vmatpush1.bf16.msra.mxu0 0
      %616 = vmatprep.subr.bf16.mxu0 0
      %617 = vmatpush1.bf16.msra.mxu0 0
      %618 = vmatprep.subr.bf16.mxu0 0
      %619 = vmatpush1.bf16.msra.mxu0 0
      %620 = vmatprep.subr.bf16.mxu0 0
      %621 = vmatpush1.bf16.msra.mxu0 0
      %622 = vmatprep.subr.bf16.mxu0 0
      %623 = vmatpush1.bf16.msra.mxu0 0
      %624 = vmatprep.subr.bf16.mxu0 0
      %625 = vmatpush1.bf16.msra.mxu0 0
      %626 = vmatprep.subr.bf16.mxu0 0
      %627 = vmatpush1.bf16.msra.mxu0 0
      %628 = vmatprep.subr.bf16.mxu0 0
      %629 = vmatpush1.bf16.msra.mxu0 0
      %630 = vmatprep.subr.bf16.mxu0 0
      %631 = vmatpush1.bf16.msra.mxu0 0
      %632 = vmatprep.subr.bf16.mxu0 0
      %633 = vmatpush1.bf16.msra.mxu0 0
      %634 = vmatprep.subr.bf16.mxu0 0
      %635 = vmatpush1.bf16.msra.mxu0 0
      %636 = vmatprep.mubr.bf16.mxu0 0
      %637 = vmatmul.mubr.bf16.gmra.mrb[0].mxu0 %v561
      %v638 = vpop.f32.mrb[0].mxu0
      %v639 = vadd.f32 %v598, %v638
      %v640 = vpop.f32.mrb[0].mxu0
      %v641 = vpop.f32.mrb[0].mxu0
      %v642 = vadd.f32 %v601, %v641
      %v643 = vpop.f32.mrb[0].mxu0
      %644 = vdwg.mxu0
      %v645 = vmax.f32 %v639, 0.0
      %v646 = vmax.f32 %v642, 0.0
      %v647 = vpack.c.bf16 %v646, %v645
      %v649 = vunpack.c.l.b16 %v647
      %v650 = vunpack.c.h.b16 %v647
      %v651 = vpack.c.b16 %v649, %v649
      %v652 = vpack.c.b16 %v650, %v650
      %vm655 = vcmask 519168
      %656 = vst.msk [vmem:[%s170] sm:$0xf] %vm655, %v651
      %657 = vst.msk [vmem:[%s170 + $0x4] sm:$0xf] %vm655, %v652
      %p658 = scmp.lt.s32.totalorder %s14, 1
      %s659 = scalar_select %p658, %s14, 1
      %s660 = smul.addr %s659, 2
      %s661 = smul.addr %s660, 4
      %s662 = scalar_lea.vmem %s3, %s661
      // Predicated region
      $region33: #{segmentation_forward.7} parent=31 // pred_check
        %p663 = pneg %p100
      $region34: #{segmentation_forward.7} parent=31 // pred_check_branch
        %665 = sbr.rel (%p663) target = $region36
      $region35: #{segmentation_forward.7} parent=31 // pred_region
        _
      $region36: #{segmentation_forward.7} parent=31 // pred_fallthru
        _
    $region32: #{segmentation_forward.7} parent=5 // pred_fallthru
      _
    %p666 = scmp.le.s32.totalorder 2, %s9
    // Predicated region
    $region37: #{segmentation_forward.7} parent=5 // pred_check
      %p667 = pneg %p666
    $region38: #{segmentation_forward.7} parent=5 // pred_check_branch
      %669 = sbr.rel (%p667) target = $region40
    $region39: #{segmentation_forward.7} parent=5 // pred_region
      %s670 = ssub.s32 %s9, 2
      // Predicated region
      $region41: #{segmentation_forward.7} parent=39 // pred_check
        %p671 = pneg %p106
      $region42: #{segmentation_forward.7} parent=39 // pred_check_branch
        %673 = sbr.rel (%p671) target = $region44
      $region43: #{segmentation_forward.7} parent=39 // pred_region
        %p674 = scmp.lt.s32.totalorder %s15, 1
        %s675 = scalar_select %p674, %s15, 1
        %s676 = smul.addr %s675, 2
        %s677 = smul.addr %s676, 4
        %s678 = scalar_lea.vmem %s3, %s677
      $region44: #{segmentation_forward.7} parent=39 // pred_fallthru
        _
    $region40: #{segmentation_forward.7} parent=5 // pred_fallthru
      _
  $region6: #{segmentation_forward.7} parent=0 // loop_footer
    %s13 = sadd.s32 1, %s9
  $region7: #{segmentation_forward.7} parent=0 // loop_footer_branch
    %8 = sbr.rel target = $region3
  $region8: #{segmentation_forward.7} parent=0 // loop_exit
    _

// kernel: segmentation_forward.5
$region0: #{segmentation_forward.5}
  #allocation0 [shape = 'u32[]', space=smem, size = 0x4, offset = 0x4, fixed_abs, tag = 'smem constant byte address 0x4 - core index']
  #allocation1 [shape = 'u32[144,128]{1,0:T(1,128)}', space=vmem, size = 0x12000, scoped, tag = 'internal scratch']
  %s0 = inlined_call_operand.vmem [shape: bf16[2,290,3], index: 0, kind: input, shape index: {}]
  %s1 = inlined_call_operand.vmem [shape: bf16[27,16], index: 1, kind: input, shape index: {}]
  %s2 = inlined_call_operand.vmem [shape: f32[1,16], index: 2, kind: input, shape index: {}]
  %s3 = inlined_call_operand.vmem [shape: bf16[2,256,16], index: 3, kind: output, shape index: {}]
  %s4 = sld [smem:[#allocation0]]
  $region45: #{segmentation_forward.5} parent=0
    _
  %s6 = ssub.s32 1, %s4
  %s7 = scalar_select 0, %s6, %s4
  loop: start=0, step=1, limit=4
  $region2: #{segmentation_forward.5} parent=0 // loop_pre_header
    _
  $region3: #{segmentation_forward.5} parent=0 // loop_header
    %s9 = sphi 0, %s13
    %p10 = scmp.ge.s32.totalorder %s9, 4
    %s19 = sphi 0, %s21
    %s22 = sphi 0, %s19
    %s23 = sphi 0, %s22
    %s39 = sphi 0, %s23
    %s43 = sphi 0, %s43
    %s45 = sphi 0, %s43
    %s46 = sphi 0, %s45
    %s60 = sphi 0, %s46
    %s64 = sphi 0, %s64
    %s66 = sphi 0, %s64
    %s67 = sphi 0, %s66
    %s81 = sphi 0, %s67
    %s87 = sphi 0, %s89
    %s90 = sphi 0, %s87
    %s91 = sphi 0, %s90
    %s107 = sphi 0, %s91
  $region4: #{segmentation_forward.5} parent=0 // loop_header_branch
    %12 = sbr.rel (%p10) target = $region8
  $region5: #{segmentation_forward.5} parent=0 // loop_body
    %s14 = ssub.s32 %s9, 1
    %s15 = ssub.s32 %s9, 2
    %s16 = sadd.s32 %s9, 1
    %s17 = ssub.s32 %s9, %s16
    %p18 = scmp.eq.s32.totalorder %s17, 0
    %s20 = sadd.s32 %s19, 1
    %s21 = scalar_select %p18, %s19, %s20
    %p24 = pneg %p18
    %p25 = scmp.eq.s32.totalorder %s9, 1
    %p26 = por %p24, %p25
    %p27 = scmp.ne.s32.totalorder %s19, %s22
    %p28 = scmp.eq.s32.totalorder %s9, 0
    %p29 = por %p27, %p28
    %p30 = scmp.ne.s32.totalorder %s19, %s22
    %p31 = scmp.eq.s32.totalorder %s14, 1
    %p32 = por %p30, %p31
    %p33 = scmp.ne.s32.totalorder %s22, %s23
    %p34 = scmp.eq.s32.totalorder %s14, 0
    %p35 = por %p33, %p34
    %p36 = scmp.ne.s32.totalorder %s22, %s23
    %p37 = scmp.eq.s32.totalorder %s15, 1
    %p38 = por %p36, %p37
    %p40 = scmp.ne.s32.totalorder %s23, %s39
    %p41 = scmp.eq.s32.totalorder %s15, 0
    %p42 = por %p40, %p41
    %s44 = sadd.s32 %s43, 1
    %p47 = scmp.eq.s32.totalorder %s9, 1
    %p48 = scmp.ne.s32.totalorder %s43, %s45
    %p49 = scmp.eq.s32.totalorder %s9, 0
    %p50 = por %p48, %p49
    %p51 = scmp.ne.s32.totalorder %s43, %s45
    %p52 = scmp.eq.s32.totalorder %s14, 1
    %p53 = por %p51, %p52
    %p54 = scmp.ne.s32.totalorder %s45, %s46
    %p55 = scmp.eq.s32.totalorder %s14, 0
    %p56 = por %p54, %p55
    %p57 = scmp.ne.s32.totalorder %s45, %s46
    %p58 = scmp.eq.s32.totalorder %s15, 1
    %p59 = por %p57, %p58
    %p61 = scmp.ne.s32.totalorder %s46, %s60
    %p62 = scmp.eq.s32.totalorder %s15, 0
    %p63 = por %p61, %p62
    %s65 = sadd.s32 %s64, 1
    %p68 = scmp.eq.s32.totalorder %s9, 1
    %p69 = scmp.ne.s32.totalorder %s64, %s66
    %p70 = scmp.eq.s32.totalorder %s9, 0
    %p71 = por %p69, %p70
    %p72 = scmp.ne.s32.totalorder %s64, %s66
    %p73 = scmp.eq.s32.totalorder %s14, 1
    %p74 = por %p72, %p73
    %p75 = scmp.ne.s32.totalorder %s66, %s67
    %p76 = scmp.eq.s32.totalorder %s14, 0
    %p77 = por %p75, %p76
    %p78 = scmp.ne.s32.totalorder %s66, %s67
    %p79 = scmp.eq.s32.totalorder %s15, 1
    %p80 = por %p78, %p79
    %p82 = scmp.ne.s32.totalorder %s67, %s81
    %p83 = scmp.eq.s32.totalorder %s15, 0
    %p84 = por %p82, %p83
    %s85 = ssub.s32 %s9, %s16
    %p86 = scmp.eq.s32.totalorder %s85, 0
    %s88 = sadd.s32 %s87, 1
    %s89 = scalar_select %p86, %s87, %s88
    %p92 = pneg %p86
    %p93 = scmp.eq.s32.totalorder %s9, 1
    %p94 = por %p92, %p93
    %p95 = scmp.ne.s32.totalorder %s87, %s90
    %p96 = scmp.eq.s32.totalorder %s9, 0
    %p97 = por %p95, %p96
    %p98 = scmp.ne.s32.totalorder %s87, %s90
    %p99 = scmp.eq.s32.totalorder %s14, 1
    %p100 = por %p98, %p99
    %p101 = scmp.ne.s32.totalorder %s90, %s91
    %p102 = scmp.eq.s32.totalorder %s14, 0
    %p103 = por %p101, %p102
    %p104 = scmp.ne.s32.totalorder %s90, %s91
    %p105 = scmp.eq.s32.totalorder %s15, 1
    %p106 = por %p104, %p105
    %p108 = scmp.ne.s32.totalorder %s91, %s107
    %p109 = scmp.eq.s32.totalorder %s15, 0
    %p110 = por %p108, %p109
    %p111 = scmp.le.s32.totalorder 1, %s9
    %p112 = scmp.lt.s32.totalorder %s9, 3
    %p113 = pnand %p111, %p112
    %p114 = pneg %p113
    // Predicated region
    $region9: #{segmentation_forward.5} parent=5 // pred_check
      _
    $region10: #{segmentation_forward.5} parent=5 // pred_check_branch
      %116 = sbr.rel (%p113) target = $region12
    $region11: #{segmentation_forward.5} parent=5 // pred_region
      %s117 = ssub.s32 %s9, 1
      // Predicated region
      $region13: #{segmentation_forward.5} parent=11 // pred_check
        %p118 = pneg %p56
      $region14: #{segmentation_forward.5} parent=11 // pred_check_branch
        %120 = sbr.rel (%p118) target = $region16
      $region15: #{segmentation_forward.5} parent=11 // pred_region
        _
      $region16: #{segmentation_forward.5} parent=11 // pred_fallthru
        _
      // Predicated region
      $region17: #{segmentation_forward.5} parent=11 // pred_check
        %p121 = pneg %p77
      $region18: #{segmentation_forward.5} parent=11 // pred_check_branch
        %123 = sbr.rel (%p121) target = $region20
      $region19: #{segmentation_forward.5} parent=11 // pred_region
        _
      $region20: #{segmentation_forward.5} parent=11 // pred_fallthru
        _
    $region12: #{segmentation_forward.5} parent=5 // pred_fallthru
      _
    %p124 = scmp.lt.s32.totalorder %s9, 2
    // Predicated region
    $region21: #{segmentation_forward.5} parent=5 // pred_check
      %p125 = pneg %p124
    $region22: #{segmentation_forward.5} parent=5 // pred_check_branch
      %127 = sbr.rel (%p125) target = $region24
    $region23: #{segmentation_forward.5} parent=5 // pred_region
      // Predicated region
      $region25: #{segmentation_forward.5} parent=23 // pred_check
        %p128 = pneg %p29
      $region26: #{segmentation_forward.5} parent=23 // pred_check_branch
        %130 = sbr.rel (%p128) target = $region28
      $region27: #{segmentation_forward.5} parent=23 // pred_region
        %p131 = scmp.lt.s32.totalorder %s9, 1
        %s132 = scalar_select %p131, %s9, 1
        %s133 = smul.addr %s132, 37
        %s134 = smul.addr %s133, 4
        %s135 = scalar_lea.vmem %s0, %s134
      $region28: #{segmentation_forward.5} parent=23 // pred_fallthru
        _
    $region24: #{segmentation_forward.5} parent=5 // pred_fallthru
      _
    %p136 = scmp.le.s32.totalorder 1, %s9
    %p137 = scmp.lt.s32.totalorder %s9, 3
    %p138 = pnand %p136, %p137
    %p139 = pneg %p138
    // Predicated region
    $region29: #{segmentation_forward.5} parent=5 // pred_check
      _
    $region30: #{segmentation_forward.5} parent=5 // pred_check_branch
      %141 = sbr.rel (%p138) target = $region32
    $region31: #{segmentation_forward.5} parent=5 // pred_region
      %s142 = ssub.s32 %s9, 1
      %p143 = scmp.lt.s32.totalorder %s14, 1
      %s144 = scalar_select %p143, %s14, 1
      %s145 = smul.addr %s144, 37
      %s146 = smul.addr %s145, 4
      %s147 = scalar_lea.vmem %s0, %s146
      %p148 = pneg %p35
      %p149 = pneg %p32
      %p150 = pneg %p56
      %p151 = pneg %p53
      %p152 = pneg %p77
      %p153 = pneg %p74
      %p154 = pneg %p103
      %p155 = pneg %p100
      %p156 = scmp.lt.s32.totalorder %s14, 1
      %s157 = scalar_select %p156, %s14, 1
      %s158 = smul.addr %s157, 32
      %s159 = smul.addr %s158, 4
      %s160 = scalar_lea.vmem %s3, %s159
      %p161 = scmp.lt.s32.totalorder %s14, 1
      %s162 = scalar_select %p161, %s14, 1
      %s163 = smul.addr %s162, 37
      %s164 = smul.addr %s163, 4
      %s165 = scalar_lea.vmem %s0, %s164
      %p166 = scmp.lt.s32.totalorder %s14, 1
      %s167 = scalar_select %p166, %s14, 1
      %s168 = smul.addr %s167, 32
      %s169 = smul.addr %s168, 4
      %s170 = scalar_lea.vmem %s3, %s169
      %v174 = vld [vmem:[%s165] sm:$0xf]
      %v175 = vld [vmem:[%s165 + $0x4] sm:$0xf]
      %v176 = vld [vmem:[%s165 + $0x8] sm:$0xf]
      %v177 = vld [vmem:[%s165 + $0xc] sm:$0xf]
      %v178 = vld [vmem:[%s165 + $0x10] sm:$0xf]
      %v179 = vld [vmem:[%s165 + $0x14] sm:$0xf]
      %v180 = vld [vmem:[%s165 + $0x18] sm:$0xf]
      %v181 = vld [vmem:[%s165 + $0x1c] sm:$0xf]
      %v182 = vld [vmem:[%s165 + $0x20] sm:$0xf]
      %v183 = vld [vmem:[%s165 + $0x24] sm:$0xf]
      %v184 = vld [vmem:[%s165 + $0x28] sm:$0xf]
      %v185 = vld [vmem:[%s165 + $0x2c] sm:$0xf]
      %v186 = vld [vmem:[%s165 + $0x30] sm:$0xf]
      %v187 = vld [vmem:[%s165 + $0x34] sm:$0xf]
      %v188 = vld [vmem:[%s165 + $0x38] sm:$0xf]
      %v189 = vld [vmem:[%s165 + $0x3c] sm:$0xf]
      %v190 = vld [vmem:[%s165 + $0x40] sm:$0xf]
      %v191 = vld [vmem:[%s165 + $0x44] sm:$0xf]
      %v192 = vld [vmem:[%s165 + $0x48] sm:$0xf]
      %v193 = vld [vmem:[%s165 + $0x4c] sm:$0xf]
      %v194 = vld [vmem:[%s165 + $0x50] sm:$0xf]
      %v195 = vld [vmem:[%s165 + $0x54] sm:$0xf]
      %v196 = vld [vmem:[%s165 + $0x58] sm:$0xf]
      %v197 = vld [vmem:[%s165 + $0x5c] sm:$0xf]
      %v198 = vld [vmem:[%s165 + $0x60] sm:$0xf]
      %v199 = vld [vmem:[%s165 + $0x64] sm:$0xf]
      %v200 = vld [vmem:[%s165 + $0x68] sm:$0xf]
      %v201 = vld [vmem:[%s165 + $0x6c] sm:$0xf]
      %v202 = vld [vmem:[%s165 + $0x70] sm:$0xf]
      %v203 = vld [vmem:[%s165 + $0x74] sm:$0xf]
      %v204 = vld [vmem:[%s165 + $0x78] sm:$0xf]
      %v205 = vld [vmem:[%s165 + $0x7c] sm:$0xf]
      %v206 = vld [vmem:[%s165 + $0x80] sm:$0xf]
      %v207 = vld [vmem:[%s165 + $0x84] sm:$0xf]
      %v208 = vld [vmem:[%s165 + $0x88] sm:$0xf]
      %v209 = vld [vmem:[%s165 + $0x8c] sm:$0xf]
      %v210 = vld [vmem:[%s165 + $0x90] sm:$0x1]
      %v211 = vlaneseq
      %v212 = vshrl.u32 %v211, 7
      %v213 = vadd.s32 %v212, 8
      %v214 = vadd.s32 %v212, 16
      %v215 = vadd.s32 %v212, 24
      %v216 = vadd.s32 %v212, 32
      %v217 = vadd.s32 %v212, 40
      %v218 = vadd.s32 %v212, 48
      %v219 = vadd.s32 %v212, 56
      %v220 = vadd.s32 %v212, 64
      %v221 = vadd.s32 %v212, 72
      %v222 = vadd.s32 %v212, 80
      %v223 = vadd.s32 %v212, 88
      %v224 = vadd.s32 %v212, 96
      %v225 = vadd.s32 %v212, 104
      %v226 = vadd.s32 %v212, 112
      %v227 = vadd.s32 %v212, 120
      %v228 = vadd.s32 %v212, 128
      %v229 = vadd.s32 %v212, 136
      %v230 = vadd.s32 %v212, 144
      %v231 = vadd.s32 %v212, 152
      %v232 = vadd.s32 %v212, 160
      %v233 = vadd.s32 %v212, 168
      %v234 = vadd.s32 %v212, 176
      %v235 = vadd.s32 %v212, 184
      %v236 = vadd.s32 %v212, 192
      %v237 = vadd.s32 %v212, 200
      %v238 = vadd.s32 %v212, 208
      %v239 = vadd.s32 %v212, 216
      %v240 = vadd.s32 %v212, 224
      %v241 = vadd.s32 %v212, 232
      %v242 = vadd.s32 %v212, 240
      %v243 = vadd.s32 %v212, 248
      %vm244 = vcmp.lt.s32.totalorder %v212, 0
      %v245 = vsub.s32 0, %v212
      %v246 = vsel %vm244, %v245, %v212
      %v247 = vshrl.u32 %v246, 4
      %v248 = vand.u32 %v246, 15
      %v249 = vsub.s32 0, %v248
      %v250 = vsel %vm244, %v249, %v248
      %vm251 = vcmp.lt.s32.totalorder %v213, 0
      %v252 = vsub.s32 0, %v213
      %v253 = vsel %vm251, %v252, %v213
      %v254 = vshrl.u32 %v253, 4
      %v255 = vand.u32 %v253, 15
      %v256 = vsub.s32 0, %v255
      %v257 = vsel %vm251, %v256, %v255
      %vm258 = vcmp.lt.s32.totalorder %v214, 0
      %v259 = vsub.s32 0, %v214
      %v260 = vsel %vm258, %v259, %v214
      %v261 = vshrl.u32 %v260, 4
      %v262 = vand.u32 %v260, 15
      %v263 = vsub.s32 0, %v262
      %v264 = vsel %vm258, %v263, %v262
      %vm265 = vcmp.lt.s32.totalorder %v215, 0
      %v266 = vsub.s32 0, %v215
      %v267 = vsel %vm265, %v266, %v215
      %v268 = vshrl.u32 %v267, 4
      %v269 = vand.u32 %v267, 15
      %v270 = vsub.s32 0, %v269
      %v271 = vsel %vm265, %v270, %v269
      %vm272 = vcmp.lt.s32.totalorder %v216, 0
      %v273 = vsub.s32 0, %v216
      %v274 = vsel %vm272, %v273, %v216
      %v275 = vshrl.u32 %v274, 4
      %v276 = vand.u32 %v274, 15
      %v277 = vsub.s32 0, %v276
      %v278 = vsel %vm272, %v277, %v276
      %vm279 = vcmp.lt.s32.totalorder %v217, 0
      %v280 = vsub.s32 0, %v217
      %v281 = vsel %vm279, %v280, %v217
      %v282 = vshrl.u32 %v281, 4
      %v283 = vand.u32 %v281, 15
      %v284 = vsub.s32 0, %v283
      %v285 = vsel %vm279, %v284, %v283
      %vm286 = vcmp.lt.s32.totalorder %v218, 0
      %v287 = vsub.s32 0, %v218
      %v288 = vsel %vm286, %v287, %v218
      %v289 = vshrl.u32 %v288, 4
      %v290 = vand.u32 %v288, 15
      %v291 = vsub.s32 0, %v290
      %v292 = vsel %vm286, %v291, %v290
      %vm293 = vcmp.lt.s32.totalorder %v219, 0
      %v294 = vsub.s32 0, %v219
      %v295 = vsel %vm293, %v294, %v219
      %v296 = vshrl.u32 %v295, 4
      %v297 = vand.u32 %v295, 15
      %v298 = vsub.s32 0, %v297
      %v299 = vsel %vm293, %v298, %v297
      %vm300 = vcmp.lt.s32.totalorder %v220, 0
      %v301 = vsub.s32 0, %v220
      %v302 = vsel %vm300, %v301, %v220
      %v303 = vshrl.u32 %v302, 4
      %v304 = vand.u32 %v302, 15
      %v305 = vsub.s32 0, %v304
      %v306 = vsel %vm300, %v305, %v304
      %vm307 = vcmp.lt.s32.totalorder %v221, 0
      %v308 = vsub.s32 0, %v221
      %v309 = vsel %vm307, %v308, %v221
      %v310 = vshrl.u32 %v309, 4
      %v311 = vand.u32 %v309, 15
      %v312 = vsub.s32 0, %v311
      %v313 = vsel %vm307, %v312, %v311
      %vm314 = vcmp.lt.s32.totalorder %v222, 0
      %v315 = vsub.s32 0, %v222
      %v316 = vsel %vm314, %v315, %v222
      %v317 = vshrl.u32 %v316, 4
      %v318 = vand.u32 %v316, 15
      %v319 = vsub.s32 0, %v318
      %v320 = vsel %vm314, %v319, %v318
      %vm321 = vcmp.lt.s32.totalorder %v223, 0
      %v322 = vsub.s32 0, %v223
      %v323 = vsel %vm321, %v322, %v223
      %v324 = vshrl.u32 %v323, 4
      %v325 = vand.u32 %v323, 15
      %v326 = vsub.s32 0, %v325
      %v327 = vsel %vm321, %v326, %v325
      %vm328 = vcmp.lt.s32.totalorder %v224, 0
      %v329 = vsub.s32 0, %v224
      %v330 = vsel %vm328, %v329, %v224
      %v331 = vshrl.u32 %v330, 4
      %v332 = vand.u32 %v330, 15
      %v333 = vsub.s32 0, %v332
      %v334 = vsel %vm328, %v333, %v332
      %vm335 = vcmp.lt.s32.totalorder %v225, 0
      %v336 = vsub.s32 0, %v225
      %v337 = vsel %vm335, %v336, %v225
      %v338 = vshrl.u32 %v337, 4
      %v339 = vand.u32 %v337, 15
      %v340 = vsub.s32 0, %v339
      %v341 = vsel %vm335, %v340, %v339
      %vm342 = vcmp.lt.s32.totalorder %v226, 0
      %v343 = vsub.s32 0, %v226
      %v344 = vsel %vm342, %v343, %v226
      %v345 = vshrl.u32 %v344, 4
      %v346 = vand.u32 %v344, 15
      %v347 = vsub.s32 0, %v346
      %v348 = vsel %vm342, %v347, %v346
      %vm349 = vcmp.lt.s32.totalorder %v227, 0
      %v350 = vsub.s32 0, %v227
      %v351 = vsel %vm349, %v350, %v227
      %v352 = vshrl.u32 %v351, 4
      %v353 = vand.u32 %v351, 15
      %v354 = vsub.s32 0, %v353
      %v355 = vsel %vm349, %v354, %v353
      %vm356 = vcmp.lt.s32.totalorder %v228, 0
      %v357 = vsub.s32 0, %v228
      %v358 = vsel %vm356, %v357, %v228
      %v359 = vshrl.u32 %v358, 4
      %v360 = vand.u32 %v358, 15
      %v361 = vsub.s32 0, %v360
      %v362 = vsel %vm356, %v361, %v360
      %vm363 = vcmp.lt.s32.totalorder %v229, 0
      %v364 = vsub.s32 0, %v229
      %v365 = vsel %vm363, %v364, %v229
      %v366 = vshrl.u32 %v365, 4
      %v367 = vand.u32 %v365, 15
      %v368 = vsub.s32 0, %v367
      %v369 = vsel %vm363, %v368, %v367
      %vm370 = vcmp.lt.s32.totalorder %v230, 0
      %v371 = vsub.s32 0, %v230
      %v372 = vsel %vm370, %v371, %v230
      %v373 = vshrl.u32 %v372, 4
      %v374 = vand.u32 %v372, 15
      %v375 = vsub.s32 0, %v374
      %v376 = vsel %vm370, %v375, %v374
      %vm377 = vcmp.lt.s32.totalorder %v231, 0
      %v378 = vsub.s32 0, %v231
      %v379 = vsel %vm377, %v378, %v231
      %v380 = vshrl.u32 %v379, 4
      %v381 = vand.u32 %v379, 15
      %v382 = vsub.s32 0, %v381
      %v383 = vsel %vm377, %v382, %v381
      %vm384 = vcmp.lt.s32.totalorder %v232, 0
      %v385 = vsub.s32 0, %v232
      %v386 = vsel %vm384, %v385, %v232
      %v387 = vshrl.u32 %v386, 4
      %v388 = vand.u32 %v386, 15
      %v389 = vsub.s32 0, %v388
      %v390 = vsel %vm384, %v389, %v388
      %vm391 = vcmp.lt.s32.totalorder %v233, 0
      %v392 = vsub.s32 0, %v233
      %v393 = vsel %vm391, %v392, %v233
      %v394 = vshrl.u32 %v393, 4
      %v395 = vand.u32 %v393, 15
      %v396 = vsub.s32 0, %v395
      %v397 = vsel %vm391, %v396, %v395
      %vm398 = vcmp.lt.s32.totalorder %v234, 0
      %v399 = vsub.s32 0, %v234
      %v400 = vsel %vm398, %v399, %v234
      %v401 = vshrl.u32 %v400, 4
      %v402 = vand.u32 %v400, 15
      %v403 = vsub.s32 0, %v402
      %v404 = vsel %vm398, %v403, %v402
      %vm405 = vcmp.lt.s32.totalorder %v235, 0
      %v406 = vsub.s32 0, %v235
      %v407 = vsel %vm405, %v406, %v235
      %v408 = vshrl.u32 %v407, 4
      %v409 = vand.u32 %v407, 15
      %v410 = vsub.s32 0, %v409
      %v411 = vsel %vm405, %v410, %v409
      %vm412 = vcmp.lt.s32.totalorder %v236, 0
      %v413 = vsub.s32 0, %v236
      %v414 = vsel %vm412, %v413, %v236
      %v415 = vshrl.u32 %v414, 4
      %v416 = vand.u32 %v414, 15
      %v417 = vsub.s32 0, %v416
      %v418 = vsel %vm412, %v417, %v416
      %vm419 = vcmp.lt.s32.totalorder %v237, 0
      %v420 = vsub.s32 0, %v237
      %v421 = vsel %vm419, %v420, %v237
      %v422 = vshrl.u32 %v421, 4
      %v423 = vand.u32 %v421, 15
      %v424 = vsub.s32 0, %v423
      %v425 = vsel %vm419, %v424, %v423
      %vm426 = vcmp.lt.s32.totalorder %v238, 0
      %v427 = vsub.s32 0, %v238
      %v428 = vsel %vm426, %v427, %v238
      %v429 = vshrl.u32 %v428, 4
      %v430 = vand.u32 %v428, 15
      %v431 = vsub.s32 0, %v430
      %v432 = vsel %vm426, %v431, %v430
      %vm433 = vcmp.lt.s32.totalorder %v239, 0
      %v434 = vsub.s32 0, %v239
      %v435 = vsel %vm433, %v434, %v239
      %v436 = vshrl.u32 %v435, 4
      %v437 = vand.u32 %v435, 15
      %v438 = vsub.s32 0, %v437
      %v439 = vsel %vm433, %v438, %v437
      %vm440 = vcmp.lt.s32.totalorder %v240, 0
      %v441 = vsub.s32 0, %v240
      %v442 = vsel %vm440, %v441, %v240
      %v443 = vshrl.u32 %v442, 4
      %v444 = vand.u32 %v442, 15
      %v445 = vsub.s32 0, %v444
      %v446 = vsel %vm440, %v445, %v444
      %vm447 = vcmp.lt.s32.totalorder %v241, 0
      %v448 = vsub.s32 0, %v241
      %v449 = vsel %vm447, %v448, %v241
      %v450 = vshrl.u32 %v449, 4
      %v451 = vand.u32 %v449, 15
      %v452 = vsub.s32 0, %v451
      %v453 = vsel %vm447, %v452, %v451
      %vm454 = vcmp.lt.s32.totalorder %v242, 0
      %v455 = vsub.s32 0, %v242
      %v456 = vsel %vm454, %v455, %v242
      %v457 = vshrl.u32 %v456, 4
      %v458 = vand.u32 %v456, 15
      %v459 = vsub.s32 0, %v458
      %v460 = vsel %vm454, %v459, %v458
      %vm461 = vcmp.lt.s32.totalorder %v243, 0
      %v462 = vsub.s32 0, %v243
      %v463 = vsel %vm461, %v462, %v243
      %v464 = vshrl.u32 %v463, 4
      %v465 = vand.u32 %v463, 15
      %v466 = vsub.s32 0, %v465
      %v467 = vsel %vm461, %v466, %v465
      %vm468 = vcmp.ne.s32.totalorder %v250, 0
      %vm469 = vcmp.ne.s32.totalorder %v257, 0
      %vm470 = vcmp.ne.s32.totalorder %v264, 0
      %vm471 = vcmp.ne.s32.totalorder %v271, 0
      %vm472 = vcmp.ne.s32.totalorder %v278, 0
      %vm473 = vcmp.ne.s32.totalorder %v285, 0
      %vm474 = vcmp.ne.s32.totalorder %v292, 0
      %vm475 = vcmp.ne.s32.totalorder %v299, 0
      %vm476 = vcmp.ne.s32.totalorder %v306, 0
      %vm477 = vcmp.ne.s32.totalorder %v313, 0
      %vm478 = vcmp.ne.s32.totalorder %v320, 0
      %vm479 = vcmp.ne.s32.totalorder %v327, 0
      %vm480 = vcmp.ne.s32.totalorder %v334, 0
      %vm481 = vcmp.ne.s32.totalorder %v341, 0
      %vm482 = vcmp.ne.s32.totalorder %v348, 0
      %vm483 = vcmp.ne.s32.totalorder %v355, 0
      %vm484 = vcmp.ne.s32.totalorder %v362, 0
      %vm485 = vcmp.ne.s32.totalorder %v369, 0
      %vm486 = vcmp.ne.s32.totalorder %v376, 0
      %vm487 = vcmp.ne.s32.totalorder %v383, 0
      %vm488 = vcmp.ne.s32.totalorder %v390, 0
      %vm489 = vcmp.ne.s32.totalorder %v397, 0
      %vm490 = vcmp.ne.s32.totalorder %v404, 0
      %vm491 = vcmp.ne.s32.totalorder %v411, 0
      %vm492 = vcmp.ne.s32.totalorder %v418, 0
      %vm493 = vcmp.ne.s32.totalorder %v425, 0
      %vm494 = vcmp.ne.s32.totalorder %v432, 0
      %vm495 = vcmp.ne.s32.totalorder %v439, 0
      %vm496 = vcmp.ne.s32.totalorder %v446, 0
      %vm497 = vcmp.ne.s32.totalorder %v453, 0
      %vm498 = vcmp.ne.s32.totalorder %v460, 0
      %vm499 = vcmp.ne.s32.totalorder %v467, 0
      %vm500 = vcmp.lt.s32.totalorder %v250, 0
      %vm501 = vcmp.lt.s32.totalorder %v257, 0
      %vm502 = vcmp.lt.s32.totalorder %v264, 0
      %vm503 = vcmp.lt.s32.totalorder %v271, 0
      %vm504 = vcmp.lt.s32.totalorder %v278, 0
      %vm505 = vcmp.lt.s32.totalorder %v285, 0
      %vm506 = vcmp.lt.s32.totalorder %v292, 0
      %vm507 = vcmp.lt.s32.totalorder %v299, 0
      %vm508 = vcmp.lt.s32.totalorder %v306, 0
      %vm509 = vcmp.lt.s32.totalorder %v313, 0
      %vm510 = vcmp.lt.s32.totalorder %v320, 0
      %vm511 = vcmp.lt.s32.totalorder %v327, 0
      %vm512 = vcmp.lt.s32.totalorder %v334, 0
      %vm513 = vcmp.lt.s32.totalorder %v341, 0
      %vm514 = vcmp.lt.s32.totalorder %v348, 0
      %vm515 = vcmp.lt.s32.totalorder %v355, 0
      %vm516 = vcmp.lt.s32.totalorder %v362, 0
      %vm517 = vcmp.lt.s32.totalorder %v369, 0
      %vm518 = vcmp.lt.s32.totalorder %v376, 0
      %vm519 = vcmp.lt.s32.totalorder %v383, 0
      %vm520 = vcmp.lt.s32.totalorder %v390, 0
      %vm521 = vcmp.lt.s32.totalorder %v397, 0
      %vm522 = vcmp.lt.s32.totalorder %v404, 0
      %vm523 = vcmp.lt.s32.totalorder %v411, 0
      %vm524 = vcmp.lt.s32.totalorder %v418, 0
      %vm525 = vcmp.lt.s32.totalorder %v425, 0
      %vm526 = vcmp.lt.s32.totalorder %v432, 0
      %vm527 = vcmp.lt.s32.totalorder %v439, 0
      %vm528 = vcmp.lt.s32.totalorder %v446, 0
      %vm529 = vcmp.lt.s32.totalorder %v453, 0
      %vm530 = vcmp.lt.s32.totalorder %v460, 0
      %vm531 = vcmp.lt.s32.totalorder %v467, 0
      %vm532 = vmand %vm500, %vm468
      %vm533 = vmand %vm501, %vm469
      %vm534 = vmand %vm502, %vm470
      %vm535 = vmand %vm503, %vm471
      %vm536 = vmand %vm504, %vm472
      %vm537 = vmand %vm505, %vm473
      %vm538 = vmand %vm506, %vm474
      %vm539 = vmand %vm507, %vm475
      %vm540 = vmand %vm508, %vm476
      %vm541 = vmand %vm509, %vm477
      %vm542 = vmand %vm510, %vm478
      %vm543 = vmand %vm511, %vm479
      %vm544 = vmand %vm512, %vm480
      %vm545 = vmand %vm513, %vm481
      %vm546 = vmand %vm514, %vm482
      %vm547 = vmand %vm515, %vm483
      %vm548 = vmand %vm516, %vm484
      %vm549 = vmand %vm517, %vm485
      %vm550 = vmand %vm518, %vm486
      %vm551 = vmand %vm519, %vm487
      %vm552 = vmand %vm520, %vm488
      %vm553 = vmand %vm521, %vm489
      %vm554 = vmand %vm522, %vm490
      %vm555 = vmand %vm523, %vm491
      %vm556 = vmand %vm524, %vm492
      %vm557 = vmand %vm525, %vm493
      %vm558 = vmand %vm526, %vm494
      %vm559 = vmand %vm527, %vm495
      %vm560 = vmand %vm528, %vm496
      %vm561 = vmand %vm529, %vm497
      %vm562 = vmand %vm530, %vm498
      %vm563 = vmand %vm531, %vm499
      %v564 = vadd.s32 %v250, 16
      %v565 = vadd.s32 %v257, 16
      %v566 = vadd.s32 %v264, 16
      %v567 = vadd.s32 %v271, 16
      %v568 = vadd.s32 %v278, 16
      %v569 = vadd.s32 %v285, 16
      %v570 = vadd.s32 %v292, 16
      %v571 = vadd.s32 %v299, 16
      %v572 = vadd.s32 %v306, 16
      %v573 = vadd.s32 %v313, 16
      %v574 = vadd.s32 %v320, 16
      %v575 = vadd.s32 %v327, 16
      %v576 = vadd.s32 %v334, 16
      %v577 = vadd.s32 %v341, 16
      %v578 = vadd.s32 %v348, 16
      %v579 = vadd.s32 %v355, 16
      %v580 = vadd.s32 %v362, 16
      %v581 = vadd.s32 %v369, 16
      %v582 = vadd.s32 %v376, 16
      %v583 = vadd.s32 %v383, 16
      %v584 = vadd.s32 %v390, 16
      %v585 = vadd.s32 %v397, 16
      %v586 = vadd.s32 %v404, 16
      %v587 = vadd.s32 %v411, 16
      %v588 = vadd.s32 %v418, 16
      %v589 = vadd.s32 %v425, 16
      %v590 = vadd.s32 %v432, 16
      %v591 = vadd.s32 %v439, 16
      %v592 = vadd.s32 %v446, 16
      %v593 = vadd.s32 %v453, 16
      %v594 = vadd.s32 %v460, 16
      %v595 = vadd.s32 %v467, 16
      %v596 = vsel %vm532, %v564, %v250
      %v597 = vsel %vm533, %v565, %v257
      %v598 = vsel %vm534, %v566, %v264
      %v599 = vsel %vm535, %v567, %v271
      %v600 = vsel %vm536, %v568, %v278
      %v601 = vsel %vm537, %v569, %v285
      %v602 = vsel %vm538, %v570, %v292
      %v603 = vsel %vm539, %v571, %v299
      %v604 = vsel %vm540, %v572, %v306
      %v605 = vsel %vm541, %v573, %v313
      %v606 = vsel %vm542, %v574, %v320
      %v607 = vsel %vm543, %v575, %v327
      %v608 = vsel %vm544, %v576, %v334
      %v609 = vsel %vm545, %v577, %v341
      %v610 = vsel %vm546, %v578, %v348
      %v611 = vsel %vm547, %v579, %v355
      %v612 = vsel %vm548, %v580, %v362
      %v613 = vsel %vm549, %v581, %v369
      %v614 = vsel %vm550, %v582, %v376
      %v615 = vsel %vm551, %v583, %v383
      %v616 = vsel %vm552, %v584, %v390
      %v617 = vsel %vm553, %v585, %v397
      %v618 = vsel %vm554, %v586, %v404
      %v619 = vsel %vm555, %v587, %v411
      %v620 = vsel %vm556, %v588, %v418
      %v621 = vsel %vm557, %v589, %v425
      %v622 = vsel %vm558, %v590, %v432
      %v623 = vsel %vm559, %v591, %v439
      %v624 = vsel %vm560, %v592, %v446
      %v625 = vsel %vm561, %v593, %v453
      %v626 = vsel %vm562, %v594, %v460
      %v627 = vsel %vm563, %v595, %v467
      %vm628 = vcmp.eq.s32.totalorder %v596, 0
      %vm629 = vcmp.eq.s32.totalorder %v597, 0
      %vm630 = vcmp.eq.s32.totalorder %v598, 0
      %vm631 = vcmp.eq.s32.totalorder %v599, 0
      %vm632 = vcmp.eq.s32.totalorder %v600, 0
      %vm633 = vcmp.eq.s32.totalorder %v601, 0
      %vm634 = vcmp.eq.s32.totalorder %v602, 0
      %vm635 = vcmp.eq.s32.totalorder %v603, 0
      %vm636 = vcmp.eq.s32.totalorder %v604, 0
      %vm637 = vcmp.eq.s32.totalorder %v605, 0
      %vm638 = vcmp.eq.s32.totalorder %v606, 0
      %vm639 = vcmp.eq.s32.totalorder %v607, 0
      %vm640 = vcmp.eq.s32.totalorder %v608, 0
      %vm641 = vcmp.eq.s32.totalorder %v609, 0
      %vm642 = vcmp.eq.s32.totalorder %v610, 0
      %vm643 = vcmp.eq.s32.totalorder %v611, 0
      %vm644 = vcmp.eq.s32.totalorder %v612, 0
      %vm645 = vcmp.eq.s32.totalorder %v613, 0
      %vm646 = vcmp.eq.s32.totalorder %v614, 0
      %vm647 = vcmp.eq.s32.totalorder %v615, 0
      %vm648 = vcmp.eq.s32.totalorder %v616, 0
      %vm649 = vcmp.eq.s32.totalorder %v617, 0
      %vm650 = vcmp.eq.s32.totalorder %v618, 0
      %vm651 = vcmp.eq.s32.totalorder %v619, 0
      %vm652 = vcmp.eq.s32.totalorder %v620, 0
      %vm653 = vcmp.eq.s32.totalorder %v621, 0
      %vm654 = vcmp.eq.s32.totalorder %v622, 0
      %vm655 = vcmp.eq.s32.totalorder %v623, 0
      %vm656 = vcmp.eq.s32.totalorder %v624, 0
      %vm657 = vcmp.eq.s32.totalorder %v625, 0
      %vm658 = vcmp.eq.s32.totalorder %v626, 0
      %vm659 = vcmp.eq.s32.totalorder %v627, 0
      %v660 = vsel %vm628, 1, 0
      %v661 = vsel %vm629, 1, 0
      %v662 = vsel %vm630, 1, 0
      %v663 = vsel %vm631, 1, 0
      %v664 = vsel %vm632, 1, 0
      %v665 = vsel %vm633, 1, 0
      %v666 = vsel %vm634, 1, 0
      %v667 = vsel %vm635, 1, 0
      %v668 = vsel %vm636, 1, 0
      %v669 = vsel %vm637, 1, 0
      %v670 = vsel %vm638, 1, 0
      %v671 = vsel %vm639, 1, 0
      %v672 = vsel %vm640, 1, 0
      %v673 = vsel %vm641, 1, 0
      %v674 = vsel %vm642, 1, 0
      %v675 = vsel %vm643, 1, 0
      %v676 = vsel %vm644, 1, 0
      %v677 = vsel %vm645, 1, 0
      %v678 = vsel %vm646, 1, 0
      %v679 = vsel %vm647, 1, 0
      %v680 = vsel %vm648, 1, 0
      %v681 = vsel %vm649, 1, 0
      %v682 = vsel %vm650, 1, 0
      %v683 = vsel %vm651, 1, 0
      %v684 = vsel %vm652, 1, 0
      %v685 = vsel %vm653, 1, 0
      %v686 = vsel %vm654, 1, 0
      %v687 = vsel %vm655, 1, 0
      %v688 = vsel %vm656, 1, 0
      %v689 = vsel %vm657, 1, 0
      %v690 = vsel %vm658, 1, 0
      %v691 = vsel %vm659, 1, 0
      %vm692 = vcmp.eq.s32.totalorder %v660, 1
      %vm693 = vcmp.eq.s32.totalorder %v661, 1
      %vm694 = vcmp.eq.s32.totalorder %v662, 1
      %vm695 = vcmp.eq.s32.totalorder %v663, 1
      %vm696 = vcmp.eq.s32.totalorder %v664, 1
      %vm697 = vcmp.eq.s32.totalorder %v665, 1
      %vm698 = vcmp.eq.s32.totalorder %v666, 1
      %vm699 = vcmp.eq.s32.totalorder %v667, 1
      %vm700 = vcmp.eq.s32.totalorder %v668, 1
      %vm701 = vcmp.eq.s32.totalorder %v669, 1
      %vm702 = vcmp.eq.s32.totalorder %v670, 1
      %vm703 = vcmp.eq.s32.totalorder %v671, 1
      %vm704 = vcmp.eq.s32.totalorder %v672, 1
      %vm705 = vcmp.eq.s32.totalorder %v673, 1
      %vm706 = vcmp.eq.s32.totalorder %v674, 1
      %vm707 = vcmp.eq.s32.totalorder %v675, 1
      %vm708 = vcmp.eq.s32.totalorder %v676, 1
      %vm709 = vcmp.eq.s32.totalorder %v677, 1
      %vm710 = vcmp.eq.s32.totalorder %v678, 1
      %vm711 = vcmp.eq.s32.totalorder %v679, 1
      %vm712 = vcmp.eq.s32.totalorder %v680, 1
      %vm713 = vcmp.eq.s32.totalorder %v681, 1
      %vm714 = vcmp.eq.s32.totalorder %v682, 1
      %vm715 = vcmp.eq.s32.totalorder %v683, 1
      %vm716 = vcmp.eq.s32.totalorder %v684, 1
      %vm717 = vcmp.eq.s32.totalorder %v685, 1
      %vm718 = vcmp.eq.s32.totalorder %v686, 1
      %vm719 = vcmp.eq.s32.totalorder %v687, 1
      %vm720 = vcmp.eq.s32.totalorder %v688, 1
      %vm721 = vcmp.eq.s32.totalorder %v689, 1
      %vm722 = vcmp.eq.s32.totalorder %v690, 1
      %vm723 = vcmp.eq.s32.totalorder %v691, 1
      %vm724 = vmpackc.low %vm692, %vm692
      %vm725 = vmpackc.low %vm693, %vm693
      %vm726 = vmpackc.low %vm694, %vm694
      %vm727 = vmpackc.low %vm695, %vm695
      %vm728 = vmpackc.low %vm696, %vm696
      %vm729 = vmpackc.low %vm697, %vm697
      %vm730 = vmpackc.low %vm698, %vm698
      %vm731 = vmpackc.low %vm699, %vm699
      %vm732 = vmpackc.low %vm700, %vm700
      %vm733 = vmpackc.low %vm701, %vm701
      %vm734 = vmpackc.low %vm702, %vm702
      %vm735 = vmpackc.low %vm703, %vm703
      %vm736 = vmpackc.low %vm704, %vm704
      %vm737 = vmpackc.low %vm705, %vm705
      %vm738 = vmpackc.low %vm706, %vm706
      %vm739 = vmpackc.low %vm707, %vm707
      %vm740 = vmpackc.low %vm708, %vm708
      %vm741 = vmpackc.low %vm709, %vm709
      %vm742 = vmpackc.low %vm710, %vm710
      %vm743 = vmpackc.low %vm711, %vm711
      %vm744 = vmpackc.low %vm712, %vm712
      %vm745 = vmpackc.low %vm713, %vm713
      %vm746 = vmpackc.low %vm714, %vm714
      %vm747 = vmpackc.low %vm715, %vm715
      %vm748 = vmpackc.low %vm716, %vm716
      %vm749 = vmpackc.low %vm717, %vm717
      %vm750 = vmpackc.low %vm718, %vm718
      %vm751 = vmpackc.low %vm719, %vm719
      %vm752 = vmpackc.low %vm720, %vm720
      %vm753 = vmpackc.low %vm721, %vm721
      %vm754 = vmpackc.low %vm722, %vm722
      %vm755 = vmpackc.low %vm723, %vm723
      %v756 = vsel %vm724, 0, %v174
      %v757 = vsel %vm725, 0, %v175
      %v758 = vsel %vm726, 0, %v176
      %v759 = vsel %vm727, 0, %v177
      %v760 = vsel %vm728, 0, %v178
      %v761 = vsel %vm729, 0, %v179
      %v762 = vsel %vm730, 0, %v180
      %v763 = vsel %vm731, 0, %v181
      %v764 = vsel %vm732, 0, %v182
      %v765 = vsel %vm733, 0, %v183
      %v766 = vsel %vm734, 0, %v184
      %v767 = vsel %vm735, 0, %v185
      %v768 = vsel %vm736, 0, %v186
      %v769 = vsel %vm737, 0, %v187
      %v770 = vsel %vm738, 0, %v188
      %v771 = vsel %vm739, 0, %v189
      %v772 = vsel %vm740, 0, %v190
      %v773 = vsel %vm741, 0, %v191
      %v774 = vsel %vm742, 0, %v192
      %v775 = vsel %vm743, 0, %v193
      %v776 = vsel %vm744, 0, %v194
      %v777 = vsel %vm745, 0, %v195
      %v778 = vsel %vm746, 0, %v196
      %v779 = vsel %vm747, 0, %v197
      %v780 = vsel %vm748, 0, %v198
      %v781 = vsel %vm749, 0, %v199
      %v782 = vsel %vm750, 0, %v200
      %v783 = vsel %vm751, 0, %v201
      %v784 = vsel %vm752, 0, %v202
      %v785 = vsel %vm753, 0, %v203
      %v786 = vsel %vm754, 0, %v204
      %v787 = vsel %vm755, 0, %v205
      %vm788 = vcmp.eq.s32.totalorder %v596, 15
      %vm789 = vcmp.eq.s32.totalorder %v597, 15
      %vm790 = vcmp.eq.s32.totalorder %v598, 15
      %vm791 = vcmp.eq.s32.totalorder %v599, 15
      %vm792 = vcmp.eq.s32.totalorder %v600, 15
      %vm793 = vcmp.eq.s32.totalorder %v601, 15
      %vm794 = vcmp.eq.s32.totalorder %v602, 15
      %vm795 = vcmp.eq.s32.totalorder %v603, 15
      %vm796 = vcmp.eq.s32.totalorder %v604, 15
      %vm797 = vcmp.eq.s32.totalorder %v605, 15
      %vm798 = vcmp.eq.s32.totalorder %v606, 15
      %vm799 = vcmp.eq.s32.totalorder %v607, 15
      %vm800 = vcmp.eq.s32.totalorder %v608, 15
      %vm801 = vcmp.eq.s32.totalorder %v609, 15
      %vm802 = vcmp.eq.s32.totalorder %v610, 15
      %vm803 = vcmp.eq.s32.totalorder %v611, 15
      %vm804 = vcmp.eq.s32.totalorder %v612, 15
      %vm805 = vcmp.eq.s32.totalorder %v613, 15
      %vm806 = vcmp.eq.s32.totalorder %v614, 15
      %vm807 = vcmp.eq.s32.totalorder %v615, 15
      %vm808 = vcmp.eq.s32.totalorder %v616, 15
      %vm809 = vcmp.eq.s32.totalorder %v617, 15
      %vm810 = vcmp.eq.s32.totalorder %v618, 15
      %vm811 = vcmp.eq.s32.totalorder %v619, 15
      %vm812 = vcmp.eq.s32.totalorder %v620, 15
      %vm813 = vcmp.eq.s32.totalorder %v621, 15
      %vm814 = vcmp.eq.s32.totalorder %v622, 15
      %vm815 = vcmp.eq.s32.totalorder %v623, 15
      %vm816 = vcmp.eq.s32.totalorder %v624, 15
      %vm817 = vcmp.eq.s32.totalorder %v625, 15
      %vm818 = vcmp.eq.s32.totalorder %v626, 15
      %vm819 = vcmp.eq.s32.totalorder %v627, 15
      %v820 = vsel %vm788, 1, 0
      %v821 = vsel %vm789, 1, 0
      %v822 = vsel %vm790, 1, 0
      %v823 = vsel %vm791, 1, 0
      %v824 = vsel %vm792, 1, 0
      %v825 = vsel %vm793, 1, 0
      %v826 = vsel %vm794, 1, 0
      %v827 = vsel %vm795, 1, 0
      %v828 = vsel %vm796, 1, 0
      %v829 = vsel %vm797, 1, 0
      %v830 = vsel %vm798, 1, 0
      %v831 = vsel %vm799, 1, 0
      %v832 = vsel %vm800, 1, 0
      %v833 = vsel %vm801, 1, 0
      %v834 = vsel %vm802, 1, 0
      %v835 = vsel %vm803, 1, 0
      %v836 = vsel %vm804, 1, 0
      %v837 = vsel %vm805, 1, 0
      %v838 = vsel %vm806, 1, 0
      %v839 = vsel %vm807, 1, 0
      %v840 = vsel %vm808, 1, 0
      %v841 = vsel %vm809, 1, 0
      %v842 = vsel %vm810, 1, 0
      %v843 = vsel %vm811, 1, 0
      %v844 = vsel %vm812, 1, 0
      %v845 = vsel %vm813, 1, 0
      %v846 = vsel %vm814, 1, 0
      %v847 = vsel %vm815, 1, 0
      %v848 = vsel %vm816, 1, 0
      %v849 = vsel %vm817, 1, 0
      %v850 = vsel %vm818, 1, 0
      %v851 = vsel %vm819, 1, 0
      %vm852 = vcmp.eq.s32.totalorder %v820, 1
      %vm853 = vcmp.eq.s32.totalorder %v821, 1
      %vm854 = vcmp.eq.s32.totalorder %v822, 1
      %vm855 = vcmp.eq.s32.totalorder %v823, 1
      %vm856 = vcmp.eq.s32.totalorder %v824, 1
      %vm857 = vcmp.eq.s32.totalorder %v825, 1
      %vm858 = vcmp.eq.s32.totalorder %v826, 1
      %vm859 = vcmp.eq.s32.totalorder %v827, 1
      %vm860 = vcmp.eq.s32.totalorder %v828, 1
      %vm861 = vcmp.eq.s32.totalorder %v829, 1
      %vm862 = vcmp.eq.s32.totalorder %v830, 1
      %vm863 = vcmp.eq.s32.totalorder %v831, 1
      %vm864 = vcmp.eq.s32.totalorder %v832, 1
      %vm865 = vcmp.eq.s32.totalorder %v833, 1
      %vm866 = vcmp.eq.s32.totalorder %v834, 1
      %vm867 = vcmp.eq.s32.totalorder %v835, 1
      %vm868 = vcmp.eq.s32.totalorder %v836, 1
      %vm869 = vcmp.eq.s32.totalorder %v837, 1
      %vm870 = vcmp.eq.s32.totalorder %v838, 1
      %vm871 = vcmp.eq.s32.totalorder %v839, 1
      %vm872 = vcmp.eq.s32.totalorder %v840, 1
      %vm873 = vcmp.eq.s32.totalorder %v841, 1
      %vm874 = vcmp.eq.s32.totalorder %v842, 1
      %vm875 = vcmp.eq.s32.totalorder %v843, 1
      %vm876 = vcmp.eq.s32.totalorder %v844, 1
      %vm877 = vcmp.eq.s32.totalorder %v845, 1
      %vm878 = vcmp.eq.s32.totalorder %v846, 1
      %vm879 = vcmp.eq.s32.totalorder %v847, 1
      %vm880 = vcmp.eq.s32.totalorder %v848, 1
      %vm881 = vcmp.eq.s32.totalorder %v849, 1
      %vm882 = vcmp.eq.s32.totalorder %v850, 1
      %vm883 = vcmp.eq.s32.totalorder %v851, 1
      %vm884 = vmpackc.low %vm852, %vm852
      %vm885 = vmpackc.low %vm853, %vm853
      %vm886 = vmpackc.low %vm854, %vm854
      %vm887 = vmpackc.low %vm855, %vm855
      %vm888 = vmpackc.low %vm856, %vm856
      %vm889 = vmpackc.low %vm857, %vm857
      %vm890 = vmpackc.low %vm858, %vm858
      %vm891 = vmpackc.low %vm859, %vm859
      %vm892 = vmpackc.low %vm860, %vm860
      %vm893 = vmpackc.low %vm861, %vm861
      %vm894 = vmpackc.low %vm862, %vm862
      %vm895 = vmpackc.low %vm863, %vm863
      %vm896 = vmpackc.low %vm864, %vm864
      %vm897 = vmpackc.low %vm865, %vm865
      %vm898 = vmpackc.low %vm866, %vm866
      %vm899 = vmpackc.low %vm867, %vm867
      %vm900 = vmpackc.low %vm868, %vm868
      %vm901 = vmpackc.low %vm869, %vm869
      %vm902 = vmpackc.low %vm870, %vm870
      %vm903 = vmpackc.low %vm871, %vm871
      %vm904 = vmpackc.low %vm872, %vm872
      %vm905 = vmpackc.low %vm873, %vm873
      %vm906 = vmpackc.low %vm874, %vm874
      %vm907 = vmpackc.low %vm875, %vm875
      %vm908 = vmpackc.low %vm876, %vm876
      %vm909 = vmpackc.low %vm877, %vm877
      %vm910 = vmpackc.low %vm878, %vm878
      %vm911 = vmpackc.low %vm879, %vm879
      %vm912 = vmpackc.low %vm880, %vm880
      %vm913 = vmpackc.low %vm881, %vm881
      %vm914 = vmpackc.low %vm882, %vm882
      %vm915 = vmpackc.low %vm883, %vm883
      %v916 = vsel %vm884, 65537, 0
      %v917 = vsel %vm885, 65537, 0
      %v918 = vsel %vm886, 65537, 0
      %v919 = vsel %vm887, 65537, 0
      %v920 = vsel %vm888, 65537, 0
      %v921 = vsel %vm889, 65537, 0
      %v922 = vsel %vm890, 65537, 0
      %v923 = vsel %vm891, 65537, 0
      %v924 = vsel %vm892, 65537, 0
      %v925 = vsel %vm893, 65537, 0
      %v926 = vsel %vm894, 65537, 0
      %v927 = vsel %vm895, 65537, 0
      %v928 = vsel %vm896, 65537, 0
      %v929 = vsel %vm897, 65537, 0
      %v930 = vsel %vm898, 65537, 0
      %v931 = vsel %vm899, 65537, 0
      %v932 = vsel %vm900, 65537, 0
      %v933 = vsel %vm901, 65537, 0
      %v934 = vsel %vm902, 65537, 0
      %v935 = vsel %vm903, 65537, 0
      %v936 = vsel %vm904, 65537, 0
      %v937 = vsel %vm905, 65537, 0
      %v938 = vsel %vm906, 65537, 0
      %v939 = vsel %vm907, 65537, 0
      %v940 = vsel %vm908, 65537, 0
      %v941 = vsel %vm909, 65537, 0
      %v942 = vsel %vm910, 65537, 0
      %v943 = vsel %vm911, 65537, 0
      %v944 = vsel %vm912, 65537, 0
      %v945 = vsel %vm913, 65537, 0
      %v946 = vsel %vm914, 65537, 0
      %v947 = vsel %vm915, 65537, 0
      %vm948 = vcmask 1040384
      %vm949 = vcmask 1044484
      %vm950 = vmor %vm948, %vm949
      %v951 = vrot.slane %v916, 7
      %v952 = vrot.slane %v951, 4
      %v953 = vrot.slane %v917, 7
      %v954 = vsel %vm950, %v952, %v953
      %v955 = vrot.slane %v953, 4
      %v956 = vrot.slane %v918, 7
      %v957 = vsel %vm950, %v955, %v956
      %v958 = vrot.slane %v956, 4
      %v959 = vrot.slane %v919, 7
      %v960 = vsel %vm950, %v958, %v959
      %v961 = vrot.slane %v959, 4
      %v962 = vrot.slane %v920, 7
      %v963 = vsel %vm950, %v961, %v962
      %v964 = vrot.slane %v962, 4
      %v965 = vrot.slane %v921, 7
      %v966 = vsel %vm950, %v964, %v965
      %v967 = vrot.slane %v965, 4
      %v968 = vrot.slane %v922, 7
      %v969 = vsel %vm950, %v967, %v968
      %v970 = vrot.slane %v968, 4
      %v971 = vrot.slane %v923, 7
      %v972 = vsel %vm950, %v970, %v971
      %v973 = vrot.slane %v971, 4
      %v974 = vrot.slane %v924, 7
      %v975 = vsel %vm950, %v973, %v974
      %v976 = vrot.slane %v974, 4
      %v977 = vrot.slane %v925, 7
      %v978 = vsel %vm950, %v976, %v977
      %v979 = vrot.slane %v977, 4
      %v980 = vrot.slane %v926, 7
      %v981 = vsel %vm950, %v979, %v980
      %v982 = vrot.slane %v980, 4
      %v983 = vrot.slane %v927, 7
      %v984 = vsel %vm950, %v982, %v983
      %v985 = vrot.slane %v983, 4
      %v986 = vrot.slane %v928, 7
      %v987 = vsel %vm950, %v985, %v986
      %v988 = vrot.slane %v986, 4
      %v989 = vrot.slane %v929, 7
      %v990 = vsel %vm950, %v988, %v989
      %v991 = vrot.slane %v989, 4
      %v992 = vrot.slane %v930, 7
      %v993 = vsel %vm950, %v991, %v992
      %v994 = vrot.slane %v992, 4
      %v995 = vrot.slane %v931, 7
      %v996 = vsel %vm950, %v994, %v995
      %v997 = vrot.slane %v995, 4
      %v998 = vrot.slane %v932, 7
      %v999 = vsel %vm950, %v997, %v998
      %v1000 = vrot.slane %v998, 4
      %v1001 = vrot.slane %v933, 7
      %v1002 = vsel %vm950, %v1000, %v1001
      %v1003 = vrot.slane %v1001, 4
      %v1004 = vrot.slane %v934, 7
      %v1005 = vsel %vm950, %v1003, %v1004
      %v1006 = vrot.slane %v1004, 4
      %v1007 = vrot.slane %v935, 7
      %v1008 = vsel %vm950, %v1006, %v1007
      %v1009 = vrot.slane %v1007, 4
      %v1010 = vrot.slane %v936, 7
      %v1011 = vsel %vm950, %v1009, %v1010
      %v1012 = vrot.slane %v1010, 4
      %v1013 = vrot.slane %v937, 7
      %v1014 = vsel %vm950, %v1012, %v1013
      %v1015 = vrot.slane %v1013, 4
      %v1016 = vrot.slane %v938, 7
      %v1017 = vsel %vm950, %v1015, %v1016
      %v1018 = vrot.slane %v1016, 4
      %v1019 = vrot.slane %v939, 7
      %v1020 = vsel %vm950, %v1018, %v1019
      %v1021 = vrot.slane %v1019, 4
      %v1022 = vrot.slane %v940, 7
      %v1023 = vsel %vm950, %v1021, %v1022
      %v1024 = vrot.slane %v1022, 4
      %v1025 = vrot.slane %v941, 7
      %v1026 = vsel %vm950, %v1024, %v1025
      %v1027 = vrot.slane %v1025, 4
      %v1028 = vrot.slane %v942, 7
      %v1029 = vsel %vm950, %v1027, %v1028
      %v1030 = vrot.slane %v1028, 4
      %v1031 = vrot.slane %v943, 7
      %v1032 = vsel %vm950, %v1030, %v1031
      %v1033 = vrot.slane %v1031, 4
      %v1034 = vrot.slane %v944, 7
      %v1035 = vsel %vm950, %v1033, %v1034
      %v1036 = vrot.slane %v1034, 4
      %v1037 = vrot.slane %v945, 7
      %v1038 = vsel %vm950, %v1036, %v1037
      %v1039 = vrot.slane %v1037, 4
      %v1040 = vrot.slane %v946, 7
      %v1041 = vsel %vm950, %v1039, %v1040
      %v1042 = vrot.slane %v1040, 4
      %v1043 = vrot.slane %v947, 7
      %v1044 = vsel %vm950, %v1042, %v1043
      %v1045 = vrot.slane %v1043, 4
      %vm1046 = vcmp.ne.s16.totalorder %v951, 0
      %vm1047 = vcmp.ne.s16.totalorder %v954, 0
      %vm1048 = vcmp.ne.s16.totalorder %v957, 0
      %vm1049 = vcmp.ne.s16.totalorder %v960, 0
      %vm1050 = vcmp.ne.s16.totalorder %v963, 0
      %vm1051 = vcmp.ne.s16.totalorder %v966, 0
      %vm1052 = vcmp.ne.s16.totalorder %v969, 0
      %vm1053 = vcmp.ne.s16.totalorder %v972, 0
      %vm1054 = vcmp.ne.s16.totalorder %v975, 0
      %vm1055 = vcmp.ne.s16.totalorder %v978, 0
      %vm1056 = vcmp.ne.s16.totalorder %v981, 0
      %vm1057 = vcmp.ne.s16.totalorder %v984, 0
      %vm1058 = vcmp.ne.s16.totalorder %v987, 0
      %vm1059 = vcmp.ne.s16.totalorder %v990, 0
      %vm1060 = vcmp.ne.s16.totalorder %v993, 0
      %vm1061 = vcmp.ne.s16.totalorder %v996, 0
      %vm1062 = vcmp.ne.s16.totalorder %v999, 0
      %vm1063 = vcmp.ne.s16.totalorder %v1002, 0
      %vm1064 = vcmp.ne.s16.totalorder %v1005, 0
      %vm1065 = vcmp.ne.s16.totalorder %v1008, 0
      %vm1066 = vcmp.ne.s16.totalorder %v1011, 0
      %vm1067 = vcmp.ne.s16.totalorder %v1014, 0
      %vm1068 = vcmp.ne.s16.totalorder %v1017, 0
      %vm1069 = vcmp.ne.s16.totalorder %v1020, 0
      %vm1070 = vcmp.ne.s16.totalorder %v1023, 0
      %vm1071 = vcmp.ne.s16.totalorder %v1026, 0
      %vm1072 = vcmp.ne.s16.totalorder %v1029, 0
      %vm1073 = vcmp.ne.s16.totalorder %v1032, 0
      %vm1074 = vcmp.ne.s16.totalorder %v1035, 0
      %vm1075 = vcmp.ne.s16.totalorder %v1038, 0
      %vm1076 = vcmp.ne.s16.totalorder %v1041, 0
      %vm1077 = vcmp.ne.s16.totalorder %v1044, 0
      %vm1078 = vcmp.ne.s16.totalorder %v1045, 0
      %v1079 = vsel %vm1046, 0, %v174
      %v1080 = vsel %vm1047, 0, %v175
      %v1081 = vsel %vm1048, 0, %v176
      %v1082 = vsel %vm1049, 0, %v177
      %v1083 = vsel %vm1050, 0, %v178
      %v1084 = vsel %vm1051, 0, %v179
      %v1085 = vsel %vm1052, 0, %v180
      %v1086 = vsel %vm1053, 0, %v181
      %v1087 = vsel %vm1054, 0, %v182
      %v1088 = vsel %vm1055, 0, %v183
      %v1089 = vsel %vm1056, 0, %v184
      %v1090 = vsel %vm1057, 0, %v185
      %v1091 = vsel %vm1058, 0, %v186
      %v1092 = vsel %vm1059, 0, %v187
      %v1093 = vsel %vm1060, 0, %v188
      %v1094 = vsel %vm1061, 0, %v189
      %v1095 = vsel %vm1062, 0, %v190
      %v1096 = vsel %vm1063, 0, %v191
      %v1097 = vsel %vm1064, 0, %v192
      %v1098 = vsel %vm1065, 0, %v193
      %v1099 = vsel %vm1066, 0, %v194
      %v1100 = vsel %vm1067, 0, %v195
      %v1101 = vsel %vm1068, 0, %v196
      %v1102 = vsel %vm1069, 0, %v197
      %v1103 = vsel %vm1070, 0, %v198
      %v1104 = vsel %vm1071, 0, %v199
      %v1105 = vsel %vm1072, 0, %v200
      %v1106 = vsel %vm1073, 0, %v201
      %v1107 = vsel %vm1074, 0, %v202
      %v1108 = vsel %vm1075, 0, %v203
      %v1109 = vsel %vm1076, 0, %v204
      %v1110 = vsel %vm1077, 0, %v205
      %v1111 = vsel %vm1078, 0, %v206
      %v1112 = vsel %vm724, 0, %v176
      %v1113 = vsel %vm725, 0, %v177
      %v1114 = vsel %vm726, 0, %v178
      %v1115 = vsel %vm727, 0, %v179
      %v1116 = vsel %vm728, 0, %v180
      %v1117 = vsel %vm729, 0, %v181
      %v1118 = vsel %vm730, 0, %v182
      %v1119 = vsel %vm731, 0, %v183
      %v1120 = vsel %vm732, 0, %v184
      %v1121 = vsel %vm733, 0, %v185
      %v1122 = vsel %vm734, 0, %v186
      %v1123 = vsel %vm735, 0, %v187
      %v1124 = vsel %vm736, 0, %v188
      %v1125 = vsel %vm737, 0, %v189
      %v1126 = vsel %vm738, 0, %v190
      %v1127 = vsel %vm739, 0, %v191
      %v1128 = vsel %vm740, 0, %v192
      %v1129 = vsel %vm741, 0, %v193
      %v1130 = vsel %vm742, 0, %v194
      %v1131 = vsel %vm743, 0, %v195
      %v1132 = vsel %vm744, 0, %v196
      %v1133 = vsel %vm745, 0, %v197
      %v1134 = vsel %vm746, 0, %v198
      %v1135 = vsel %vm747, 0, %v199
      %v1136 = vsel %vm748, 0, %v200
      %v1137 = vsel %vm749, 0, %v201
      %v1138 = vsel %vm750, 0, %v202
      %v1139 = vsel %vm751, 0, %v203
      %v1140 = vsel %vm752, 0, %v204
      %v1141 = vsel %vm753, 0, %v205
      %v1142 = vsel %vm754, 0, %v206
      %v1143 = vsel %vm755, 0, %v207
      %v1144 = vsel %vm1046, 0, %v176
      %v1145 = vsel %vm1047, 0, %v177
      %v1146 = vsel %vm1048, 0, %v178
      %v1147 = vsel %vm1049, 0, %v179
      %v1148 = vsel %vm1050, 0, %v180
      %v1149 = vsel %vm1051, 0, %v181
      %v1150 = vsel %vm1052, 0, %v182
      %v1151 = vsel %vm1053, 0, %v183
      %v1152 = vsel %vm1054, 0, %v184
      %v1153 = vsel %vm1055, 0, %v185
      %v1154 = vsel %vm1056, 0, %v186
      %v1155 = vsel %vm1057, 0, %v187
      %v1156 = vsel %vm1058, 0, %v188
      %v1157 = vsel %vm1059, 0, %v189
      %v1158 = vsel %vm1060, 0, %v190
      %v1159 = vsel %vm1061, 0, %v191
      %v1160 = vsel %vm1062, 0, %v192
      %v1161 = vsel %vm1063, 0, %v193
      %v1162 = vsel %vm1064, 0, %v194
      %v1163 = vsel %vm1065, 0, %v195
      %v1164 = vsel %vm1066, 0, %v196
      %v1165 = vsel %vm1067, 0, %v197
      %v1166 = vsel %vm1068, 0, %v198
      %v1167 = vsel %vm1069, 0, %v199
      %v1168 = vsel %vm1070, 0, %v200
      %v1169 = vsel %vm1071, 0, %v201
      %v1170 = vsel %vm1072, 0, %v202
      %v1171 = vsel %vm1073, 0, %v203
      %v1172 = vsel %vm1074, 0, %v204
      %v1173 = vsel %vm1075, 0, %v205
      %v1174 = vsel %vm1076, 0, %v206
      %v1175 = vsel %vm1077, 0, %v207
      %v1176 = vsel %vm1078, 0, %v208
      %v1177 = vsel %vm724, 0, %v178
      %v1178 = vsel %vm725, 0, %v179
      %v1179 = vsel %vm726, 0, %v180
      %v1180 = vsel %vm727, 0, %v181
      %v1181 = vsel %vm728, 0, %v182
      %v1182 = vsel %vm729, 0, %v183
      %v1183 = vsel %vm730, 0, %v184
      %v1184 = vsel %vm731, 0, %v185
      %v1185 = vsel %vm732, 0, %v186
      %v1186 = vsel %vm733, 0, %v187
      %v1187 = vsel %vm734, 0, %v188
      %v1188 = vsel %vm735, 0, %v189
      %v1189 = vsel %vm736, 0, %v190
      %v1190 = vsel %vm737, 0, %v191
      %v1191 = vsel %vm738, 0, %v192
      %v1192 = vsel %vm739, 0, %v193
      %v1193 = vsel %vm740, 0, %v194
      %v1194 = vsel %vm741, 0, %v195
      %v1195 = vsel %vm742, 0, %v196
      %v1196 = vsel %vm743, 0, %v197
      %v1197 = vsel %vm744, 0, %v198
      %v1198 = vsel %vm745, 0, %v199
      %v1199 = vsel %vm746, 0, %v200
      %v1200 = vsel %vm747, 0, %v201
      %v1201 = vsel %vm748, 0, %v202
      %v1202 = vsel %vm749, 0, %v203
      %v1203 = vsel %vm750, 0, %v204
      %v1204 = vsel %vm751, 0, %v205
      %v1205 = vsel %vm752, 0, %v206
      %v1206 = vsel %vm753, 0, %v207
      %v1207 = vsel %vm754, 0, %v208
      %v1208 = vsel %vm755, 0, %v209
      %v1209 = vsel %vm1046, 0, %v178
      %v1210 = vsel %vm1047, 0, %v179
      %v1211 = vsel %vm1048, 0, %v180
      %v1212 = vsel %vm1049, 0, %v181
      %v1213 = vsel %vm1050, 0, %v182
      %v1214 = vsel %vm1051, 0, %v183
      %v1215 = vsel %vm1052, 0, %v184
      %v1216 = vsel %vm1053, 0, %v185
      %v1217 = vsel %vm1054, 0, %v186
      %v1218 = vsel %vm1055, 0, %v187
      %v1219 = vsel %vm1056, 0, %v188
      %v1220 = vsel %vm1057, 0, %v189
      %v1221 = vsel %vm1058, 0, %v190
      %v1222 = vsel %vm1059, 0, %v191
      %v1223 = vsel %vm1060, 0, %v192
      %v1224 = vsel %vm1061, 0, %v193
      %v1225 = vsel %vm1062, 0, %v194
      %v1226 = vsel %vm1063, 0, %v195
      %v1227 = vsel %vm1064, 0, %v196
      %v1228 = vsel %vm1065, 0, %v197
      %v1229 = vsel %vm1066, 0, %v198
      %v1230 = vsel %vm1067, 0, %v199
      %v1231 = vsel %vm1068, 0, %v200
      %v1232 = vsel %vm1069, 0, %v201
      %v1233 = vsel %vm1070, 0, %v202
      %v1234 = vsel %vm1071, 0, %v203
      %v1235 = vsel %vm1072, 0, %v204
      %v1236 = vsel %vm1073, 0, %v205
      %v1237 = vsel %vm1074, 0, %v206
      %v1238 = vsel %vm1075, 0, %v207
      %v1239 = vsel %vm1076, 0, %v208
      %v1240 = vsel %vm1077, 0, %v209
      %v1241 = vsel %vm1078, 0, %v210
      %v1274 = vunpack.c.l.b16 %v756
      %v1275 = vunpack.c.l.b16 %v757
      %v1276 = vunpack.c.l.b16 %v758
      %v1277 = vunpack.c.l.b16 %v759
      %v1278 = vunpack.c.l.b16 %v760
      %v1279 = vunpack.c.l.b16 %v761
      %v1280 = vunpack.c.l.b16 %v762
      %v1281 = vunpack.c.l.b16 %v763
      %v1282 = vunpack.c.l.b16 %v764
      %v1283 = vunpack.c.l.b16 %v765
      %v1284 = vunpack.c.l.b16 %v766
      %v1285 = vunpack.c.l.b16 %v767
      %v1286 = vunpack.c.l.b16 %v768
      %v1287 = vunpack.c.l.b16 %v769
      %v1288 = vunpack.c.l.b16 %v770
      %v1289 = vunpack.c.l.b16 %v771
      %v1290 = vunpack.c.l.b16 %v772
      %v1291 = vunpack.c.l.b16 %v773
      %v1292 = vunpack.c.l.b16 %v774
      %v1293 = vunpack.c.l.b16 %v775
      %v1294 = vunpack.c.l.b16 %v776
      %v1295 = vunpack.c.l.b16 %v777
      %v1296 = vunpack.c.l.b16 %v778
      %v1297 = vunpack.c.l.b16 %v779
      %v1298 = vunpack.c.l.b16 %v780
      %v1299 = vunpack.c.l.b16 %v781
      %v1300 = vunpack.c.l.b16 %v782
      %v1301 = vunpack.c.l.b16 %v783
      %v1302 = vunpack.c.l.b16 %v784
      %v1303 = vunpack.c.l.b16 %v785
      %v1304 = vunpack.c.l.b16 %v786
      %v1305 = vunpack.c.l.b16 %v787
      %v1306 = vpack.c.b16 %v1275, %v1274
      %v1307 = vpack.c.b16 %v1277, %v1276
      %v1308 = vpack.c.b16 %v1279, %v1278
      %v1309 = vpack.c.b16 %v1281, %v1280
      %v1310 = vpack.c.b16 %v1283, %v1282
      %v1311 = vpack.c.b16 %v1285, %v1284
      %v1312 = vpack.c.b16 %v1287, %v1286
      %v1313 = vpack.c.b16 %v1289, %v1288
      %v1314 = vpack.c.b16 %v1291, %v1290
      %v1315 = vpack.c.b16 %v1293, %v1292
      %v1316 = vpack.c.b16 %v1295, %v1294
      %v1317 = vpack.c.b16 %v1297, %v1296
      %v1318 = vpack.c.b16 %v1299, %v1298
      %v1319 = vpack.c.b16 %v1301, %v1300
      %v1320 = vpack.c.b16 %v1303, %v1302
      %v1321 = vpack.c.b16 %v1305, %v1304
      %v1355 = vunpack.c.l.b16 %v174
      %v1356 = vunpack.c.l.b16 %v175
      %v1357 = vunpack.c.l.b16 %v176
      %v1358 = vunpack.c.l.b16 %v177
      %v1359 = vunpack.c.l.b16 %v178
      %v1360 = vunpack.c.l.b16 %v179
      %v1361 = vunpack.c.l.b16 %v180
      %v1362 = vunpack.c.l.b16 %v181
      %v1363 = vunpack.c.l.b16 %v182
      %v1364 = vunpack.c.l.b16 %v183
      %v1365 = vunpack.c.l.b16 %v184
      %v1366 = vunpack.c.l.b16 %v185
      %v1367 = vunpack.c.l.b16 %v186
      %v1368 = vunpack.c.l.b16 %v187
      %v1369 = vunpack.c.l.b16 %v188
      %v1370 = vunpack.c.l.b16 %v189
      %v1371 = vunpack.c.l.b16 %v190
      %v1372 = vunpack.c.l.b16 %v191
      %v1373 = vunpack.c.l.b16 %v192
      %v1374 = vunpack.c.l.b16 %v193
      %v1375 = vunpack.c.l.b16 %v194
      %v1376 = vunpack.c.l.b16 %v195
      %v1377 = vunpack.c.l.b16 %v196
      %v1378 = vunpack.c.l.b16 %v197
      %v1379 = vunpack.c.l.b16 %v198
      %v1380 = vunpack.c.l.b16 %v199
      %v1381 = vunpack.c.l.b16 %v200
      %v1382 = vunpack.c.l.b16 %v201
      %v1383 = vunpack.c.l.b16 %v202
      %v1384 = vunpack.c.l.b16 %v203
      %v1385 = vunpack.c.l.b16 %v204
      %v1386 = vunpack.c.l.b16 %v205
      %v1387 = vunpack.c.l.b16 %v206
      %v1388 = vpack.c.b16 %v1356, %v1355
      %v1389 = vpack.c.b16 %v1358, %v1357
      %v1390 = vpack.c.b16 %v1360, %v1359
      %v1391 = vpack.c.b16 %v1362, %v1361
      %v1392 = vpack.c.b16 %v1364, %v1363
      %v1393 = vpack.c.b16 %v1366, %v1365
      %v1394 = vpack.c.b16 %v1368, %v1367
      %v1395 = vpack.c.b16 %v1370, %v1369
      %v1396 = vpack.c.b16 %v1372, %v1371
      %v1397 = vpack.c.b16 %v1374, %v1373
      %v1398 = vpack.c.b16 %v1376, %v1375
      %v1399 = vpack.c.b16 %v1378, %v1377
      %v1400 = vpack.c.b16 %v1380, %v1379
      %v1401 = vpack.c.b16 %v1382, %v1381
      %v1402 = vpack.c.b16 %v1384, %v1383
      %v1403 = vpack.c.b16 %v1386, %v1385
      %v1404 = vpack.c.b16 %v1387, %v1387
      %vm1405 = vsmask.f32 7424
      %v1407 = vshrl.u32 %v1388, 16
      %v1409 = vshll.u32 %v1388, 16
      %v1411 = vrot.slane %v1409, 1
      %v1412 = vor.u32 %v1407, %v1411
      %v1414 = vshll.u32 %v1389, 16
      %v1416 = vrot.slane %v1414, 1
      %v1417 = vsel %vm1405, %v1412, %v1416
      %v1418 = vshrl.u32 %v1389, 16
      %v1420 = vor.u32 %v1418, %v1416
      %v1422 = vshll.u32 %v1390, 16
      %v1424 = vrot.slane %v1422, 1
      %v1425 = vsel %vm1405, %v1420, %v1424
      %v1426 = vshrl.u32 %v1390, 16
      %v1428 = vor.u32 %v1426, %v1424
      %v1430 = vshll.u32 %v1391, 16
      %v1432 = vrot.slane %v1430, 1
      %v1433 = vsel %vm1405, %v1428, %v1432
      %v1434 = vshrl.u32 %v1391, 16
      %v1436 = vor.u32 %v1434, %v1432
      %v1438 = vshll.u32 %v1392, 16
      %v1440 = vrot.slane %v1438, 1
      %v1441 = vsel %vm1405, %v1436, %v1440
      %v1442 = vshrl.u32 %v1392, 16
      %v1444 = vor.u32 %v1442, %v1440
      %v1446 = vshll.u32 %v1393, 16
      %v1448 = vrot.slane %v1446, 1
      %v1449 = vsel %vm1405, %v1444, %v1448
      %v1450 = vshrl.u32 %v1393, 16
      %v1452 = vor.u32 %v1450, %v1448
      %v1454 = vshll.u32 %v1394, 16
      %v1456 = vrot.slane %v1454, 1
      %v1457 = vsel %vm1405, %v1452, %v1456
      %v1458 = vshrl.u32 %v1394, 16
      %v1460 = vor.u32 %v1458, %v1456
      %v1462 = vshll.u32 %v1395, 16
      %v1464 = vrot.slane %v1462, 1
      %v1465 = vsel %vm1405, %v1460, %v1464
      %v1466 = vshrl.u32 %v1395, 16
      %v1468 = vor.u32 %v1466, %v1464
      %v1470 = vshll.u32 %v1396, 16
      %v1472 = vrot.slane %v1470, 1
      %v1473 = vsel %vm1405, %v1468, %v1472
      %v1474 = vshrl.u32 %v1396, 16
      %v1476 = vor.u32 %v1474, %v1472
      %v1478 = vshll.u32 %v1397, 16
      %v1480 = vrot.slane %v1478, 1
      %v1481 = vsel %vm1405, %v1476, %v1480
      %v1482 = vshrl.u32 %v1397, 16
      %v1484 = vor.u32 %v1482, %v1480
      %v1486 = vshll.u32 %v1398, 16
      %v1488 = vrot.slane %v1486, 1
      %v1489 = vsel %vm1405, %v1484, %v1488
      %v1490 = vshrl.u32 %v1398, 16
      %v1492 = vor.u32 %v1490, %v1488
      %v1494 = vshll.u32 %v1399, 16
      %v1496 = vrot.slane %v1494, 1
      %v1497 = vsel %vm1405, %v1492, %v1496
      %v1498 = vshrl.u32 %v1399, 16
      %v1500 = vor.u32 %v1498, %v1496
      %v1502 = vshll.u32 %v1400, 16
      %v1504 = vrot.slane %v1502, 1
      %v1505 = vsel %vm1405, %v1500, %v1504
      %v1506 = vshrl.u32 %v1400, 16
      %v1508 = vor.u32 %v1506, %v1504
      %v1510 = vshll.u32 %v1401, 16
      %v1512 = vrot.slane %v1510, 1
      %v1513 = vsel %vm1405, %v1508, %v1512
      %v1514 = vshrl.u32 %v1401, 16
      %v1516 = vor.u32 %v1514, %v1512
      %v1518 = vshll.u32 %v1402, 16
      %v1520 = vrot.slane %v1518, 1
      %v1521 = vsel %vm1405, %v1516, %v1520
      %v1522 = vshrl.u32 %v1402, 16
      %v1524 = vor.u32 %v1522, %v1520
      %v1526 = vshll.u32 %v1403, 16
      %v1528 = vrot.slane %v1526, 1
      %v1529 = vsel %vm1405, %v1524, %v1528
      %v1530 = vshrl.u32 %v1403, 16
      %v1532 = vor.u32 %v1530, %v1528
      %v1534 = vshll.u32 %v1404, 16
      %v1536 = vrot.slane %v1534, 1
      %v1537 = vsel %vm1405, %v1532, %v1536
      %1538 = vrot.lane.b32.xlu0 %v1417, 3
      %v1539 = vpop.permute.xlu0 %1538
      %1540 = vrot.lane.b32.xlu0 %v1425, 3
      %v1541 = vpop.permute.xlu0 %1540
      %1542 = vrot.lane.b32.xlu0 %v1433, 3
      %v1543 = vpop.permute.xlu0 %1542
      %1544 = vrot.lane.b32.xlu0 %v1441, 3
      %v1545 = vpop.permute.xlu0 %1544
      %1546 = vrot.lane.b32.xlu0 %v1449, 3
      %v1547 = vpop.permute.xlu0 %1546
      %1548 = vrot.lane.b32.xlu0 %v1457, 3
      %v1549 = vpop.permute.xlu0 %1548
      %1550 = vrot.lane.b32.xlu0 %v1465, 3
      %v1551 = vpop.permute.xlu0 %1550
      %1552 = vrot.lane.b32.xlu0 %v1473, 3
      %v1553 = vpop.permute.xlu0 %1552
      %1554 = vrot.lane.b32.xlu0 %v1481, 3
      %v1555 = vpop.permute.xlu0 %1554
      %1556 = vrot.lane.b32.xlu0 %v1489, 3
      %v1557 = vpop.permute.xlu0 %1556
      %1558 = vrot.lane.b32.xlu0 %v1497, 3
      %v1559 = vpop.permute.xlu0 %1558
      %1560 = vrot.lane.b32.xlu0 %v1505, 3
      %v1561 = vpop.permute.xlu0 %1560
      %1562 = vrot.lane.b32.xlu0 %v1513, 3
      %v1563 = vpop.permute.xlu0 %1562
      %1564 = vrot.lane.b32.xlu0 %v1521, 3
      %v1565 = vpop.permute.xlu0 %1564
      %1566 = vrot.lane.b32.xlu0 %v1529, 3
      %v1567 = vpop.permute.xlu0 %1566
      %1568 = vrot.lane.b32.xlu0 %v1537, 3
      %v1569 = vpop.permute.xlu0 %1568
      %v1603 = vunpack.c.l.b16 %v1079
      %v1604 = vunpack.c.l.b16 %v1080
      %v1605 = vunpack.c.l.b16 %v1081
      %v1606 = vunpack.c.l.b16 %v1082
      %v1607 = vunpack.c.l.b16 %v1083
      %v1608 = vunpack.c.l.b16 %v1084
      %v1609 = vunpack.c.l.b16 %v1085
      %v1610 = vunpack.c.l.b16 %v1086
      %v1611 = vunpack.c.l.b16 %v1087
      %v1612 = vunpack.c.l.b16 %v1088
      %v1613 = vunpack.c.l.b16 %v1089
      %v1614 = vunpack.c.l.b16 %v1090
      %v1615 = vunpack.c.l.b16 %v1091
      %v1616 = vunpack.c.l.b16 %v1092
      %v1617 = vunpack.c.l.b16 %v1093
      %v1618 = vunpack.c.l.b16 %v1094
      %v1619 = vunpack.c.l.b16 %v1095
      %v1620 = vunpack.c.l.b16 %v1096
      %v1621 = vunpack.c.l.b16 %v1097
      %v1622 = vunpack.c.l.b16 %v1098
      %v1623 = vunpack.c.l.b16 %v1099
      %v1624 = vunpack.c.l.b16 %v1100
      %v1625 = vunpack.c.l.b16 %v1101
      %v1626 = vunpack.c.l.b16 %v1102
      %v1627 = vunpack.c.l.b16 %v1103
      %v1628 = vunpack.c.l.b16 %v1104
      %v1629 = vunpack.c.l.b16 %v1105
      %v1630 = vunpack.c.l.b16 %v1106
      %v1631 = vunpack.c.l.b16 %v1107
      %v1632 = vunpack.c.l.b16 %v1108
      %v1633 = vunpack.c.l.b16 %v1109
      %v1634 = vunpack.c.l.b16 %v1110
      %v1635 = vunpack.c.l.b16 %v1111
      %v1636 = vpack.c.b16 %v1604, %v1603
      %v1637 = vpack.c.b16 %v1606, %v1605
      %v1638 = vpack.c.b16 %v1608, %v1607
      %v1639 = vpack.c.b16 %v1610, %v1609
      %v1640 = vpack.c.b16 %v1612, %v1611
      %v1641 = vpack.c.b16 %v1614, %v1613
      %v1642 = vpack.c.b16 %v1616, %v1615
      %v1643 = vpack.c.b16 %v1618, %v1617
      %v1644 = vpack.c.b16 %v1620, %v1619
      %v1645 = vpack.c.b16 %v1622, %v1621
      %v1646 = vpack.c.b16 %v1624, %v1623
      %v1647 = vpack.c.b16 %v1626, %v1625
      %v1648 = vpack.c.b16 %v1628, %v1627
      %v1649 = vpack.c.b16 %v1630, %v1629
      %v1650 = vpack.c.b16 %v1632, %v1631
      %v1651 = vpack.c.b16 %v1634, %v1633
      %v1652 = vpack.c.b16 %v1635, %v1635
      %vm1653 = vcmask 1046528
      %v1654 = vrot.slane %v1636, 1
      %v1655 = vrot.slane %v1637, 1
      %v1656 = vsel %vm1653, %v1654, %v1655
      %v1657 = vrot.slane %v1638, 1
      %v1658 = vsel %vm1653, %v1655, %v1657
      %v1659 = vrot.slane %v1639, 1
      %v1660 = vsel %vm1653, %v1657, %v1659
      %v1661 = vrot.slane %v1640, 1
      %v1662 = vsel %vm1653, %v1659, %v1661
      %v1663 = vrot.slane %v1641, 1
      %v1664 = vsel %vm1653, %v1661, %v1663
      %v1665 = vrot.slane %v1642, 1
      %v1666 = vsel %vm1653, %v1663, %v1665
      %v1667 = vrot.slane %v1643, 1
      %v1668 = vsel %vm1653, %v1665, %v1667
      %v1669 = vrot.slane %v1644, 1
      %v1670 = vsel %vm1653, %v1667, %v1669
      %v1671 = vrot.slane %v1645, 1
      %v1672 = vsel %vm1653, %v1669, %v1671
      %v1673 = vrot.slane %v1646, 1
      %v1674 = vsel %vm1653, %v1671, %v1673
      %v1675 = vrot.slane %v1647, 1
      %v1676 = vsel %vm1653, %v1673, %v1675
      %v1677 = vrot.slane %v1648, 1
      %v1678 = vsel %vm1653, %v1675, %v1677
      %v1679 = vrot.slane %v1649, 1
      %v1680 = vsel %vm1653, %v1677, %v1679
      %v1681 = vrot.slane %v1650, 1
      %v1682 = vsel %vm1653, %v1679, %v1681
      %v1683 = vrot.slane %v1651, 1
      %v1684 = vsel %vm1653, %v1681, %v1683
      %v1685 = vrot.slane %v1652, 1
      %v1686 = vsel %vm1653, %v1683, %v1685
      %1687 = vrot.lane.b32.xlu0 %v1656, 6
      %v1688 = vpop.permute.xlu0 %1687
      %1689 = vrot.lane.b32.xlu0 %v1658, 6
      %v1690 = vpop.permute.xlu0 %1689
      %1691 = vrot.lane.b32.xlu0 %v1660, 6
      %v1692 = vpop.permute.xlu0 %1691
      %1693 = vrot.lane.b32.xlu0 %v1662, 6
      %v1694 = vpop.permute.xlu0 %1693
      %1695 = vrot.lane.b32.xlu0 %v1664, 6
      %v1696 = vpop.permute.xlu0 %1695
      %1697 = vrot.lane.b32.xlu0 %v1666, 6
      %v1698 = vpop.permute.xlu0 %1697
      %1699 = vrot.lane.b32.xlu0 %v1668, 6
      %v1700 = vpop.permute.xlu0 %1699
      %1701 = vrot.lane.b32.xlu0 %v1670, 6
      %v1702 = vpop.permute.xlu0 %1701
      %1703 = vrot.lane.b32.xlu0 %v1672, 6
      %v1704 = vpop.permute.xlu0 %1703
      %1705 = vrot.lane.b32.xlu0 %v1674, 6
      %v1706 = vpop.permute.xlu0 %1705
      %1707 = vrot.lane.b32.xlu0 %v1676, 6
      %v1708 = vpop.permute.xlu0 %1707
      %1709 = vrot.lane.b32.xlu0 %v1678, 6
      %v1710 = vpop.permute.xlu0 %1709
      %1711 = vrot.lane.b32.xlu0 %v1680, 6
      %v1712 = vpop.permute.xlu0 %1711
      %1713 = vrot.lane.b32.xlu0 %v1682, 6
      %v1714 = vpop.permute.xlu0 %1713
      %1715 = vrot.lane.b32.xlu0 %v1684, 6
      %v1716 = vpop.permute.xlu0 %1715
      %1717 = vrot.lane.b32.xlu0 %v1686, 6
      %v1718 = vpop.permute.xlu0 %1717
      %v1751 = vunpack.c.l.b16 %v1112
      %v1752 = vunpack.c.l.b16 %v1113
      %v1753 = vunpack.c.l.b16 %v1114
      %v1754 = vunpack.c.l.b16 %v1115
      %v1755 = vunpack.c.l.b16 %v1116
      %v1756 = vunpack.c.l.b16 %v1117
      %v1757 = vunpack.c.l.b16 %v1118
      %v1758 = vunpack.c.l.b16 %v1119
      %v1759 = vunpack.c.l.b16 %v1120
      %v1760 = vunpack.c.l.b16 %v1121
      %v1761 = vunpack.c.l.b16 %v1122
      %v1762 = vunpack.c.l.b16 %v1123
      %v1763 = vunpack.c.l.b16 %v1124
      %v1764 = vunpack.c.l.b16 %v1125
      %v1765 = vunpack.c.l.b16 %v1126
      %v1766 = vunpack.c.l.b16 %v1127
      %v1767 = vunpack.c.l.b16 %v1128
      %v1768 = vunpack.c.l.b16 %v1129
      %v1769 = vunpack.c.l.b16 %v1130
      %v1770 = vunpack.c.l.b16 %v1131
      %v1771 = vunpack.c.l.b16 %v1132
      %v1772 = vunpack.c.l.b16 %v1133
      %v1773 = vunpack.c.l.b16 %v1134
      %v1774 = vunpack.c.l.b16 %v1135
      %v1775 = vunpack.c.l.b16 %v1136
      %v1776 = vunpack.c.l.b16 %v1137
      %v1777 = vunpack.c.l.b16 %v1138
      %v1778 = vunpack.c.l.b16 %v1139
      %v1779 = vunpack.c.l.b16 %v1140
      %v1780 = vunpack.c.l.b16 %v1141
      %v1781 = vunpack.c.l.b16 %v1142
      %v1782 = vunpack.c.l.b16 %v1143
      %v1783 = vpack.c.b16 %v1752, %v1751
      %v1784 = vpack.c.b16 %v1754, %v1753
      %v1785 = vpack.c.b16 %v1756, %v1755
      %v1786 = vpack.c.b16 %v1758, %v1757
      %v1787 = vpack.c.b16 %v1760, %v1759
      %v1788 = vpack.c.b16 %v1762, %v1761
      %v1789 = vpack.c.b16 %v1764, %v1763
      %v1790 = vpack.c.b16 %v1766, %v1765
      %v1791 = vpack.c.b16 %v1768, %v1767
      %v1792 = vpack.c.b16 %v1770, %v1769
      %v1793 = vpack.c.b16 %v1772, %v1771
      %v1794 = vpack.c.b16 %v1774, %v1773
      %v1795 = vpack.c.b16 %v1776, %v1775
      %v1796 = vpack.c.b16 %v1778, %v1777
      %v1797 = vpack.c.b16 %v1780, %v1779
      %v1798 = vpack.c.b16 %v1782, %v1781
      %1799 = vrot.lane.b32.xlu0 %v1783, 9
      %v1800 = vpop.permute.xlu0 %1799
      %1801 = vrot.lane.b32.xlu0 %v1784, 9
      %v1802 = vpop.permute.xlu0 %1801
      %1803 = vrot.lane.b32.xlu0 %v1785, 9
      %v1804 = vpop.permute.xlu0 %1803
      %1805 = vrot.lane.b32.xlu0 %v1786, 9
      %v1806 = vpop.permute.xlu0 %1805
      %1807 = vrot.lane.b32.xlu0 %v1787, 9
      %v1808 = vpop.permute.xlu0 %1807
      %1809 = vrot.lane.b32.xlu0 %v1788, 9
      %v1810 = vpop.permute.xlu0 %1809
      %1811 = vrot.lane.b32.xlu0 %v1789, 9
      %v1812 = vpop.permute.xlu0 %1811
      %1813 = vrot.lane.b32.xlu0 %v1790, 9
      %v1814 = vpop.permute.xlu0 %1813
      %1815 = vrot.lane.b32.xlu0 %v1791, 9
      %v1816 = vpop.permute.xlu0 %1815
      %1817 = vrot.lane.b32.xlu0 %v1792, 9
      %v1818 = vpop.permute.xlu0 %1817
      %1819 = vrot.lane.b32.xlu0 %v1793, 9
      %v1820 = vpop.permute.xlu0 %1819
      %1821 = vrot.lane.b32.xlu0 %v1794, 9
      %v1822 = vpop.permute.xlu0 %1821
      %1823 = vrot.lane.b32.xlu0 %v1795, 9
      %v1824 = vpop.permute.xlu0 %1823
      %1825 = vrot.lane.b32.xlu0 %v1796, 9
      %v1826 = vpop.permute.xlu0 %1825
      %1827 = vrot.lane.b32.xlu0 %v1797, 9
      %v1828 = vpop.permute.xlu0 %1827
      %1829 = vrot.lane.b32.xlu0 %v1798, 9
      %v1830 = vpop.permute.xlu0 %1829
      %v1833 = vunpack.c.l.b16 %v207
      %v1834 = vunpack.c.l.b16 %v208
      %v1835 = vpack.c.b16 %v1833, %v1387
      %v1836 = vpack.c.b16 %v1834, %v1834
      %v1838 = vshll.u32 %v1835, 16
      %v1840 = vrot.slane %v1838, 1
      %v1841 = vsel %vm1405, %v1532, %v1840
      %v1842 = vshrl.u32 %v1835, 16
      %v1844 = vor.u32 %v1842, %v1840
      %v1846 = vshll.u32 %v1836, 16
      %v1848 = vrot.slane %v1846, 1
      %v1849 = vsel %vm1405, %v1844, %v1848
      %1850 = vrot.lane.b32.xlu0 %v1425, 12
      %v1851 = vpop.permute.xlu0 %1850
      %1852 = vrot.lane.b32.xlu0 %v1433, 12
      %v1853 = vpop.permute.xlu0 %1852
      %1854 = vrot.lane.b32.xlu0 %v1441, 12
      %v1855 = vpop.permute.xlu0 %1854
      %1856 = vrot.lane.b32.xlu0 %v1449, 12
      %v1857 = vpop.permute.xlu0 %1856
      %1858 = vrot.lane.b32.xlu0 %v1457, 12
      %v1859 = vpop.permute.xlu0 %1858
      %1860 = vrot.lane.b32.xlu0 %v1465, 12
      %v1861 = vpop.permute.xlu0 %1860
      %1862 = vrot.lane.b32.xlu0 %v1473, 12
      %v1863 = vpop.permute.xlu0 %1862
      %1864 = vrot.lane.b32.xlu0 %v1481, 12
      %v1865 = vpop.permute.xlu0 %1864
      %1866 = vrot.lane.b32.xlu0 %v1489, 12
      %v1867 = vpop.permute.xlu0 %1866
      %1868 = vrot.lane.b32.xlu0 %v1497, 12
      %v1869 = vpop.permute.xlu0 %1868
      %1870 = vrot.lane.b32.xlu0 %v1505, 12
      %v1871 = vpop.permute.xlu0 %1870
      %1872 = vrot.lane.b32.xlu0 %v1513, 12
      %v1873 = vpop.permute.xlu0 %1872
      %1874 = vrot.lane.b32.xlu0 %v1521, 12
      %v1875 = vpop.permute.xlu0 %1874
      %1876 = vrot.lane.b32.xlu0 %v1529, 12
      %v1877 = vpop.permute.xlu0 %1876
      %1878 = vrot.lane.b32.xlu0 %v1841, 12
      %v1879 = vpop.permute.xlu0 %1878
      %1880 = vrot.lane.b32.xlu0 %v1849, 12
      %v1881 = vpop.permute.xlu0 %1880
      %v1915 = vunpack.c.l.b16 %v1144
      %v1916 = vunpack.c.l.b16 %v1145
      %v1917 = vunpack.c.l.b16 %v1146
      %v1918 = vunpack.c.l.b16 %v1147
      %v1919 = vunpack.c.l.b16 %v1148
      %v1920 = vunpack.c.l.b16 %v1149
      %v1921 = vunpack.c.l.b16 %v1150
      %v1922 = vunpack.c.l.b16 %v1151
      %v1923 = vunpack.c.l.b16 %v1152
      %v1924 = vunpack.c.l.b16 %v1153
      %v1925 = vunpack.c.l.b16 %v1154
      %v1926 = vunpack.c.l.b16 %v1155
      %v1927 = vunpack.c.l.b16 %v1156
      %v1928 = vunpack.c.l.b16 %v1157
      %v1929 = vunpack.c.l.b16 %v1158
      %v1930 = vunpack.c.l.b16 %v1159
      %v1931 = vunpack.c.l.b16 %v1160
      %v1932 = vunpack.c.l.b16 %v1161
      %v1933 = vunpack.c.l.b16 %v1162
      %v1934 = vunpack.c.l.b16 %v1163
      %v1935 = vunpack.c.l.b16 %v1164
      %v1936 = vunpack.c.l.b16 %v1165
      %v1937 = vunpack.c.l.b16 %v1166
      %v1938 = vunpack.c.l.b16 %v1167
      %v1939 = vunpack.c.l.b16 %v1168
      %v1940 = vunpack.c.l.b16 %v1169
      %v1941 = vunpack.c.l.b16 %v1170
      %v1942 = vunpack.c.l.b16 %v1171
      %v1943 = vunpack.c.l.b16 %v1172
      %v1944 = vunpack.c.l.b16 %v1173
      %v1945 = vunpack.c.l.b16 %v1174
      %v1946 = vunpack.c.l.b16 %v1175
      %v1947 = vunpack.c.l.b16 %v1176
      %v1948 = vpack.c.b16 %v1916, %v1915
      %v1949 = vpack.c.b16 %v1918, %v1917
      %v1950 = vpack.c.b16 %v1920, %v1919
      %v1951 = vpack.c.b16 %v1922, %v1921
      %v1952 = vpack.c.b16 %v1924, %v1923
      %v1953 = vpack.c.b16 %v1926, %v1925
      %v1954 = vpack.c.b16 %v1928, %v1927
      %v1955 = vpack.c.b16 %v1930, %v1929
      %v1956 = vpack.c.b16 %v1932, %v1931
      %v1957 = vpack.c.b16 %v1934, %v1933
      %v1958 = vpack.c.b16 %v1936, %v1935
      %v1959 = vpack.c.b16 %v1938, %v1937
      %v1960 = vpack.c.b16 %v1940, %v1939
      %v1961 = vpack.c.b16 %v1942, %v1941
      %v1962 = vpack.c.b16 %v1944, %v1943
      %v1963 = vpack.c.b16 %v1946, %v1945
      %v1964 = vpack.c.b16 %v1947, %v1947
      %v1965 = vrot.slane %v1948, 1
      %v1966 = vrot.slane %v1949, 1
      %v1967 = vsel %vm1653, %v1965, %v1966
      %v1968 = vrot.slane %v1950, 1
      %v1969 = vsel %vm1653, %v1966, %v1968
      %v1970 = vrot.slane %v1951, 1
      %v1971 = vsel %vm1653, %v1968, %v1970
      %v1972 = vrot.slane %v1952, 1
      %v1973 = vsel %vm1653, %v1970, %v1972
      %v1974 = vrot.slane %v1953, 1
      %v1975 = vsel %vm1653, %v1972, %v1974
      %v1976 = vrot.slane %v1954, 1
      %v1977 = vsel %vm1653, %v1974, %v1976
      %v1978 = vrot.slane %v1955, 1
      %v1979 = vsel %vm1653, %v1976, %v1978
      %v1980 = vrot.slane %v1956, 1
      %v1981 = vsel %vm1653, %v1978, %v1980
      %v1982 = vrot.slane %v1957, 1
      %v1983 = vsel %vm1653, %v1980, %v1982
      %v1984 = vrot.slane %v1958, 1
      %v1985 = vsel %vm1653, %v1982, %v1984
      %v1986 = vrot.slane %v1959, 1
      %v1987 = vsel %vm1653, %v1984, %v1986
      %v1988 = vrot.slane %v1960, 1
      %v1989 = vsel %vm1653, %v1986, %v1988
      %v1990 = vrot.slane %v1961, 1
      %v1991 = vsel %vm1653, %v1988, %v1990
      %v1992 = vrot.slane %v1962, 1
      %v1993 = vsel %vm1653, %v1990, %v1992
      %v1994 = vrot.slane %v1963, 1
      %v1995 = vsel %vm1653, %v1992, %v1994
      %v1996 = vrot.slane %v1964, 1
      %v1997 = vsel %vm1653, %v1994, %v1996
      %1998 = vrot.lane.b32.xlu0 %v1967, 15
      %v1999 = vpop.permute.xlu0 %1998
      %2000 = vrot.lane.b32.xlu0 %v1969, 15
      %v2001 = vpop.permute.xlu0 %2000
      %2002 = vrot.lane.b32.xlu0 %v1971, 15
      %v2003 = vpop.permute.xlu0 %2002
      %2004 = vrot.lane.b32.xlu0 %v1973, 15
      %v2005 = vpop.permute.xlu0 %2004
      %2006 = vrot.lane.b32.xlu0 %v1975, 15
      %v2007 = vpop.permute.xlu0 %2006
      %2008 = vrot.lane.b32.xlu0 %v1977, 15
      %v2009 = vpop.permute.xlu0 %2008
      %2010 = vrot.lane.b32.xlu0 %v1979, 15
      %v2011 = vpop.permute.xlu0 %2010
      %2012 = vrot.lane.b32.xlu0 %v1981, 15
      %v2013 = vpop.permute.xlu0 %2012
      %2014 = vrot.lane.b32.xlu0 %v1983, 15
      %v2015 = vpop.permute.xlu0 %2014
      %2016 = vrot.lane.b32.xlu0 %v1985, 15
      %v2017 = vpop.permute.xlu0 %2016
      %2018 = vrot.lane.b32.xlu0 %v1987, 15
      %v2019 = vpop.permute.xlu0 %2018
      %2020 = vrot.lane.b32.xlu0 %v1989, 15
      %v2021 = vpop.permute.xlu0 %2020
      %2022 = vrot.lane.b32.xlu0 %v1991, 15
      %v2023 = vpop.permute.xlu0 %2022
      %2024 = vrot.lane.b32.xlu0 %v1993, 15
      %v2025 = vpop.permute.xlu0 %2024
      %2026 = vrot.lane.b32.xlu0 %v1995, 15
      %v2027 = vpop.permute.xlu0 %2026
      %2028 = vrot.lane.b32.xlu0 %v1997, 15
      %v2029 = vpop.permute.xlu0 %2028
      %v2062 = vunpack.c.l.b16 %v1177
      %v2063 = vunpack.c.l.b16 %v1178
      %v2064 = vunpack.c.l.b16 %v1179
      %v2065 = vunpack.c.l.b16 %v1180
      %v2066 = vunpack.c.l.b16 %v1181
      %v2067 = vunpack.c.l.b16 %v1182
      %v2068 = vunpack.c.l.b16 %v1183
      %v2069 = vunpack.c.l.b16 %v1184
      %v2070 = vunpack.c.l.b16 %v1185
      %v2071 = vunpack.c.l.b16 %v1186
      %v2072 = vunpack.c.l.b16 %v1187
      %v2073 = vunpack.c.l.b16 %v1188
      %v2074 = vunpack.c.l.b16 %v1189
      %v2075 = vunpack.c.l.b16 %v1190
      %v2076 = vunpack.c.l.b16 %v1191
      %v2077 = vunpack.c.l.b16 %v1192
      %v2078 = vunpack.c.l.b16 %v1193
      %v2079 = vunpack.c.l.b16 %v1194
      %v2080 = vunpack.c.l.b16 %v1195
      %v2081 = vunpack.c.l.b16 %v1196
      %v2082 = vunpack.c.l.b16 %v1197
      %v2083 = vunpack.c.l.b16 %v1198
      %v2084 = vunpack.c.l.b16 %v1199
      %v2085 = vunpack.c.l.b16 %v1200
      %v2086 = vunpack.c.l.b16 %v1201
      %v2087 = vunpack.c.l.b16 %v1202
      %v2088 = vunpack.c.l.b16 %v1203
      %v2089 = vunpack.c.l.b16 %v1204
      %v2090 = vunpack.c.l.b16 %v1205
      %v2091 = vunpack.c.l.b16 %v1206
      %v2092 = vunpack.c.l.b16 %v1207
      %v2093 = vunpack.c.l.b16 %v1208
      %v2094 = vpack.c.b16 %v2063, %v2062
      %v2095 = vpack.c.b16 %v2065, %v2064
      %v2096 = vpack.c.b16 %v2067, %v2066
      %v2097 = vpack.c.b16 %v2069, %v2068
      %v2098 = vpack.c.b16 %v2071, %v2070
      %v2099 = vpack.c.b16 %v2073, %v2072
      %v2100 = vpack.c.b16 %v2075, %v2074
      %v2101 = vpack.c.b16 %v2077, %v2076
      %v2102 = vpack.c.b16 %v2079, %v2078
      %v2103 = vpack.c.b16 %v2081, %v2080
      %v2104 = vpack.c.b16 %v2083, %v2082
      %v2105 = vpack.c.b16 %v2085, %v2084
      %v2106 = vpack.c.b16 %v2087, %v2086
      %v2107 = vpack.c.b16 %v2089, %v2088
      %v2108 = vpack.c.b16 %v2091, %v2090
      %v2109 = vpack.c.b16 %v2093, %v2092
      %2110 = vrot.lane.b32.xlu0 %v2094, 18
      %v2111 = vpop.permute.xlu0 %2110
      %2112 = vrot.lane.b32.xlu0 %v2095, 18
      %v2113 = vpop.permute.xlu0 %2112
      %2114 = vrot.lane.b32.xlu0 %v2096, 18
      %v2115 = vpop.permute.xlu0 %2114
      %2116 = vrot.lane.b32.xlu0 %v2097, 18
      %v2117 = vpop.permute.xlu0 %2116
      %2118 = vrot.lane.b32.xlu0 %v2098, 18
      %v2119 = vpop.permute.xlu0 %2118
      %2120 = vrot.lane.b32.xlu0 %v2099, 18
      %v2121 = vpop.permute.xlu0 %2120
      %2122 = vrot.lane.b32.xlu0 %v2100, 18
      %v2123 = vpop.permute.xlu0 %2122
      %2124 = vrot.lane.b32.xlu0 %v2101, 18
      %v2125 = vpop.permute.xlu0 %2124
      %2126 = vrot.lane.b32.xlu0 %v2102, 18
      %v2127 = vpop.permute.xlu0 %2126
      %2128 = vrot.lane.b32.xlu0 %v2103, 18
      %v2129 = vpop.permute.xlu0 %2128
      %2130 = vrot.lane.b32.xlu0 %v2104, 18
      %v2131 = vpop.permute.xlu0 %2130
      %2132 = vrot.lane.b32.xlu0 %v2105, 18
      %v2133 = vpop.permute.xlu0 %2132
      %2134 = vrot.lane.b32.xlu0 %v2106, 18
      %v2135 = vpop.permute.xlu0 %2134
      %2136 = vrot.lane.b32.xlu0 %v2107, 18
      %v2137 = vpop.permute.xlu0 %2136
      %2138 = vrot.lane.b32.xlu0 %v2108, 18
      %v2139 = vpop.permute.xlu0 %2138
      %2140 = vrot.lane.b32.xlu0 %v2109, 18
      %v2141 = vpop.permute.xlu0 %2140
      %v2144 = vunpack.c.l.b16 %v209
      %v2145 = vunpack.c.l.b16 %v210
      %v2146 = vpack.c.b16 %v2144, %v1834
      %v2147 = vpack.c.b16 %v2145, %v2145
      %v2149 = vshll.u32 %v2146, 16
      %v2151 = vrot.slane %v2149, 1
      %v2152 = vsel %vm1405, %v1844, %v2151
      %v2153 = vshrl.u32 %v2146, 16
      %v2155 = vor.u32 %v2153, %v2151
      %v2157 = vshll.u32 %v2147, 16
      %v2159 = vrot.slane %v2157, 1
      %v2160 = vsel %vm1405, %v2155, %v2159
      %2161 = vrot.lane.b32.xlu0 %v1433, 21
      %v2162 = vpop.permute.xlu0 %2161
      %2163 = vrot.lane.b32.xlu0 %v1441, 21
      %v2164 = vpop.permute.xlu0 %2163
      %2165 = vrot.lane.b32.xlu0 %v1449, 21
      %v2166 = vpop.permute.xlu0 %2165
      %2167 = vrot.lane.b32.xlu0 %v1457, 21
      %v2168 = vpop.permute.xlu0 %2167
      %2169 = vrot.lane.b32.xlu0 %v1465, 21
      %v2170 = vpop.permute.xlu0 %2169
      %2171 = vrot.lane.b32.xlu0 %v1473, 21
      %v2172 = vpop.permute.xlu0 %2171
      %2173 = vrot.lane.b32.xlu0 %v1481, 21
      %v2174 = vpop.permute.xlu0 %2173
      %2175 = vrot.lane.b32.xlu0 %v1489, 21
      %v2176 = vpop.permute.xlu0 %2175
      %2177 = vrot.lane.b32.xlu0 %v1497, 21
      %v2178 = vpop.permute.xlu0 %2177
      %2179 = vrot.lane.b32.xlu0 %v1505, 21
      %v2180 = vpop.permute.xlu0 %2179
      %2181 = vrot.lane.b32.xlu0 %v1513, 21
      %v2182 = vpop.permute.xlu0 %2181
      %2183 = vrot.lane.b32.xlu0 %v1521, 21
      %v2184 = vpop.permute.xlu0 %2183
      %2185 = vrot.lane.b32.xlu0 %v1529, 21
      %v2186 = vpop.permute.xlu0 %2185
      %2187 = vrot.lane.b32.xlu0 %v1841, 21
      %v2188 = vpop.permute.xlu0 %2187
      %2189 = vrot.lane.b32.xlu0 %v2152, 21
      %v2190 = vpop.permute.xlu0 %2189
      %2191 = vrot.lane.b32.xlu0 %v2160, 21
      %v2192 = vpop.permute.xlu0 %2191
      %v2226 = vunpack.c.l.b16 %v1209
      %v2227 = vunpack.c.l.b16 %v1210
      %v2228 = vunpack.c.l.b16 %v1211
      %v2229 = vunpack.c.l.b16 %v1212
      %v2230 = vunpack.c.l.b16 %v1213
      %v2231 = vunpack.c.l.b16 %v1214
      %v2232 = vunpack.c.l.b16 %v1215
      %v2233 = vunpack.c.l.b16 %v1216
      %v2234 = vunpack.c.l.b16 %v1217
      %v2235 = vunpack.c.l.b16 %v1218
      %v2236 = vunpack.c.l.b16 %v1219
      %v2237 = vunpack.c.l.b16 %v1220
      %v2238 = vunpack.c.l.b16 %v1221
      %v2239 = vunpack.c.l.b16 %v1222
      %v2240 = vunpack.c.l.b16 %v1223
      %v2241 = vunpack.c.l.b16 %v1224
      %v2242 = vunpack.c.l.b16 %v1225
      %v2243 = vunpack.c.l.b16 %v1226
      %v2244 = vunpack.c.l.b16 %v1227
      %v2245 = vunpack.c.l.b16 %v1228
      %v2246 = vunpack.c.l.b16 %v1229
      %v2247 = vunpack.c.l.b16 %v1230
      %v2248 = vunpack.c.l.b16 %v1231
      %v2249 = vunpack.c.l.b16 %v1232
      %v2250 = vunpack.c.l.b16 %v1233
      %v2251 = vunpack.c.l.b16 %v1234
      %v2252 = vunpack.c.l.b16 %v1235
      %v2253 = vunpack.c.l.b16 %v1236
      %v2254 = vunpack.c.l.b16 %v1237
      %v2255 = vunpack.c.l.b16 %v1238
      %v2256 = vunpack.c.l.b16 %v1239
      %v2257 = vunpack.c.l.b16 %v1240
      %v2258 = vunpack.c.l.b16 %v1241
      %v2259 = vpack.c.b16 %v2227, %v2226
      %v2260 = vpack.c.b16 %v2229, %v2228
      %v2261 = vpack.c.b16 %v2231, %v2230
      %v2262 = vpack.c.b16 %v2233, %v2232
      %v2263 = vpack.c.b16 %v2235, %v2234
      %v2264 = vpack.c.b16 %v2237, %v2236
      %v2265 = vpack.c.b16 %v2239, %v2238
      %v2266 = vpack.c.b16 %v2241, %v2240
      %v2267 = vpack.c.b16 %v2243, %v2242
      %v2268 = vpack.c.b16 %v2245, %v2244
      %v2269 = vpack.c.b16 %v2247, %v2246
      %v2270 = vpack.c.b16 %v2249, %v2248
      %v2271 = vpack.c.b16 %v2251, %v2250
      %v2272 = vpack.c.b16 %v2253, %v2252
      %v2273 = vpack.c.b16 %v2255, %v2254
      %v2274 = vpack.c.b16 %v2257, %v2256
      %v2275 = vpack.c.b16 %v2258, %v2258
      %v2276 = vrot.slane %v2259, 1
      %v2277 = vrot.slane %v2260, 1
      %v2278 = vsel %vm1653, %v2276, %v2277
      %v2279 = vrot.slane %v2261, 1
      %v2280 = vsel %vm1653, %v2277, %v2279
      %v2281 = vrot.slane %v2262, 1
      %v2282 = vsel %vm1653, %v2279, %v2281
      %v2283 = vrot.slane %v2263, 1
      %v2284 = vsel %vm1653, %v2281, %v2283
      %v2285 = vrot.slane %v2264, 1
      %v2286 = vsel %vm1653, %v2283, %v2285
      %v2287 = vrot.slane %v2265, 1
      %v2288 = vsel %vm1653, %v2285, %v2287
      %v2289 = vrot.slane %v2266, 1
      %v2290 = vsel %vm1653, %v2287, %v2289
      %v2291 = vrot.slane %v2267, 1
      %v2292 = vsel %vm1653, %v2289, %v2291
      %v2293 = vrot.slane %v2268, 1
      %v2294 = vsel %vm1653, %v2291, %v2293
      %v2295 = vrot.slane %v2269, 1
      %v2296 = vsel %vm1653, %v2293, %v2295
      %v2297 = vrot.slane %v2270, 1
      %v2298 = vsel %vm1653, %v2295, %v2297
      %v2299 = vrot.slane %v2271, 1
      %v2300 = vsel %vm1653, %v2297, %v2299
      %v2301 = vrot.slane %v2272, 1
      %v2302 = vsel %vm1653, %v2299, %v2301
      %v2303 = vrot.slane %v2273, 1
      %v2304 = vsel %vm1653, %v2301, %v2303
      %v2305 = vrot.slane %v2274, 1
      %v2306 = vsel %vm1653, %v2303, %v2305
      %v2307 = vrot.slane %v2275, 1
      %v2308 = vsel %vm1653, %v2305, %v2307
      %2309 = vrot.lane.b32.xlu0 %v2278, 24
      %v2310 = vpop.permute.xlu0 %2309
      %2311 = vrot.lane.b32.xlu0 %v2280, 24
      %v2312 = vpop.permute.xlu0 %2311
      %2313 = vrot.lane.b32.xlu0 %v2282, 24
      %v2314 = vpop.permute.xlu0 %2313
      %2315 = vrot.lane.b32.xlu0 %v2284, 24
      %v2316 = vpop.permute.xlu0 %2315
      %2317 = vrot.lane.b32.xlu0 %v2286, 24
      %v2318 = vpop.permute.xlu0 %2317
      %2319 = vrot.lane.b32.xlu0 %v2288, 24
      %v2320 = vpop.permute.xlu0 %2319
      %2321 = vrot.lane.b32.xlu0 %v2290, 24
      %v2322 = vpop.permute.xlu0 %2321
      %2323 = vrot.lane.b32.xlu0 %v2292, 24
      %v2324 = vpop.permute.xlu0 %2323
      %2325 = vrot.lane.b32.xlu0 %v2294, 24
      %v2326 = vpop.permute.xlu0 %2325
      %2327 = vrot.lane.b32.xlu0 %v2296, 24
      %v2328 = vpop.permute.xlu0 %2327
      %2329 = vrot.lane.b32.xlu0 %v2298, 24
      %v2330 = vpop.permute.xlu0 %2329
      %2331 = vrot.lane.b32.xlu0 %v2300, 24
      %v2332 = vpop.permute.xlu0 %2331
      %2333 = vrot.lane.b32.xlu0 %v2302, 24
      %v2334 = vpop.permute.xlu0 %2333
      %2335 = vrot.lane.b32.xlu0 %v2304, 24
      %v2336 = vpop.permute.xlu0 %2335
      %2337 = vrot.lane.b32.xlu0 %v2306, 24
      %v2338 = vpop.permute.xlu0 %2337
      %2339 = vrot.lane.b32.xlu0 %v2308, 24
      %v2340 = vpop.permute.xlu0 %2339
      %vm2341 = vcmask 23552
      %v2344 = vsel %vm2341, %v1306, %v1539
      %v2347 = vsel %vm2341, %v1307, %v1541
      %v2350 = vsel %vm2341, %v1308, %v1543
      %v2353 = vsel %vm2341, %v1309, %v1545
      %v2356 = vsel %vm2341, %v1310, %v1547
      %v2359 = vsel %vm2341, %v1311, %v1549
      %v2362 = vsel %vm2341, %v1312, %v1551
      %v2365 = vsel %vm2341, %v1313, %v1553
      %v2368 = vsel %vm2341, %v1314, %v1555
      %v2371 = vsel %vm2341, %v1315, %v1557
      %v2374 = vsel %vm2341, %v1316, %v1559
      %v2377 = vsel %vm2341, %v1317, %v1561
      %v2380 = vsel %vm2341, %v1318, %v1563
      %v2383 = vsel %vm2341, %v1319, %v1565
      %v2386 = vsel %vm2341, %v1320, %v1567
      %v2389 = vsel %vm2341, %v1321, %v1569
      %vm2390 = vcmask 48128
      %v2392 = vsel %vm2390, %v2344, %v1688
      %v2394 = vsel %vm2390, %v2347, %v1690
      %v2396 = vsel %vm2390, %v2350, %v1692
      %v2398 = vsel %vm2390, %v2353, %v1694
      %v2400 = vsel %vm2390, %v2356, %v1696
      %v2402 = vsel %vm2390, %v2359, %v1698
      %v2404 = vsel %vm2390, %v2362, %v1700
      %v2406 = vsel %vm2390, %v2365, %v1702
      %v2408 = vsel %vm2390, %v2368, %v1704
      %v2410 = vsel %vm2390, %v2371, %v1706
      %v2412 = vsel %vm2390, %v2374, %v1708
      %v2414 = vsel %vm2390, %v2377, %v1710
      %v2416 = vsel %vm2390, %v2380, %v1712
      %v2418 = vsel %vm2390, %v2383, %v1714
      %v2420 = vsel %vm2390, %v2386, %v1716
      %v2422 = vsel %vm2390, %v2389, %v1718
      %vm2423 = vcmask 72704
      %v2425 = vsel %vm2423, %v2392, %v1800
      %v2427 = vsel %vm2423, %v2394, %v1802
      %v2429 = vsel %vm2423, %v2396, %v1804
      %v2431 = vsel %vm2423, %v2398, %v1806
      %v2433 = vsel %vm2423, %v2400, %v1808
      %v2435 = vsel %vm2423, %v2402, %v1810
      %v2437 = vsel %vm2423, %v2404, %v1812
      %v2439 = vsel %vm2423, %v2406, %v1814
      %v2441 = vsel %vm2423, %v2408, %v1816
      %v2443 = vsel %vm2423, %v2410, %v1818
      %v2445 = vsel %vm2423, %v2412, %v1820
      %v2447 = vsel %vm2423, %v2414, %v1822
      %v2449 = vsel %vm2423, %v2416, %v1824
      %v2451 = vsel %vm2423, %v2418, %v1826
      %v2453 = vsel %vm2423, %v2420, %v1828
      %v2455 = vsel %vm2423, %v2422, %v1830
      %vm2456 = vcmask 97280
      %v2458 = vsel %vm2456, %v2425, %v1851
      %v2460 = vsel %vm2456, %v2427, %v1853
      %v2462 = vsel %vm2456, %v2429, %v1855
      %v2464 = vsel %vm2456, %v2431, %v1857
      %v2466 = vsel %vm2456, %v2433, %v1859
      %v2468 = vsel %vm2456, %v2435, %v1861
      %v2470 = vsel %vm2456, %v2437, %v1863
      %v2472 = vsel %vm2456, %v2439, %v1865
      %v2474 = vsel %vm2456, %v2441, %v1867
      %v2476 = vsel %vm2456, %v2443, %v1869
      %v2478 = vsel %vm2456, %v2445, %v1871
      %v2480 = vsel %vm2456, %v2447, %v1873
      %v2482 = vsel %vm2456, %v2449, %v1875
      %v2484 = vsel %vm2456, %v2451, %v1877
      %v2486 = vsel %vm2456, %v2453, %v1879
      %v2488 = vsel %vm2456, %v2455, %v1881
      %vm2489 = vcmask 121856
      %v2491 = vsel %vm2489, %v2458, %v1999
      %v2493 = vsel %vm2489, %v2460, %v2001
      %v2495 = vsel %vm2489, %v2462, %v2003
      %v2497 = vsel %vm2489, %v2464, %v2005
      %v2499 = vsel %vm2489, %v2466, %v2007
      %v2501 = vsel %vm2489, %v2468, %v2009
      %v2503 = vsel %vm2489, %v2470, %v2011
      %v2505 = vsel %vm2489, %v2472, %v2013
      %v2507 = vsel %vm2489, %v2474, %v2015
      %v2509 = vsel %vm2489, %v2476, %v2017
      %v2511 = vsel %vm2489, %v2478, %v2019
      %v2513 = vsel %vm2489, %v2480, %v2021
      %v2515 = vsel %vm2489, %v2482, %v2023
      %v2517 = vsel %vm2489, %v2484, %v2025
      %v2519 = vsel %vm2489, %v2486, %v2027
      %v2521 = vsel %vm2489, %v2488, %v2029
      %vm2522 = vcmask 146432
      %v2524 = vsel %vm2522, %v2491, %v2111
      %v2526 = vsel %vm2522, %v2493, %v2113
      %v2528 = vsel %vm2522, %v2495, %v2115
      %v2530 = vsel %vm2522, %v2497, %v2117
      %v2532 = vsel %vm2522, %v2499, %v2119
      %v2534 = vsel %vm2522, %v2501, %v2121
      %v2536 = vsel %vm2522, %v2503, %v2123
      %v2538 = vsel %vm2522, %v2505, %v2125
      %v2540 = vsel %vm2522, %v2507, %v2127
      %v2542 = vsel %vm2522, %v2509, %v2129
      %v2544 = vsel %vm2522, %v2511, %v2131
      %v2546 = vsel %vm2522, %v2513, %v2133
      %v2548 = vsel %vm2522, %v2515, %v2135
      %v2550 = vsel %vm2522, %v2517, %v2137
      %v2552 = vsel %vm2522, %v2519, %v2139
      %v2554 = vsel %vm2522, %v2521, %v2141
      %vm2555 = vcmask 171008
      %v2557 = vsel %vm2555, %v2524, %v2162
      %v2559 = vsel %vm2555, %v2526, %v2164
      %v2561 = vsel %vm2555, %v2528, %v2166
      %v2563 = vsel %vm2555, %v2530, %v2168
      %v2565 = vsel %vm2555, %v2532, %v2170
      %v2567 = vsel %vm2555, %v2534, %v2172
      %v2569 = vsel %vm2555, %v2536, %v2174
      %v2571 = vsel %vm2555, %v2538, %v2176
      %v2573 = vsel %vm2555, %v2540, %v2178
      %v2575 = vsel %vm2555, %v2542, %v2180
      %v2577 = vsel %vm2555, %v2544, %v2182
      %v2579 = vsel %vm2555, %v2546, %v2184
      %v2581 = vsel %vm2555, %v2548, %v2186
      %v2583 = vsel %vm2555, %v2550, %v2188
      %v2585 = vsel %vm2555, %v2552, %v2190
      %v2587 = vsel %vm2555, %v2554, %v2192
      %vm2588 = vcmask 195584
      %v2590 = vsel %vm2588, %v2557, %v2310
      %v2592 = vsel %vm2588, %v2559, %v2312
      %v2594 = vsel %vm2588, %v2561, %v2314
      %v2596 = vsel %vm2588, %v2563, %v2316
      %v2598 = vsel %vm2588, %v2565, %v2318
      %v2600 = vsel %vm2588, %v2567, %v2320
      %v2602 = vsel %vm2588, %v2569, %v2322
      %v2604 = vsel %vm2588, %v2571, %v2324
      %v2606 = vsel %vm2588, %v2573, %v2326
      %v2608 = vsel %vm2588, %v2575, %v2328
      %v2610 = vsel %vm2588, %v2577, %v2330
      %v2612 = vsel %vm2588, %v2579, %v2332
      %v2614 = vsel %vm2588, %v2581, %v2334
      %v2616 = vsel %vm2588, %v2583, %v2336
      %v2618 = vsel %vm2588, %v2585, %v2338
      %v2620 = vsel %vm2588, %v2587, %v2340
      %v2621 = vld [vmem:[%s1] sm:$0xf]
      %v2622 = vld [vmem:[%s1 + $0x4] sm:$0xf]
      %v2623 = vld [vmem:[%s1 + $0x8] sm:$0xf]
      %v2624 = vld [vmem:[%s1 + $0xc] sm:$0x3]
      %v2625 = vld [vmem:[%s2] sm:$0x1]
      %v2627 = vlaneseq
      %v2628 = vshrl.u32 %v2627, 7
      %v2629 = vsub.s32 0, %v2628
      %v2630 = vrot.slane %v2625, %v2629
      %v2636 = vunpack.c.l.b16 %v2621
      %v2637 = vunpack.c.l.b16 %v2622
      %v2638 = vunpack.c.l.b16 %v2623
      %v2639 = vunpack.c.l.b16 %v2624
      %v2640 = vpack.c.b16 %v2637, %v2636
      %v2641 = vpack.c.b16 %v2639, %v2638
      %vm2643 = vcmask 220160
      %v2644 = vsel %vm2643, %v2590, 0
      %v2646 = vsel %vm2643, %v2592, 0
      %v2648 = vsel %vm2643, %v2594, 0
      %v2650 = vsel %vm2643, %v2596, 0
      %v2652 = vsel %vm2643, %v2598, 0
      %v2654 = vsel %vm2643, %v2600, 0
      %v2656 = vsel %vm2643, %v2602, 0
      %v2658 = vsel %vm2643, %v2604, 0
      %v2660 = vsel %vm2643, %v2606, 0
      %v2662 = vsel %vm2643, %v2608, 0
      %v2664 = vsel %vm2643, %v2610, 0
      %v2666 = vsel %vm2643, %v2612, 0
      %v2668 = vsel %vm2643, %v2614, 0
      %v2670 = vsel %vm2643, %v2616, 0
      %v2672 = vsel %vm2643, %v2618, 0
      %v2674 = vsel %vm2643, %v2620, 0
      %vm2676 = vcmask 1044480
      %vm2677 = vcmask 1045504
      %v2678 = vsel %vm2676, 4294967295, 65535
      %v2679 = vsel %vm2677, %v2678, 0
      %v2681 = vand.u32 %v2641, %v2679
      %2683 = vmatprep.subr.bf16.mxu0 0
      %2684 = vmatpush1.bf16.msra.mxu0 %v2640
      %2685 = vmatprep.subr.bf16.mxu0 0
      %2686 = vmatpush1.bf16.msra.mxu0 %v2681
      %2687 = vmatprep.subr.bf16.mxu0 0
      %2688 = vmatpush1.bf16.msra.mxu0 0
      %2689 = vmatprep.subr.bf16.mxu0 0
      %2690 = vmatpush1.bf16.msra.mxu0 0
      %2691 = vmatprep.subr.bf16.mxu0 0
      %2692 = vmatpush1.bf16.msra.mxu0 0
      %2693 = vmatprep.subr.bf16.mxu0 0
      %2694 = vmatpush1.bf16.msra.mxu0 0
      %2695 = vmatprep.subr.bf16.mxu0 0
      %2696 = vmatpush1.bf16.msra.mxu0 0
      %2697 = vmatprep.subr.bf16.mxu0 0
      %2698 = vmatpush1.bf16.msra.mxu0 0
      %2699 = vmatprep.subr.bf16.mxu0 0
      %2700 = vmatpush1.bf16.msra.mxu0 0
      %2701 = vmatprep.subr.bf16.mxu0 0
      %2702 = vmatpush1.bf16.msra.mxu0 0
      %2703 = vmatprep.subr.bf16.mxu0 0
      %2704 = vmatpush1.bf16.msra.mxu0 0
      %2705 = vmatprep.subr.bf16.mxu0 0
      %2706 = vmatpush1.bf16.msra.mxu0 0
      %2707 = vmatprep.subr.bf16.mxu0 0
      %2708 = vmatpush1.bf16.msra.mxu0 0
      %2709 = vmatprep.subr.bf16.mxu0 0
      %2710 = vmatpush1.bf16.msra.mxu0 0
      %2711 = vmatprep.subr.bf16.mxu0 0
      %2712 = vmatpush1.bf16.msra.mxu0 0
      %2713 = vmatprep.subr.bf16.mxu0 0
      %2714 = vmatpush1.bf16.msra.mxu0 0
      %2715 = vmatprep.mubr.bf16.mxu0 0
      %2716 = vmatmul.mubr.bf16.gmra.mrb[0].mxu0 %v2644
      %v2717 = vpop.f32.mrb[0].mxu0
      %v2718 = vadd.f32 %v2630, %v2717
      %v2719 = vpop.f32.mrb[0].mxu0
      %v2720 = vpop.f32.mrb[0].mxu0
      %v2721 = vadd.f32 %v2630, %v2720
      %v2722 = vpop.f32.mrb[0].mxu0
      %2723 = vmatprep.mubr.bf16.mxu0 0
      %2724 = vmatmul.mubr.bf16.gmra.mrb[0].mxu0 %v2646
      %v2725 = vpop.f32.mrb[0].mxu0
      %v2726 = vadd.f32 %v2630, %v2725
      %v2727 = vpop.f32.mrb[0].mxu0
      %v2728 = vpop.f32.mrb[0].mxu0
      %v2729 = vadd.f32 %v2630, %v2728
      %v2730 = vpop.f32.mrb[0].mxu0
      %2731 = vmatprep.mubr.bf16.mxu0 0
      %2732 = vmatmul.mubr.bf16.gmra.mrb[0].mxu0 %v2648
      %v2733 = vpop.f32.mrb[0].mxu0
      %v2734 = vadd.f32 %v2630, %v2733
      %v2735 = vpop.f32.mrb[0].mxu0
      %v2736 = vpop.f32.mrb[0].mxu0
      %v2737 = vadd.f32 %v2630, %v2736
      %v2738 = vpop.f32.mrb[0].mxu0
      %2739 = vmatprep.mubr.bf16.mxu0 0
      %2740 = vmatmul.mubr.bf16.gmra.mrb[0].mxu0 %v2650
      %v2741 = vpop.f32.mrb[0].mxu0
      %v2742 = vadd.f32 %v2630, %v2741
      %v2743 = vpop.f32.mrb[0].mxu0
      %v2744 = vpop.f32.mrb[0].mxu0
      %v2745 = vadd.f32 %v2630, %v2744
      %v2746 = vpop.f32.mrb[0].mxu0
      %2747 = vmatprep.mubr.bf16.mxu0 0
      %2748 = vmatmul.mubr.bf16.gmra.mrb[0].mxu0 %v2652
      %v2749 = vpop.f32.mrb[0].mxu0
      %v2750 = vadd.f32 %v2630, %v2749
      %v2751 = vpop.f32.mrb[0].mxu0
      %v2752 = vpop.f32.mrb[0].mxu0
      %v2753 = vadd.f32 %v2630, %v2752
      %v2754 = vpop.f32.mrb[0].mxu0
      %2755 = vmatprep.mubr.bf16.mxu0 0
      %2756 = vmatmul.mubr.bf16.gmra.mrb[0].mxu0 %v2654
      %v2757 = vpop.f32.mrb[0].mxu0
      %v2758 = vadd.f32 %v2630, %v2757
      %v2759 = vpop.f32.mrb[0].mxu0
      %v2760 = vpop.f32.mrb[0].mxu0
      %v2761 = vadd.f32 %v2630, %v2760
      %v2762 = vpop.f32.mrb[0].mxu0
      %2763 = vmatprep.mubr.bf16.mxu0 0
      %2764 = vmatmul.mubr.bf16.gmra.mrb[0].mxu0 %v2656
      %v2765 = vpop.f32.mrb[0].mxu0
      %v2766 = vadd.f32 %v2630, %v2765
      %v2767 = vpop.f32.mrb[0].mxu0
      %v2768 = vpop.f32.mrb[0].mxu0
      %v2769 = vadd.f32 %v2630, %v2768
      %v2770 = vpop.f32.mrb[0].mxu0
      %2771 = vmatprep.mubr.bf16.mxu0 0
      %2772 = vmatmul.mubr.bf16.gmra.mrb[0].mxu0 %v2658
      %v2773 = vpop.f32.mrb[0].mxu0
      %v2774 = vadd.f32 %v2630, %v2773
      %v2775 = vpop.f32.mrb[0].mxu0
      %v2776 = vpop.f32.mrb[0].mxu0
      %v2777 = vadd.f32 %v2630, %v2776
      %v2778 = vpop.f32.mrb[0].mxu0
      %2779 = vmatprep.mubr.bf16.mxu0 0
      %2780 = vmatmul.mubr.bf16.gmra.mrb[0].mxu0 %v2660
      %v2781 = vpop.f32.mrb[0].mxu0
      %v2782 = vadd.f32 %v2630, %v2781
      %v2783 = vpop.f32.mrb[0].mxu0
      %v2784 = vpop.f32.mrb[0].mxu0
      %v2785 = vadd.f32 %v2630, %v2784
      %v2786 = vpop.f32.mrb[0].mxu0
      %2787 = vmatprep.mubr.bf16.mxu0 0
      %2788 = vmatmul.mubr.bf16.gmra.mrb[0].mxu0 %v2662
      %v2789 = vpop.f32.mrb[0].mxu0
      %v2790 = vadd.f32 %v2630, %v2789
      %v2791 = vpop.f32.mrb[0].mxu0
      %v2792 = vpop.f32.mrb[0].mxu0
      %v2793 = vadd.f32 %v2630, %v2792
      %v2794 = vpop.f32.mrb[0].mxu0
      %2795 = vmatprep.mubr.bf16.mxu0 0
      %2796 = vmatmul.mubr.bf16.gmra.mrb[0].mxu0 %v2664
      %v2797 = vpop.f32.mrb[0].mxu0
      %v2798 = vadd.f32 %v2630, %v2797
      %v2799 = vpop.f32.mrb[0].mxu0
      %v2800 = vpop.f32.mrb[0].mxu0
      %v2801 = vadd.f32 %v2630, %v2800
      %v2802 = vpop.f32.mrb[0].mxu0
      %2803 = vmatprep.mubr.bf16.mxu0 0
      %2804 = vmatmul.mubr.bf16.gmra.mrb[0].mxu0 %v2666
      %v2805 = vpop.f32.mrb[0].mxu0
      %v2806 = vadd.f32 %v2630, %v2805
      %v2807 = vpop.f32.mrb[0].mxu0
      %v2808 = vpop.f32.mrb[0].mxu0
      %v2809 = vadd.f32 %v2630, %v2808
      %v2810 = vpop.f32.mrb[0].mxu0
      %2811 = vmatprep.mubr.bf16.mxu0 0
      %2812 = vmatmul.mubr.bf16.gmra.mrb[0].mxu0 %v2668
      %v2813 = vpop.f32.mrb[0].mxu0
      %v2814 = vadd.f32 %v2630, %v2813
      %v2815 = vpop.f32.mrb[0].mxu0
      %v2816 = vpop.f32.mrb[0].mxu0
      %v2817 = vadd.f32 %v2630, %v2816
      %v2818 = vpop.f32.mrb[0].mxu0
      %2819 = vmatprep.mubr.bf16.mxu0 0
      %2820 = vmatmul.mubr.bf16.gmra.mrb[0].mxu0 %v2670
      %v2821 = vpop.f32.mrb[0].mxu0
      %v2822 = vadd.f32 %v2630, %v2821
      %v2823 = vpop.f32.mrb[0].mxu0
      %v2824 = vpop.f32.mrb[0].mxu0
      %v2825 = vadd.f32 %v2630, %v2824
      %v2826 = vpop.f32.mrb[0].mxu0
      %2827 = vmatprep.mubr.bf16.mxu0 0
      %2828 = vmatmul.mubr.bf16.gmra.mrb[0].mxu0 %v2672
      %v2829 = vpop.f32.mrb[0].mxu0
      %v2830 = vadd.f32 %v2630, %v2829
      %v2831 = vpop.f32.mrb[0].mxu0
      %v2832 = vpop.f32.mrb[0].mxu0
      %v2833 = vadd.f32 %v2630, %v2832
      %v2834 = vpop.f32.mrb[0].mxu0
      %2835 = vmatprep.mubr.bf16.mxu0 0
      %2836 = vmatmul.mubr.bf16.gmra.mrb[0].mxu0 %v2674
      %v2837 = vpop.f32.mrb[0].mxu0
      %v2838 = vadd.f32 %v2630, %v2837
      %v2839 = vpop.f32.mrb[0].mxu0
      %v2840 = vpop.f32.mrb[0].mxu0
      %v2841 = vadd.f32 %v2630, %v2840
      %v2842 = vpop.f32.mrb[0].mxu0
      %2843 = vdwg.mxu0
      %v2844 = vmax.f32 %v2718, 0.0
      %v2845 = vmax.f32 %v2721, 0.0
      %v2846 = vmax.f32 %v2726, 0.0
      %v2847 = vmax.f32 %v2729, 0.0
      %v2848 = vmax.f32 %v2734, 0.0
      %v2849 = vmax.f32 %v2737, 0.0
      %v2850 = vmax.f32 %v2742, 0.0
      %v2851 = vmax.f32 %v2745, 0.0
      %v2852 = vmax.f32 %v2750, 0.0
      %v2853 = vmax.f32 %v2753, 0.0
      %v2854 = vmax.f32 %v2758, 0.0
      %v2855 = vmax.f32 %v2761, 0.0
      %v2856 = vmax.f32 %v2766, 0.0
      %v2857 = vmax.f32 %v2769, 0.0
      %v2858 = vmax.f32 %v2774, 0.0
      %v2859 = vmax.f32 %v2777, 0.0
      %v2860 = vmax.f32 %v2782, 0.0
      %v2861 = vmax.f32 %v2785, 0.0
      %v2862 = vmax.f32 %v2790, 0.0
      %v2863 = vmax.f32 %v2793, 0.0
      %v2864 = vmax.f32 %v2798, 0.0
      %v2865 = vmax.f32 %v2801, 0.0
      %v2866 = vmax.f32 %v2806, 0.0
      %v2867 = vmax.f32 %v2809, 0.0
      %v2868 = vmax.f32 %v2814, 0.0
      %v2869 = vmax.f32 %v2817, 0.0
      %v2870 = vmax.f32 %v2822, 0.0
      %v2871 = vmax.f32 %v2825, 0.0
      %v2872 = vmax.f32 %v2830, 0.0
      %v2873 = vmax.f32 %v2833, 0.0
      %v2874 = vmax.f32 %v2838, 0.0
      %v2875 = vmax.f32 %v2841, 0.0
      %v2876 = vpack.c.bf16 %v2845, %v2844
      %v2877 = vpack.c.bf16 %v2847, %v2846
      %v2878 = vpack.c.bf16 %v2849, %v2848
      %v2879 = vpack.c.bf16 %v2851, %v2850
      %v2880 = vpack.c.bf16 %v2853, %v2852
      %v2881 = vpack.c.bf16 %v2855, %v2854
      %v2882 = vpack.c.bf16 %v2857, %v2856
      %v2883 = vpack.c.bf16 %v2859, %v2858
      %v2884 = vpack.c.bf16 %v2861, %v2860
      %v2885 = vpack.c.bf16 %v2863, %v2862
      %v2886 = vpack.c.bf16 %v2865, %v2864
      %v2887 = vpack.c.bf16 %v2867, %v2866
      %v2888 = vpack.c.bf16 %v2869, %v2868
      %v2889 = vpack.c.bf16 %v2871, %v2870
      %v2890 = vpack.c.bf16 %v2873, %v2872
      %v2891 = vpack.c.bf16 %v2875, %v2874
      %v2908 = vunpack.c.l.b16 %v2876
      %v2909 = vunpack.c.h.b16 %v2876
      %v2910 = vunpack.c.l.b16 %v2877
      %v2911 = vunpack.c.h.b16 %v2877
      %v2912 = vunpack.c.l.b16 %v2878
      %v2913 = vunpack.c.h.b16 %v2878
      %v2914 = vunpack.c.l.b16 %v2879
      %v2915 = vunpack.c.h.b16 %v2879
      %v2916 = vunpack.c.l.b16 %v2880
      %v2917 = vunpack.c.h.b16 %v2880
      %v2918 = vunpack.c.l.b16 %v2881
      %v2919 = vunpack.c.h.b16 %v2881
      %v2920 = vunpack.c.l.b16 %v2882
      %v2921 = vunpack.c.h.b16 %v2882
      %v2922 = vunpack.c.l.b16 %v2883
      %v2923 = vunpack.c.h.b16 %v2883
      %v2924 = vunpack.c.l.b16 %v2884
      %v2925 = vunpack.c.h.b16 %v2884
      %v2926 = vunpack.c.l.b16 %v2885
      %v2927 = vunpack.c.h.b16 %v2885
      %v2928 = vunpack.c.l.b16 %v2886
      %v2929 = vunpack.c.h.b16 %v2886
      %v2930 = vunpack.c.l.b16 %v2887
      %v2931 = vunpack.c.h.b16 %v2887
      %v2932 = vunpack.c.l.b16 %v2888
      %v2933 = vunpack.c.h.b16 %v2888
      %v2934 = vunpack.c.l.b16 %v2889
      %v2935 = vunpack.c.h.b16 %v2889
      %v2936 = vunpack.c.l.b16 %v2890
      %v2937 = vunpack.c.h.b16 %v2890
      %v2938 = vunpack.c.l.b16 %v2891
      %v2939 = vunpack.c.h.b16 %v2891
      %v2940 = vpack.c.b16 %v2908, %v2908
      %v2941 = vpack.c.b16 %v2909, %v2909
      %v2942 = vpack.c.b16 %v2910, %v2910
      %v2943 = vpack.c.b16 %v2911, %v2911
      %v2944 = vpack.c.b16 %v2912, %v2912
      %v2945 = vpack.c.b16 %v2913, %v2913
      %v2946 = vpack.c.b16 %v2914, %v2914
      %v2947 = vpack.c.b16 %v2915, %v2915
      %v2948 = vpack.c.b16 %v2916, %v2916
      %v2949 = vpack.c.b16 %v2917, %v2917
      %v2950 = vpack.c.b16 %v2918, %v2918
      %v2951 = vpack.c.b16 %v2919, %v2919
      %v2952 = vpack.c.b16 %v2920, %v2920
      %v2953 = vpack.c.b16 %v2921, %v2921
      %v2954 = vpack.c.b16 %v2922, %v2922
      %v2955 = vpack.c.b16 %v2923, %v2923
      %v2956 = vpack.c.b16 %v2924, %v2924
      %v2957 = vpack.c.b16 %v2925, %v2925
      %v2958 = vpack.c.b16 %v2926, %v2926
      %v2959 = vpack.c.b16 %v2927, %v2927
      %v2960 = vpack.c.b16 %v2928, %v2928
      %v2961 = vpack.c.b16 %v2929, %v2929
      %v2962 = vpack.c.b16 %v2930, %v2930
      %v2963 = vpack.c.b16 %v2931, %v2931
      %v2964 = vpack.c.b16 %v2932, %v2932
      %v2965 = vpack.c.b16 %v2933, %v2933
      %v2966 = vpack.c.b16 %v2934, %v2934
      %v2967 = vpack.c.b16 %v2935, %v2935
      %v2968 = vpack.c.b16 %v2936, %v2936
      %v2969 = vpack.c.b16 %v2937, %v2937
      %v2970 = vpack.c.b16 %v2938, %v2938
      %v2971 = vpack.c.b16 %v2939, %v2939
      %vm3004 = vcmask 125952
      %3005 = vst.msk [vmem:[%s170] sm:$0xf] %vm3004, %v2940
      %3006 = vst.msk [vmem:[%s170 + $0x4] sm:$0xf] %vm3004, %v2941
      %3007 = vst.msk [vmem:[%s170 + $0x8] sm:$0xf] %vm3004, %v2942
      %3008 = vst.msk [vmem:[%s170 + $0xc] sm:$0xf] %vm3004, %v2943
      %3009 = vst.msk [vmem:[%s170 + $0x10] sm:$0xf] %vm3004, %v2944
      %3010 = vst.msk [vmem:[%s170 + $0x14] sm:$0xf] %vm3004, %v2945
      %3011 = vst.msk [vmem:[%s170 + $0x18] sm:$0xf] %vm3004, %v2946
      %3012 = vst.msk [vmem:[%s170 + $0x1c] sm:$0xf] %vm3004, %v2947
      %3013 = vst.msk [vmem:[%s170 + $0x20] sm:$0xf] %vm3004, %v2948
      %3014 = vst.msk [vmem:[%s170 + $0x24] sm:$0xf] %vm3004, %v2949
      %3015 = vst.msk [vmem:[%s170 + $0x28] sm:$0xf] %vm3004, %v2950
      %3016 = vst.msk [vmem:[%s170 + $0x2c] sm:$0xf] %vm3004, %v2951
      %3017 = vst.msk [vmem:[%s170 + $0x30] sm:$0xf] %vm3004, %v2952
      %3018 = vst.msk [vmem:[%s170 + $0x34] sm:$0xf] %vm3004, %v2953
      %3019 = vst.msk [vmem:[%s170 + $0x38] sm:$0xf] %vm3004, %v2954
      %3020 = vst.msk [vmem:[%s170 + $0x3c] sm:$0xf] %vm3004, %v2955
      %3021 = vst.msk [vmem:[%s170 + $0x40] sm:$0xf] %vm3004, %v2956
      %3022 = vst.msk [vmem:[%s170 + $0x44] sm:$0xf] %vm3004, %v2957
      %3023 = vst.msk [vmem:[%s170 + $0x48] sm:$0xf] %vm3004, %v2958
      %3024 = vst.msk [vmem:[%s170 + $0x4c] sm:$0xf] %vm3004, %v2959
      %3025 = vst.msk [vmem:[%s170 + $0x50] sm:$0xf] %vm3004, %v2960
      %3026 = vst.msk [vmem:[%s170 + $0x54] sm:$0xf] %vm3004, %v2961
      %3027 = vst.msk [vmem:[%s170 + $0x58] sm:$0xf] %vm3004, %v2962
      %3028 = vst.msk [vmem:[%s170 + $0x5c] sm:$0xf] %vm3004, %v2963
      %3029 = vst.msk [vmem:[%s170 + $0x60] sm:$0xf] %vm3004, %v2964
      %3030 = vst.msk [vmem:[%s170 + $0x64] sm:$0xf] %vm3004, %v2965
      %3031 = vst.msk [vmem:[%s170 + $0x68] sm:$0xf] %vm3004, %v2966
      %3032 = vst.msk [vmem:[%s170 + $0x6c] sm:$0xf] %vm3004, %v2967
      %3033 = vst.msk [vmem:[%s170 + $0x70] sm:$0xf] %vm3004, %v2968
      %3034 = vst.msk [vmem:[%s170 + $0x74] sm:$0xf] %vm3004, %v2969
      %3035 = vst.msk [vmem:[%s170 + $0x78] sm:$0xf] %vm3004, %v2970
      %3036 = vst.msk [vmem:[%s170 + $0x7c] sm:$0xf] %vm3004, %v2971
      %p3037 = scmp.lt.s32.totalorder %s14, 1
      %s3038 = scalar_select %p3037, %s14, 1
      %s3039 = smul.addr %s3038, 32
      %s3040 = smul.addr %s3039, 4
      %s3041 = scalar_lea.vmem %s3, %s3040
      // Predicated region
      $region33: #{segmentation_forward.5} parent=31 // pred_check
        %p3042 = pneg %p100
      $region34: #{segmentation_forward.5} parent=31 // pred_check_branch
        %3044 = sbr.rel (%p3042) target = $region36
      $region35: #{segmentation_forward.5} parent=31 // pred_region
        _
      $region36: #{segmentation_forward.5} parent=31 // pred_fallthru
        _
    $region32: #{segmentation_forward.5} parent=5 // pred_fallthru
      _
    %p3045 = scmp.le.s32.totalorder 2, %s9
    // Predicated region
    $region37: #{segmentation_forward.5} parent=5 // pred_check
      %p3046 = pneg %p3045
    $region38: #{segmentation_forward.5} parent=5 // pred_check_branch
      %3048 = sbr.rel (%p3046) target = $region40
    $region39: #{segmentation_forward.5} parent=5 // pred_region
      %s3049 = ssub.s32 %s9, 2
      // Predicated region
      $region41: #{segmentation_forward.5} parent=39 // pred_check
        %p3050 = pneg %p106
      $region42: #{segmentation_forward.5} parent=39 // pred_check_branch
        %3052 = sbr.rel (%p3050) target = $region44
      $region43: #{segmentation_forward.5} parent=39 // pred_region
        %p3053 = scmp.lt.s32.totalorder %s15, 1
        %s3054 = scalar_select %p3053, %s15, 1
        %s3055 = smul.addr %s3054, 32
        %s3056 = smul.addr %s3055, 4
        %s3057 = scalar_lea.vmem %s3, %s3056
      $region44: #{segmentation_forward.5} parent=39 // pred_fallthru
        _
    $region40: #{segmentation_forward.5} parent=5 // pred_fallthru
      _
  $region6: #{segmentation_forward.5} parent=0 // loop_footer
    %s13 = sadd.s32 1, %s9
  $region7: #{segmentation_forward.5} parent=0 // loop_footer_branch
    %8 = sbr.rel target = $region3
  $region8: #{segmentation_forward.5} parent=0 // loop_exit
    _

// kernel: segmentation_forward.8
$region0: #{segmentation_forward.8}
  #allocation0 [shape = 'u32[]', space=smem, size = 0x4, offset = 0x4, fixed_abs, tag = 'smem constant byte address 0x4 - core index']
  #allocation1 [shape = 'u32[144,128]{1,0:T(1,128)}', space=vmem, size = 0x12000, scoped, tag = 'internal scratch']
  %s0 = inlined_call_operand.vmem [shape: bf16[2,82,64], index: 0, kind: input, shape index: {}]
  %s1 = inlined_call_operand.vmem [shape: bf16[2,82,32], index: 1, kind: input, shape index: {}]
  %s2 = inlined_call_operand.vmem [shape: bf16[864,32], index: 2, kind: input, shape index: {}]
  %s3 = inlined_call_operand.vmem [shape: f32[1,32], index: 3, kind: input, shape index: {}]
  %s4 = inlined_call_operand.vmem [shape: bf16[2,64,32], index: 4, kind: output, shape index: {}]
  %s5 = sld [smem:[#allocation0]]
  $region49: #{segmentation_forward.8} parent=0
    _
  %s7 = ssub.s32 1, %s5
  %s8 = scalar_select 0, %s7, %s5
  loop: start=0, step=1, limit=4
  $region2: #{segmentation_forward.8} parent=0 // loop_pre_header
    _
  $region3: #{segmentation_forward.8} parent=0 // loop_header
    %s10 = sphi 0, %s14
    %p11 = scmp.ge.s32.totalorder %s10, 4
    %s20 = sphi 0, %s22
    %s23 = sphi 0, %s20
    %s24 = sphi 0, %s23
    %s40 = sphi 0, %s24
    %s46 = sphi 0, %s48
    %s49 = sphi 0, %s46
    %s50 = sphi 0, %s49
    %s66 = sphi 0, %s50
    %s70 = sphi 0, %s70
    %s72 = sphi 0, %s70
    %s73 = sphi 0, %s72
    %s87 = sphi 0, %s73
    %s91 = sphi 0, %s91
    %s93 = sphi 0, %s91
    %s94 = sphi 0, %s93
    %s108 = sphi 0, %s94
    %s114 = sphi 0, %s116
    %s117 = sphi 0, %s114
    %s118 = sphi 0, %s117
    %s134 = sphi 0, %s118
  $region4: #{segmentation_forward.8} parent=0 // loop_header_branch
    %13 = sbr.rel (%p11) target = $region8
  $region5: #{segmentation_forward.8} parent=0 // loop_body
    %s15 = ssub.s32 %s10, 1
    %s16 = ssub.s32 %s10, 2
    %s17 = sadd.s32 %s10, 1
    %s18 = ssub.s32 %s10, %s17
    %p19 = scmp.eq.s32.totalorder %s18, 0
    %s21 = sadd.s32 %s20, 1
    %s22 = scalar_select %p19, %s20, %s21
    %p25 = pneg %p19
    %p26 = scmp.eq.s32.totalorder %s10, 1
    %p27 = por %p25, %p26
    %p28 = scmp.ne.s32.totalorder %s20, %s23
    %p29 = scmp.eq.s32.totalorder %s10, 0
    %p30 = por %p28, %p29
    %p31 = scmp.ne.s32.totalorder %s20, %s23
    %p32 = scmp.eq.s32.totalorder %s15, 1
    %p33 = por %p31, %p32
    %p34 = scmp.ne.s32.totalorder %s23, %s24
    %p35 = scmp.eq.s32.totalorder %s15, 0
    %p36 = por %p34, %p35
    %p37 = scmp.ne.s32.totalorder %s23, %s24
    %p38 = scmp.eq.s32.totalorder %s16, 1
    %p39 = por %p37, %p38
    %p41 = scmp.ne.s32.totalorder %s24, %s40
    %p42 = scmp.eq.s32.totalorder %s16, 0
    %p43 = por %p41, %p42
    %s44 = ssub.s32 %s10, %s17
    %p45 = scmp.eq.s32.totalorder %s44, 0
    %s47 = sadd.s32 %s46, 1
    %s48 = scalar_select %p45, %s46, %s47
    %p51 = pneg %p45
    %p52 = scmp.eq.s32.totalorder %s10, 1
    %p53 = por %p51, %p52
    %p54 = scmp.ne.s32.totalorder %s46, %s49
    %p55 = scmp.eq.s32.totalorder %s10, 0
    %p56 = por %p54, %p55
    %p57 = scmp.ne.s32.totalorder %s46, %s49
    %p58 = scmp.eq.s32.totalorder %s15, 1
    %p59 = por %p57, %p58
    %p60 = scmp.ne.s32.totalorder %s49, %s50
    %p61 = scmp.eq.s32.totalorder %s15, 0
    %p62 = por %p60, %p61
    %p63 = scmp.ne.s32.totalorder %s49, %s50
    %p64 = scmp.eq.s32.totalorder %s16, 1
    %p65 = por %p63, %p64
    %p67 = scmp.ne.s32.totalorder %s50, %s66
    %p68 = scmp.eq.s32.totalorder %s16, 0
    %p69 = por %p67, %p68
    %s71 = sadd.s32 %s70, 1
    %p74 = scmp.eq.s32.totalorder %s10, 1
    %p75 = scmp.ne.s32.totalorder %s70, %s72
    %p76 = scmp.eq.s32.totalorder %s10, 0
    %p77 = por %p75, %p76
    %p78 = scmp.ne.s32.totalorder %s70, %s72
    %p79 = scmp.eq.s32.totalorder %s15, 1
    %p80 = por %p78, %p79
    %p81 = scmp.ne.s32.totalorder %s72, %s73
    %p82 = scmp.eq.s32.totalorder %s15, 0
    %p83 = por %p81, %p82
    %p84 = scmp.ne.s32.totalorder %s72, %s73
    %p85 = scmp.eq.s32.totalorder %s16, 1
    %p86 = por %p84, %p85
    %p88 = scmp.ne.s32.totalorder %s73, %s87
    %p89 = scmp.eq.s32.totalorder %s16, 0
    %p90 = por %p88, %p89
    %s92 = sadd.s32 %s91, 1
    %p95 = scmp.eq.s32.totalorder %s10, 1
    %p96 = scmp.ne.s32.totalorder %s91, %s93
    %p97 = scmp.eq.s32.totalorder %s10, 0
    %p98 = por %p96, %p97
    %p99 = scmp.ne.s32.totalorder %s91, %s93
    %p100 = scmp.eq.s32.totalorder %s15, 1
    %p101 = por %p99, %p100
    %p102 = scmp.ne.s32.totalorder %s93, %s94
    %p103 = scmp.eq.s32.totalorder %s15, 0
    %p104 = por %p102, %p103
    %p105 = scmp.ne.s32.totalorder %s93, %s94
    %p106 = scmp.eq.s32.totalorder %s16, 1
    %p107 = por %p105, %p106
    %p109 = scmp.ne.s32.totalorder %s94, %s108
    %p110 = scmp.eq.s32.totalorder %s16, 0
    %p111 = por %p109, %p110
    %s112 = ssub.s32 %s10, %s17
    %p113 = scmp.eq.s32.totalorder %s112, 0
    %s115 = sadd.s32 %s114, 1
    %s116 = scalar_select %p113, %s114, %s115
    %p119 = pneg %p113
    %p120 = scmp.eq.s32.totalorder %s10, 1
    %p121 = por %p119, %p120
    %p122 = scmp.ne.s32.totalorder %s114, %s117
    %p123 = scmp.eq.s32.totalorder %s10, 0
    %p124 = por %p122, %p123
    %p125 = scmp.ne.s32.totalorder %s114, %s117
    %p126 = scmp.eq.s32.totalorder %s15, 1
    %p127 = por %p125, %p126
    %p128 = scmp.ne.s32.totalorder %s117, %s118
    %p129 = scmp.eq.s32.totalorder %s15, 0
    %p130 = por %p128, %p129
    %p131 = scmp.ne.s32.totalorder %s117, %s118
    %p132 = scmp.eq.s32.totalorder %s16, 1
    %p133 = por %p131, %p132
    %p135 = scmp.ne.s32.totalorder %s118, %s134
    %p136 = scmp.eq.s32.totalorder %s16, 0
    %p137 = por %p135, %p136
    %p138 = scmp.le.s32.totalorder 1, %s10
    %p139 = scmp.lt.s32.totalorder %s10, 3
    %p140 = pnand %p138, %p139
    %p141 = pneg %p140
    // Predicated region
    $region9: #{segmentation_forward.8} parent=5 // pred_check
      _
    $region10: #{segmentation_forward.8} parent=5 // pred_check_branch
      %143 = sbr.rel (%p140) target = $region12
    $region11: #{segmentation_forward.8} parent=5 // pred_region
      %s144 = ssub.s32 %s10, 1
      // Predicated region
      $region13: #{segmentation_forward.8} parent=11 // pred_check
        %p145 = pneg %p83
      $region14: #{segmentation_forward.8} parent=11 // pred_check_branch
        %147 = sbr.rel (%p145) target = $region16
      $region15: #{segmentation_forward.8} parent=11 // pred_region
        _
      $region16: #{segmentation_forward.8} parent=11 // pred_fallthru
        _
      // Predicated region
      $region17: #{segmentation_forward.8} parent=11 // pred_check
        %p148 = pneg %p104
      $region18: #{segmentation_forward.8} parent=11 // pred_check_branch
        %150 = sbr.rel (%p148) target = $region20
      $region19: #{segmentation_forward.8} parent=11 // pred_region
        _
      $region20: #{segmentation_forward.8} parent=11 // pred_fallthru
        _
    $region12: #{segmentation_forward.8} parent=5 // pred_fallthru
      _
    %p151 = scmp.lt.s32.totalorder %s10, 2
    // Predicated region
    $region21: #{segmentation_forward.8} parent=5 // pred_check
      %p152 = pneg %p151
    $region22: #{segmentation_forward.8} parent=5 // pred_check_branch
      %154 = sbr.rel (%p152) target = $region24
    $region23: #{segmentation_forward.8} parent=5 // pred_region
      // Predicated region
      $region25: #{segmentation_forward.8} parent=23 // pred_check
        %p155 = pneg %p30
      $region26: #{segmentation_forward.8} parent=23 // pred_check_branch
        %157 = sbr.rel (%p155) target = $region28
      $region27: #{segmentation_forward.8} parent=23 // pred_region
        %p158 = scmp.lt.s32.totalorder %s10, 1
        %s159 = scalar_select %p158, %s10, 1
        %s160 = smul.addr %s159, 11
        %s161 = smul.addr %s160, 4
        %s162 = scalar_lea.vmem %s0, %s161
      $region28: #{segmentation_forward.8} parent=23 // pred_fallthru
        _
      // Predicated region
      $region29: #{segmentation_forward.8} parent=23 // pred_check
        %p163 = pneg %p56
      $region30: #{segmentation_forward.8} parent=23 // pred_check_branch
        %165 = sbr.rel (%p163) target = $region32
      $region31: #{segmentation_forward.8} parent=23 // pred_region
        %p166 = scmp.lt.s32.totalorder %s10, 1
        %s167 = scalar_select %p166, %s10, 1
        %s168 = smul.addr %s167, 11
        %s169 = smul.addr %s168, 4
        %s170 = scalar_lea.vmem %s1, %s169
      $region32: #{segmentation_forward.8} parent=23 // pred_fallthru
        _
    $region24: #{segmentation_forward.8} parent=5 // pred_fallthru
      _
    %p171 = scmp.le.s32.totalorder 1, %s10
    %p172 = scmp.lt.s32.totalorder %s10, 3
    %p173 = pnand %p171, %p172
    %p174 = pneg %p173
    // Predicated region
    $region33: #{segmentation_forward.8} parent=5 // pred_check
      _
    $region34: #{segmentation_forward.8} parent=5 // pred_check_branch
      %176 = sbr.rel (%p173) target = $region36
    $region35: #{segmentation_forward.8} parent=5 // pred_region
      %s177 = ssub.s32 %s10, 1
      %p178 = scmp.lt.s32.totalorder %s15, 1
      %s179 = scalar_select %p178, %s15, 1
      %s180 = smul.addr %s179, 11
      %s181 = smul.addr %s180, 4
      %s182 = scalar_lea.vmem %s0, %s181
      %p183 = pneg %p36
      %p184 = pneg %p33
      %p185 = scmp.lt.s32.totalorder %s15, 1
      %s186 = scalar_select %p185, %s15, 1
      %s187 = smul.addr %s186, 11
      %s188 = smul.addr %s187, 4
      %s189 = scalar_lea.vmem %s1, %s188
      %p190 = pneg %p62
      %p191 = pneg %p59
      %p192 = pneg %p83
      %p193 = pneg %p80
      %p194 = pneg %p104
      %p195 = pneg %p101
      %p196 = pneg %p130
      %p197 = pneg %p127
      %p198 = scmp.lt.s32.totalorder %s15, 1
      %s199 = scalar_select %p198, %s15, 1
      %s200 = smul.addr %s199, 8
      %s201 = smul.addr %s200, 4
      %s202 = scalar_lea.vmem %s4, %s201
      %p203 = scmp.lt.s32.totalorder %s15, 1
      %s204 = scalar_select %p203, %s15, 1
      %s205 = smul.addr %s204, 11
      %s206 = smul.addr %s205, 4
      %s207 = scalar_lea.vmem %s0, %s206
      %p208 = scmp.lt.s32.totalorder %s15, 1
      %s209 = scalar_select %p208, %s15, 1
      %s210 = smul.addr %s209, 11
      %s211 = smul.addr %s210, 4
      %s212 = scalar_lea.vmem %s1, %s211
      %p213 = scmp.lt.s32.totalorder %s15, 1
      %s214 = scalar_select %p213, %s15, 1
      %s215 = smul.addr %s214, 8
      %s216 = smul.addr %s215, 4
      %s217 = scalar_lea.vmem %s4, %s216
      %v221 = vld [vmem:[%s207] sm:$0xf]
      %v222 = vld [vmem:[%s207 + $0x4] sm:$0xf]
      %v223 = vld [vmem:[%s207 + $0x8] sm:$0xf]
      %v224 = vld [vmem:[%s207 + $0xc] sm:$0xf]
      %v225 = vld [vmem:[%s207 + $0x10] sm:$0xf]
      %v226 = vld [vmem:[%s207 + $0x14] sm:$0xf]
      %v227 = vld [vmem:[%s207 + $0x18] sm:$0xf]
      %v228 = vld [vmem:[%s207 + $0x1c] sm:$0xf]
      %v229 = vld [vmem:[%s207 + $0x20] sm:$0xf]
      %v230 = vld [vmem:[%s207 + $0x24] sm:$0xf]
      %v231 = vld [vmem:[%s207 + $0x28] sm:$0x1]
      %v232 = vld [vmem:[%s212] sm:$0xf]
      %v233 = vld [vmem:[%s212 + $0x4] sm:$0xf]
      %v234 = vld [vmem:[%s212 + $0x8] sm:$0xf]
      %v235 = vld [vmem:[%s212 + $0xc] sm:$0xf]
      %v236 = vld [vmem:[%s212 + $0x10] sm:$0xf]
      %v237 = vld [vmem:[%s212 + $0x14] sm:$0xf]
      %v238 = vld [vmem:[%s212 + $0x18] sm:$0xf]
      %v239 = vld [vmem:[%s212 + $0x1c] sm:$0xf]
      %v240 = vld [vmem:[%s212 + $0x20] sm:$0xf]
      %v241 = vld [vmem:[%s212 + $0x24] sm:$0xf]
      %v242 = vld [vmem:[%s212 + $0x28] sm:$0x1]
      %v243 = vlaneseq
      %v244 = vshrl.u32 %v243, 7
      %v245 = vadd.s32 %v244, 8
      %v246 = vadd.s32 %v244, 16
      %v247 = vadd.s32 %v244, 24
      %v248 = vadd.s32 %v244, 32
      %v249 = vadd.s32 %v244, 40
      %v250 = vadd.s32 %v244, 48
      %v251 = vadd.s32 %v244, 56
      %vm252 = vcmp.lt.s32.totalorder %v244, 0
      %v253 = vsub.s32 0, %v244
      %v254 = vsel %vm252, %v253, %v244
      %v255 = vshrl.u32 %v254, 3
      %v256 = vand.u32 %v254, 7
      %v257 = vsub.s32 0, %v256
      %v258 = vsel %vm252, %v257, %v256
      %vm259 = vcmp.lt.s32.totalorder %v245, 0
      %v260 = vsub.s32 0, %v245
      %v261 = vsel %vm259, %v260, %v245
      %v262 = vshrl.u32 %v261, 3
      %v263 = vand.u32 %v261, 7
      %v264 = vsub.s32 0, %v263
      %v265 = vsel %vm259, %v264, %v263
      %vm266 = vcmp.lt.s32.totalorder %v246, 0
      %v267 = vsub.s32 0, %v246
      %v268 = vsel %vm266, %v267, %v246
      %v269 = vshrl.u32 %v268, 3
      %v270 = vand.u32 %v268, 7
      %v271 = vsub.s32 0, %v270
      %v272 = vsel %vm266, %v271, %v270
      %vm273 = vcmp.lt.s32.totalorder %v247, 0
      %v274 = vsub.s32 0, %v247
      %v275 = vsel %vm273, %v274, %v247
      %v276 = vshrl.u32 %v275, 3
      %v277 = vand.u32 %v275, 7
      %v278 = vsub.s32 0, %v277
      %v279 = vsel %vm273, %v278, %v277
      %vm280 = vcmp.lt.s32.totalorder %v248, 0
      %v281 = vsub.s32 0, %v248
      %v282 = vsel %vm280, %v281, %v248
      %v283 = vshrl.u32 %v282, 3
      %v284 = vand.u32 %v282, 7
      %v285 = vsub.s32 0, %v284
      %v286 = vsel %vm280, %v285, %v284
      %vm287 = vcmp.lt.s32.totalorder %v249, 0
      %v288 = vsub.s32 0, %v249
      %v289 = vsel %vm287, %v288, %v249
      %v290 = vshrl.u32 %v289, 3
      %v291 = vand.u32 %v289, 7
      %v292 = vsub.s32 0, %v291
      %v293 = vsel %vm287, %v292, %v291
      %vm294 = vcmp.lt.s32.totalorder %v250, 0
      %v295 = vsub.s32 0, %v250
      %v296 = vsel %vm294, %v295, %v250
      %v297 = vshrl.u32 %v296, 3
      %v298 = vand.u32 %v296, 7
      %v299 = vsub.s32 0, %v298
      %v300 = vsel %vm294, %v299, %v298
      %vm301 = vcmp.lt.s32.totalorder %v251, 0
      %v302 = vsub.s32 0, %v251
      %v303 = vsel %vm301, %v302, %v251
      %v304 = vshrl.u32 %v303, 3
      %v305 = vand.u32 %v303, 7
      %v306 = vsub.s32 0, %v305
      %v307 = vsel %vm301, %v306, %v305
      %vm308 = vcmp.ne.s32.totalorder %v258, 0
      %vm309 = vcmp.ne.s32.totalorder %v265, 0
      %vm310 = vcmp.ne.s32.totalorder %v272, 0
      %vm311 = vcmp.ne.s32.totalorder %v279, 0
      %vm312 = vcmp.ne.s32.totalorder %v286, 0
      %vm313 = vcmp.ne.s32.totalorder %v293, 0
      %vm314 = vcmp.ne.s32.totalorder %v300, 0
      %vm315 = vcmp.ne.s32.totalorder %v307, 0
      %vm316 = vcmp.lt.s32.totalorder %v258, 0
      %vm317 = vcmp.lt.s32.totalorder %v265, 0
      %vm318 = vcmp.lt.s32.totalorder %v272, 0
      %vm319 = vcmp.lt.s32.totalorder %v279, 0
      %vm320 = vcmp.lt.s32.totalorder %v286, 0
      %vm321 = vcmp.lt.s32.totalorder %v293, 0
      %vm322 = vcmp.lt.s32.totalorder %v300, 0
      %vm323 = vcmp.lt.s32.totalorder %v307, 0
      %vm324 = vmand %vm316, %vm308
      %vm325 = vmand %vm317, %vm309
      %vm326 = vmand %vm318, %vm310
      %vm327 = vmand %vm319, %vm311
      %vm328 = vmand %vm320, %vm312
      %vm329 = vmand %vm321, %vm313
      %vm330 = vmand %vm322, %vm314
      %vm331 = vmand %vm323, %vm315
      %v332 = vadd.s32 %v258, 8
      %v333 = vadd.s32 %v265, 8
      %v334 = vadd.s32 %v272, 8
      %v335 = vadd.s32 %v279, 8
      %v336 = vadd.s32 %v286, 8
      %v337 = vadd.s32 %v293, 8
      %v338 = vadd.s32 %v300, 8
      %v339 = vadd.s32 %v307, 8
      %v340 = vsel %vm324, %v332, %v258
      %v341 = vsel %vm325, %v333, %v265
      %v342 = vsel %vm326, %v334, %v272
      %v343 = vsel %vm327, %v335, %v279
      %v344 = vsel %vm328, %v336, %v286
      %v345 = vsel %vm329, %v337, %v293
      %v346 = vsel %vm330, %v338, %v300
      %v347 = vsel %vm331, %v339, %v307
      %v356 = vunpack.c.l.b16 %v221
      %v357 = vunpack.c.l.b16 %v222
      %v358 = vunpack.c.l.b16 %v223
      %v359 = vunpack.c.l.b16 %v224
      %v360 = vunpack.c.l.b16 %v225
      %v361 = vunpack.c.l.b16 %v226
      %v362 = vunpack.c.l.b16 %v227
      %v363 = vunpack.c.l.b16 %v228
      %v364 = vpack.c.b16 %v357, %v356
      %v365 = vpack.c.b16 %v359, %v358
      %v366 = vpack.c.b16 %v361, %v360
      %v367 = vpack.c.b16 %v363, %v362
      %v376 = vunpack.c.l.b16 %v232
      %v377 = vunpack.c.l.b16 %v233
      %v378 = vunpack.c.l.b16 %v234
      %v379 = vunpack.c.l.b16 %v235
      %v380 = vunpack.c.l.b16 %v236
      %v381 = vunpack.c.l.b16 %v237
      %v382 = vunpack.c.l.b16 %v238
      %v383 = vunpack.c.l.b16 %v239
      %v384 = vpack.c.b16 %v377, %v376
      %v385 = vpack.c.b16 %v379, %v378
      %v386 = vpack.c.b16 %v381, %v380
      %v387 = vpack.c.b16 %v383, %v382
      %388 = vrot.lane.b32.xlu0 %v384, 64
      %v389 = vpop.permute.xlu0 %388
      %390 = vrot.lane.b32.xlu0 %v385, 64
      %v391 = vpop.permute.xlu0 %390
      %392 = vrot.lane.b32.xlu0 %v386, 64
      %v393 = vpop.permute.xlu0 %392
      %394 = vrot.lane.b32.xlu0 %v387, 64
      %v395 = vpop.permute.xlu0 %394
      %vm396 = vcmask 523264
      %v399 = vsel %vm396, %v364, %v389
      %v403 = vsel %vm396, %v365, %v391
      %v407 = vsel %vm396, %v366, %v393
      %v411 = vsel %vm396, %v367, %v395
      %vm413 = vcmp.eq.s32.totalorder %v340, 0
      %vm414 = vcmp.eq.s32.totalorder %v341, 0
      %vm415 = vcmp.eq.s32.totalorder %v342, 0
      %vm416 = vcmp.eq.s32.totalorder %v343, 0
      %vm417 = vcmp.eq.s32.totalorder %v344, 0
      %vm418 = vcmp.eq.s32.totalorder %v345, 0
      %vm419 = vcmp.eq.s32.totalorder %v346, 0
      %vm420 = vcmp.eq.s32.totalorder %v347, 0
      %v421 = vsel %vm413, 1, 0
      %v422 = vsel %vm414, 1, 0
      %v423 = vsel %vm415, 1, 0
      %v424 = vsel %vm416, 1, 0
      %v425 = vsel %vm417, 1, 0
      %v426 = vsel %vm418, 1, 0
      %v427 = vsel %vm419, 1, 0
      %v428 = vsel %vm420, 1, 0
      %vm429 = vcmp.eq.s32.totalorder %v421, 1
      %vm430 = vcmp.eq.s32.totalorder %v422, 1
      %vm431 = vcmp.eq.s32.totalorder %v423, 1
      %vm432 = vcmp.eq.s32.totalorder %v424, 1
      %vm433 = vcmp.eq.s32.totalorder %v425, 1
      %vm434 = vcmp.eq.s32.totalorder %v426, 1
      %vm435 = vcmp.eq.s32.totalorder %v427, 1
      %vm436 = vcmp.eq.s32.totalorder %v428, 1
      %vm437 = vmpackc.low %vm429, %vm429
      %vm438 = vmpackc.low %vm430, %vm430
      %vm439 = vmpackc.low %vm431, %vm431
      %vm440 = vmpackc.low %vm432, %vm432
      %vm441 = vmpackc.low %vm433, %vm433
      %vm442 = vmpackc.low %vm434, %vm434
      %vm443 = vmpackc.low %vm435, %vm435
      %vm444 = vmpackc.low %vm436, %vm436
      %v445 = vsel %vm437, 65537, 0
      %v446 = vsel %vm438, 65537, 0
      %v447 = vsel %vm439, 65537, 0
      %v448 = vsel %vm440, 65537, 0
      %v449 = vsel %vm441, 65537, 0
      %v450 = vsel %vm442, 65537, 0
      %v451 = vsel %vm443, 65537, 0
      %v452 = vsel %vm444, 65537, 0
      %v453 = vunpack.c.l.b16 %v445
      %v454 = vunpack.c.l.b16 %v446
      %v455 = vunpack.c.l.b16 %v447
      %v456 = vunpack.c.l.b16 %v448
      %v457 = vunpack.c.l.b16 %v449
      %v458 = vunpack.c.l.b16 %v450
      %v459 = vunpack.c.l.b16 %v451
      %v460 = vunpack.c.l.b16 %v452
      %v461 = vpack.c.b16 %v454, %v453
      %v462 = vpack.c.b16 %v456, %v455
      %v463 = vpack.c.b16 %v458, %v457
      %v464 = vpack.c.b16 %v460, %v459
      %vm465 = vcmp.ne.s16.totalorder %v461, 0
      %vm466 = vcmp.ne.s16.totalorder %v462, 0
      %vm467 = vcmp.ne.s16.totalorder %v463, 0
      %vm468 = vcmp.ne.s16.totalorder %v464, 0
      %v469 = vsel %vm465, 0, %v399
      %v470 = vsel %vm466, 0, %v403
      %v471 = vsel %vm467, 0, %v407
      %v472 = vsel %vm468, 0, %v411
      %v474 = vunpack.c.l.b16 %v229
      %v475 = vpack.c.b16 %v474, %v474
      %v477 = vunpack.c.l.b16 %v240
      %v478 = vpack.c.b16 %v477, %v477
      %479 = vrot.lane.b32.xlu0 %v478, 64
      %v480 = vpop.permute.xlu0 %479
      %v483 = vsel %vm396, %v475, %v480
      %vm485 = vcmp.eq.s32.totalorder %v340, 7
      %vm486 = vcmp.eq.s32.totalorder %v341, 7
      %vm487 = vcmp.eq.s32.totalorder %v342, 7
      %vm488 = vcmp.eq.s32.totalorder %v343, 7
      %vm489 = vcmp.eq.s32.totalorder %v344, 7
      %vm490 = vcmp.eq.s32.totalorder %v345, 7
      %vm491 = vcmp.eq.s32.totalorder %v346, 7
      %vm492 = vcmp.eq.s32.totalorder %v347, 7
      %v493 = vsel %vm485, 1, 0
      %v494 = vsel %vm486, 1, 0
      %v495 = vsel %vm487, 1, 0
      %v496 = vsel %vm488, 1, 0
      %v497 = vsel %vm489, 1, 0
      %v498 = vsel %vm490, 1, 0
      %v499 = vsel %vm491, 1, 0
      %v500 = vsel %vm492, 1, 0
      %vm501 = vcmp.eq.s32.totalorder %v493, 1
      %vm502 = vcmp.eq.s32.totalorder %v494, 1
      %vm503 = vcmp.eq.s32.totalorder %v495, 1
      %vm504 = vcmp.eq.s32.totalorder %v496, 1
      %vm505 = vcmp.eq.s32.totalorder %v497, 1
      %vm506 = vcmp.eq.s32.totalorder %v498, 1
      %vm507 = vcmp.eq.s32.totalorder %v499, 1
      %vm508 = vcmp.eq.s32.totalorder %v500, 1
      %vm509 = vmpackc.low %vm501, %vm501
      %vm510 = vmpackc.low %vm502, %vm502
      %vm511 = vmpackc.low %vm503, %vm503
      %vm512 = vmpackc.low %vm504, %vm504
      %vm513 = vmpackc.low %vm505, %vm505
      %vm514 = vmpackc.low %vm506, %vm506
      %vm515 = vmpackc.low %vm507, %vm507
      %vm516 = vmpackc.low %vm508, %vm508
      %v517 = vsel %vm509, 65537, 0
      %v518 = vsel %vm510, 65537, 0
      %v519 = vsel %vm511, 65537, 0
      %v520 = vsel %vm512, 65537, 0
      %v521 = vsel %vm513, 65537, 0
      %v522 = vsel %vm514, 65537, 0
      %v523 = vsel %vm515, 65537, 0
      %v524 = vsel %vm516, 65537, 0
      %v525 = vunpack.c.l.b16 %v517
      %v526 = vunpack.c.l.b16 %v518
      %v527 = vunpack.c.l.b16 %v519
      %v528 = vunpack.c.l.b16 %v520
      %v529 = vunpack.c.l.b16 %v521
      %v530 = vunpack.c.l.b16 %v522
      %v531 = vunpack.c.l.b16 %v523
      %v532 = vunpack.c.l.b16 %v524
      %v533 = vpack.c.b16 %v526, %v525
      %v534 = vpack.c.b16 %v528, %v527
      %v535 = vpack.c.b16 %v530, %v529
      %v536 = vpack.c.b16 %v532, %v531
      %vm537 = vcmask 1040384
      %v538 = vrot.slane %v533, 7
      %v539 = vrot.slane %v534, 7
      %v540 = vsel %vm537, %v538, %v539
      %v541 = vrot.slane %v535, 7
      %v542 = vsel %vm537, %v539, %v541
      %v543 = vrot.slane %v536, 7
      %v544 = vsel %vm537, %v541, %v543
      %vm545 = vcmp.ne.s16.totalorder %v538, 0
      %vm546 = vcmp.ne.s16.totalorder %v540, 0
      %vm547 = vcmp.ne.s16.totalorder %v542, 0
      %vm548 = vcmp.ne.s16.totalorder %v544, 0
      %vm549 = vcmp.ne.s16.totalorder %v543, 0
      %v550 = vsel %vm545, 0, %v399
      %v551 = vsel %vm546, 0, %v403
      %v552 = vsel %vm547, 0, %v407
      %v553 = vsel %vm548, 0, %v411
      %v554 = vsel %vm549, 0, %v483
      %v555 = vpack.c.b16 %v358, %v357
      %v556 = vpack.c.b16 %v360, %v359
      %v557 = vpack.c.b16 %v362, %v361
      %v558 = vpack.c.b16 %v474, %v363
      %v559 = vpack.c.b16 %v378, %v377
      %v560 = vpack.c.b16 %v380, %v379
      %v561 = vpack.c.b16 %v382, %v381
      %v562 = vpack.c.b16 %v477, %v383
      %563 = vrot.lane.b32.xlu0 %v559, 64
      %v564 = vpop.permute.xlu0 %563
      %565 = vrot.lane.b32.xlu0 %v560, 64
      %v566 = vpop.permute.xlu0 %565
      %567 = vrot.lane.b32.xlu0 %v561, 64
      %v568 = vpop.permute.xlu0 %567
      %569 = vrot.lane.b32.xlu0 %v562, 64
      %v570 = vpop.permute.xlu0 %569
      %v573 = vsel %vm396, %v555, %v564
      %v577 = vsel %vm396, %v556, %v566
      %v581 = vsel %vm396, %v557, %v568
      %v585 = vsel %vm396, %v558, %v570
      %v587 = vsel %vm465, 0, %v573
      %v588 = vsel %vm466, 0, %v577
      %v589 = vsel %vm467, 0, %v581
      %v590 = vsel %vm468, 0, %v585
      %v592 = vunpack.c.l.b16 %v230
      %v593 = vpack.c.b16 %v592, %v592
      %v595 = vunpack.c.l.b16 %v241
      %v596 = vpack.c.b16 %v595, %v595
      %597 = vrot.lane.b32.xlu0 %v596, 64
      %v598 = vpop.permute.xlu0 %597
      %v601 = vsel %vm396, %v593, %v598
      %v603 = vsel %vm545, 0, %v573
      %v604 = vsel %vm546, 0, %v577
      %v605 = vsel %vm547, 0, %v581
      %v606 = vsel %vm548, 0, %v585
      %v607 = vsel %vm549, 0, %v601
      %v608 = vpack.c.b16 %v592, %v474
      %v609 = vpack.c.b16 %v595, %v477
      %610 = vrot.lane.b32.xlu0 %v609, 64
      %v611 = vpop.permute.xlu0 %610
      %v614 = vsel %vm396, %v608, %v611
      %v616 = vsel %vm465, 0, %v403
      %v617 = vsel %vm466, 0, %v407
      %v618 = vsel %vm467, 0, %v411
      %v619 = vsel %vm468, 0, %v614
      %v621 = vunpack.c.l.b16 %v231
      %v622 = vpack.c.b16 %v621, %v621
      %v624 = vunpack.c.l.b16 %v242
      %v625 = vpack.c.b16 %v624, %v624
      %626 = vrot.lane.b32.xlu0 %v625, 64
      %v627 = vpop.permute.xlu0 %626
      %v630 = vsel %vm396, %v622, %v627
      %v632 = vsel %vm545, 0, %v403
      %v633 = vsel %vm546, 0, %v407
      %v634 = vsel %vm547, 0, %v411
      %v635 = vsel %vm548, 0, %v614
      %v636 = vsel %vm549, 0, %v630
      %vm637 = vsmask.f32 7424
      %v638 = vshrl.u32 %v399, 16
      %v640 = vshll.u32 %v399, 16
      %v642 = vrot.slane %v640, 1
      %v643 = vor.u32 %v638, %v642
      %v644 = vshll.u32 %v403, 16
      %v646 = vrot.slane %v644, 1
      %v647 = vsel %vm637, %v643, %v646
      %v648 = vshrl.u32 %v403, 16
      %v650 = vor.u32 %v648, %v646
      %v651 = vshll.u32 %v407, 16
      %v653 = vrot.slane %v651, 1
      %v654 = vsel %vm637, %v650, %v653
      %v655 = vshrl.u32 %v407, 16
      %v657 = vor.u32 %v655, %v653
      %v658 = vshll.u32 %v411, 16
      %v660 = vrot.slane %v658, 1
      %v661 = vsel %vm637, %v657, %v660
      %v662 = vshrl.u32 %v411, 16
      %v664 = vor.u32 %v662, %v660
      %v665 = vshll.u32 %v483, 16
      %v667 = vrot.slane %v665, 1
      %v668 = vsel %vm637, %v664, %v667
      %669 = vrot.lane.b32.xlu0 %v647, 96
      %v670 = vpop.permute.xlu0 %669
      %671 = vrot.lane.b32.xlu0 %v654, 96
      %v672 = vpop.permute.xlu0 %671
      %673 = vrot.lane.b32.xlu0 %v661, 96
      %v674 = vpop.permute.xlu0 %673
      %675 = vrot.lane.b32.xlu0 %v668, 96
      %v676 = vpop.permute.xlu0 %675
      %vm682 = vcmask 1046528
      %v683 = vrot.slane %v550, 1
      %v684 = vrot.slane %v551, 1
      %v685 = vsel %vm682, %v683, %v684
      %v686 = vrot.slane %v552, 1
      %v687 = vsel %vm682, %v684, %v686
      %v688 = vrot.slane %v553, 1
      %v689 = vsel %vm682, %v686, %v688
      %v690 = vrot.slane %v554, 1
      %v691 = vsel %vm682, %v688, %v690
      %692 = vrot.lane.b32.xlu0 %v685, 64
      %v693 = vpop.permute.xlu0 %692
      %694 = vrot.lane.b32.xlu0 %v687, 64
      %v695 = vpop.permute.xlu0 %694
      %696 = vrot.lane.b32.xlu0 %v689, 64
      %v697 = vpop.permute.xlu0 %696
      %698 = vrot.lane.b32.xlu0 %v691, 64
      %v699 = vpop.permute.xlu0 %698
      %704 = vrot.lane.b32.xlu0 %v587, 32
      %v705 = vpop.permute.xlu0 %704
      %706 = vrot.lane.b32.xlu0 %v588, 32
      %v707 = vpop.permute.xlu0 %706
      %708 = vrot.lane.b32.xlu0 %v589, 32
      %v709 = vpop.permute.xlu0 %708
      %710 = vrot.lane.b32.xlu0 %v590, 32
      %v711 = vpop.permute.xlu0 %710
      %v712 = vshrl.u32 %v573, 16
      %v714 = vshll.u32 %v573, 16
      %v716 = vrot.slane %v714, 1
      %v717 = vor.u32 %v712, %v716
      %v718 = vshll.u32 %v577, 16
      %v720 = vrot.slane %v718, 1
      %v721 = vsel %vm637, %v717, %v720
      %v722 = vshrl.u32 %v577, 16
      %v724 = vor.u32 %v722, %v720
      %v725 = vshll.u32 %v581, 16
      %v727 = vrot.slane %v725, 1
      %v728 = vsel %vm637, %v724, %v727
      %v729 = vshrl.u32 %v581, 16
      %v731 = vor.u32 %v729, %v727
      %v732 = vshll.u32 %v585, 16
      %v734 = vrot.slane %v732, 1
      %v735 = vsel %vm637, %v731, %v734
      %v736 = vshrl.u32 %v585, 16
      %v738 = vor.u32 %v736, %v734
      %v739 = vshll.u32 %v601, 16
      %v741 = vrot.slane %v739, 1
      %v742 = vsel %vm637, %v738, %v741
      %v748 = vrot.slane %v603, 1
      %v749 = vrot.slane %v604, 1
      %v750 = vsel %vm682, %v748, %v749
      %v751 = vrot.slane %v605, 1
      %v752 = vsel %vm682, %v749, %v751
      %v753 = vrot.slane %v606, 1
      %v754 = vsel %vm682, %v751, %v753
      %v755 = vrot.slane %v607, 1
      %v756 = vsel %vm682, %v753, %v755
      %757 = vrot.lane.b32.xlu0 %v750, 96
      %v758 = vpop.permute.xlu0 %757
      %759 = vrot.lane.b32.xlu0 %v752, 96
      %v760 = vpop.permute.xlu0 %759
      %761 = vrot.lane.b32.xlu0 %v754, 96
      %v762 = vpop.permute.xlu0 %761
      %763 = vrot.lane.b32.xlu0 %v756, 96
      %v764 = vpop.permute.xlu0 %763
      %769 = vrot.lane.b32.xlu0 %v616, 64
      %v770 = vpop.permute.xlu0 %769
      %771 = vrot.lane.b32.xlu0 %v617, 64
      %v772 = vpop.permute.xlu0 %771
      %773 = vrot.lane.b32.xlu0 %v618, 64
      %v774 = vpop.permute.xlu0 %773
      %775 = vrot.lane.b32.xlu0 %v619, 64
      %v776 = vpop.permute.xlu0 %775
      %v777 = vshll.u32 %v614, 16
      %v779 = vrot.slane %v777, 1
      %v780 = vsel %vm637, %v664, %v779
      %v781 = vshrl.u32 %v614, 16
      %v783 = vor.u32 %v781, %v779
      %v784 = vshll.u32 %v630, 16
      %v786 = vrot.slane %v784, 1
      %v787 = vsel %vm637, %v783, %v786
      %788 = vrot.lane.b32.xlu0 %v654, 32
      %v789 = vpop.permute.xlu0 %788
      %790 = vrot.lane.b32.xlu0 %v661, 32
      %v791 = vpop.permute.xlu0 %790
      %792 = vrot.lane.b32.xlu0 %v780, 32
      %v793 = vpop.permute.xlu0 %792
      %794 = vrot.lane.b32.xlu0 %v787, 32
      %v795 = vpop.permute.xlu0 %794
      %v801 = vrot.slane %v632, 1
      %v802 = vrot.slane %v633, 1
      %v803 = vsel %vm682, %v801, %v802
      %v804 = vrot.slane %v634, 1
      %v805 = vsel %vm682, %v802, %v804
      %v806 = vrot.slane %v635, 1
      %v807 = vsel %vm682, %v804, %v806
      %v808 = vrot.slane %v636, 1
      %v809 = vsel %vm682, %v806, %v808
      %vm810 = vcmask 785408
      %v813 = vsel %vm810, %v469, %v670
      %v817 = vsel %vm810, %v470, %v672
      %v821 = vsel %vm810, %v471, %v674
      %v825 = vsel %vm810, %v472, %v676
      %v828 = vsel %vm396, %v670, %v693
      %v831 = vsel %vm396, %v672, %v695
      %v834 = vsel %vm396, %v674, %v697
      %v837 = vsel %vm396, %v676, %v699
      %vm839 = vcmask 261120
      %v841 = vsel %vm839, %v693, %v705
      %v844 = vsel %vm839, %v695, %v707
      %v847 = vsel %vm839, %v697, %v709
      %v850 = vsel %vm839, %v699, %v711
      %v854 = vsel %vm810, %v721, %v758
      %v858 = vsel %vm810, %v728, %v760
      %v862 = vsel %vm810, %v735, %v762
      %v866 = vsel %vm810, %v742, %v764
      %v869 = vsel %vm396, %v758, %v770
      %v872 = vsel %vm396, %v760, %v772
      %v875 = vsel %vm396, %v762, %v774
      %v878 = vsel %vm396, %v764, %v776
      %v881 = vsel %vm839, %v770, %v789
      %v884 = vsel %vm839, %v772, %v791
      %v887 = vsel %vm839, %v774, %v793
      %v890 = vsel %vm839, %v776, %v795
      %v892 = vld [vmem:[%s2] sm:$0xf]
      %v893 = vld [vmem:[%s2 + $0x4] sm:$0xf]
      %v894 = vld [vmem:[%s2 + $0x8] sm:$0xf]
      %v895 = vld [vmem:[%s2 + $0xc] sm:$0xf]
      %v896 = vld [vmem:[%s2 + $0x10] sm:$0xf]
      %v897 = vld [vmem:[%s2 + $0x14] sm:$0xf]
      %v898 = vld [vmem:[%s2 + $0x18] sm:$0xf]
      %v899 = vld [vmem:[%s2 + $0x1c] sm:$0xf]
      %v900 = vld [vmem:[%s2 + $0x20] sm:$0xf]
      %v901 = vld [vmem:[%s2 + $0x24] sm:$0xf]
      %v902 = vld [vmem:[%s2 + $0x28] sm:$0xf]
      %v903 = vld [vmem:[%s2 + $0x2c] sm:$0xf]
      %v904 = vld [vmem:[%s2 + $0x30] sm:$0xf]
      %v905 = vld [vmem:[%s2 + $0x34] sm:$0xf]
      %v906 = vld [vmem:[%s2 + $0x38] sm:$0xf]
      %v907 = vld [vmem:[%s2 + $0x3c] sm:$0xf]
      %v908 = vld [vmem:[%s2 + $0x40] sm:$0xf]
      %v909 = vld [vmem:[%s2 + $0x44] sm:$0xf]
      %v910 = vld [vmem:[%s2 + $0x48] sm:$0xf]
      %v911 = vld [vmem:[%s2 + $0x4c] sm:$0xf]
      %v912 = vld [vmem:[%s2 + $0x50] sm:$0xf]
      %v913 = vld [vmem:[%s2 + $0x54] sm:$0xf]
      %v914 = vld [vmem:[%s2 + $0x58] sm:$0xf]
      %v915 = vld [vmem:[%s2 + $0x5c] sm:$0xf]
      %v916 = vld [vmem:[%s2 + $0x60] sm:$0xf]
      %v917 = vld [vmem:[%s2 + $0x64] sm:$0xf]
      %v918 = vld [vmem:[%s2 + $0x68] sm:$0xf]
      %v919 = vld [vmem:[%s2 + $0x6c] sm:$0xf]
      %v920 = vld [vmem:[%s2 + $0x70] sm:$0xf]
      %v921 = vld [vmem:[%s2 + $0x74] sm:$0xf]
      %v922 = vld [vmem:[%s2 + $0x78] sm:$0xf]
      %v923 = vld [vmem:[%s2 + $0x7c] sm:$0xf]
      %v924 = vld [vmem:[%s2 + $0x80] sm:$0xf]
      %v925 = vld [vmem:[%s2 + $0x84] sm:$0xf]
      %v926 = vld [vmem:[%s2 + $0x88] sm:$0xf]
      %v927 = vld [vmem:[%s2 + $0x8c] sm:$0xf]
      %v928 = vld [vmem:[%s2 + $0x90] sm:$0xf]
      %v929 = vld [vmem:[%s2 + $0x94] sm:$0xf]
      %v930 = vld [vmem:[%s2 + $0x98] sm:$0xf]
      %v931 = vld [vmem:[%s2 + $0x9c] sm:$0xf]
      %v932 = vld [vmem:[%s2 + $0xa0] sm:$0xf]
      %v933 = vld [vmem:[%s2 + $0xa4] sm:$0xf]
      %v934 = vld [vmem:[%s2 + $0xa8] sm:$0xf]
      %v935 = vld [vmem:[%s2 + $0xac] sm:$0xf]
      %v936 = vld [vmem:[%s2 + $0xb0] sm:$0xf]
      %v937 = vld [vmem:[%s2 + $0xb4] sm:$0xf]
      %v938 = vld [vmem:[%s2 + $0xb8] sm:$0xf]
      %v939 = vld [vmem:[%s2 + $0xbc] sm:$0xf]
      %v940 = vld [vmem:[%s2 + $0xc0] sm:$0xf]
      %v941 = vld [vmem:[%s2 + $0xc4] sm:$0xf]
      %v942 = vld [vmem:[%s2 + $0xc8] sm:$0xf]
      %v943 = vld [vmem:[%s2 + $0xcc] sm:$0xf]
      %v944 = vld [vmem:[%s2 + $0xd0] sm:$0xf]
      %v945 = vld [vmem:[%s2 + $0xd4] sm:$0xf]
      %v946 = vld [vmem:[%s2 + $0xd8] sm:$0xf]
      %v947 = vld [vmem:[%s2 + $0xdc] sm:$0xf]
      %v948 = vld [vmem:[%s2 + $0xe0] sm:$0xf]
      %v949 = vld [vmem:[%s2 + $0xe4] sm:$0xf]
      %v950 = vld [vmem:[%s2 + $0xe8] sm:$0xf]
      %v951 = vld [vmem:[%s2 + $0xec] sm:$0xf]
      %v952 = vld [vmem:[%s2 + $0xf0] sm:$0xf]
      %v953 = vld [vmem:[%s2 + $0xf4] sm:$0xf]
      %v954 = vld [vmem:[%s2 + $0xf8] sm:$0xf]
      %v955 = vld [vmem:[%s2 + $0xfc] sm:$0xf]
      %v956 = vld [vmem:[%s2 + $0x100] sm:$0xf]
      %v957 = vld [vmem:[%s2 + $0x104] sm:$0xf]
      %v958 = vld [vmem:[%s2 + $0x108] sm:$0xf]
      %v959 = vld [vmem:[%s2 + $0x10c] sm:$0xf]
      %v960 = vld [vmem:[%s2 + $0x110] sm:$0xf]
      %v961 = vld [vmem:[%s2 + $0x114] sm:$0xf]
      %v962 = vld [vmem:[%s2 + $0x118] sm:$0xf]
      %v963 = vld [vmem:[%s2 + $0x11c] sm:$0xf]
      %v964 = vld [vmem:[%s2 + $0x120] sm:$0xf]
      %v965 = vld [vmem:[%s2 + $0x124] sm:$0xf]
      %v966 = vld [vmem:[%s2 + $0x128] sm:$0xf]
      %v967 = vld [vmem:[%s2 + $0x12c] sm:$0xf]
      %v968 = vld [vmem:[%s2 + $0x130] sm:$0xf]
      %v969 = vld [vmem:[%s2 + $0x134] sm:$0xf]
      %v970 = vld [vmem:[%s2 + $0x138] sm:$0xf]
      %v971 = vld [vmem:[%s2 + $0x13c] sm:$0xf]
      %v972 = vld [vmem:[%s2 + $0x140] sm:$0xf]
      %v973 = vld [vmem:[%s2 + $0x144] sm:$0xf]
      %v974 = vld [vmem:[%s2 + $0x148] sm:$0xf]
      %v975 = vld [vmem:[%s2 + $0x14c] sm:$0xf]
      %v976 = vld [vmem:[%s2 + $0x150] sm:$0xf]
      %v977 = vld [vmem:[%s2 + $0x154] sm:$0xf]
      %v978 = vld [vmem:[%s2 + $0x158] sm:$0xf]
      %v979 = vld [vmem:[%s2 + $0x15c] sm:$0xf]
      %v980 = vld [vmem:[%s2 + $0x160] sm:$0xf]
      %v981 = vld [vmem:[%s2 + $0x164] sm:$0xf]
      %v982 = vld [vmem:[%s2 + $0x168] sm:$0xf]
      %v983 = vld [vmem:[%s2 + $0x16c] sm:$0xf]
      %v984 = vld [vmem:[%s2 + $0x170] sm:$0xf]
      %v985 = vld [vmem:[%s2 + $0x174] sm:$0xf]
      %v986 = vld [vmem:[%s2 + $0x178] sm:$0xf]
      %v987 = vld [vmem:[%s2 + $0x17c] sm:$0xf]
      %v988 = vld [vmem:[%s2 + $0x180] sm:$0xf]
      %v989 = vld [vmem:[%s2 + $0x184] sm:$0xf]
      %v990 = vld [vmem:[%s2 + $0x188] sm:$0xf]
      %v991 = vld [vmem:[%s2 + $0x18c] sm:$0xf]
      %v992 = vld [vmem:[%s2 + $0x190] sm:$0xf]
      %v993 = vld [vmem:[%s2 + $0x194] sm:$0xf]
      %v994 = vld [vmem:[%s2 + $0x198] sm:$0xf]
      %v995 = vld [vmem:[%s2 + $0x19c] sm:$0xf]
      %v996 = vld [vmem:[%s2 + $0x1a0] sm:$0xf]
      %v997 = vld [vmem:[%s2 + $0x1a4] sm:$0xf]
      %v998 = vld [vmem:[%s2 + $0x1a8] sm:$0xf]
      %v999 = vld [vmem:[%s2 + $0x1ac] sm:$0xf]
      %v1000 = vld [vmem:[%s3] sm:$0x1]
      %v1002 = vlaneseq
      %v1003 = vshrl.u32 %v1002, 7
      %v1004 = vsub.s32 0, %v1003
      %v1005 = vrot.slane %v1000, %v1004
      %v1115 = vunpack.c.l.b16 %v892
      %v1116 = vunpack.c.l.b16 %v893
      %v1117 = vunpack.c.l.b16 %v894
      %v1118 = vunpack.c.l.b16 %v895
      %v1119 = vunpack.c.l.b16 %v896
      %v1120 = vunpack.c.l.b16 %v897
      %v1121 = vunpack.c.l.b16 %v898
      %v1122 = vunpack.c.l.b16 %v899
      %v1123 = vunpack.c.l.b16 %v900
      %v1124 = vunpack.c.l.b16 %v901
      %v1125 = vunpack.c.l.b16 %v902
      %v1126 = vunpack.c.l.b16 %v903
      %v1127 = vunpack.c.l.b16 %v904
      %v1128 = vunpack.c.l.b16 %v905
      %v1129 = vunpack.c.l.b16 %v906
      %v1130 = vunpack.c.l.b16 %v907
      %v1131 = vunpack.c.l.b16 %v908
      %v1132 = vunpack.c.l.b16 %v909
      %v1133 = vunpack.c.l.b16 %v910
      %v1134 = vunpack.c.l.b16 %v911
      %v1135 = vunpack.c.l.b16 %v912
      %v1136 = vunpack.c.l.b16 %v913
      %v1137 = vunpack.c.l.b16 %v914
      %v1138 = vunpack.c.l.b16 %v915
      %v1139 = vunpack.c.l.b16 %v916
      %v1140 = vunpack.c.l.b16 %v917
      %v1141 = vunpack.c.l.b16 %v918
      %v1142 = vunpack.c.l.b16 %v919
      %v1143 = vunpack.c.l.b16 %v920
      %v1144 = vunpack.c.l.b16 %v921
      %v1145 = vunpack.c.l.b16 %v922
      %v1146 = vunpack.c.l.b16 %v923
      %v1147 = vunpack.c.l.b16 %v924
      %v1148 = vunpack.c.l.b16 %v925
      %v1149 = vunpack.c.l.b16 %v926
      %v1150 = vunpack.c.l.b16 %v927
      %v1151 = vunpack.c.l.b16 %v928
      %v1152 = vunpack.c.l.b16 %v929
      %v1153 = vunpack.c.l.b16 %v930
      %v1154 = vunpack.c.l.b16 %v931
      %v1155 = vunpack.c.l.b16 %v932
      %v1156 = vunpack.c.l.b16 %v933
      %v1157 = vunpack.c.l.b16 %v934
      %v1158 = vunpack.c.l.b16 %v935
      %v1159 = vunpack.c.l.b16 %v936
      %v1160 = vunpack.c.l.b16 %v937
      %v1161 = vunpack.c.l.b16 %v938
      %v1162 = vunpack.c.l.b16 %v939
      %v1163 = vunpack.c.l.b16 %v940
      %v1164 = vunpack.c.l.b16 %v941
      %v1165 = vunpack.c.l.b16 %v942
      %v1166 = vunpack.c.l.b16 %v943
      %v1167 = vunpack.c.l.b16 %v944
      %v1168 = vunpack.c.l.b16 %v945
      %v1169 = vunpack.c.l.b16 %v946
      %v1170 = vunpack.c.l.b16 %v947
      %v1171 = vunpack.c.l.b16 %v948
      %v1172 = vunpack.c.l.b16 %v949
      %v1173 = vunpack.c.l.b16 %v950
      %v1174 = vunpack.c.l.b16 %v951
      %v1175 = vunpack.c.l.b16 %v952
      %v1176 = vunpack.c.l.b16 %v953
      %v1177 = vunpack.c.l.b16 %v954
      %v1178 = vunpack.c.l.b16 %v955
      %v1179 = vunpack.c.l.b16 %v956
      %v1180 = vunpack.c.l.b16 %v957
      %v1181 = vunpack.c.l.b16 %v958
      %v1182 = vunpack.c.l.b16 %v959
      %v1183 = vunpack.c.l.b16 %v960
      %v1184 = vunpack.c.l.b16 %v961
      %v1185 = vunpack.c.l.b16 %v962
      %v1186 = vunpack.c.l.b16 %v963
      %v1187 = vunpack.c.l.b16 %v964
      %v1188 = vunpack.c.l.b16 %v965
      %v1189 = vunpack.c.l.b16 %v966
      %v1190 = vunpack.c.l.b16 %v967
      %v1191 = vunpack.c.l.b16 %v968
      %v1192 = vunpack.c.l.b16 %v969
      %v1193 = vunpack.c.l.b16 %v970
      %v1194 = vunpack.c.l.b16 %v971
      %v1195 = vunpack.c.l.b16 %v972
      %v1196 = vunpack.c.l.b16 %v973
      %v1197 = vunpack.c.l.b16 %v974
      %v1198 = vunpack.c.l.b16 %v975
      %v1199 = vunpack.c.l.b16 %v976
      %v1200 = vunpack.c.l.b16 %v977
      %v1201 = vunpack.c.l.b16 %v978
      %v1202 = vunpack.c.l.b16 %v979
      %v1203 = vunpack.c.l.b16 %v980
      %v1204 = vunpack.c.l.b16 %v981
      %v1205 = vunpack.c.l.b16 %v982
      %v1206 = vunpack.c.l.b16 %v983
      %v1207 = vunpack.c.l.b16 %v984
      %v1208 = vunpack.c.l.b16 %v985
      %v1209 = vunpack.c.l.b16 %v986
      %v1210 = vunpack.c.l.b16 %v987
      %v1211 = vunpack.c.l.b16 %v988
      %v1212 = vunpack.c.l.b16 %v989
      %v1213 = vunpack.c.l.b16 %v990
      %v1214 = vunpack.c.l.b16 %v991
      %v1215 = vunpack.c.l.b16 %v992
      %v1216 = vunpack.c.l.b16 %v993
      %v1217 = vunpack.c.l.b16 %v994
      %v1218 = vunpack.c.l.b16 %v995
      %v1219 = vunpack.c.l.b16 %v996
      %v1220 = vunpack.c.l.b16 %v997
      %v1221 = vunpack.c.l.b16 %v998
      %v1222 = vunpack.c.l.b16 %v999
      %v1223 = vpack.c.b16 %v1116, %v1115
      %v1224 = vpack.c.b16 %v1118, %v1117
      %v1225 = vpack.c.b16 %v1120, %v1119
      %v1226 = vpack.c.b16 %v1122, %v1121
      %v1227 = vpack.c.b16 %v1124, %v1123
      %v1228 = vpack.c.b16 %v1126, %v1125
      %v1229 = vpack.c.b16 %v1128, %v1127
      %v1230 = vpack.c.b16 %v1130, %v1129
      %v1231 = vpack.c.b16 %v1132, %v1131
      %v1232 = vpack.c.b16 %v1134, %v1133
      %v1233 = vpack.c.b16 %v1136, %v1135
      %v1234 = vpack.c.b16 %v1138, %v1137
      %v1235 = vpack.c.b16 %v1140, %v1139
      %v1236 = vpack.c.b16 %v1142, %v1141
      %v1237 = vpack.c.b16 %v1144, %v1143
      %v1238 = vpack.c.b16 %v1146, %v1145
      %v1239 = vpack.c.b16 %v1148, %v1147
      %v1240 = vpack.c.b16 %v1150, %v1149
      %v1241 = vpack.c.b16 %v1152, %v1151
      %v1242 = vpack.c.b16 %v1154, %v1153
      %v1243 = vpack.c.b16 %v1156, %v1155
      %v1244 = vpack.c.b16 %v1158, %v1157
      %v1245 = vpack.c.b16 %v1160, %v1159
      %v1246 = vpack.c.b16 %v1162, %v1161
      %v1247 = vpack.c.b16 %v1164, %v1163
      %v1248 = vpack.c.b16 %v1166, %v1165
      %v1249 = vpack.c.b16 %v1168, %v1167
      %v1250 = vpack.c.b16 %v1170, %v1169
      %v1251 = vpack.c.b16 %v1172, %v1171
      %v1252 = vpack.c.b16 %v1174, %v1173
      %v1253 = vpack.c.b16 %v1176, %v1175
      %v1254 = vpack.c.b16 %v1178, %v1177
      %v1255 = vpack.c.b16 %v1180, %v1179
      %v1256 = vpack.c.b16 %v1182, %v1181
      %v1257 = vpack.c.b16 %v1184, %v1183
      %v1258 = vpack.c.b16 %v1186, %v1185
      %v1259 = vpack.c.b16 %v1188, %v1187
      %v1260 = vpack.c.b16 %v1190, %v1189
      %v1261 = vpack.c.b16 %v1192, %v1191
      %v1262 = vpack.c.b16 %v1194, %v1193
      %v1263 = vpack.c.b16 %v1196, %v1195
      %v1264 = vpack.c.b16 %v1198, %v1197
      %v1265 = vpack.c.b16 %v1200, %v1199
      %v1266 = vpack.c.b16 %v1202, %v1201
      %v1267 = vpack.c.b16 %v1204, %v1203
      %v1268 = vpack.c.b16 %v1206, %v1205
      %v1269 = vpack.c.b16 %v1208, %v1207
      %v1270 = vpack.c.b16 %v1210, %v1209
      %v1271 = vpack.c.b16 %v1212, %v1211
      %v1272 = vpack.c.b16 %v1214, %v1213
      %v1273 = vpack.c.b16 %v1216, %v1215
      %v1274 = vpack.c.b16 %v1218, %v1217
      %v1275 = vpack.c.b16 %v1220, %v1219
      %v1276 = vpack.c.b16 %v1222, %v1221
      %v1332 = vsel %vm810, %v803, 0
      %v1335 = vsel %vm810, %v805, 0
      %v1338 = vsel %vm810, %v807, 0
      %v1341 = vsel %vm810, %v809, 0
      %1343 = vmatprep.subr.bf16.mxu0 0
      %1344 = vmatpush1.bf16.msra.mxu0 %v1223
      %1345 = vmatprep.subr.bf16.mxu0 0
      %1346 = vmatpush1.bf16.msra.mxu0 %v1224
      %1347 = vmatprep.subr.bf16.mxu0 0
      %1348 = vmatpush1.bf16.msra.mxu0 %v1225
      %1349 = vmatprep.subr.bf16.mxu0 0
      %1350 = vmatpush1.bf16.msra.mxu0 %v1226
      %1351 = vmatprep.subr.bf16.mxu0 0
      %1352 = vmatpush1.bf16.msra.mxu0 %v1227
      %1353 = vmatprep.subr.bf16.mxu0 0
      %1354 = vmatpush1.bf16.msra.mxu0 %v1228
      %1355 = vmatprep.subr.bf16.mxu0 0
      %1356 = vmatpush1.bf16.msra.mxu0 %v1229
      %1357 = vmatprep.subr.bf16.mxu0 0
      %1358 = vmatpush1.bf16.msra.mxu0 %v1230
      %1359 = vmatprep.subr.bf16.mxu0 0
      %1360 = vmatpush1.bf16.msra.mxu0 %v1231
      %1361 = vmatprep.subr.bf16.mxu0 0
      %1362 = vmatpush1.bf16.msra.mxu0 %v1232
      %1363 = vmatprep.subr.bf16.mxu0 0
      %1364 = vmatpush1.bf16.msra.mxu0 %v1233
      %1365 = vmatprep.subr.bf16.mxu0 0
      %1366 = vmatpush1.bf16.msra.mxu0 %v1234
      %1367 = vmatprep.subr.bf16.mxu0 0
      %1368 = vmatpush1.bf16.msra.mxu0 %v1235
      %1369 = vmatprep.subr.bf16.mxu0 0
      %1370 = vmatpush1.bf16.msra.mxu0 %v1236
      %1371 = vmatprep.subr.bf16.mxu0 0
      %1372 = vmatpush1.bf16.msra.mxu0 %v1237
      %1373 = vmatprep.subr.bf16.mxu0 0
      %1374 = vmatpush1.bf16.msra.mxu0 %v1238
      %1375 = vmatprep.mubr.bf16.mxu0 %v828
      %1376 = vmatmul.mubr.bf16.gmra.mrb[0].mxu0 %v813
      %v1377 = vpop.f32.mrb[0].mxu0
      %v1378 = vadd.f32 %v1005, %v1377
      %v1379 = vpop.f32.mrb[0].mxu0
      %v1380 = vpop.f32.mrb[0].mxu0
      %v1381 = vadd.f32 %v1005, %v1380
      %v1382 = vpop.f32.mrb[0].mxu0
      %1383 = vmatprep.mubr.bf16.mxu0 %v831
      %1384 = vmatmul.mubr.bf16.gmra.mrb[0].mxu0 %v817
      %v1385 = vpop.f32.mrb[0].mxu0
      %v1386 = vadd.f32 %v1005, %v1385
      %v1387 = vpop.f32.mrb[0].mxu0
      %v1388 = vpop.f32.mrb[0].mxu0
      %v1389 = vadd.f32 %v1005, %v1388
      %v1390 = vpop.f32.mrb[0].mxu0
      %1391 = vmatprep.mubr.bf16.mxu0 %v834
      %1392 = vmatmul.mubr.bf16.gmra.mrb[0].mxu0 %v821
      %v1393 = vpop.f32.mrb[0].mxu0
      %v1394 = vadd.f32 %v1005, %v1393
      %v1395 = vpop.f32.mrb[0].mxu0
      %v1396 = vpop.f32.mrb[0].mxu0
      %v1397 = vadd.f32 %v1005, %v1396
      %v1398 = vpop.f32.mrb[0].mxu0
      %1399 = vmatprep.mubr.bf16.mxu0 %v837
      %1400 = vmatmul.mubr.bf16.gmra.mrb[0].mxu0 %v825
      %v1401 = vpop.f32.mrb[0].mxu0
      %v1402 = vadd.f32 %v1005, %v1401
      %v1403 = vpop.f32.mrb[0].mxu0
      %v1404 = vpop.f32.mrb[0].mxu0
      %v1405 = vadd.f32 %v1005, %v1404
      %v1406 = vpop.f32.mrb[0].mxu0
      %1407 = vdwg.mxu0
      %1408 = vmatprep.subr.bf16.mxu0 0
      %1409 = vmatpush1.bf16.msra.mxu0 %v1239
      %1410 = vmatprep.subr.bf16.mxu0 0
      %1411 = vmatpush1.bf16.msra.mxu0 %v1240
      %1412 = vmatprep.subr.bf16.mxu0 0
      %1413 = vmatpush1.bf16.msra.mxu0 %v1241
      %1414 = vmatprep.subr.bf16.mxu0 0
      %1415 = vmatpush1.bf16.msra.mxu0 %v1242
      %1416 = vmatprep.subr.bf16.mxu0 0
      %1417 = vmatpush1.bf16.msra.mxu0 %v1243
      %1418 = vmatprep.subr.bf16.mxu0 0
      %1419 = vmatpush1.bf16.msra.mxu0 %v1244
      %1420 = vmatprep.subr.bf16.mxu0 0
      %1421 = vmatpush1.bf16.msra.mxu0 %v1245
      %1422 = vmatprep.subr.bf16.mxu0 0
      %1423 = vmatpush1.bf16.msra.mxu0 %v1246
      %1424 = vmatprep.subr.bf16.mxu0 0
      %1425 = vmatpush1.bf16.msra.mxu0 %v1247
      %1426 = vmatprep.subr.bf16.mxu0 0
      %1427 = vmatpush1.bf16.msra.mxu0 %v1248
      %1428 = vmatprep.subr.bf16.mxu0 0
      %1429 = vmatpush1.bf16.msra.mxu0 %v1249
      %1430 = vmatprep.subr.bf16.mxu0 0
      %1431 = vmatpush1.bf16.msra.mxu0 %v1250
      %1432 = vmatprep.subr.bf16.mxu0 0
      %1433 = vmatpush1.bf16.msra.mxu0 %v1251
      %1434 = vmatprep.subr.bf16.mxu0 0
      %1435 = vmatpush1.bf16.msra.mxu0 %v1252
      %1436 = vmatprep.subr.bf16.mxu0 0
      %1437 = vmatpush1.bf16.msra.mxu0 %v1253
      %1438 = vmatprep.subr.bf16.mxu0 0
      %1439 = vmatpush1.bf16.msra.mxu0 %v1254
      %1440 = vmatprep.mubr.bf16.mxu0 %v854
      %1441 = vmatmul.mubr.bf16.gmra.mrb[0].mxu0 %v841
      %v1442 = vpop.f32.mrb[0].mxu0
      %v1443 = vadd.f32 %v1378, %v1442
      %v1444 = vpop.f32.mrb[0].mxu0
      %v1445 = vpop.f32.mrb[0].mxu0
      %v1446 = vadd.f32 %v1381, %v1445
      %v1447 = vpop.f32.mrb[0].mxu0
      %1448 = vmatprep.mubr.bf16.mxu0 %v858
      %1449 = vmatmul.mubr.bf16.gmra.mrb[0].mxu0 %v844
      %v1450 = vpop.f32.mrb[0].mxu0
      %v1451 = vadd.f32 %v1386, %v1450
      %v1452 = vpop.f32.mrb[0].mxu0
      %v1453 = vpop.f32.mrb[0].mxu0
      %v1454 = vadd.f32 %v1389, %v1453
      %v1455 = vpop.f32.mrb[0].mxu0
      %1456 = vmatprep.mubr.bf16.mxu0 %v862
      %1457 = vmatmul.mubr.bf16.gmra.mrb[0].mxu0 %v847
      %v1458 = vpop.f32.mrb[0].mxu0
      %v1459 = vadd.f32 %v1394, %v1458
      %v1460 = vpop.f32.mrb[0].mxu0
      %v1461 = vpop.f32.mrb[0].mxu0
      %v1462 = vadd.f32 %v1397, %v1461
      %v1463 = vpop.f32.mrb[0].mxu0
      %1464 = vmatprep.mubr.bf16.mxu0 %v866
      %1465 = vmatmul.mubr.bf16.gmra.mrb[0].mxu0 %v850
      %v1466 = vpop.f32.mrb[0].mxu0
      %v1467 = vadd.f32 %v1402, %v1466
      %v1468 = vpop.f32.mrb[0].mxu0
      %v1469 = vpop.f32.mrb[0].mxu0
      %v1470 = vadd.f32 %v1405, %v1469
      %v1471 = vpop.f32.mrb[0].mxu0
      %1472 = vdwg.mxu0
      %1473 = vmatprep.subr.bf16.mxu0 0
      %1474 = vmatpush1.bf16.msra.mxu0 %v1255
      %1475 = vmatprep.subr.bf16.mxu0 0
      %1476 = vmatpush1.bf16.msra.mxu0 %v1256
      %1477 = vmatprep.subr.bf16.mxu0 0
      %1478 = vmatpush1.bf16.msra.mxu0 %v1257
      %1479 = vmatprep.subr.bf16.mxu0 0
      %1480 = vmatpush1.bf16.msra.mxu0 %v1258
      %1481 = vmatprep.subr.bf16.mxu0 0
      %1482 = vmatpush1.bf16.msra.mxu0 %v1259
      %1483 = vmatprep.subr.bf16.mxu0 0
      %1484 = vmatpush1.bf16.msra.mxu0 %v1260
      %1485 = vmatprep.subr.bf16.mxu0 0
      %1486 = vmatpush1.bf16.msra.mxu0 %v1261
      %1487 = vmatprep.subr.bf16.mxu0 0
      %1488 = vmatpush1.bf16.msra.mxu0 %v1262
      %1489 = vmatprep.subr.bf16.mxu0 0
      %1490 = vmatpush1.bf16.msra.mxu0 %v1263
      %1491 = vmatprep.subr.bf16.mxu0 0
      %1492 = vmatpush1.bf16.msra.mxu0 %v1264
      %1493 = vmatprep.subr.bf16.mxu0 0
      %1494 = vmatpush1.bf16.msra.mxu0 %v1265
      %1495 = vmatprep.subr.bf16.mxu0 0
      %1496 = vmatpush1.bf16.msra.mxu0 %v1266
      %1497 = vmatprep.subr.bf16.mxu0 0
      %1498 = vmatpush1.bf16.msra.mxu0 %v1267
      %1499 = vmatprep.subr.bf16.mxu0 0
      %1500 = vmatpush1.bf16.msra.mxu0 %v1268
      %1501 = vmatprep.subr.bf16.mxu0 0
      %1502 = vmatpush1.bf16.msra.mxu0 %v1269
      %1503 = vmatprep.subr.bf16.mxu0 0
      %1504 = vmatpush1.bf16.msra.mxu0 %v1270
      %1505 = vmatprep.mubr.bf16.mxu0 %v881
      %1506 = vmatmul.mubr.bf16.gmra.mrb[0].mxu0 %v869
      %v1507 = vpop.f32.mrb[0].mxu0
      %v1508 = vadd.f32 %v1443, %v1507
      %v1509 = vpop.f32.mrb[0].mxu0
      %v1510 = vpop.f32.mrb[0].mxu0
      %v1511 = vadd.f32 %v1446, %v1510
      %v1512 = vpop.f32.mrb[0].mxu0
      %1513 = vmatprep.mubr.bf16.mxu0 %v884
      %1514 = vmatmul.mubr.bf16.gmra.mrb[0].mxu0 %v872
      %v1515 = vpop.f32.mrb[0].mxu0
      %v1516 = vadd.f32 %v1451, %v1515
      %v1517 = vpop.f32.mrb[0].mxu0
      %v1518 = vpop.f32.mrb[0].mxu0
      %v1519 = vadd.f32 %v1454, %v1518
      %v1520 = vpop.f32.mrb[0].mxu0
      %1521 = vmatprep.mubr.bf16.mxu0 %v887
      %1522 = vmatmul.mubr.bf16.gmra.mrb[0].mxu0 %v875
      %v1523 = vpop.f32.mrb[0].mxu0
      %v1524 = vadd.f32 %v1459, %v1523
      %v1525 = vpop.f32.mrb[0].mxu0
      %v1526 = vpop.f32.mrb[0].mxu0
      %v1527 = vadd.f32 %v1462, %v1526
      %v1528 = vpop.f32.mrb[0].mxu0
      %1529 = vmatprep.mubr.bf16.mxu0 %v890
      %1530 = vmatmul.mubr.bf16.gmra.mrb[0].mxu0 %v878
      %v1531 = vpop.f32.mrb[0].mxu0
      %v1532 = vadd.f32 %v1467, %v1531
      %v1533 = vpop.f32.mrb[0].mxu0
      %v1534 = vpop.f32.mrb[0].mxu0
      %v1535 = vadd.f32 %v1470, %v1534
      %v1536 = vpop.f32.mrb[0].mxu0
      %1537 = vdwg.mxu0
      %1538 = vmatprep.subr.bf16.mxu0 0
      %1539 = vmatpush1.bf16.msra.mxu0 %v1271
      %1540 = vmatprep.subr.bf16.mxu0 0
      %1541 = vmatpush1.bf16.msra.mxu0 %v1272
      %1542 = vmatprep.subr.bf16.mxu0 0
      %1543 = vmatpush1.bf16.msra.mxu0 %v1273
      %1544 = vmatprep.subr.bf16.mxu0 0
      %1545 = vmatpush1.bf16.msra.mxu0 %v1274
      %1546 = vmatprep.subr.bf16.mxu0 0
      %1547 = vmatpush1.bf16.msra.mxu0 %v1275
      %1548 = vmatprep.subr.bf16.mxu0 0
      %1549 = vmatpush1.bf16.msra.mxu0 %v1276
      %1550 = vmatprep.subr.bf16.mxu0 0
      %1551 = vmatpush1.bf16.msra.mxu0 0
      %1552 = vmatprep.subr.bf16.mxu0 0
      %1553 = vmatpush1.bf16.msra.mxu0 0
      %1554 = vmatprep.subr.bf16.mxu0 0
      %1555 = vmatpush1.bf16.msra.mxu0 0
      %1556 = vmatprep.subr.bf16.mxu0 0
      %1557 = vmatpush1.bf16.msra.mxu0 0
      %1558 = vmatprep.subr.bf16.mxu0 0
      %1559 = vmatpush1.bf16.msra.mxu0 0
      %1560 = vmatprep.subr.bf16.mxu0 0
      %1561 = vmatpush1.bf16.msra.mxu0 0
      %1562 = vmatprep.subr.bf16.mxu0 0
      %1563 = vmatpush1.bf16.msra.mxu0 0
      %1564 = vmatprep.subr.bf16.mxu0 0
      %1565 = vmatpush1.bf16.msra.mxu0 0
      %1566 = vmatprep.subr.bf16.mxu0 0
      %1567 = vmatpush1.bf16.msra.mxu0 0
      %1568 = vmatprep.subr.bf16.mxu0 0
      %1569 = vmatpush1.bf16.msra.mxu0 0
      %1570 = vmatprep.mubr.bf16.mxu0 0
      %1571 = vmatmul.mubr.bf16.gmra.mrb[0].mxu0 %v1332
      %v1572 = vpop.f32.mrb[0].mxu0
      %v1573 = vadd.f32 %v1508, %v1572
      %v1574 = vpop.f32.mrb[0].mxu0
      %v1575 = vpop.f32.mrb[0].mxu0
      %v1576 = vadd.f32 %v1511, %v1575
      %v1577 = vpop.f32.mrb[0].mxu0
      %1578 = vmatprep.mubr.bf16.mxu0 0
      %1579 = vmatmul.mubr.bf16.gmra.mrb[0].mxu0 %v1335
      %v1580 = vpop.f32.mrb[0].mxu0
      %v1581 = vadd.f32 %v1516, %v1580
      %v1582 = vpop.f32.mrb[0].mxu0
      %v1583 = vpop.f32.mrb[0].mxu0
      %v1584 = vadd.f32 %v1519, %v1583
      %v1585 = vpop.f32.mrb[0].mxu0
      %1586 = vmatprep.mubr.bf16.mxu0 0
      %1587 = vmatmul.mubr.bf16.gmra.mrb[0].mxu0 %v1338
      %v1588 = vpop.f32.mrb[0].mxu0
      %v1589 = vadd.f32 %v1524, %v1588
      %v1590 = vpop.f32.mrb[0].mxu0
      %v1591 = vpop.f32.mrb[0].mxu0
      %v1592 = vadd.f32 %v1527, %v1591
      %v1593 = vpop.f32.mrb[0].mxu0
      %1594 = vmatprep.mubr.bf16.mxu0 0
      %1595 = vmatmul.mubr.bf16.gmra.mrb[0].mxu0 %v1341
      %v1596 = vpop.f32.mrb[0].mxu0
      %v1597 = vadd.f32 %v1532, %v1596
      %v1598 = vpop.f32.mrb[0].mxu0
      %v1599 = vpop.f32.mrb[0].mxu0
      %v1600 = vadd.f32 %v1535, %v1599
      %v1601 = vpop.f32.mrb[0].mxu0
      %1602 = vdwg.mxu0
      %v1603 = vmax.f32 %v1573, 0.0
      %v1604 = vmax.f32 %v1576, 0.0
      %v1605 = vmax.f32 %v1581, 0.0
      %v1606 = vmax.f32 %v1584, 0.0
      %v1607 = vmax.f32 %v1589, 0.0
      %v1608 = vmax.f32 %v1592, 0.0
      %v1609 = vmax.f32 %v1597, 0.0
      %v1610 = vmax.f32 %v1600, 0.0
      %v1611 = vpack.c.bf16 %v1604, %v1603
      %v1612 = vpack.c.bf16 %v1606, %v1605
      %v1613 = vpack.c.bf16 %v1608, %v1607
      %v1614 = vpack.c.bf16 %v1610, %v1609
      %v1619 = vunpack.c.l.b16 %v1611
      %v1620 = vunpack.c.h.b16 %v1611
      %v1621 = vunpack.c.l.b16 %v1612
      %v1622 = vunpack.c.h.b16 %v1612
      %v1623 = vunpack.c.l.b16 %v1613
      %v1624 = vunpack.c.h.b16 %v1613
      %v1625 = vunpack.c.l.b16 %v1614
      %v1626 = vunpack.c.h.b16 %v1614
      %v1627 = vpack.c.b16 %v1619, %v1619
      %v1628 = vpack.c.b16 %v1620, %v1620
      %v1629 = vpack.c.b16 %v1621, %v1621
      %v1630 = vpack.c.b16 %v1622, %v1622
      %v1631 = vpack.c.b16 %v1623, %v1623
      %v1632 = vpack.c.b16 %v1624, %v1624
      %v1633 = vpack.c.b16 %v1625, %v1625
      %v1634 = vpack.c.b16 %v1626, %v1626
      %vm1643 = vcmask 257024
      %1644 = vst.msk [vmem:[%s217] sm:$0xf] %vm1643, %v1627
      %1645 = vst.msk [vmem:[%s217 + $0x4] sm:$0xf] %vm1643, %v1628
      %1646 = vst.msk [vmem:[%s217 + $0x8] sm:$0xf] %vm1643, %v1629
      %1647 = vst.msk [vmem:[%s217 + $0xc] sm:$0xf] %vm1643, %v1630
      %1648 = vst.msk [vmem:[%s217 + $0x10] sm:$0xf] %vm1643, %v1631
      %1649 = vst.msk [vmem:[%s217 + $0x14] sm:$0xf] %vm1643, %v1632
      %1650 = vst.msk [vmem:[%s217 + $0x18] sm:$0xf] %vm1643, %v1633
      %1651 = vst.msk [vmem:[%s217 + $0x1c] sm:$0xf] %vm1643, %v1634
      %p1652 = scmp.lt.s32.totalorder %s15, 1
      %s1653 = scalar_select %p1652, %s15, 1
      %s1654 = smul.addr %s1653, 8
      %s1655 = smul.addr %s1654, 4
      %s1656 = scalar_lea.vmem %s4, %s1655
      // Predicated region
      $region37: #{segmentation_forward.8} parent=35 // pred_check
        %p1657 = pneg %p127
      $region38: #{segmentation_forward.8} parent=35 // pred_check_branch
        %1659 = sbr.rel (%p1657) target = $region40
      $region39: #{segmentation_forward.8} parent=35 // pred_region
        _
      $region40: #{segmentation_forward.8} parent=35 // pred_fallthru
        _
    $region36: #{segmentation_forward.8} parent=5 // pred_fallthru
      _
    %p1660 = scmp.le.s32.totalorder 2, %s10
    // Predicated region
    $region41: #{segmentation_forward.8} parent=5 // pred_check
      %p1661 = pneg %p1660
    $region42: #{segmentation_forward.8} parent=5 // pred_check_branch
      %1663 = sbr.rel (%p1661) target = $region44
    $region43: #{segmentation_forward.8} parent=5 // pred_region
      %s1664 = ssub.s32 %s10, 2
      // Predicated region
      $region45: #{segmentation_forward.8} parent=43 // pred_check
        %p1665 = pneg %p133
      $region46: #{segmentation_forward.8} parent=43 // pred_check_branch
        %1667 = sbr.rel (%p1665) target = $region48
      $region47: #{segmentation_forward.8} parent=43 // pred_region
        %p1668 = scmp.lt.s32.totalorder %s16, 1
        %s1669 = scalar_select %p1668, %s16, 1
        %s1670 = smul.addr %s1669, 8
        %s1671 = smul.addr %s1670, 4
        %s1672 = scalar_lea.vmem %s4, %s1671
      $region48: #{segmentation_forward.8} parent=43 // pred_fallthru
        _
    $region44: #{segmentation_forward.8} parent=5 // pred_fallthru
      _
  $region6: #{segmentation_forward.8} parent=0 // loop_footer
    %s14 = sadd.s32 1, %s10
  $region7: #{segmentation_forward.8} parent=0 // loop_footer_branch
    %9 = sbr.rel target = $region3
  $region8: #{segmentation_forward.8} parent=0 // loop_exit
    _

// kernel: segmentation_forward.9
$region0: #{segmentation_forward.9}
  #allocation0 [shape = 'u32[]', space=smem, size = 0x4, offset = 0x4, fixed_abs, tag = 'smem constant byte address 0x4 - core index']
  #allocation1 [shape = 'u32[144,128]{1,0:T(1,128)}', space=vmem, size = 0x12000, scoped, tag = 'internal scratch']
  #allocation2 [shape = 'f32[1,1]{1,0:T(1,128)S(1)}', space=vmem, size = 0x200, scoped, tag = 'scoped memory for segmentation_forward.9']
  %s0 = inlined_call_operand.vmem [shape: bf16[2,290,32], index: 0, kind: input, shape index: {}]
  %s1 = inlined_call_operand.vmem [shape: bf16[2,290,16], index: 1, kind: input, shape index: {}]
  %s2 = inlined_call_operand.vmem [shape: bf16[432,16], index: 2, kind: input, shape index: {}]
  %s3 = inlined_call_operand.vmem [shape: f32[1,16], index: 3, kind: input, shape index: {}]
  %s4 = inlined_call_operand.vmem [shape: f32[1,16], index: 4, kind: input, shape index: {}]
  %s5 = inlined_call_operand.<no memory space> [shape: f32[1,1], index: 5, kind: input, shape index: {}]
  %s6 = inlined_call_operand.vmem [shape: f32[2,256,1], index: 6, kind: output, shape index: {}]
  %s7 = sld [smem:[#allocation0]]
  $region57: #{segmentation_forward.9} parent=0
    _
  %s9 = ssub.s32 1, %s7
  %s10 = scalar_select 0, %s9, %s7
  %v11 = vstv %s5
  %12 = vst [vmem:[#allocation2] sm:$0x1] %v11
  loop: start=0, step=1, limit=4
  $region2: #{segmentation_forward.9} parent=0 // loop_pre_header
    _
  $region3: #{segmentation_forward.9} parent=0 // loop_header
    %s14 = sphi 0, %s18
    %p15 = scmp.ge.s32.totalorder %s14, 4
    %s24 = sphi 0, %s26
    %s27 = sphi 0, %s24
    %s28 = sphi 0, %s27
    %s44 = sphi 0, %s28
    %s50 = sphi 0, %s52
    %s53 = sphi 0, %s50
    %s54 = sphi 0, %s53
    %s70 = sphi 0, %s54
    %s74 = sphi 0, %s74
    %s76 = sphi 0, %s74
    %s77 = sphi 0, %s76
    %s91 = sphi 0, %s77
    %s95 = sphi 0, %s95
    %s97 = sphi 0, %s95
    %s98 = sphi 0, %s97
    %s112 = sphi 0, %s98
    %s116 = sphi 0, %s116
    %s118 = sphi 0, %s116
    %s119 = sphi 0, %s118
    %s133 = sphi 0, %s119
    %s137 = sphi 0, %s137
    %s139 = sphi 0, %s137
    %s140 = sphi 0, %s139
    %s154 = sphi 0, %s140
    %s160 = sphi 0, %s162
    %s163 = sphi 0, %s160
    %s164 = sphi 0, %s163
    %s180 = sphi 0, %s164
  $region4: #{segmentation_forward.9} parent=0 // loop_header_branch
    %17 = sbr.rel (%p15) target = $region8
  $region5: #{segmentation_forward.9} parent=0 // loop_body
    %s19 = ssub.s32 %s14, 1
    %s20 = ssub.s32 %s14, 2
    %s21 = sadd.s32 %s14, 1
    %s22 = ssub.s32 %s14, %s21
    %p23 = scmp.eq.s32.totalorder %s22, 0
    %s25 = sadd.s32 %s24, 1
    %s26 = scalar_select %p23, %s24, %s25
    %p29 = pneg %p23
    %p30 = scmp.eq.s32.totalorder %s14, 1
    %p31 = por %p29, %p30
    %p32 = scmp.ne.s32.totalorder %s24, %s27
    %p33 = scmp.eq.s32.totalorder %s14, 0
    %p34 = por %p32, %p33
    %p35 = scmp.ne.s32.totalorder %s24, %s27
    %p36 = scmp.eq.s32.totalorder %s19, 1
    %p37 = por %p35, %p36
    %p38 = scmp.ne.s32.totalorder %s27, %s28
    %p39 = scmp.eq.s32.totalorder %s19, 0
    %p40 = por %p38, %p39
    %p41 = scmp.ne.s32.totalorder %s27, %s28
    %p42 = scmp.eq.s32.totalorder %s20, 1
    %p43 = por %p41, %p42
    %p45 = scmp.ne.s32.totalorder %s28, %s44
    %p46 = scmp.eq.s32.totalorder %s20, 0
    %p47 = por %p45, %p46
    %s48 = ssub.s32 %s14, %s21
    %p49 = scmp.eq.s32.totalorder %s48, 0
    %s51 = sadd.s32 %s50, 1
    %s52 = scalar_select %p49, %s50, %s51
    %p55 = pneg %p49
    %p56 = scmp.eq.s32.totalorder %s14, 1
    %p57 = por %p55, %p56
    %p58 = scmp.ne.s32.totalorder %s50, %s53
    %p59 = scmp.eq.s32.totalorder %s14, 0
    %p60 = por %p58, %p59
    %p61 = scmp.ne.s32.totalorder %s50, %s53
    %p62 = scmp.eq.s32.totalorder %s19, 1
    %p63 = por %p61, %p62
    %p64 = scmp.ne.s32.totalorder %s53, %s54
    %p65 = scmp.eq.s32.totalorder %s19, 0
    %p66 = por %p64, %p65
    %p67 = scmp.ne.s32.totalorder %s53, %s54
    %p68 = scmp.eq.s32.totalorder %s20, 1
    %p69 = por %p67, %p68
    %p71 = scmp.ne.s32.totalorder %s54, %s70
    %p72 = scmp.eq.s32.totalorder %s20, 0
    %p73 = por %p71, %p72
    %s75 = sadd.s32 %s74, 1
    %p78 = scmp.eq.s32.totalorder %s14, 1
    %p79 = scmp.ne.s32.totalorder %s74, %s76
    %p80 = scmp.eq.s32.totalorder %s14, 0
    %p81 = por %p79, %p80
    %p82 = scmp.ne.s32.totalorder %s74, %s76
    %p83 = scmp.eq.s32.totalorder %s19, 1
    %p84 = por %p82, %p83
    %p85 = scmp.ne.s32.totalorder %s76, %s77
    %p86 = scmp.eq.s32.totalorder %s19, 0
    %p87 = por %p85, %p86
    %p88 = scmp.ne.s32.totalorder %s76, %s77
    %p89 = scmp.eq.s32.totalorder %s20, 1
    %p90 = por %p88, %p89
    %p92 = scmp.ne.s32.totalorder %s77, %s91
    %p93 = scmp.eq.s32.totalorder %s20, 0
    %p94 = por %p92, %p93
    %s96 = sadd.s32 %s95, 1
    %p99 = scmp.eq.s32.totalorder %s14, 1
    %p100 = scmp.ne.s32.totalorder %s95, %s97
    %p101 = scmp.eq.s32.totalorder %s14, 0
    %p102 = por %p100, %p101
    %p103 = scmp.ne.s32.totalorder %s95, %s97
    %p104 = scmp.eq.s32.totalorder %s19, 1
    %p105 = por %p103, %p104
    %p106 = scmp.ne.s32.totalorder %s97, %s98
    %p107 = scmp.eq.s32.totalorder %s19, 0
    %p108 = por %p106, %p107
    %p109 = scmp.ne.s32.totalorder %s97, %s98
    %p110 = scmp.eq.s32.totalorder %s20, 1
    %p111 = por %p109, %p110
    %p113 = scmp.ne.s32.totalorder %s98, %s112
    %p114 = scmp.eq.s32.totalorder %s20, 0
    %p115 = por %p113, %p114
    %s117 = sadd.s32 %s116, 1
    %p120 = scmp.eq.s32.totalorder %s14, 1
    %p121 = scmp.ne.s32.totalorder %s116, %s118
    %p122 = scmp.eq.s32.totalorder %s14, 0
    %p123 = por %p121, %p122
    %p124 = scmp.ne.s32.totalorder %s116, %s118
    %p125 = scmp.eq.s32.totalorder %s19, 1
    %p126 = por %p124, %p125
    %p127 = scmp.ne.s32.totalorder %s118, %s119
    %p128 = scmp.eq.s32.totalorder %s19, 0
    %p129 = por %p127, %p128
    %p130 = scmp.ne.s32.totalorder %s118, %s119
    %p131 = scmp.eq.s32.totalorder %s20, 1
    %p132 = por %p130, %p131
    %p134 = scmp.ne.s32.totalorder %s119, %s133
    %p135 = scmp.eq.s32.totalorder %s20, 0
    %p136 = por %p134, %p135
    %s138 = sadd.s32 %s137, 1
    %p141 = scmp.eq.s32.totalorder %s14, 1
    %p142 = scmp.ne.s32.totalorder %s137, %s139
    %p143 = scmp.eq.s32.totalorder %s14, 0
    %p144 = por %p142, %p143
    %p145 = scmp.ne.s32.totalorder %s137, %s139
    %p146 = scmp.eq.s32.totalorder %s19, 1
    %p147 = por %p145, %p146
    %p148 = scmp.ne.s32.totalorder %s139, %s140
    %p149 = scmp.eq.s32.totalorder %s19, 0
    %p150 = por %p148, %p149
    %p151 = scmp.ne.s32.totalorder %s139, %s140
    %p152 = scmp.eq.s32.totalorder %s20, 1
    %p153 = por %p151, %p152
    %p155 = scmp.ne.s32.totalorder %s140, %s154
    %p156 = scmp.eq.s32.totalorder %s20, 0
    %p157 = por %p155, %p156
    %s158 = ssub.s32 %s14, %s21
    %p159 = scmp.eq.s32.totalorder %s158, 0
    %s161 = sadd.s32 %s160, 1
    %s162 = scalar_select %p159, %s160, %s161
    %p165 = pneg %p159
    %p166 = scmp.eq.s32.totalorder %s14, 1
    %p167 = por %p165, %p166
    %p168 = scmp.ne.s32.totalorder %s160, %s163
    %p169 = scmp.eq.s32.totalorder %s14, 0
    %p170 = por %p168, %p169
    %p171 = scmp.ne.s32.totalorder %s160, %s163
    %p172 = scmp.eq.s32.totalorder %s19, 1
    %p173 = por %p171, %p172
    %p174 = scmp.ne.s32.totalorder %s163, %s164
    %p175 = scmp.eq.s32.totalorder %s19, 0
    %p176 = por %p174, %p175
    %p177 = scmp.ne.s32.totalorder %s163, %s164
    %p178 = scmp.eq.s32.totalorder %s20, 1
    %p179 = por %p177, %p178
    %p181 = scmp.ne.s32.totalorder %s164, %s180
    %p182 = scmp.eq.s32.totalorder %s20, 0
    %p183 = por %p181, %p182
    %p184 = scmp.le.s32.totalorder 1, %s14
    %p185 = scmp.lt.s32.totalorder %s14, 3
    %p186 = pnand %p184, %p185
    %p187 = pneg %p186
    // Predicated region
    $region9: #{segmentation_forward.9} parent=5 // pred_check
      _
    $region10: #{segmentation_forward.9} parent=5 // pred_check_branch
      %189 = sbr.rel (%p186) target = $region12
    $region11: #{segmentation_forward.9} parent=5 // pred_region
      %s190 = ssub.s32 %s14, 1
      // Predicated region
      $region13: #{segmentation_forward.9} parent=11 // pred_check
        %p191 = pneg %p87
      $region14: #{segmentation_forward.9} parent=11 // pred_check_branch
        %193 = sbr.rel (%p191) target = $region16
      $region15: #{segmentation_forward.9} parent=11 // pred_region
        _
      $region16: #{segmentation_forward.9} parent=11 // pred_fallthru
        _
      // Predicated region
      $region17: #{segmentation_forward.9} parent=11 // pred_check
        %p194 = pneg %p108
      $region18: #{segmentation_forward.9} parent=11 // pred_check_branch
        %196 = sbr.rel (%p194) target = $region20
      $region19: #{segmentation_forward.9} parent=11 // pred_region
        _
      $region20: #{segmentation_forward.9} parent=11 // pred_fallthru
        _
      // Predicated region
      $region21: #{segmentation_forward.9} parent=11 // pred_check
        %p197 = pneg %p129
      $region22: #{segmentation_forward.9} parent=11 // pred_check_branch
        %199 = sbr.rel (%p197) target = $region24
      $region23: #{segmentation_forward.9} parent=11 // pred_region
        _
      $region24: #{segmentation_forward.9} parent=11 // pred_fallthru
        _
      // Predicated region
      $region25: #{segmentation_forward.9} parent=11 // pred_check
        %p200 = pneg %p150
      $region26: #{segmentation_forward.9} parent=11 // pred_check_branch
        %202 = sbr.rel (%p200) target = $region28
      $region27: #{segmentation_forward.9} parent=11 // pred_region
        _
      $region28: #{segmentation_forward.9} parent=11 // pred_fallthru
        _
    $region12: #{segmentation_forward.9} parent=5 // pred_fallthru
      _
    %p203 = scmp.lt.s32.totalorder %s14, 2
    // Predicated region
    $region29: #{segmentation_forward.9} parent=5 // pred_check
      %p204 = pneg %p203
    $region30: #{segmentation_forward.9} parent=5 // pred_check_branch
      %206 = sbr.rel (%p204) target = $region32
    $region31: #{segmentation_forward.9} parent=5 // pred_region
      // Predicated region
      $region33: #{segmentation_forward.9} parent=31 // pred_check
        %p207 = pneg %p34
      $region34: #{segmentation_forward.9} parent=31 // pred_check_branch
        %209 = sbr.rel (%p207) target = $region36
      $region35: #{segmentation_forward.9} parent=31 // pred_region
        %p210 = scmp.lt.s32.totalorder %s14, 1
        %s211 = scalar_select %p210, %s14, 1
        %s212 = smul.addr %s211, 37
        %s213 = smul.addr %s212, 4
        %s214 = scalar_lea.vmem %s0, %s213
      $region36: #{segmentation_forward.9} parent=31 // pred_fallthru
        _
      // Predicated region
      $region37: #{segmentation_forward.9} parent=31 // pred_check
        %p215 = pneg %p60
      $region38: #{segmentation_forward.9} parent=31 // pred_check_branch
        %217 = sbr.rel (%p215) target = $region40
      $region39: #{segmentation_forward.9} parent=31 // pred_region
        %p218 = scmp.lt.s32.totalorder %s14, 1
        %s219 = scalar_select %p218, %s14, 1
        %s220 = smul.addr %s219, 37
        %s221 = smul.addr %s220, 4
        %s222 = scalar_lea.vmem %s1, %s221
      $region40: #{segmentation_forward.9} parent=31 // pred_fallthru
        _
    $region32: #{segmentation_forward.9} parent=5 // pred_fallthru
      _
    %p223 = scmp.le.s32.totalorder 1, %s14
    %p224 = scmp.lt.s32.totalorder %s14, 3
    %p225 = pnand %p223, %p224
    %p226 = pneg %p225
    // Predicated region
    $region41: #{segmentation_forward.9} parent=5 // pred_check
      _
    $region42: #{segmentation_forward.9} parent=5 // pred_check_branch
      %228 = sbr.rel (%p225) target = $region44
    $region43: #{segmentation_forward.9} parent=5 // pred_region
      %s229 = ssub.s32 %s14, 1
      %p230 = scmp.lt.s32.totalorder %s19, 1
      %s231 = scalar_select %p230, %s19, 1
      %s232 = smul.addr %s231, 37
      %s233 = smul.addr %s232, 4
      %s234 = scalar_lea.vmem %s0, %s233
      %p235 = pneg %p40
      %p236 = pneg %p37
      %p237 = scmp.lt.s32.totalorder %s19, 1
      %s238 = scalar_select %p237, %s19, 1
      %s239 = smul.addr %s238, 37
      %s240 = smul.addr %s239, 4
      %s241 = scalar_lea.vmem %s1, %s240
      %p242 = pneg %p66
      %p243 = pneg %p63
      %p244 = pneg %p87
      %p245 = pneg %p84
      %p246 = pneg %p108
      %p247 = pneg %p105
      %p248 = pneg %p129
      %p249 = pneg %p126
      %p250 = pneg %p150
      %p251 = pneg %p147
      %p252 = pneg %p176
      %p253 = pneg %p173
      %p254 = scmp.lt.s32.totalorder %s19, 1
      %s255 = scalar_select %p254, %s19, 1
      %s256 = smul.addr %s255, 32
      %s257 = smul.addr %s256, 8
      %s258 = scalar_lea.vmem %s6, %s257
      %p259 = scmp.lt.s32.totalorder %s19, 1
      %s260 = scalar_select %p259, %s19, 1
      %s261 = smul.addr %s260, 37
      %s262 = smul.addr %s261, 4
      %s263 = scalar_lea.vmem %s0, %s262
      %p264 = scmp.lt.s32.totalorder %s19, 1
      %s265 = scalar_select %p264, %s19, 1
      %s266 = smul.addr %s265, 37
      %s267 = smul.addr %s266, 4
      %s268 = scalar_lea.vmem %s1, %s267
      %p269 = scmp.lt.s32.totalorder %s19, 1
      %s270 = scalar_select %p269, %s19, 1
      %s271 = smul.addr %s270, 32
      %s272 = smul.addr %s271, 8
      %s273 = scalar_lea.vmem %s6, %s272
      %v277 = vld [vmem:[%s263] sm:$0xf]
      %v278 = vld [vmem:[%s263 + $0x4] sm:$0xf]
      %v279 = vld [vmem:[%s263 + $0x8] sm:$0xf]
      %v280 = vld [vmem:[%s263 + $0xc] sm:$0xf]
      %v281 = vld [vmem:[%s263 + $0x10] sm:$0xf]
      %v282 = vld [vmem:[%s263 + $0x14] sm:$0xf]
      %v283 = vld [vmem:[%s263 + $0x18] sm:$0xf]
      %v284 = vld [vmem:[%s263 + $0x1c] sm:$0xf]
      %v285 = vld [vmem:[%s263 + $0x20] sm:$0xf]
      %v286 = vld [vmem:[%s263 + $0x24] sm:$0xf]
      %v287 = vld [vmem:[%s263 + $0x28] sm:$0xf]
      %v288 = vld [vmem:[%s263 + $0x2c] sm:$0xf]
      %v289 = vld [vmem:[%s263 + $0x30] sm:$0xf]
      %v290 = vld [vmem:[%s263 + $0x34] sm:$0xf]
      %v291 = vld [vmem:[%s263 + $0x38] sm:$0xf]
      %v292 = vld [vmem:[%s263 + $0x3c] sm:$0xf]
      %v293 = vld [vmem:[%s263 + $0x40] sm:$0xf]
      %v294 = vld [vmem:[%s263 + $0x44] sm:$0xf]
      %v295 = vld [vmem:[%s263 + $0x48] sm:$0xf]
      %v296 = vld [vmem:[%s263 + $0x4c] sm:$0xf]
      %v297 = vld [vmem:[%s263 + $0x50] sm:$0xf]
      %v298 = vld [vmem:[%s263 + $0x54] sm:$0xf]
      %v299 = vld [vmem:[%s263 + $0x58] sm:$0xf]
      %v300 = vld [vmem:[%s263 + $0x5c] sm:$0xf]
      %v301 = vld [vmem:[%s263 + $0x60] sm:$0xf]
      %v302 = vld [vmem:[%s263 + $0x64] sm:$0xf]
      %v303 = vld [vmem:[%s263 + $0x68] sm:$0xf]
      %v304 = vld [vmem:[%s263 + $0x6c] sm:$0xf]
      %v305 = vld [vmem:[%s263 + $0x70] sm:$0xf]
      %v306 = vld [vmem:[%s263 + $0x74] sm:$0xf]
      %v307 = vld [vmem:[%s263 + $0x78] sm:$0xf]
      %v308 = vld [vmem:[%s263 + $0x7c] sm:$0xf]
      %v309 = vld [vmem:[%s263 + $0x80] sm:$0xf]
      %v310 = vld [vmem:[%s263 + $0x84] sm:$0xf]
      %v311 = vld [vmem:[%s263 + $0x88] sm:$0xf]
      %v312 = vld [vmem:[%s263 + $0x8c] sm:$0xf]
      %v313 = vld [vmem:[%s263 + $0x90] sm:$0x1]
      %v314 = vld [vmem:[%s268] sm:$0xf]
      %v315 = vld [vmem:[%s268 + $0x4] sm:$0xf]
      %v316 = vld [vmem:[%s268 + $0x8] sm:$0xf]
      %v317 = vld [vmem:[%s268 + $0xc] sm:$0xf]
      %v318 = vld [vmem:[%s268 + $0x10] sm:$0xf]
      %v319 = vld [vmem:[%s268 + $0x14] sm:$0xf]
      %v320 = vld [vmem:[%s268 + $0x18] sm:$0xf]
      %v321 = vld [vmem:[%s268 + $0x1c] sm:$0xf]
      %v322 = vld [vmem:[%s268 + $0x20] sm:$0xf]
      %v323 = vld [vmem:[%s268 + $0x24] sm:$0xf]
      %v324 = vld [vmem:[%s268 + $0x28] sm:$0xf]
      %v325 = vld [vmem:[%s268 + $0x2c] sm:$0xf]
      %v326 = vld [vmem:[%s268 + $0x30] sm:$0xf]
      %v327 = vld [vmem:[%s268 + $0x34] sm:$0xf]
      %v328 = vld [vmem:[%s268 + $0x38] sm:$0xf]
      %v329 = vld [vmem:[%s268 + $0x3c] sm:$0xf]
      %v330 = vld [vmem:[%s268 + $0x40] sm:$0xf]
      %v331 = vld [vmem:[%s268 + $0x44] sm:$0xf]
      %v332 = vld [vmem:[%s268 + $0x48] sm:$0xf]
      %v333 = vld [vmem:[%s268 + $0x4c] sm:$0xf]
      %v334 = vld [vmem:[%s268 + $0x50] sm:$0xf]
      %v335 = vld [vmem:[%s268 + $0x54] sm:$0xf]
      %v336 = vld [vmem:[%s268 + $0x58] sm:$0xf]
      %v337 = vld [vmem:[%s268 + $0x5c] sm:$0xf]
      %v338 = vld [vmem:[%s268 + $0x60] sm:$0xf]
      %v339 = vld [vmem:[%s268 + $0x64] sm:$0xf]
      %v340 = vld [vmem:[%s268 + $0x68] sm:$0xf]
      %v341 = vld [vmem:[%s268 + $0x6c] sm:$0xf]
      %v342 = vld [vmem:[%s268 + $0x70] sm:$0xf]
      %v343 = vld [vmem:[%s268 + $0x74] sm:$0xf]
      %v344 = vld [vmem:[%s268 + $0x78] sm:$0xf]
      %v345 = vld [vmem:[%s268 + $0x7c] sm:$0xf]
      %v346 = vld [vmem:[%s268 + $0x80] sm:$0xf]
      %v347 = vld [vmem:[%s268 + $0x84] sm:$0xf]
      %v348 = vld [vmem:[%s268 + $0x88] sm:$0xf]
      %v349 = vld [vmem:[%s268 + $0x8c] sm:$0xf]
      %v350 = vld [vmem:[%s268 + $0x90] sm:$0x1]
      %v351 = vlaneseq
      %v352 = vshrl.u32 %v351, 7
      %v353 = vadd.s32 %v352, 8
      %v354 = vadd.s32 %v352, 16
      %v355 = vadd.s32 %v352, 24
      %v356 = vadd.s32 %v352, 32
      %v357 = vadd.s32 %v352, 40
      %v358 = vadd.s32 %v352, 48
      %v359 = vadd.s32 %v352, 56
      %v360 = vadd.s32 %v352, 64
      %v361 = vadd.s32 %v352, 72
      %v362 = vadd.s32 %v352, 80
      %v363 = vadd.s32 %v352, 88
      %v364 = vadd.s32 %v352, 96
      %v365 = vadd.s32 %v352, 104
      %v366 = vadd.s32 %v352, 112
      %v367 = vadd.s32 %v352, 120
      %v368 = vadd.s32 %v352, 128
      %v369 = vadd.s32 %v352, 136
      %v370 = vadd.s32 %v352, 144
      %v371 = vadd.s32 %v352, 152
      %v372 = vadd.s32 %v352, 160
      %v373 = vadd.s32 %v352, 168
      %v374 = vadd.s32 %v352, 176
      %v375 = vadd.s32 %v352, 184
      %v376 = vadd.s32 %v352, 192
      %v377 = vadd.s32 %v352, 200
      %v378 = vadd.s32 %v352, 208
      %v379 = vadd.s32 %v352, 216
      %v380 = vadd.s32 %v352, 224
      %v381 = vadd.s32 %v352, 232
      %v382 = vadd.s32 %v352, 240
      %v383 = vadd.s32 %v352, 248
      %vm384 = vcmp.lt.s32.totalorder %v352, 0
      %v385 = vsub.s32 0, %v352
      %v386 = vsel %vm384, %v385, %v352
      %v387 = vshrl.u32 %v386, 4
      %v388 = vand.u32 %v386, 15
      %v389 = vsub.s32 0, %v388
      %v390 = vsel %vm384, %v389, %v388
      %vm391 = vcmp.lt.s32.totalorder %v353, 0
      %v392 = vsub.s32 0, %v353
      %v393 = vsel %vm391, %v392, %v353
      %v394 = vshrl.u32 %v393, 4
      %v395 = vand.u32 %v393, 15
      %v396 = vsub.s32 0, %v395
      %v397 = vsel %vm391, %v396, %v395
      %vm398 = vcmp.lt.s32.totalorder %v354, 0
      %v399 = vsub.s32 0, %v354
      %v400 = vsel %vm398, %v399, %v354
      %v401 = vshrl.u32 %v400, 4
      %v402 = vand.u32 %v400, 15
      %v403 = vsub.s32 0, %v402
      %v404 = vsel %vm398, %v403, %v402
      %vm405 = vcmp.lt.s32.totalorder %v355, 0
      %v406 = vsub.s32 0, %v355
      %v407 = vsel %vm405, %v406, %v355
      %v408 = vshrl.u32 %v407, 4
      %v409 = vand.u32 %v407, 15
      %v410 = vsub.s32 0, %v409
      %v411 = vsel %vm405, %v410, %v409
      %vm412 = vcmp.lt.s32.totalorder %v356, 0
      %v413 = vsub.s32 0, %v356
      %v414 = vsel %vm412, %v413, %v356
      %v415 = vshrl.u32 %v414, 4
      %v416 = vand.u32 %v414, 15
      %v417 = vsub.s32 0, %v416
      %v418 = vsel %vm412, %v417, %v416
      %vm419 = vcmp.lt.s32.totalorder %v357, 0
      %v420 = vsub.s32 0, %v357
      %v421 = vsel %vm419, %v420, %v357
      %v422 = vshrl.u32 %v421, 4
      %v423 = vand.u32 %v421, 15
      %v424 = vsub.s32 0, %v423
      %v425 = vsel %vm419, %v424, %v423
      %vm426 = vcmp.lt.s32.totalorder %v358, 0
      %v427 = vsub.s32 0, %v358
      %v428 = vsel %vm426, %v427, %v358
      %v429 = vshrl.u32 %v428, 4
      %v430 = vand.u32 %v428, 15
      %v431 = vsub.s32 0, %v430
      %v432 = vsel %vm426, %v431, %v430
      %vm433 = vcmp.lt.s32.totalorder %v359, 0
      %v434 = vsub.s32 0, %v359
      %v435 = vsel %vm433, %v434, %v359
      %v436 = vshrl.u32 %v435, 4
      %v437 = vand.u32 %v435, 15
      %v438 = vsub.s32 0, %v437
      %v439 = vsel %vm433, %v438, %v437
      %vm440 = vcmp.lt.s32.totalorder %v360, 0
      %v441 = vsub.s32 0, %v360
      %v442 = vsel %vm440, %v441, %v360
      %v443 = vshrl.u32 %v442, 4
      %v444 = vand.u32 %v442, 15
      %v445 = vsub.s32 0, %v444
      %v446 = vsel %vm440, %v445, %v444
      %vm447 = vcmp.lt.s32.totalorder %v361, 0
      %v448 = vsub.s32 0, %v361
      %v449 = vsel %vm447, %v448, %v361
      %v450 = vshrl.u32 %v449, 4
      %v451 = vand.u32 %v449, 15
      %v452 = vsub.s32 0, %v451
      %v453 = vsel %vm447, %v452, %v451
      %vm454 = vcmp.lt.s32.totalorder %v362, 0
      %v455 = vsub.s32 0, %v362
      %v456 = vsel %vm454, %v455, %v362
      %v457 = vshrl.u32 %v456, 4
      %v458 = vand.u32 %v456, 15
      %v459 = vsub.s32 0, %v458
      %v460 = vsel %vm454, %v459, %v458
      %vm461 = vcmp.lt.s32.totalorder %v363, 0
      %v462 = vsub.s32 0, %v363
      %v463 = vsel %vm461, %v462, %v363
      %v464 = vshrl.u32 %v463, 4
      %v465 = vand.u32 %v463, 15
      %v466 = vsub.s32 0, %v465
      %v467 = vsel %vm461, %v466, %v465
      %vm468 = vcmp.lt.s32.totalorder %v364, 0
      %v469 = vsub.s32 0, %v364
      %v470 = vsel %vm468, %v469, %v364
      %v471 = vshrl.u32 %v470, 4
      %v472 = vand.u32 %v470, 15
      %v473 = vsub.s32 0, %v472
      %v474 = vsel %vm468, %v473, %v472
      %vm475 = vcmp.lt.s32.totalorder %v365, 0
      %v476 = vsub.s32 0, %v365
      %v477 = vsel %vm475, %v476, %v365
      %v478 = vshrl.u32 %v477, 4
      %v479 = vand.u32 %v477, 15
      %v480 = vsub.s32 0, %v479
      %v481 = vsel %vm475, %v480, %v479
      %vm482 = vcmp.lt.s32.totalorder %v366, 0
      %v483 = vsub.s32 0, %v366
      %v484 = vsel %vm482, %v483, %v366
      %v485 = vshrl.u32 %v484, 4
      %v486 = vand.u32 %v484, 15
      %v487 = vsub.s32 0, %v486
      %v488 = vsel %vm482, %v487, %v486
      %vm489 = vcmp.lt.s32.totalorder %v367, 0
      %v490 = vsub.s32 0, %v367
      %v491 = vsel %vm489, %v490, %v367
      %v492 = vshrl.u32 %v491, 4
      %v493 = vand.u32 %v491, 15
      %v494 = vsub.s32 0, %v493
      %v495 = vsel %vm489, %v494, %v493
      %vm496 = vcmp.lt.s32.totalorder %v368, 0
      %v497 = vsub.s32 0, %v368
      %v498 = vsel %vm496, %v497, %v368
      %v499 = vshrl.u32 %v498, 4
      %v500 = vand.u32 %v498, 15
      %v501 = vsub.s32 0, %v500
      %v502 = vsel %vm496, %v501, %v500
      %vm503 = vcmp.lt.s32.totalorder %v369, 0
      %v504 = vsub.s32 0, %v369
      %v505 = vsel %vm503, %v504, %v369
      %v506 = vshrl.u32 %v505, 4
      %v507 = vand.u32 %v505, 15
      %v508 = vsub.s32 0, %v507
      %v509 = vsel %vm503, %v508, %v507
      %vm510 = vcmp.lt.s32.totalorder %v370, 0
      %v511 = vsub.s32 0, %v370
      %v512 = vsel %vm510, %v511, %v370
      %v513 = vshrl.u32 %v512, 4
      %v514 = vand.u32 %v512, 15
      %v515 = vsub.s32 0, %v514
      %v516 = vsel %vm510, %v515, %v514
      %vm517 = vcmp.lt.s32.totalorder %v371, 0
      %v518 = vsub.s32 0, %v371
      %v519 = vsel %vm517, %v518, %v371
      %v520 = vshrl.u32 %v519, 4
      %v521 = vand.u32 %v519, 15
      %v522 = vsub.s32 0, %v521
      %v523 = vsel %vm517, %v522, %v521
      %vm524 = vcmp.lt.s32.totalorder %v372, 0
      %v525 = vsub.s32 0, %v372
      %v526 = vsel %vm524, %v525, %v372
      %v527 = vshrl.u32 %v526, 4
      %v528 = vand.u32 %v526, 15
      %v529 = vsub.s32 0, %v528
      %v530 = vsel %vm524, %v529, %v528
      %vm531 = vcmp.lt.s32.totalorder %v373, 0
      %v532 = vsub.s32 0, %v373
      %v533 = vsel %vm531, %v532, %v373
      %v534 = vshrl.u32 %v533, 4
      %v535 = vand.u32 %v533, 15
      %v536 = vsub.s32 0, %v535
      %v537 = vsel %vm531, %v536, %v535
      %vm538 = vcmp.lt.s32.totalorder %v374, 0
      %v539 = vsub.s32 0, %v374
      %v540 = vsel %vm538, %v539, %v374
      %v541 = vshrl.u32 %v540, 4
      %v542 = vand.u32 %v540, 15
      %v543 = vsub.s32 0, %v542
      %v544 = vsel %vm538, %v543, %v542
      %vm545 = vcmp.lt.s32.totalorder %v375, 0
      %v546 = vsub.s32 0, %v375
      %v547 = vsel %vm545, %v546, %v375
      %v548 = vshrl.u32 %v547, 4
      %v549 = vand.u32 %v547, 15
      %v550 = vsub.s32 0, %v549
      %v551 = vsel %vm545, %v550, %v549
      %vm552 = vcmp.lt.s32.totalorder %v376, 0
      %v553 = vsub.s32 0, %v376
      %v554 = vsel %vm552, %v553, %v376
      %v555 = vshrl.u32 %v554, 4
      %v556 = vand.u32 %v554, 15
      %v557 = vsub.s32 0, %v556
      %v558 = vsel %vm552, %v557, %v556
      %vm559 = vcmp.lt.s32.totalorder %v377, 0
      %v560 = vsub.s32 0, %v377
      %v561 = vsel %vm559, %v560, %v377
      %v562 = vshrl.u32 %v561, 4
      %v563 = vand.u32 %v561, 15
      %v564 = vsub.s32 0, %v563
      %v565 = vsel %vm559, %v564, %v563
      %vm566 = vcmp.lt.s32.totalorder %v378, 0
      %v567 = vsub.s32 0, %v378
      %v568 = vsel %vm566, %v567, %v378
      %v569 = vshrl.u32 %v568, 4
      %v570 = vand.u32 %v568, 15
      %v571 = vsub.s32 0, %v570
      %v572 = vsel %vm566, %v571, %v570
      %vm573 = vcmp.lt.s32.totalorder %v379, 0
      %v574 = vsub.s32 0, %v379
      %v575 = vsel %vm573, %v574, %v379
      %v576 = vshrl.u32 %v575, 4
      %v577 = vand.u32 %v575, 15
      %v578 = vsub.s32 0, %v577
      %v579 = vsel %vm573, %v578, %v577
      %vm580 = vcmp.lt.s32.totalorder %v380, 0
      %v581 = vsub.s32 0, %v380
      %v582 = vsel %vm580, %v581, %v380
      %v583 = vshrl.u32 %v582, 4
      %v584 = vand.u32 %v582, 15
      %v585 = vsub.s32 0, %v584
      %v586 = vsel %vm580, %v585, %v584
      %vm587 = vcmp.lt.s32.totalorder %v381, 0
      %v588 = vsub.s32 0, %v381
      %v589 = vsel %vm587, %v588, %v381
      %v590 = vshrl.u32 %v589, 4
      %v591 = vand.u32 %v589, 15
      %v592 = vsub.s32 0, %v591
      %v593 = vsel %vm587, %v592, %v591
      %vm594 = vcmp.lt.s32.totalorder %v382, 0
      %v595 = vsub.s32 0, %v382
      %v596 = vsel %vm594, %v595, %v382
      %v597 = vshrl.u32 %v596, 4
      %v598 = vand.u32 %v596, 15
      %v599 = vsub.s32 0, %v598
      %v600 = vsel %vm594, %v599, %v598
      %vm601 = vcmp.lt.s32.totalorder %v383, 0
      %v602 = vsub.s32 0, %v383
      %v603 = vsel %vm601, %v602, %v383
      %v604 = vshrl.u32 %v603, 4
      %v605 = vand.u32 %v603, 15
      %v606 = vsub.s32 0, %v605
      %v607 = vsel %vm601, %v606, %v605
      %vm608 = vcmp.ne.s32.totalorder %v390, 0
      %vm609 = vcmp.ne.s32.totalorder %v397, 0
      %vm610 = vcmp.ne.s32.totalorder %v404, 0
      %vm611 = vcmp.ne.s32.totalorder %v411, 0
      %vm612 = vcmp.ne.s32.totalorder %v418, 0
      %vm613 = vcmp.ne.s32.totalorder %v425, 0
      %vm614 = vcmp.ne.s32.totalorder %v432, 0
      %vm615 = vcmp.ne.s32.totalorder %v439, 0
      %vm616 = vcmp.ne.s32.totalorder %v446, 0
      %vm617 = vcmp.ne.s32.totalorder %v453, 0
      %vm618 = vcmp.ne.s32.totalorder %v460, 0
      %vm619 = vcmp.ne.s32.totalorder %v467, 0
      %vm620 = vcmp.ne.s32.totalorder %v474, 0
      %vm621 = vcmp.ne.s32.totalorder %v481, 0
      %vm622 = vcmp.ne.s32.totalorder %v488, 0
      %vm623 = vcmp.ne.s32.totalorder %v495, 0
      %vm624 = vcmp.ne.s32.totalorder %v502, 0
      %vm625 = vcmp.ne.s32.totalorder %v509, 0
      %vm626 = vcmp.ne.s32.totalorder %v516, 0
      %vm627 = vcmp.ne.s32.totalorder %v523, 0
      %vm628 = vcmp.ne.s32.totalorder %v530, 0
      %vm629 = vcmp.ne.s32.totalorder %v537, 0
      %vm630 = vcmp.ne.s32.totalorder %v544, 0
      %vm631 = vcmp.ne.s32.totalorder %v551, 0
      %vm632 = vcmp.ne.s32.totalorder %v558, 0
      %vm633 = vcmp.ne.s32.totalorder %v565, 0
      %vm634 = vcmp.ne.s32.totalorder %v572, 0
      %vm635 = vcmp.ne.s32.totalorder %v579, 0
      %vm636 = vcmp.ne.s32.totalorder %v586, 0
      %vm637 = vcmp.ne.s32.totalorder %v593, 0
      %vm638 = vcmp.ne.s32.totalorder %v600, 0
      %vm639 = vcmp.ne.s32.totalorder %v607, 0
      %vm640 = vcmp.lt.s32.totalorder %v390, 0
      %vm641 = vcmp.lt.s32.totalorder %v397, 0
      %vm642 = vcmp.lt.s32.totalorder %v404, 0
      %vm643 = vcmp.lt.s32.totalorder %v411, 0
      %vm644 = vcmp.lt.s32.totalorder %v418, 0
      %vm645 = vcmp.lt.s32.totalorder %v425, 0
      %vm646 = vcmp.lt.s32.totalorder %v432, 0
      %vm647 = vcmp.lt.s32.totalorder %v439, 0
      %vm648 = vcmp.lt.s32.totalorder %v446, 0
      %vm649 = vcmp.lt.s32.totalorder %v453, 0
      %vm650 = vcmp.lt.s32.totalorder %v460, 0
      %vm651 = vcmp.lt.s32.totalorder %v467, 0
      %vm652 = vcmp.lt.s32.totalorder %v474, 0
      %vm653 = vcmp.lt.s32.totalorder %v481, 0
      %vm654 = vcmp.lt.s32.totalorder %v488, 0
      %vm655 = vcmp.lt.s32.totalorder %v495, 0
      %vm656 = vcmp.lt.s32.totalorder %v502, 0
      %vm657 = vcmp.lt.s32.totalorder %v509, 0
      %vm658 = vcmp.lt.s32.totalorder %v516, 0
      %vm659 = vcmp.lt.s32.totalorder %v523, 0
      %vm660 = vcmp.lt.s32.totalorder %v530, 0
      %vm661 = vcmp.lt.s32.totalorder %v537, 0
      %vm662 = vcmp.lt.s32.totalorder %v544, 0
      %vm663 = vcmp.lt.s32.totalorder %v551, 0
      %vm664 = vcmp.lt.s32.totalorder %v558, 0
      %vm665 = vcmp.lt.s32.totalorder %v565, 0
      %vm666 = vcmp.lt.s32.totalorder %v572, 0
      %vm667 = vcmp.lt.s32.totalorder %v579, 0
      %vm668 = vcmp.lt.s32.totalorder %v586, 0
      %vm669 = vcmp.lt.s32.totalorder %v593, 0
      %vm670 = vcmp.lt.s32.totalorder %v600, 0
      %vm671 = vcmp.lt.s32.totalorder %v607, 0
      %vm672 = vmand %vm640, %vm608
      %vm673 = vmand %vm641, %vm609
      %vm674 = vmand %vm642, %vm610
      %vm675 = vmand %vm643, %vm611
      %vm676 = vmand %vm644, %vm612
      %vm677 = vmand %vm645, %vm613
      %vm678 = vmand %vm646, %vm614
      %vm679 = vmand %vm647, %vm615
      %vm680 = vmand %vm648, %vm616
      %vm681 = vmand %vm649, %vm617
      %vm682 = vmand %vm650, %vm618
      %vm683 = vmand %vm651, %vm619
      %vm684 = vmand %vm652, %vm620
      %vm685 = vmand %vm653, %vm621
      %vm686 = vmand %vm654, %vm622
      %vm687 = vmand %vm655, %vm623
      %vm688 = vmand %vm656, %vm624
      %vm689 = vmand %vm657, %vm625
      %vm690 = vmand %vm658, %vm626
      %vm691 = vmand %vm659, %vm627
      %vm692 = vmand %vm660, %vm628
      %vm693 = vmand %vm661, %vm629
      %vm694 = vmand %vm662, %vm630
      %vm695 = vmand %vm663, %vm631
      %vm696 = vmand %vm664, %vm632
      %vm697 = vmand %vm665, %vm633
      %vm698 = vmand %vm666, %vm634
      %vm699 = vmand %vm667, %vm635
      %vm700 = vmand %vm668, %vm636
      %vm701 = vmand %vm669, %vm637
      %vm702 = vmand %vm670, %vm638
      %vm703 = vmand %vm671, %vm639
      %v704 = vadd.s32 %v390, 16
      %v705 = vadd.s32 %v397, 16
      %v706 = vadd.s32 %v404, 16
      %v707 = vadd.s32 %v411, 16
      %v708 = vadd.s32 %v418, 16
      %v709 = vadd.s32 %v425, 16
      %v710 = vadd.s32 %v432, 16
      %v711 = vadd.s32 %v439, 16
      %v712 = vadd.s32 %v446, 16
      %v713 = vadd.s32 %v453, 16
      %v714 = vadd.s32 %v460, 16
      %v715 = vadd.s32 %v467, 16
      %v716 = vadd.s32 %v474, 16
      %v717 = vadd.s32 %v481, 16
      %v718 = vadd.s32 %v488, 16
      %v719 = vadd.s32 %v495, 16
      %v720 = vadd.s32 %v502, 16
      %v721 = vadd.s32 %v509, 16
      %v722 = vadd.s32 %v516, 16
      %v723 = vadd.s32 %v523, 16
      %v724 = vadd.s32 %v530, 16
      %v725 = vadd.s32 %v537, 16
      %v726 = vadd.s32 %v544, 16
      %v727 = vadd.s32 %v551, 16
      %v728 = vadd.s32 %v558, 16
      %v729 = vadd.s32 %v565, 16
      %v730 = vadd.s32 %v572, 16
      %v731 = vadd.s32 %v579, 16
      %v732 = vadd.s32 %v586, 16
      %v733 = vadd.s32 %v593, 16
      %v734 = vadd.s32 %v600, 16
      %v735 = vadd.s32 %v607, 16
      %v736 = vsel %vm672, %v704, %v390
      %v737 = vsel %vm673, %v705, %v397
      %v738 = vsel %vm674, %v706, %v404
      %v739 = vsel %vm675, %v707, %v411
      %v740 = vsel %vm676, %v708, %v418
      %v741 = vsel %vm677, %v709, %v425
      %v742 = vsel %vm678, %v710, %v432
      %v743 = vsel %vm679, %v711, %v439
      %v744 = vsel %vm680, %v712, %v446
      %v745 = vsel %vm681, %v713, %v453
      %v746 = vsel %vm682, %v714, %v460
      %v747 = vsel %vm683, %v715, %v467
      %v748 = vsel %vm684, %v716, %v474
      %v749 = vsel %vm685, %v717, %v481
      %v750 = vsel %vm686, %v718, %v488
      %v751 = vsel %vm687, %v719, %v495
      %v752 = vsel %vm688, %v720, %v502
      %v753 = vsel %vm689, %v721, %v509
      %v754 = vsel %vm690, %v722, %v516
      %v755 = vsel %vm691, %v723, %v523
      %v756 = vsel %vm692, %v724, %v530
      %v757 = vsel %vm693, %v725, %v537
      %v758 = vsel %vm694, %v726, %v544
      %v759 = vsel %vm695, %v727, %v551
      %v760 = vsel %vm696, %v728, %v558
      %v761 = vsel %vm697, %v729, %v565
      %v762 = vsel %vm698, %v730, %v572
      %v763 = vsel %vm699, %v731, %v579
      %v764 = vsel %vm700, %v732, %v586
      %v765 = vsel %vm701, %v733, %v593
      %v766 = vsel %vm702, %v734, %v600
      %v767 = vsel %vm703, %v735, %v607
      %v800 = vunpack.c.l.b16 %v277
      %v801 = vunpack.c.l.b16 %v278
      %v802 = vunpack.c.l.b16 %v279
      %v803 = vunpack.c.l.b16 %v280
      %v804 = vunpack.c.l.b16 %v281
      %v805 = vunpack.c.l.b16 %v282
      %v806 = vunpack.c.l.b16 %v283
      %v807 = vunpack.c.l.b16 %v284
      %v808 = vunpack.c.l.b16 %v285
      %v809 = vunpack.c.l.b16 %v286
      %v810 = vunpack.c.l.b16 %v287
      %v811 = vunpack.c.l.b16 %v288
      %v812 = vunpack.c.l.b16 %v289
      %v813 = vunpack.c.l.b16 %v290
      %v814 = vunpack.c.l.b16 %v291
      %v815 = vunpack.c.l.b16 %v292
      %v816 = vunpack.c.l.b16 %v293
      %v817 = vunpack.c.l.b16 %v294
      %v818 = vunpack.c.l.b16 %v295
      %v819 = vunpack.c.l.b16 %v296
      %v820 = vunpack.c.l.b16 %v297
      %v821 = vunpack.c.l.b16 %v298
      %v822 = vunpack.c.l.b16 %v299
      %v823 = vunpack.c.l.b16 %v300
      %v824 = vunpack.c.l.b16 %v301
      %v825 = vunpack.c.l.b16 %v302
      %v826 = vunpack.c.l.b16 %v303
      %v827 = vunpack.c.l.b16 %v304
      %v828 = vunpack.c.l.b16 %v305
      %v829 = vunpack.c.l.b16 %v306
      %v830 = vunpack.c.l.b16 %v307
      %v831 = vunpack.c.l.b16 %v308
      %v832 = vpack.c.b16 %v801, %v800
      %v833 = vpack.c.b16 %v803, %v802
      %v834 = vpack.c.b16 %v805, %v804
      %v835 = vpack.c.b16 %v807, %v806
      %v836 = vpack.c.b16 %v809, %v808
      %v837 = vpack.c.b16 %v811, %v810
      %v838 = vpack.c.b16 %v813, %v812
      %v839 = vpack.c.b16 %v815, %v814
      %v840 = vpack.c.b16 %v817, %v816
      %v841 = vpack.c.b16 %v819, %v818
      %v842 = vpack.c.b16 %v821, %v820
      %v843 = vpack.c.b16 %v823, %v822
      %v844 = vpack.c.b16 %v825, %v824
      %v845 = vpack.c.b16 %v827, %v826
      %v846 = vpack.c.b16 %v829, %v828
      %v847 = vpack.c.b16 %v831, %v830
      %v880 = vunpack.c.l.b16 %v314
      %v881 = vunpack.c.l.b16 %v315
      %v882 = vunpack.c.l.b16 %v316
      %v883 = vunpack.c.l.b16 %v317
      %v884 = vunpack.c.l.b16 %v318
      %v885 = vunpack.c.l.b16 %v319
      %v886 = vunpack.c.l.b16 %v320
      %v887 = vunpack.c.l.b16 %v321
      %v888 = vunpack.c.l.b16 %v322
      %v889 = vunpack.c.l.b16 %v323
      %v890 = vunpack.c.l.b16 %v324
      %v891 = vunpack.c.l.b16 %v325
      %v892 = vunpack.c.l.b16 %v326
      %v893 = vunpack.c.l.b16 %v327
      %v894 = vunpack.c.l.b16 %v328
      %v895 = vunpack.c.l.b16 %v329
      %v896 = vunpack.c.l.b16 %v330
      %v897 = vunpack.c.l.b16 %v331
      %v898 = vunpack.c.l.b16 %v332
      %v899 = vunpack.c.l.b16 %v333
      %v900 = vunpack.c.l.b16 %v334
      %v901 = vunpack.c.l.b16 %v335
      %v902 = vunpack.c.l.b16 %v336
      %v903 = vunpack.c.l.b16 %v337
      %v904 = vunpack.c.l.b16 %v338
      %v905 = vunpack.c.l.b16 %v339
      %v906 = vunpack.c.l.b16 %v340
      %v907 = vunpack.c.l.b16 %v341
      %v908 = vunpack.c.l.b16 %v342
      %v909 = vunpack.c.l.b16 %v343
      %v910 = vunpack.c.l.b16 %v344
      %v911 = vunpack.c.l.b16 %v345
      %v912 = vpack.c.b16 %v881, %v880
      %v913 = vpack.c.b16 %v883, %v882
      %v914 = vpack.c.b16 %v885, %v884
      %v915 = vpack.c.b16 %v887, %v886
      %v916 = vpack.c.b16 %v889, %v888
      %v917 = vpack.c.b16 %v891, %v890
      %v918 = vpack.c.b16 %v893, %v892
      %v919 = vpack.c.b16 %v895, %v894
      %v920 = vpack.c.b16 %v897, %v896
      %v921 = vpack.c.b16 %v899, %v898
      %v922 = vpack.c.b16 %v901, %v900
      %v923 = vpack.c.b16 %v903, %v902
      %v924 = vpack.c.b16 %v905, %v904
      %v925 = vpack.c.b16 %v907, %v906
      %v926 = vpack.c.b16 %v909, %v908
      %v927 = vpack.c.b16 %v911, %v910
      %928 = vrot.lane.b32.xlu0 %v912, 32
      %v929 = vpop.permute.xlu0 %928
      %930 = vrot.lane.b32.xlu0 %v913, 32
      %v931 = vpop.permute.xlu0 %930
      %932 = vrot.lane.b32.xlu0 %v914, 32
      %v933 = vpop.permute.xlu0 %932
      %934 = vrot.lane.b32.xlu0 %v915, 32
      %v935 = vpop.permute.xlu0 %934
      %936 = vrot.lane.b32.xlu0 %v916, 32
      %v937 = vpop.permute.xlu0 %936
      %938 = vrot.lane.b32.xlu0 %v917, 32
      %v939 = vpop.permute.xlu0 %938
      %940 = vrot.lane.b32.xlu0 %v918, 32
      %v941 = vpop.permute.xlu0 %940
      %942 = vrot.lane.b32.xlu0 %v919, 32
      %v943 = vpop.permute.xlu0 %942
      %944 = vrot.lane.b32.xlu0 %v920, 32
      %v945 = vpop.permute.xlu0 %944
      %946 = vrot.lane.b32.xlu0 %v921, 32
      %v947 = vpop.permute.xlu0 %946
      %948 = vrot.lane.b32.xlu0 %v922, 32
      %v949 = vpop.permute.xlu0 %948
      %950 = vrot.lane.b32.xlu0 %v923, 32
      %v951 = vpop.permute.xlu0 %950
      %952 = vrot.lane.b32.xlu0 %v924, 32
      %v953 = vpop.permute.xlu0 %952
      %954 = vrot.lane.b32.xlu0 %v925, 32
      %v955 = vpop.permute.xlu0 %954
      %956 = vrot.lane.b32.xlu0 %v926, 32
      %v957 = vpop.permute.xlu0 %956
      %958 = vrot.lane.b32.xlu0 %v927, 32
      %v959 = vpop.permute.xlu0 %958
      %vm960 = vcmask 261120
      %v963 = vsel %vm960, %v832, %v929
      %v967 = vsel %vm960, %v833, %v931
      %v971 = vsel %vm960, %v834, %v933
      %v975 = vsel %vm960, %v835, %v935
      %v979 = vsel %vm960, %v836, %v937
      %v983 = vsel %vm960, %v837, %v939
      %v987 = vsel %vm960, %v838, %v941
      %v991 = vsel %vm960, %v839, %v943
      %v995 = vsel %vm960, %v840, %v945
      %v999 = vsel %vm960, %v841, %v947
      %v1003 = vsel %vm960, %v842, %v949
      %v1007 = vsel %vm960, %v843, %v951
      %v1011 = vsel %vm960, %v844, %v953
      %v1015 = vsel %vm960, %v845, %v955
      %v1019 = vsel %vm960, %v846, %v957
      %v1023 = vsel %vm960, %v847, %v959
      %vm1025 = vcmp.eq.s32.totalorder %v736, 0
      %vm1026 = vcmp.eq.s32.totalorder %v737, 0
      %vm1027 = vcmp.eq.s32.totalorder %v738, 0
      %vm1028 = vcmp.eq.s32.totalorder %v739, 0
      %vm1029 = vcmp.eq.s32.totalorder %v740, 0
      %vm1030 = vcmp.eq.s32.totalorder %v741, 0
      %vm1031 = vcmp.eq.s32.totalorder %v742, 0
      %vm1032 = vcmp.eq.s32.totalorder %v743, 0
      %vm1033 = vcmp.eq.s32.totalorder %v744, 0
      %vm1034 = vcmp.eq.s32.totalorder %v745, 0
      %vm1035 = vcmp.eq.s32.totalorder %v746, 0
      %vm1036 = vcmp.eq.s32.totalorder %v747, 0
      %vm1037 = vcmp.eq.s32.totalorder %v748, 0
      %vm1038 = vcmp.eq.s32.totalorder %v749, 0
      %vm1039 = vcmp.eq.s32.totalorder %v750, 0
      %vm1040 = vcmp.eq.s32.totalorder %v751, 0
      %vm1041 = vcmp.eq.s32.totalorder %v752, 0
      %vm1042 = vcmp.eq.s32.totalorder %v753, 0
      %vm1043 = vcmp.eq.s32.totalorder %v754, 0
      %vm1044 = vcmp.eq.s32.totalorder %v755, 0
      %vm1045 = vcmp.eq.s32.totalorder %v756, 0
      %vm1046 = vcmp.eq.s32.totalorder %v757, 0
      %vm1047 = vcmp.eq.s32.totalorder %v758, 0
      %vm1048 = vcmp.eq.s32.totalorder %v759, 0
      %vm1049 = vcmp.eq.s32.totalorder %v760, 0
      %vm1050 = vcmp.eq.s32.totalorder %v761, 0
      %vm1051 = vcmp.eq.s32.totalorder %v762, 0
      %vm1052 = vcmp.eq.s32.totalorder %v763, 0
      %vm1053 = vcmp.eq.s32.totalorder %v764, 0
      %vm1054 = vcmp.eq.s32.totalorder %v765, 0
      %vm1055 = vcmp.eq.s32.totalorder %v766, 0
      %vm1056 = vcmp.eq.s32.totalorder %v767, 0
      %v1057 = vsel %vm1025, 1, 0
      %v1058 = vsel %vm1026, 1, 0
      %v1059 = vsel %vm1027, 1, 0
      %v1060 = vsel %vm1028, 1, 0
      %v1061 = vsel %vm1029, 1, 0
      %v1062 = vsel %vm1030, 1, 0
      %v1063 = vsel %vm1031, 1, 0
      %v1064 = vsel %vm1032, 1, 0
      %v1065 = vsel %vm1033, 1, 0
      %v1066 = vsel %vm1034, 1, 0
      %v1067 = vsel %vm1035, 1, 0
      %v1068 = vsel %vm1036, 1, 0
      %v1069 = vsel %vm1037, 1, 0
      %v1070 = vsel %vm1038, 1, 0
      %v1071 = vsel %vm1039, 1, 0
      %v1072 = vsel %vm1040, 1, 0
      %v1073 = vsel %vm1041, 1, 0
      %v1074 = vsel %vm1042, 1, 0
      %v1075 = vsel %vm1043, 1, 0
      %v1076 = vsel %vm1044, 1, 0
      %v1077 = vsel %vm1045, 1, 0
      %v1078 = vsel %vm1046, 1, 0
      %v1079 = vsel %vm1047, 1, 0
      %v1080 = vsel %vm1048, 1, 0
      %v1081 = vsel %vm1049, 1, 0
      %v1082 = vsel %vm1050, 1, 0
      %v1083 = vsel %vm1051, 1, 0
      %v1084 = vsel %vm1052, 1, 0
      %v1085 = vsel %vm1053, 1, 0
      %v1086 = vsel %vm1054, 1, 0
      %v1087 = vsel %vm1055, 1, 0
      %v1088 = vsel %vm1056, 1, 0
      %vm1089 = vcmp.eq.s32.totalorder %v1057, 1
      %vm1090 = vcmp.eq.s32.totalorder %v1058, 1
      %vm1091 = vcmp.eq.s32.totalorder %v1059, 1
      %vm1092 = vcmp.eq.s32.totalorder %v1060, 1
      %vm1093 = vcmp.eq.s32.totalorder %v1061, 1
      %vm1094 = vcmp.eq.s32.totalorder %v1062, 1
      %vm1095 = vcmp.eq.s32.totalorder %v1063, 1
      %vm1096 = vcmp.eq.s32.totalorder %v1064, 1
      %vm1097 = vcmp.eq.s32.totalorder %v1065, 1
      %vm1098 = vcmp.eq.s32.totalorder %v1066, 1
      %vm1099 = vcmp.eq.s32.totalorder %v1067, 1
      %vm1100 = vcmp.eq.s32.totalorder %v1068, 1
      %vm1101 = vcmp.eq.s32.totalorder %v1069, 1
      %vm1102 = vcmp.eq.s32.totalorder %v1070, 1
      %vm1103 = vcmp.eq.s32.totalorder %v1071, 1
      %vm1104 = vcmp.eq.s32.totalorder %v1072, 1
      %vm1105 = vcmp.eq.s32.totalorder %v1073, 1
      %vm1106 = vcmp.eq.s32.totalorder %v1074, 1
      %vm1107 = vcmp.eq.s32.totalorder %v1075, 1
      %vm1108 = vcmp.eq.s32.totalorder %v1076, 1
      %vm1109 = vcmp.eq.s32.totalorder %v1077, 1
      %vm1110 = vcmp.eq.s32.totalorder %v1078, 1
      %vm1111 = vcmp.eq.s32.totalorder %v1079, 1
      %vm1112 = vcmp.eq.s32.totalorder %v1080, 1
      %vm1113 = vcmp.eq.s32.totalorder %v1081, 1
      %vm1114 = vcmp.eq.s32.totalorder %v1082, 1
      %vm1115 = vcmp.eq.s32.totalorder %v1083, 1
      %vm1116 = vcmp.eq.s32.totalorder %v1084, 1
      %vm1117 = vcmp.eq.s32.totalorder %v1085, 1
      %vm1118 = vcmp.eq.s32.totalorder %v1086, 1
      %vm1119 = vcmp.eq.s32.totalorder %v1087, 1
      %vm1120 = vcmp.eq.s32.totalorder %v1088, 1
      %vm1121 = vmpackc.low %vm1089, %vm1089
      %vm1122 = vmpackc.low %vm1090, %vm1090
      %vm1123 = vmpackc.low %vm1091, %vm1091
      %vm1124 = vmpackc.low %vm1092, %vm1092
      %vm1125 = vmpackc.low %vm1093, %vm1093
      %vm1126 = vmpackc.low %vm1094, %vm1094
      %vm1127 = vmpackc.low %vm1095, %vm1095
      %vm1128 = vmpackc.low %vm1096, %vm1096
      %vm1129 = vmpackc.low %vm1097, %vm1097
      %vm1130 = vmpackc.low %vm1098, %vm1098
      %vm1131 = vmpackc.low %vm1099, %vm1099
      %vm1132 = vmpackc.low %vm1100, %vm1100
      %vm1133 = vmpackc.low %vm1101, %vm1101
      %vm1134 = vmpackc.low %vm1102, %vm1102
      %vm1135 = vmpackc.low %vm1103, %vm1103
      %vm1136 = vmpackc.low %vm1104, %vm1104
      %vm1137 = vmpackc.low %vm1105, %vm1105
      %vm1138 = vmpackc.low %vm1106, %vm1106
      %vm1139 = vmpackc.low %vm1107, %vm1107
      %vm1140 = vmpackc.low %vm1108, %vm1108
      %vm1141 = vmpackc.low %vm1109, %vm1109
      %vm1142 = vmpackc.low %vm1110, %vm1110
      %vm1143 = vmpackc.low %vm1111, %vm1111
      %vm1144 = vmpackc.low %vm1112, %vm1112
      %vm1145 = vmpackc.low %vm1113, %vm1113
      %vm1146 = vmpackc.low %vm1114, %vm1114
      %vm1147 = vmpackc.low %vm1115, %vm1115
      %vm1148 = vmpackc.low %vm1116, %vm1116
      %vm1149 = vmpackc.low %vm1117, %vm1117
      %vm1150 = vmpackc.low %vm1118, %vm1118
      %vm1151 = vmpackc.low %vm1119, %vm1119
      %vm1152 = vmpackc.low %vm1120, %vm1120
      %v1153 = vsel %vm1121, 65537, 0
      %v1154 = vsel %vm1122, 65537, 0
      %v1155 = vsel %vm1123, 65537, 0
      %v1156 = vsel %vm1124, 65537, 0
      %v1157 = vsel %vm1125, 65537, 0
      %v1158 = vsel %vm1126, 65537, 0
      %v1159 = vsel %vm1127, 65537, 0
      %v1160 = vsel %vm1128, 65537, 0
      %v1161 = vsel %vm1129, 65537, 0
      %v1162 = vsel %vm1130, 65537, 0
      %v1163 = vsel %vm1131, 65537, 0
      %v1164 = vsel %vm1132, 65537, 0
      %v1165 = vsel %vm1133, 65537, 0
      %v1166 = vsel %vm1134, 65537, 0
      %v1167 = vsel %vm1135, 65537, 0
      %v1168 = vsel %vm1136, 65537, 0
      %v1169 = vsel %vm1137, 65537, 0
      %v1170 = vsel %vm1138, 65537, 0
      %v1171 = vsel %vm1139, 65537, 0
      %v1172 = vsel %vm1140, 65537, 0
      %v1173 = vsel %vm1141, 65537, 0
      %v1174 = vsel %vm1142, 65537, 0
      %v1175 = vsel %vm1143, 65537, 0
      %v1176 = vsel %vm1144, 65537, 0
      %v1177 = vsel %vm1145, 65537, 0
      %v1178 = vsel %vm1146, 65537, 0
      %v1179 = vsel %vm1147, 65537, 0
      %v1180 = vsel %vm1148, 65537, 0
      %v1181 = vsel %vm1149, 65537, 0
      %v1182 = vsel %vm1150, 65537, 0
      %v1183 = vsel %vm1151, 65537, 0
      %v1184 = vsel %vm1152, 65537, 0
      %v1185 = vunpack.c.l.b16 %v1153
      %v1186 = vunpack.c.l.b16 %v1154
      %v1187 = vunpack.c.l.b16 %v1155
      %v1188 = vunpack.c.l.b16 %v1156
      %v1189 = vunpack.c.l.b16 %v1157
      %v1190 = vunpack.c.l.b16 %v1158
      %v1191 = vunpack.c.l.b16 %v1159
      %v1192 = vunpack.c.l.b16 %v1160
      %v1193 = vunpack.c.l.b16 %v1161
      %v1194 = vunpack.c.l.b16 %v1162
      %v1195 = vunpack.c.l.b16 %v1163
      %v1196 = vunpack.c.l.b16 %v1164
      %v1197 = vunpack.c.l.b16 %v1165
      %v1198 = vunpack.c.l.b16 %v1166
      %v1199 = vunpack.c.l.b16 %v1167
      %v1200 = vunpack.c.l.b16 %v1168
      %v1201 = vunpack.c.l.b16 %v1169
      %v1202 = vunpack.c.l.b16 %v1170
      %v1203 = vunpack.c.l.b16 %v1171
      %v1204 = vunpack.c.l.b16 %v1172
      %v1205 = vunpack.c.l.b16 %v1173
      %v1206 = vunpack.c.l.b16 %v1174
      %v1207 = vunpack.c.l.b16 %v1175
      %v1208 = vunpack.c.l.b16 %v1176
      %v1209 = vunpack.c.l.b16 %v1177
      %v1210 = vunpack.c.l.b16 %v1178
      %v1211 = vunpack.c.l.b16 %v1179
      %v1212 = vunpack.c.l.b16 %v1180
      %v1213 = vunpack.c.l.b16 %v1181
      %v1214 = vunpack.c.l.b16 %v1182
      %v1215 = vunpack.c.l.b16 %v1183
      %v1216 = vunpack.c.l.b16 %v1184
      %v1217 = vpack.c.b16 %v1186, %v1185
      %v1218 = vpack.c.b16 %v1188, %v1187
      %v1219 = vpack.c.b16 %v1190, %v1189
      %v1220 = vpack.c.b16 %v1192, %v1191
      %v1221 = vpack.c.b16 %v1194, %v1193
      %v1222 = vpack.c.b16 %v1196, %v1195
      %v1223 = vpack.c.b16 %v1198, %v1197
      %v1224 = vpack.c.b16 %v1200, %v1199
      %v1225 = vpack.c.b16 %v1202, %v1201
      %v1226 = vpack.c.b16 %v1204, %v1203
      %v1227 = vpack.c.b16 %v1206, %v1205
      %v1228 = vpack.c.b16 %v1208, %v1207
      %v1229 = vpack.c.b16 %v1210, %v1209
      %v1230 = vpack.c.b16 %v1212, %v1211
      %v1231 = vpack.c.b16 %v1214, %v1213
      %v1232 = vpack.c.b16 %v1216, %v1215
      %vm1233 = vcmp.ne.s16.totalorder %v1217, 0
      %vm1234 = vcmp.ne.s16.totalorder %v1218, 0
      %vm1235 = vcmp.ne.s16.totalorder %v1219, 0
      %vm1236 = vcmp.ne.s16.totalorder %v1220, 0
      %vm1237 = vcmp.ne.s16.totalorder %v1221, 0
      %vm1238 = vcmp.ne.s16.totalorder %v1222, 0
      %vm1239 = vcmp.ne.s16.totalorder %v1223, 0
      %vm1240 = vcmp.ne.s16.totalorder %v1224, 0
      %vm1241 = vcmp.ne.s16.totalorder %v1225, 0
      %vm1242 = vcmp.ne.s16.totalorder %v1226, 0
      %vm1243 = vcmp.ne.s16.totalorder %v1227, 0
      %vm1244 = vcmp.ne.s16.totalorder %v1228, 0
      %vm1245 = vcmp.ne.s16.totalorder %v1229, 0
      %vm1246 = vcmp.ne.s16.totalorder %v1230, 0
      %vm1247 = vcmp.ne.s16.totalorder %v1231, 0
      %vm1248 = vcmp.ne.s16.totalorder %v1232, 0
      %v1249 = vsel %vm1233, 0, %v963
      %v1250 = vsel %vm1234, 0, %v967
      %v1251 = vsel %vm1235, 0, %v971
      %v1252 = vsel %vm1236, 0, %v975
      %v1253 = vsel %vm1237, 0, %v979
      %v1254 = vsel %vm1238, 0, %v983
      %v1255 = vsel %vm1239, 0, %v987
      %v1256 = vsel %vm1240, 0, %v991
      %v1257 = vsel %vm1241, 0, %v995
      %v1258 = vsel %vm1242, 0, %v999
      %v1259 = vsel %vm1243, 0, %v1003
      %v1260 = vsel %vm1244, 0, %v1007
      %v1261 = vsel %vm1245, 0, %v1011
      %v1262 = vsel %vm1246, 0, %v1015
      %v1263 = vsel %vm1247, 0, %v1019
      %v1264 = vsel %vm1248, 0, %v1023
      %v1266 = vunpack.c.l.b16 %v309
      %v1267 = vpack.c.b16 %v1266, %v1266
      %v1269 = vunpack.c.l.b16 %v346
      %v1270 = vpack.c.b16 %v1269, %v1269
      %1271 = vrot.lane.b32.xlu0 %v1270, 32
      %v1272 = vpop.permute.xlu0 %1271
      %v1275 = vsel %vm960, %v1267, %v1272
      %vm1277 = vcmp.eq.s32.totalorder %v736, 15
      %vm1278 = vcmp.eq.s32.totalorder %v737, 15
      %vm1279 = vcmp.eq.s32.totalorder %v738, 15
      %vm1280 = vcmp.eq.s32.totalorder %v739, 15
      %vm1281 = vcmp.eq.s32.totalorder %v740, 15
      %vm1282 = vcmp.eq.s32.totalorder %v741, 15
      %vm1283 = vcmp.eq.s32.totalorder %v742, 15
      %vm1284 = vcmp.eq.s32.totalorder %v743, 15
      %vm1285 = vcmp.eq.s32.totalorder %v744, 15
      %vm1286 = vcmp.eq.s32.totalorder %v745, 15
      %vm1287 = vcmp.eq.s32.totalorder %v746, 15
      %vm1288 = vcmp.eq.s32.totalorder %v747, 15
      %vm1289 = vcmp.eq.s32.totalorder %v748, 15
      %vm1290 = vcmp.eq.s32.totalorder %v749, 15
      %vm1291 = vcmp.eq.s32.totalorder %v750, 15
      %vm1292 = vcmp.eq.s32.totalorder %v751, 15
      %vm1293 = vcmp.eq.s32.totalorder %v752, 15
      %vm1294 = vcmp.eq.s32.totalorder %v753, 15
      %vm1295 = vcmp.eq.s32.totalorder %v754, 15
      %vm1296 = vcmp.eq.s32.totalorder %v755, 15
      %vm1297 = vcmp.eq.s32.totalorder %v756, 15
      %vm1298 = vcmp.eq.s32.totalorder %v757, 15
      %vm1299 = vcmp.eq.s32.totalorder %v758, 15
      %vm1300 = vcmp.eq.s32.totalorder %v759, 15
      %vm1301 = vcmp.eq.s32.totalorder %v760, 15
      %vm1302 = vcmp.eq.s32.totalorder %v761, 15
      %vm1303 = vcmp.eq.s32.totalorder %v762, 15
      %vm1304 = vcmp.eq.s32.totalorder %v763, 15
      %vm1305 = vcmp.eq.s32.totalorder %v764, 15
      %vm1306 = vcmp.eq.s32.totalorder %v765, 15
      %vm1307 = vcmp.eq.s32.totalorder %v766, 15
      %vm1308 = vcmp.eq.s32.totalorder %v767, 15
      %v1309 = vsel %vm1277, 1, 0
      %v1310 = vsel %vm1278, 1, 0
      %v1311 = vsel %vm1279, 1, 0
      %v1312 = vsel %vm1280, 1, 0
      %v1313 = vsel %vm1281, 1, 0
      %v1314 = vsel %vm1282, 1, 0
      %v1315 = vsel %vm1283, 1, 0
      %v1316 = vsel %vm1284, 1, 0
      %v1317 = vsel %vm1285, 1, 0
      %v1318 = vsel %vm1286, 1, 0
      %v1319 = vsel %vm1287, 1, 0
      %v1320 = vsel %vm1288, 1, 0
      %v1321 = vsel %vm1289, 1, 0
      %v1322 = vsel %vm1290, 1, 0
      %v1323 = vsel %vm1291, 1, 0
      %v1324 = vsel %vm1292, 1, 0
      %v1325 = vsel %vm1293, 1, 0
      %v1326 = vsel %vm1294, 1, 0
      %v1327 = vsel %vm1295, 1, 0
      %v1328 = vsel %vm1296, 1, 0
      %v1329 = vsel %vm1297, 1, 0
      %v1330 = vsel %vm1298, 1, 0
      %v1331 = vsel %vm1299, 1, 0
      %v1332 = vsel %vm1300, 1, 0
      %v1333 = vsel %vm1301, 1, 0
      %v1334 = vsel %vm1302, 1, 0
      %v1335 = vsel %vm1303, 1, 0
      %v1336 = vsel %vm1304, 1, 0
      %v1337 = vsel %vm1305, 1, 0
      %v1338 = vsel %vm1306, 1, 0
      %v1339 = vsel %vm1307, 1, 0
      %v1340 = vsel %vm1308, 1, 0
      %vm1341 = vcmp.eq.s32.totalorder %v1309, 1
      %vm1342 = vcmp.eq.s32.totalorder %v1310, 1
      %vm1343 = vcmp.eq.s32.totalorder %v1311, 1
      %vm1344 = vcmp.eq.s32.totalorder %v1312, 1
      %vm1345 = vcmp.eq.s32.totalorder %v1313, 1
      %vm1346 = vcmp.eq.s32.totalorder %v1314, 1
      %vm1347 = vcmp.eq.s32.totalorder %v1315, 1
      %vm1348 = vcmp.eq.s32.totalorder %v1316, 1
      %vm1349 = vcmp.eq.s32.totalorder %v1317, 1
      %vm1350 = vcmp.eq.s32.totalorder %v1318, 1
      %vm1351 = vcmp.eq.s32.totalorder %v1319, 1
      %vm1352 = vcmp.eq.s32.totalorder %v1320, 1
      %vm1353 = vcmp.eq.s32.totalorder %v1321, 1
      %vm1354 = vcmp.eq.s32.totalorder %v1322, 1
      %vm1355 = vcmp.eq.s32.totalorder %v1323, 1
      %vm1356 = vcmp.eq.s32.totalorder %v1324, 1
      %vm1357 = vcmp.eq.s32.totalorder %v1325, 1
      %vm1358 = vcmp.eq.s32.totalorder %v1326, 1
      %vm1359 = vcmp.eq.s32.totalorder %v1327, 1
      %vm1360 = vcmp.eq.s32.totalorder %v1328, 1
      %vm1361 = vcmp.eq.s32.totalorder %v1329, 1
      %vm1362 = vcmp.eq.s32.totalorder %v1330, 1
      %vm1363 = vcmp.eq.s32.totalorder %v1331, 1
      %vm1364 = vcmp.eq.s32.totalorder %v1332, 1
      %vm1365 = vcmp.eq.s32.totalorder %v1333, 1
      %vm1366 = vcmp.eq.s32.totalorder %v1334, 1
      %vm1367 = vcmp.eq.s32.totalorder %v1335, 1
      %vm1368 = vcmp.eq.s32.totalorder %v1336, 1
      %vm1369 = vcmp.eq.s32.totalorder %v1337, 1
      %vm1370 = vcmp.eq.s32.totalorder %v1338, 1
      %vm1371 = vcmp.eq.s32.totalorder %v1339, 1
      %vm1372 = vcmp.eq.s32.totalorder %v1340, 1
      %vm1373 = vmpackc.low %vm1341, %vm1341
      %vm1374 = vmpackc.low %vm1342, %vm1342
      %vm1375 = vmpackc.low %vm1343, %vm1343
      %vm1376 = vmpackc.low %vm1344, %vm1344
      %vm1377 = vmpackc.low %vm1345, %vm1345
      %vm1378 = vmpackc.low %vm1346, %vm1346
      %vm1379 = vmpackc.low %vm1347, %vm1347
      %vm1380 = vmpackc.low %vm1348, %vm1348
      %vm1381 = vmpackc.low %vm1349, %vm1349
      %vm1382 = vmpackc.low %vm1350, %vm1350
      %vm1383 = vmpackc.low %vm1351, %vm1351
      %vm1384 = vmpackc.low %vm1352, %vm1352
      %vm1385 = vmpackc.low %vm1353, %vm1353
      %vm1386 = vmpackc.low %vm1354, %vm1354
      %vm1387 = vmpackc.low %vm1355, %vm1355
      %vm1388 = vmpackc.low %vm1356, %vm1356
      %vm1389 = vmpackc.low %vm1357, %vm1357
      %vm1390 = vmpackc.low %vm1358, %vm1358
      %vm1391 = vmpackc.low %vm1359, %vm1359
      %vm1392 = vmpackc.low %vm1360, %vm1360
      %vm1393 = vmpackc.low %vm1361, %vm1361
      %vm1394 = vmpackc.low %vm1362, %vm1362
      %vm1395 = vmpackc.low %vm1363, %vm1363
      %vm1396 = vmpackc.low %vm1364, %vm1364
      %vm1397 = vmpackc.low %vm1365, %vm1365
      %vm1398 = vmpackc.low %vm1366, %vm1366
      %vm1399 = vmpackc.low %vm1367, %vm1367
      %vm1400 = vmpackc.low %vm1368, %vm1368
      %vm1401 = vmpackc.low %vm1369, %vm1369
      %vm1402 = vmpackc.low %vm1370, %vm1370
      %vm1403 = vmpackc.low %vm1371, %vm1371
      %vm1404 = vmpackc.low %vm1372, %vm1372
      %v1405 = vsel %vm1373, 65537, 0
      %v1406 = vsel %vm1374, 65537, 0
      %v1407 = vsel %vm1375, 65537, 0
      %v1408 = vsel %vm1376, 65537, 0
      %v1409 = vsel %vm1377, 65537, 0
      %v1410 = vsel %vm1378, 65537, 0
      %v1411 = vsel %vm1379, 65537, 0
      %v1412 = vsel %vm1380, 65537, 0
      %v1413 = vsel %vm1381, 65537, 0
      %v1414 = vsel %vm1382, 65537, 0
      %v1415 = vsel %vm1383, 65537, 0
      %v1416 = vsel %vm1384, 65537, 0
      %v1417 = vsel %vm1385, 65537, 0
      %v1418 = vsel %vm1386, 65537, 0
      %v1419 = vsel %vm1387, 65537, 0
      %v1420 = vsel %vm1388, 65537, 0
      %v1421 = vsel %vm1389, 65537, 0
      %v1422 = vsel %vm1390, 65537, 0
      %v1423 = vsel %vm1391, 65537, 0
      %v1424 = vsel %vm1392, 65537, 0
      %v1425 = vsel %vm1393, 65537, 0
      %v1426 = vsel %vm1394, 65537, 0
      %v1427 = vsel %vm1395, 65537, 0
      %v1428 = vsel %vm1396, 65537, 0
      %v1429 = vsel %vm1397, 65537, 0
      %v1430 = vsel %vm1398, 65537, 0
      %v1431 = vsel %vm1399, 65537, 0
      %v1432 = vsel %vm1400, 65537, 0
      %v1433 = vsel %vm1401, 65537, 0
      %v1434 = vsel %vm1402, 65537, 0
      %v1435 = vsel %vm1403, 65537, 0
      %v1436 = vsel %vm1404, 65537, 0
      %v1437 = vunpack.c.l.b16 %v1405
      %v1438 = vunpack.c.l.b16 %v1406
      %v1439 = vunpack.c.l.b16 %v1407
      %v1440 = vunpack.c.l.b16 %v1408
      %v1441 = vunpack.c.l.b16 %v1409
      %v1442 = vunpack.c.l.b16 %v1410
      %v1443 = vunpack.c.l.b16 %v1411
      %v1444 = vunpack.c.l.b16 %v1412
      %v1445 = vunpack.c.l.b16 %v1413
      %v1446 = vunpack.c.l.b16 %v1414
      %v1447 = vunpack.c.l.b16 %v1415
      %v1448 = vunpack.c.l.b16 %v1416
      %v1449 = vunpack.c.l.b16 %v1417
      %v1450 = vunpack.c.l.b16 %v1418
      %v1451 = vunpack.c.l.b16 %v1419
      %v1452 = vunpack.c.l.b16 %v1420
      %v1453 = vunpack.c.l.b16 %v1421
      %v1454 = vunpack.c.l.b16 %v1422
      %v1455 = vunpack.c.l.b16 %v1423
      %v1456 = vunpack.c.l.b16 %v1424
      %v1457 = vunpack.c.l.b16 %v1425
      %v1458 = vunpack.c.l.b16 %v1426
      %v1459 = vunpack.c.l.b16 %v1427
      %v1460 = vunpack.c.l.b16 %v1428
      %v1461 = vunpack.c.l.b16 %v1429
      %v1462 = vunpack.c.l.b16 %v1430
      %v1463 = vunpack.c.l.b16 %v1431
      %v1464 = vunpack.c.l.b16 %v1432
      %v1465 = vunpack.c.l.b16 %v1433
      %v1466 = vunpack.c.l.b16 %v1434
      %v1467 = vunpack.c.l.b16 %v1435
      %v1468 = vunpack.c.l.b16 %v1436
      %v1469 = vpack.c.b16 %v1438, %v1437
      %v1470 = vpack.c.b16 %v1440, %v1439
      %v1471 = vpack.c.b16 %v1442, %v1441
      %v1472 = vpack.c.b16 %v1444, %v1443
      %v1473 = vpack.c.b16 %v1446, %v1445
      %v1474 = vpack.c.b16 %v1448, %v1447
      %v1475 = vpack.c.b16 %v1450, %v1449
      %v1476 = vpack.c.b16 %v1452, %v1451
      %v1477 = vpack.c.b16 %v1454, %v1453
      %v1478 = vpack.c.b16 %v1456, %v1455
      %v1479 = vpack.c.b16 %v1458, %v1457
      %v1480 = vpack.c.b16 %v1460, %v1459
      %v1481 = vpack.c.b16 %v1462, %v1461
      %v1482 = vpack.c.b16 %v1464, %v1463
      %v1483 = vpack.c.b16 %v1466, %v1465
      %v1484 = vpack.c.b16 %v1468, %v1467
      %vm1485 = vcmask 1040384
      %v1486 = vrot.slane %v1469, 7
      %v1487 = vrot.slane %v1470, 7
      %v1488 = vsel %vm1485, %v1486, %v1487
      %v1489 = vrot.slane %v1471, 7
      %v1490 = vsel %vm1485, %v1487, %v1489
      %v1491 = vrot.slane %v1472, 7
      %v1492 = vsel %vm1485, %v1489, %v1491
      %v1493 = vrot.slane %v1473, 7
      %v1494 = vsel %vm1485, %v1491, %v1493
      %v1495 = vrot.slane %v1474, 7
      %v1496 = vsel %vm1485, %v1493, %v1495
      %v1497 = vrot.slane %v1475, 7
      %v1498 = vsel %vm1485, %v1495, %v1497
      %v1499 = vrot.slane %v1476, 7
      %v1500 = vsel %vm1485, %v1497, %v1499
      %v1501 = vrot.slane %v1477, 7
      %v1502 = vsel %vm1485, %v1499, %v1501
      %v1503 = vrot.slane %v1478, 7
      %v1504 = vsel %vm1485, %v1501, %v1503
      %v1505 = vrot.slane %v1479, 7
      %v1506 = vsel %vm1485, %v1503, %v1505
      %v1507 = vrot.slane %v1480, 7
      %v1508 = vsel %vm1485, %v1505, %v1507
      %v1509 = vrot.slane %v1481, 7
      %v1510 = vsel %vm1485, %v1507, %v1509
      %v1511 = vrot.slane %v1482, 7
      %v1512 = vsel %vm1485, %v1509, %v1511
      %v1513 = vrot.slane %v1483, 7
      %v1514 = vsel %vm1485, %v1511, %v1513
      %v1515 = vrot.slane %v1484, 7
      %v1516 = vsel %vm1485, %v1513, %v1515
      %vm1517 = vcmp.ne.s16.totalorder %v1486, 0
      %vm1518 = vcmp.ne.s16.totalorder %v1488, 0
      %vm1519 = vcmp.ne.s16.totalorder %v1490, 0
      %vm1520 = vcmp.ne.s16.totalorder %v1492, 0
      %vm1521 = vcmp.ne.s16.totalorder %v1494, 0
      %vm1522 = vcmp.ne.s16.totalorder %v1496, 0
      %vm1523 = vcmp.ne.s16.totalorder %v1498, 0
      %vm1524 = vcmp.ne.s16.totalorder %v1500, 0
      %vm1525 = vcmp.ne.s16.totalorder %v1502, 0
      %vm1526 = vcmp.ne.s16.totalorder %v1504, 0
      %vm1527 = vcmp.ne.s16.totalorder %v1506, 0
      %vm1528 = vcmp.ne.s16.totalorder %v1508, 0
      %vm1529 = vcmp.ne.s16.totalorder %v1510, 0
      %vm1530 = vcmp.ne.s16.totalorder %v1512, 0
      %vm1531 = vcmp.ne.s16.totalorder %v1514, 0
      %vm1532 = vcmp.ne.s16.totalorder %v1516, 0
      %vm1533 = vcmp.ne.s16.totalorder %v1515, 0
      %v1534 = vsel %vm1517, 0, %v963
      %v1535 = vsel %vm1518, 0, %v967
      %v1536 = vsel %vm1519, 0, %v971
      %v1537 = vsel %vm1520, 0, %v975
      %v1538 = vsel %vm1521, 0, %v979
      %v1539 = vsel %vm1522, 0, %v983
      %v1540 = vsel %vm1523, 0, %v987
      %v1541 = vsel %vm1524, 0, %v991
      %v1542 = vsel %vm1525, 0, %v995
      %v1543 = vsel %vm1526, 0, %v999
      %v1544 = vsel %vm1527, 0, %v1003
      %v1545 = vsel %vm1528, 0, %v1007
      %v1546 = vsel %vm1529, 0, %v1011
      %v1547 = vsel %vm1530, 0, %v1015
      %v1548 = vsel %vm1531, 0, %v1019
      %v1549 = vsel %vm1532, 0, %v1023
      %v1550 = vsel %vm1533, 0, %v1275
      %v1552 = vunpack.c.l.b16 %v310
      %v1553 = vpack.c.b16 %v1552, %v1266
      %v1555 = vunpack.c.l.b16 %v347
      %v1556 = vpack.c.b16 %v1555, %v1269
      %1557 = vrot.lane.b32.xlu0 %v1556, 32
      %v1558 = vpop.permute.xlu0 %1557
      %v1561 = vsel %vm960, %v1553, %v1558
      %v1563 = vsel %vm1233, 0, %v967
      %v1564 = vsel %vm1234, 0, %v971
      %v1565 = vsel %vm1235, 0, %v975
      %v1566 = vsel %vm1236, 0, %v979
      %v1567 = vsel %vm1237, 0, %v983
      %v1568 = vsel %vm1238, 0, %v987
      %v1569 = vsel %vm1239, 0, %v991
      %v1570 = vsel %vm1240, 0, %v995
      %v1571 = vsel %vm1241, 0, %v999
      %v1572 = vsel %vm1242, 0, %v1003
      %v1573 = vsel %vm1243, 0, %v1007
      %v1574 = vsel %vm1244, 0, %v1011
      %v1575 = vsel %vm1245, 0, %v1015
      %v1576 = vsel %vm1246, 0, %v1019
      %v1577 = vsel %vm1247, 0, %v1023
      %v1578 = vsel %vm1248, 0, %v1561
      %v1580 = vunpack.c.l.b16 %v311
      %v1581 = vpack.c.b16 %v1580, %v1580
      %v1583 = vunpack.c.l.b16 %v348
      %v1584 = vpack.c.b16 %v1583, %v1583
      %1585 = vrot.lane.b32.xlu0 %v1584, 32
      %v1586 = vpop.permute.xlu0 %1585
      %v1589 = vsel %vm960, %v1581, %v1586
      %v1591 = vsel %vm1517, 0, %v967
      %v1592 = vsel %vm1518, 0, %v971
      %v1593 = vsel %vm1519, 0, %v975
      %v1594 = vsel %vm1520, 0, %v979
      %v1595 = vsel %vm1521, 0, %v983
      %v1596 = vsel %vm1522, 0, %v987
      %v1597 = vsel %vm1523, 0, %v991
      %v1598 = vsel %vm1524, 0, %v995
      %v1599 = vsel %vm1525, 0, %v999
      %v1600 = vsel %vm1526, 0, %v1003
      %v1601 = vsel %vm1527, 0, %v1007
      %v1602 = vsel %vm1528, 0, %v1011
      %v1603 = vsel %vm1529, 0, %v1015
      %v1604 = vsel %vm1530, 0, %v1019
      %v1605 = vsel %vm1531, 0, %v1023
      %v1606 = vsel %vm1532, 0, %v1561
      %v1607 = vsel %vm1533, 0, %v1589
      %v1609 = vunpack.c.l.b16 %v312
      %v1610 = vpack.c.b16 %v1609, %v1580
      %v1612 = vunpack.c.l.b16 %v349
      %v1613 = vpack.c.b16 %v1612, %v1583
      %1614 = vrot.lane.b32.xlu0 %v1613, 32
      %v1615 = vpop.permute.xlu0 %1614
      %v1618 = vsel %vm960, %v1610, %v1615
      %v1620 = vsel %vm1233, 0, %v971
      %v1621 = vsel %vm1234, 0, %v975
      %v1622 = vsel %vm1235, 0, %v979
      %v1623 = vsel %vm1236, 0, %v983
      %v1624 = vsel %vm1237, 0, %v987
      %v1625 = vsel %vm1238, 0, %v991
      %v1626 = vsel %vm1239, 0, %v995
      %v1627 = vsel %vm1240, 0, %v999
      %v1628 = vsel %vm1241, 0, %v1003
      %v1629 = vsel %vm1242, 0, %v1007
      %v1630 = vsel %vm1243, 0, %v1011
      %v1631 = vsel %vm1244, 0, %v1015
      %v1632 = vsel %vm1245, 0, %v1019
      %v1633 = vsel %vm1246, 0, %v1023
      %v1634 = vsel %vm1247, 0, %v1561
      %v1635 = vsel %vm1248, 0, %v1618
      %v1637 = vunpack.c.l.b16 %v313
      %v1638 = vpack.c.b16 %v1637, %v1637
      %v1640 = vunpack.c.l.b16 %v350
      %v1641 = vpack.c.b16 %v1640, %v1640
      %1642 = vrot.lane.b32.xlu0 %v1641, 32
      %v1643 = vpop.permute.xlu0 %1642
      %v1646 = vsel %vm960, %v1638, %v1643
      %v1648 = vsel %vm1517, 0, %v971
      %v1649 = vsel %vm1518, 0, %v975
      %v1650 = vsel %vm1519, 0, %v979
      %v1651 = vsel %vm1520, 0, %v983
      %v1652 = vsel %vm1521, 0, %v987
      %v1653 = vsel %vm1522, 0, %v991
      %v1654 = vsel %vm1523, 0, %v995
      %v1655 = vsel %vm1524, 0, %v999
      %v1656 = vsel %vm1525, 0, %v1003
      %v1657 = vsel %vm1526, 0, %v1007
      %v1658 = vsel %vm1527, 0, %v1011
      %v1659 = vsel %vm1528, 0, %v1015
      %v1660 = vsel %vm1529, 0, %v1019
      %v1661 = vsel %vm1530, 0, %v1023
      %v1662 = vsel %vm1531, 0, %v1561
      %v1663 = vsel %vm1532, 0, %v1618
      %v1664 = vsel %vm1533, 0, %v1646
      %vm1665 = vsmask.f32 7424
      %v1666 = vshrl.u32 %v963, 16
      %v1668 = vshll.u32 %v963, 16
      %v1670 = vrot.slane %v1668, 1
      %v1671 = vor.u32 %v1666, %v1670
      %v1672 = vshll.u32 %v967, 16
      %v1674 = vrot.slane %v1672, 1
      %v1675 = vsel %vm1665, %v1671, %v1674
      %v1676 = vshrl.u32 %v967, 16
      %v1678 = vor.u32 %v1676, %v1674
      %v1679 = vshll.u32 %v971, 16
      %v1681 = vrot.slane %v1679, 1
      %v1682 = vsel %vm1665, %v1678, %v1681
      %v1683 = vshrl.u32 %v971, 16
      %v1685 = vor.u32 %v1683, %v1681
      %v1686 = vshll.u32 %v975, 16
      %v1688 = vrot.slane %v1686, 1
      %v1689 = vsel %vm1665, %v1685, %v1688
      %v1690 = vshrl.u32 %v975, 16
      %v1692 = vor.u32 %v1690, %v1688
      %v1693 = vshll.u32 %v979, 16
      %v1695 = vrot.slane %v1693, 1
      %v1696 = vsel %vm1665, %v1692, %v1695
      %v1697 = vshrl.u32 %v979, 16
      %v1699 = vor.u32 %v1697, %v1695
      %v1700 = vshll.u32 %v983, 16
      %v1702 = vrot.slane %v1700, 1
      %v1703 = vsel %vm1665, %v1699, %v1702
      %v1704 = vshrl.u32 %v983, 16
      %v1706 = vor.u32 %v1704, %v1702
      %v1707 = vshll.u32 %v987, 16
      %v1709 = vrot.slane %v1707, 1
      %v1710 = vsel %vm1665, %v1706, %v1709
      %v1711 = vshrl.u32 %v987, 16
      %v1713 = vor.u32 %v1711, %v1709
      %v1714 = vshll.u32 %v991, 16
      %v1716 = vrot.slane %v1714, 1
      %v1717 = vsel %vm1665, %v1713, %v1716
      %v1718 = vshrl.u32 %v991, 16
      %v1720 = vor.u32 %v1718, %v1716
      %v1721 = vshll.u32 %v995, 16
      %v1723 = vrot.slane %v1721, 1
      %v1724 = vsel %vm1665, %v1720, %v1723
      %v1725 = vshrl.u32 %v995, 16
      %v1727 = vor.u32 %v1725, %v1723
      %v1728 = vshll.u32 %v999, 16
      %v1730 = vrot.slane %v1728, 1
      %v1731 = vsel %vm1665, %v1727, %v1730
      %v1732 = vshrl.u32 %v999, 16
      %v1734 = vor.u32 %v1732, %v1730
      %v1735 = vshll.u32 %v1003, 16
      %v1737 = vrot.slane %v1735, 1
      %v1738 = vsel %vm1665, %v1734, %v1737
      %v1739 = vshrl.u32 %v1003, 16
      %v1741 = vor.u32 %v1739, %v1737
      %v1742 = vshll.u32 %v1007, 16
      %v1744 = vrot.slane %v1742, 1
      %v1745 = vsel %vm1665, %v1741, %v1744
      %v1746 = vshrl.u32 %v1007, 16
      %v1748 = vor.u32 %v1746, %v1744
      %v1749 = vshll.u32 %v1011, 16
      %v1751 = vrot.slane %v1749, 1
      %v1752 = vsel %vm1665, %v1748, %v1751
      %v1753 = vshrl.u32 %v1011, 16
      %v1755 = vor.u32 %v1753, %v1751
      %v1756 = vshll.u32 %v1015, 16
      %v1758 = vrot.slane %v1756, 1
      %v1759 = vsel %vm1665, %v1755, %v1758
      %v1760 = vshrl.u32 %v1015, 16
      %v1762 = vor.u32 %v1760, %v1758
      %v1763 = vshll.u32 %v1019, 16
      %v1765 = vrot.slane %v1763, 1
      %v1766 = vsel %vm1665, %v1762, %v1765
      %v1767 = vshrl.u32 %v1019, 16
      %v1769 = vor.u32 %v1767, %v1765
      %v1770 = vshll.u32 %v1023, 16
      %v1772 = vrot.slane %v1770, 1
      %v1773 = vsel %vm1665, %v1769, %v1772
      %v1774 = vshrl.u32 %v1023, 16
      %v1776 = vor.u32 %v1774, %v1772
      %v1777 = vshll.u32 %v1275, 16
      %v1779 = vrot.slane %v1777, 1
      %v1780 = vsel %vm1665, %v1776, %v1779
      %1781 = vrot.lane.b32.xlu0 %v1675, 48
      %v1782 = vpop.permute.xlu0 %1781
      %1783 = vrot.lane.b32.xlu0 %v1682, 48
      %v1784 = vpop.permute.xlu0 %1783
      %1785 = vrot.lane.b32.xlu0 %v1689, 48
      %v1786 = vpop.permute.xlu0 %1785
      %1787 = vrot.lane.b32.xlu0 %v1696, 48
      %v1788 = vpop.permute.xlu0 %1787
      %1789 = vrot.lane.b32.xlu0 %v1703, 48
      %v1790 = vpop.permute.xlu0 %1789
      %1791 = vrot.lane.b32.xlu0 %v1710, 48
      %v1792 = vpop.permute.xlu0 %1791
      %1793 = vrot.lane.b32.xlu0 %v1717, 48
      %v1794 = vpop.permute.xlu0 %1793
      %1795 = vrot.lane.b32.xlu0 %v1724, 48
      %v1796 = vpop.permute.xlu0 %1795
      %1797 = vrot.lane.b32.xlu0 %v1731, 48
      %v1798 = vpop.permute.xlu0 %1797
      %1799 = vrot.lane.b32.xlu0 %v1738, 48
      %v1800 = vpop.permute.xlu0 %1799
      %1801 = vrot.lane.b32.xlu0 %v1745, 48
      %v1802 = vpop.permute.xlu0 %1801
      %1803 = vrot.lane.b32.xlu0 %v1752, 48
      %v1804 = vpop.permute.xlu0 %1803
      %1805 = vrot.lane.b32.xlu0 %v1759, 48
      %v1806 = vpop.permute.xlu0 %1805
      %1807 = vrot.lane.b32.xlu0 %v1766, 48
      %v1808 = vpop.permute.xlu0 %1807
      %1809 = vrot.lane.b32.xlu0 %v1773, 48
      %v1810 = vpop.permute.xlu0 %1809
      %1811 = vrot.lane.b32.xlu0 %v1780, 48
      %v1812 = vpop.permute.xlu0 %1811
      %vm1830 = vcmask 1046528
      %v1831 = vrot.slane %v1534, 1
      %v1832 = vrot.slane %v1535, 1
      %v1833 = vsel %vm1830, %v1831, %v1832
      %v1834 = vrot.slane %v1536, 1
      %v1835 = vsel %vm1830, %v1832, %v1834
      %v1836 = vrot.slane %v1537, 1
      %v1837 = vsel %vm1830, %v1834, %v1836
      %v1838 = vrot.slane %v1538, 1
      %v1839 = vsel %vm1830, %v1836, %v1838
      %v1840 = vrot.slane %v1539, 1
      %v1841 = vsel %vm1830, %v1838, %v1840
      %v1842 = vrot.slane %v1540, 1
      %v1843 = vsel %vm1830, %v1840, %v1842
      %v1844 = vrot.slane %v1541, 1
      %v1845 = vsel %vm1830, %v1842, %v1844
      %v1846 = vrot.slane %v1542, 1
      %v1847 = vsel %vm1830, %v1844, %v1846
      %v1848 = vrot.slane %v1543, 1
      %v1849 = vsel %vm1830, %v1846, %v1848
      %v1850 = vrot.slane %v1544, 1
      %v1851 = vsel %vm1830, %v1848, %v1850
      %v1852 = vrot.slane %v1545, 1
      %v1853 = vsel %vm1830, %v1850, %v1852
      %v1854 = vrot.slane %v1546, 1
      %v1855 = vsel %vm1830, %v1852, %v1854
      %v1856 = vrot.slane %v1547, 1
      %v1857 = vsel %vm1830, %v1854, %v1856
      %v1858 = vrot.slane %v1548, 1
      %v1859 = vsel %vm1830, %v1856, %v1858
      %v1860 = vrot.slane %v1549, 1
      %v1861 = vsel %vm1830, %v1858, %v1860
      %v1862 = vrot.slane %v1550, 1
      %v1863 = vsel %vm1830, %v1860, %v1862
      %1864 = vrot.lane.b32.xlu0 %v1833, 96
      %v1865 = vpop.permute.xlu0 %1864
      %1866 = vrot.lane.b32.xlu0 %v1835, 96
      %v1867 = vpop.permute.xlu0 %1866
      %1868 = vrot.lane.b32.xlu0 %v1837, 96
      %v1869 = vpop.permute.xlu0 %1868
      %1870 = vrot.lane.b32.xlu0 %v1839, 96
      %v1871 = vpop.permute.xlu0 %1870
      %1872 = vrot.lane.b32.xlu0 %v1841, 96
      %v1873 = vpop.permute.xlu0 %1872
      %1874 = vrot.lane.b32.xlu0 %v1843, 96
      %v1875 = vpop.permute.xlu0 %1874
      %1876 = vrot.lane.b32.xlu0 %v1845, 96
      %v1877 = vpop.permute.xlu0 %1876
      %1878 = vrot.lane.b32.xlu0 %v1847, 96
      %v1879 = vpop.permute.xlu0 %1878
      %1880 = vrot.lane.b32.xlu0 %v1849, 96
      %v1881 = vpop.permute.xlu0 %1880
      %1882 = vrot.lane.b32.xlu0 %v1851, 96
      %v1883 = vpop.permute.xlu0 %1882
      %1884 = vrot.lane.b32.xlu0 %v1853, 96
      %v1885 = vpop.permute.xlu0 %1884
      %1886 = vrot.lane.b32.xlu0 %v1855, 96
      %v1887 = vpop.permute.xlu0 %1886
      %1888 = vrot.lane.b32.xlu0 %v1857, 96
      %v1889 = vpop.permute.xlu0 %1888
      %1890 = vrot.lane.b32.xlu0 %v1859, 96
      %v1891 = vpop.permute.xlu0 %1890
      %1892 = vrot.lane.b32.xlu0 %v1861, 96
      %v1893 = vpop.permute.xlu0 %1892
      %1894 = vrot.lane.b32.xlu0 %v1863, 96
      %v1895 = vpop.permute.xlu0 %1894
      %1912 = vrot.lane.b32.xlu0 %v1563, 16
      %v1913 = vpop.permute.xlu0 %1912
      %1914 = vrot.lane.b32.xlu0 %v1564, 16
      %v1915 = vpop.permute.xlu0 %1914
      %1916 = vrot.lane.b32.xlu0 %v1565, 16
      %v1917 = vpop.permute.xlu0 %1916
      %1918 = vrot.lane.b32.xlu0 %v1566, 16
      %v1919 = vpop.permute.xlu0 %1918
      %1920 = vrot.lane.b32.xlu0 %v1567, 16
      %v1921 = vpop.permute.xlu0 %1920
      %1922 = vrot.lane.b32.xlu0 %v1568, 16
      %v1923 = vpop.permute.xlu0 %1922
      %1924 = vrot.lane.b32.xlu0 %v1569, 16
      %v1925 = vpop.permute.xlu0 %1924
      %1926 = vrot.lane.b32.xlu0 %v1570, 16
      %v1927 = vpop.permute.xlu0 %1926
      %1928 = vrot.lane.b32.xlu0 %v1571, 16
      %v1929 = vpop.permute.xlu0 %1928
      %1930 = vrot.lane.b32.xlu0 %v1572, 16
      %v1931 = vpop.permute.xlu0 %1930
      %1932 = vrot.lane.b32.xlu0 %v1573, 16
      %v1933 = vpop.permute.xlu0 %1932
      %1934 = vrot.lane.b32.xlu0 %v1574, 16
      %v1935 = vpop.permute.xlu0 %1934
      %1936 = vrot.lane.b32.xlu0 %v1575, 16
      %v1937 = vpop.permute.xlu0 %1936
      %1938 = vrot.lane.b32.xlu0 %v1576, 16
      %v1939 = vpop.permute.xlu0 %1938
      %1940 = vrot.lane.b32.xlu0 %v1577, 16
      %v1941 = vpop.permute.xlu0 %1940
      %1942 = vrot.lane.b32.xlu0 %v1578, 16
      %v1943 = vpop.permute.xlu0 %1942
      %v1944 = vshll.u32 %v1561, 16
      %v1946 = vrot.slane %v1944, 1
      %v1947 = vsel %vm1665, %v1776, %v1946
      %v1948 = vshrl.u32 %v1561, 16
      %v1950 = vor.u32 %v1948, %v1946
      %v1951 = vshll.u32 %v1589, 16
      %v1953 = vrot.slane %v1951, 1
      %v1954 = vsel %vm1665, %v1950, %v1953
      %1955 = vrot.lane.b32.xlu0 %v1682, 64
      %v1956 = vpop.permute.xlu0 %1955
      %1957 = vrot.lane.b32.xlu0 %v1689, 64
      %v1958 = vpop.permute.xlu0 %1957
      %1959 = vrot.lane.b32.xlu0 %v1696, 64
      %v1960 = vpop.permute.xlu0 %1959
      %1961 = vrot.lane.b32.xlu0 %v1703, 64
      %v1962 = vpop.permute.xlu0 %1961
      %1963 = vrot.lane.b32.xlu0 %v1710, 64
      %v1964 = vpop.permute.xlu0 %1963
      %1965 = vrot.lane.b32.xlu0 %v1717, 64
      %v1966 = vpop.permute.xlu0 %1965
      %1967 = vrot.lane.b32.xlu0 %v1724, 64
      %v1968 = vpop.permute.xlu0 %1967
      %1969 = vrot.lane.b32.xlu0 %v1731, 64
      %v1970 = vpop.permute.xlu0 %1969
      %1971 = vrot.lane.b32.xlu0 %v1738, 64
      %v1972 = vpop.permute.xlu0 %1971
      %1973 = vrot.lane.b32.xlu0 %v1745, 64
      %v1974 = vpop.permute.xlu0 %1973
      %1975 = vrot.lane.b32.xlu0 %v1752, 64
      %v1976 = vpop.permute.xlu0 %1975
      %1977 = vrot.lane.b32.xlu0 %v1759, 64
      %v1978 = vpop.permute.xlu0 %1977
      %1979 = vrot.lane.b32.xlu0 %v1766, 64
      %v1980 = vpop.permute.xlu0 %1979
      %1981 = vrot.lane.b32.xlu0 %v1773, 64
      %v1982 = vpop.permute.xlu0 %1981
      %1983 = vrot.lane.b32.xlu0 %v1947, 64
      %v1984 = vpop.permute.xlu0 %1983
      %1985 = vrot.lane.b32.xlu0 %v1954, 64
      %v1986 = vpop.permute.xlu0 %1985
      %v2004 = vrot.slane %v1591, 1
      %v2005 = vrot.slane %v1592, 1
      %v2006 = vsel %vm1830, %v2004, %v2005
      %v2007 = vrot.slane %v1593, 1
      %v2008 = vsel %vm1830, %v2005, %v2007
      %v2009 = vrot.slane %v1594, 1
      %v2010 = vsel %vm1830, %v2007, %v2009
      %v2011 = vrot.slane %v1595, 1
      %v2012 = vsel %vm1830, %v2009, %v2011
      %v2013 = vrot.slane %v1596, 1
      %v2014 = vsel %vm1830, %v2011, %v2013
      %v2015 = vrot.slane %v1597, 1
      %v2016 = vsel %vm1830, %v2013, %v2015
      %v2017 = vrot.slane %v1598, 1
      %v2018 = vsel %vm1830, %v2015, %v2017
      %v2019 = vrot.slane %v1599, 1
      %v2020 = vsel %vm1830, %v2017, %v2019
      %v2021 = vrot.slane %v1600, 1
      %v2022 = vsel %vm1830, %v2019, %v2021
      %v2023 = vrot.slane %v1601, 1
      %v2024 = vsel %vm1830, %v2021, %v2023
      %v2025 = vrot.slane %v1602, 1
      %v2026 = vsel %vm1830, %v2023, %v2025
      %v2027 = vrot.slane %v1603, 1
      %v2028 = vsel %vm1830, %v2025, %v2027
      %v2029 = vrot.slane %v1604, 1
      %v2030 = vsel %vm1830, %v2027, %v2029
      %v2031 = vrot.slane %v1605, 1
      %v2032 = vsel %vm1830, %v2029, %v2031
      %v2033 = vrot.slane %v1606, 1
      %v2034 = vsel %vm1830, %v2031, %v2033
      %v2035 = vrot.slane %v1607, 1
      %v2036 = vsel %vm1830, %v2033, %v2035
      %2037 = vrot.lane.b32.xlu0 %v2006, 112
      %v2038 = vpop.permute.xlu0 %2037
      %2039 = vrot.lane.b32.xlu0 %v2008, 112
      %v2040 = vpop.permute.xlu0 %2039
      %2041 = vrot.lane.b32.xlu0 %v2010, 112
      %v2042 = vpop.permute.xlu0 %2041
      %2043 = vrot.lane.b32.xlu0 %v2012, 112
      %v2044 = vpop.permute.xlu0 %2043
      %2045 = vrot.lane.b32.xlu0 %v2014, 112
      %v2046 = vpop.permute.xlu0 %2045
      %2047 = vrot.lane.b32.xlu0 %v2016, 112
      %v2048 = vpop.permute.xlu0 %2047
      %2049 = vrot.lane.b32.xlu0 %v2018, 112
      %v2050 = vpop.permute.xlu0 %2049
      %2051 = vrot.lane.b32.xlu0 %v2020, 112
      %v2052 = vpop.permute.xlu0 %2051
      %2053 = vrot.lane.b32.xlu0 %v2022, 112
      %v2054 = vpop.permute.xlu0 %2053
      %2055 = vrot.lane.b32.xlu0 %v2024, 112
      %v2056 = vpop.permute.xlu0 %2055
      %2057 = vrot.lane.b32.xlu0 %v2026, 112
      %v2058 = vpop.permute.xlu0 %2057
      %2059 = vrot.lane.b32.xlu0 %v2028, 112
      %v2060 = vpop.permute.xlu0 %2059
      %2061 = vrot.lane.b32.xlu0 %v2030, 112
      %v2062 = vpop.permute.xlu0 %2061
      %2063 = vrot.lane.b32.xlu0 %v2032, 112
      %v2064 = vpop.permute.xlu0 %2063
      %2065 = vrot.lane.b32.xlu0 %v2034, 112
      %v2066 = vpop.permute.xlu0 %2065
      %2067 = vrot.lane.b32.xlu0 %v2036, 112
      %v2068 = vpop.permute.xlu0 %2067
      %2085 = vrot.lane.b32.xlu0 %v1620, 32
      %v2086 = vpop.permute.xlu0 %2085
      %2087 = vrot.lane.b32.xlu0 %v1621, 32
      %v2088 = vpop.permute.xlu0 %2087
      %2089 = vrot.lane.b32.xlu0 %v1622, 32
      %v2090 = vpop.permute.xlu0 %2089
      %2091 = vrot.lane.b32.xlu0 %v1623, 32
      %v2092 = vpop.permute.xlu0 %2091
      %2093 = vrot.lane.b32.xlu0 %v1624, 32
      %v2094 = vpop.permute.xlu0 %2093
      %2095 = vrot.lane.b32.xlu0 %v1625, 32
      %v2096 = vpop.permute.xlu0 %2095
      %2097 = vrot.lane.b32.xlu0 %v1626, 32
      %v2098 = vpop.permute.xlu0 %2097
      %2099 = vrot.lane.b32.xlu0 %v1627, 32
      %v2100 = vpop.permute.xlu0 %2099
      %2101 = vrot.lane.b32.xlu0 %v1628, 32
      %v2102 = vpop.permute.xlu0 %2101
      %2103 = vrot.lane.b32.xlu0 %v1629, 32
      %v2104 = vpop.permute.xlu0 %2103
      %2105 = vrot.lane.b32.xlu0 %v1630, 32
      %v2106 = vpop.permute.xlu0 %2105
      %2107 = vrot.lane.b32.xlu0 %v1631, 32
      %v2108 = vpop.permute.xlu0 %2107
      %2109 = vrot.lane.b32.xlu0 %v1632, 32
      %v2110 = vpop.permute.xlu0 %2109
      %2111 = vrot.lane.b32.xlu0 %v1633, 32
      %v2112 = vpop.permute.xlu0 %2111
      %2113 = vrot.lane.b32.xlu0 %v1634, 32
      %v2114 = vpop.permute.xlu0 %2113
      %2115 = vrot.lane.b32.xlu0 %v1635, 32
      %v2116 = vpop.permute.xlu0 %2115
      %v2117 = vshll.u32 %v1618, 16
      %v2119 = vrot.slane %v2117, 1
      %v2120 = vsel %vm1665, %v1950, %v2119
      %v2121 = vshrl.u32 %v1618, 16
      %v2123 = vor.u32 %v2121, %v2119
      %v2124 = vshll.u32 %v1646, 16
      %v2126 = vrot.slane %v2124, 1
      %v2127 = vsel %vm1665, %v2123, %v2126
      %2128 = vrot.lane.b32.xlu0 %v1689, 80
      %v2129 = vpop.permute.xlu0 %2128
      %2130 = vrot.lane.b32.xlu0 %v1696, 80
      %v2131 = vpop.permute.xlu0 %2130
      %2132 = vrot.lane.b32.xlu0 %v1703, 80
      %v2133 = vpop.permute.xlu0 %2132
      %2134 = vrot.lane.b32.xlu0 %v1710, 80
      %v2135 = vpop.permute.xlu0 %2134
      %2136 = vrot.lane.b32.xlu0 %v1717, 80
      %v2137 = vpop.permute.xlu0 %2136
      %2138 = vrot.lane.b32.xlu0 %v1724, 80
      %v2139 = vpop.permute.xlu0 %2138
      %2140 = vrot.lane.b32.xlu0 %v1731, 80
      %v2141 = vpop.permute.xlu0 %2140
      %2142 = vrot.lane.b32.xlu0 %v1738, 80
      %v2143 = vpop.permute.xlu0 %2142
      %2144 = vrot.lane.b32.xlu0 %v1745, 80
      %v2145 = vpop.permute.xlu0 %2144
      %2146 = vrot.lane.b32.xlu0 %v1752, 80
      %v2147 = vpop.permute.xlu0 %2146
      %2148 = vrot.lane.b32.xlu0 %v1759, 80
      %v2149 = vpop.permute.xlu0 %2148
      %2150 = vrot.lane.b32.xlu0 %v1766, 80
      %v2151 = vpop.permute.xlu0 %2150
      %2152 = vrot.lane.b32.xlu0 %v1773, 80
      %v2153 = vpop.permute.xlu0 %2152
      %2154 = vrot.lane.b32.xlu0 %v1947, 80
      %v2155 = vpop.permute.xlu0 %2154
      %2156 = vrot.lane.b32.xlu0 %v2120, 80
      %v2157 = vpop.permute.xlu0 %2156
      %2158 = vrot.lane.b32.xlu0 %v2127, 80
      %v2159 = vpop.permute.xlu0 %2158
      %v2177 = vrot.slane %v1648, 1
      %v2178 = vrot.slane %v1649, 1
      %v2179 = vsel %vm1830, %v2177, %v2178
      %v2180 = vrot.slane %v1650, 1
      %v2181 = vsel %vm1830, %v2178, %v2180
      %v2182 = vrot.slane %v1651, 1
      %v2183 = vsel %vm1830, %v2180, %v2182
      %v2184 = vrot.slane %v1652, 1
      %v2185 = vsel %vm1830, %v2182, %v2184
      %v2186 = vrot.slane %v1653, 1
      %v2187 = vsel %vm1830, %v2184, %v2186
      %v2188 = vrot.slane %v1654, 1
      %v2189 = vsel %vm1830, %v2186, %v2188
      %v2190 = vrot.slane %v1655, 1
      %v2191 = vsel %vm1830, %v2188, %v2190
      %v2192 = vrot.slane %v1656, 1
      %v2193 = vsel %vm1830, %v2190, %v2192
      %v2194 = vrot.slane %v1657, 1
      %v2195 = vsel %vm1830, %v2192, %v2194
      %v2196 = vrot.slane %v1658, 1
      %v2197 = vsel %vm1830, %v2194, %v2196
      %v2198 = vrot.slane %v1659, 1
      %v2199 = vsel %vm1830, %v2196, %v2198
      %v2200 = vrot.slane %v1660, 1
      %v2201 = vsel %vm1830, %v2198, %v2200
      %v2202 = vrot.slane %v1661, 1
      %v2203 = vsel %vm1830, %v2200, %v2202
      %v2204 = vrot.slane %v1662, 1
      %v2205 = vsel %vm1830, %v2202, %v2204
      %v2206 = vrot.slane %v1663, 1
      %v2207 = vsel %vm1830, %v2204, %v2206
      %v2208 = vrot.slane %v1664, 1
      %v2209 = vsel %vm1830, %v2206, %v2208
      %vm2210 = vcmask 392192
      %v2213 = vsel %vm2210, %v1249, %v1782
      %v2216 = vsel %vm2210, %v1250, %v1784
      %v2219 = vsel %vm2210, %v1251, %v1786
      %v2222 = vsel %vm2210, %v1252, %v1788
      %v2225 = vsel %vm2210, %v1253, %v1790
      %v2228 = vsel %vm2210, %v1254, %v1792
      %v2231 = vsel %vm2210, %v1255, %v1794
      %v2234 = vsel %vm2210, %v1256, %v1796
      %v2237 = vsel %vm2210, %v1257, %v1798
      %v2240 = vsel %vm2210, %v1258, %v1800
      %v2243 = vsel %vm2210, %v1259, %v1802
      %v2246 = vsel %vm2210, %v1260, %v1804
      %v2249 = vsel %vm2210, %v1261, %v1806
      %v2252 = vsel %vm2210, %v1262, %v1808
      %v2255 = vsel %vm2210, %v1263, %v1810
      %v2258 = vsel %vm2210, %v1264, %v1812
      %vm2259 = vcmask 785408
      %v2261 = vsel %vm2259, %v2213, %v1865
      %v2264 = vsel %vm2259, %v2216, %v1867
      %v2267 = vsel %vm2259, %v2219, %v1869
      %v2270 = vsel %vm2259, %v2222, %v1871
      %v2273 = vsel %vm2259, %v2225, %v1873
      %v2276 = vsel %vm2259, %v2228, %v1875
      %v2279 = vsel %vm2259, %v2231, %v1877
      %v2282 = vsel %vm2259, %v2234, %v1879
      %v2285 = vsel %vm2259, %v2237, %v1881
      %v2288 = vsel %vm2259, %v2240, %v1883
      %v2291 = vsel %vm2259, %v2243, %v1885
      %v2294 = vsel %vm2259, %v2246, %v1887
      %v2297 = vsel %vm2259, %v2249, %v1889
      %v2300 = vsel %vm2259, %v2252, %v1891
      %v2303 = vsel %vm2259, %v2255, %v1893
      %v2306 = vsel %vm2259, %v2258, %v1895
      %vm2308 = vcmask 130048
      %v2310 = vsel %vm2308, %v1865, %v1913
      %v2312 = vsel %vm2308, %v1867, %v1915
      %v2314 = vsel %vm2308, %v1869, %v1917
      %v2316 = vsel %vm2308, %v1871, %v1919
      %v2318 = vsel %vm2308, %v1873, %v1921
      %v2320 = vsel %vm2308, %v1875, %v1923
      %v2322 = vsel %vm2308, %v1877, %v1925
      %v2324 = vsel %vm2308, %v1879, %v1927
      %v2326 = vsel %vm2308, %v1881, %v1929
      %v2328 = vsel %vm2308, %v1883, %v1931
      %v2330 = vsel %vm2308, %v1885, %v1933
      %v2332 = vsel %vm2308, %v1887, %v1935
      %v2334 = vsel %vm2308, %v1889, %v1937
      %v2336 = vsel %vm2308, %v1891, %v1939
      %v2338 = vsel %vm2308, %v1893, %v1941
      %v2340 = vsel %vm2308, %v1895, %v1943
      %vm2341 = vcmask 523264
      %v2343 = vsel %vm2341, %v2310, %v1956
      %v2345 = vsel %vm2341, %v2312, %v1958
      %v2347 = vsel %vm2341, %v2314, %v1960
      %v2349 = vsel %vm2341, %v2316, %v1962
      %v2351 = vsel %vm2341, %v2318, %v1964
      %v2353 = vsel %vm2341, %v2320, %v1966
      %v2355 = vsel %vm2341, %v2322, %v1968
      %v2357 = vsel %vm2341, %v2324, %v1970
      %v2359 = vsel %vm2341, %v2326, %v1972
      %v2361 = vsel %vm2341, %v2328, %v1974
      %v2363 = vsel %vm2341, %v2330, %v1976
      %v2365 = vsel %vm2341, %v2332, %v1978
      %v2367 = vsel %vm2341, %v2334, %v1980
      %v2369 = vsel %vm2341, %v2336, %v1982
      %v2371 = vsel %vm2341, %v2338, %v1984
      %v2373 = vsel %vm2341, %v2340, %v1986
      %vm2374 = vcmask 916480
      %v2376 = vsel %vm2374, %v2343, %v2038
      %v2379 = vsel %vm2374, %v2345, %v2040
      %v2382 = vsel %vm2374, %v2347, %v2042
      %v2385 = vsel %vm2374, %v2349, %v2044
      %v2388 = vsel %vm2374, %v2351, %v2046
      %v2391 = vsel %vm2374, %v2353, %v2048
      %v2394 = vsel %vm2374, %v2355, %v2050
      %v2397 = vsel %vm2374, %v2357, %v2052
      %v2400 = vsel %vm2374, %v2359, %v2054
      %v2403 = vsel %vm2374, %v2361, %v2056
      %v2406 = vsel %vm2374, %v2363, %v2058
      %v2409 = vsel %vm2374, %v2365, %v2060
      %v2412 = vsel %vm2374, %v2367, %v2062
      %v2415 = vsel %vm2374, %v2369, %v2064
      %v2418 = vsel %vm2374, %v2371, %v2066
      %v2421 = vsel %vm2374, %v2373, %v2068
      %v2424 = vsel %vm960, %v2038, %v2086
      %v2426 = vsel %vm960, %v2040, %v2088
      %v2428 = vsel %vm960, %v2042, %v2090
      %v2430 = vsel %vm960, %v2044, %v2092
      %v2432 = vsel %vm960, %v2046, %v2094
      %v2434 = vsel %vm960, %v2048, %v2096
      %v2436 = vsel %vm960, %v2050, %v2098
      %v2438 = vsel %vm960, %v2052, %v2100
      %v2440 = vsel %vm960, %v2054, %v2102
      %v2442 = vsel %vm960, %v2056, %v2104
      %v2444 = vsel %vm960, %v2058, %v2106
      %v2446 = vsel %vm960, %v2060, %v2108
      %v2448 = vsel %vm960, %v2062, %v2110
      %v2450 = vsel %vm960, %v2064, %v2112
      %v2452 = vsel %vm960, %v2066, %v2114
      %v2454 = vsel %vm960, %v2068, %v2116
      %vm2455 = vcmask 654336
      %v2457 = vsel %vm2455, %v2424, %v2129
      %v2460 = vsel %vm2455, %v2426, %v2131
      %v2463 = vsel %vm2455, %v2428, %v2133
      %v2466 = vsel %vm2455, %v2430, %v2135
      %v2469 = vsel %vm2455, %v2432, %v2137
      %v2472 = vsel %vm2455, %v2434, %v2139
      %v2475 = vsel %vm2455, %v2436, %v2141
      %v2478 = vsel %vm2455, %v2438, %v2143
      %v2481 = vsel %vm2455, %v2440, %v2145
      %v2484 = vsel %vm2455, %v2442, %v2147
      %v2487 = vsel %vm2455, %v2444, %v2149
      %v2490 = vsel %vm2455, %v2446, %v2151
      %v2493 = vsel %vm2455, %v2448, %v2153
      %v2496 = vsel %vm2455, %v2450, %v2155
      %v2499 = vsel %vm2455, %v2452, %v2157
      %v2502 = vsel %vm2455, %v2454, %v2159
      %v2504 = vld [vmem:[%s2] sm:$0xf]
      %v2505 = vld [vmem:[%s2 + $0x4] sm:$0xf]
      %v2506 = vld [vmem:[%s2 + $0x8] sm:$0xf]
      %v2507 = vld [vmem:[%s2 + $0xc] sm:$0xf]
      %v2508 = vld [vmem:[%s2 + $0x10] sm:$0xf]
      %v2509 = vld [vmem:[%s2 + $0x14] sm:$0xf]
      %v2510 = vld [vmem:[%s2 + $0x18] sm:$0xf]
      %v2511 = vld [vmem:[%s2 + $0x1c] sm:$0xf]
      %v2512 = vld [vmem:[%s2 + $0x20] sm:$0xf]
      %v2513 = vld [vmem:[%s2 + $0x24] sm:$0xf]
      %v2514 = vld [vmem:[%s2 + $0x28] sm:$0xf]
      %v2515 = vld [vmem:[%s2 + $0x2c] sm:$0xf]
      %v2516 = vld [vmem:[%s2 + $0x30] sm:$0xf]
      %v2517 = vld [vmem:[%s2 + $0x34] sm:$0xf]
      %v2518 = vld [vmem:[%s2 + $0x38] sm:$0xf]
      %v2519 = vld [vmem:[%s2 + $0x3c] sm:$0xf]
      %v2520 = vld [vmem:[%s2 + $0x40] sm:$0xf]
      %v2521 = vld [vmem:[%s2 + $0x44] sm:$0xf]
      %v2522 = vld [vmem:[%s2 + $0x48] sm:$0xf]
      %v2523 = vld [vmem:[%s2 + $0x4c] sm:$0xf]
      %v2524 = vld [vmem:[%s2 + $0x50] sm:$0xf]
      %v2525 = vld [vmem:[%s2 + $0x54] sm:$0xf]
      %v2526 = vld [vmem:[%s2 + $0x58] sm:$0xf]
      %v2527 = vld [vmem:[%s2 + $0x5c] sm:$0xf]
      %v2528 = vld [vmem:[%s2 + $0x60] sm:$0xf]
      %v2529 = vld [vmem:[%s2 + $0x64] sm:$0xf]
      %v2530 = vld [vmem:[%s2 + $0x68] sm:$0xf]
      %v2531 = vld [vmem:[%s2 + $0x6c] sm:$0xf]
      %v2532 = vld [vmem:[%s2 + $0x70] sm:$0xf]
      %v2533 = vld [vmem:[%s2 + $0x74] sm:$0xf]
      %v2534 = vld [vmem:[%s2 + $0x78] sm:$0xf]
      %v2535 = vld [vmem:[%s2 + $0x7c] sm:$0xf]
      %v2536 = vld [vmem:[%s2 + $0x80] sm:$0xf]
      %v2537 = vld [vmem:[%s2 + $0x84] sm:$0xf]
      %v2538 = vld [vmem:[%s2 + $0x88] sm:$0xf]
      %v2539 = vld [vmem:[%s2 + $0x8c] sm:$0xf]
      %v2540 = vld [vmem:[%s2 + $0x90] sm:$0xf]
      %v2541 = vld [vmem:[%s2 + $0x94] sm:$0xf]
      %v2542 = vld [vmem:[%s2 + $0x98] sm:$0xf]
      %v2543 = vld [vmem:[%s2 + $0x9c] sm:$0xf]
      %v2544 = vld [vmem:[%s2 + $0xa0] sm:$0xf]
      %v2545 = vld [vmem:[%s2 + $0xa4] sm:$0xf]
      %v2546 = vld [vmem:[%s2 + $0xa8] sm:$0xf]
      %v2547 = vld [vmem:[%s2 + $0xac] sm:$0xf]
      %v2548 = vld [vmem:[%s2 + $0xb0] sm:$0xf]
      %v2549 = vld [vmem:[%s2 + $0xb4] sm:$0xf]
      %v2550 = vld [vmem:[%s2 + $0xb8] sm:$0xf]
      %v2551 = vld [vmem:[%s2 + $0xbc] sm:$0xf]
      %v2552 = vld [vmem:[%s2 + $0xc0] sm:$0xf]
      %v2553 = vld [vmem:[%s2 + $0xc4] sm:$0xf]
      %v2554 = vld [vmem:[%s2 + $0xc8] sm:$0xf]
      %v2555 = vld [vmem:[%s2 + $0xcc] sm:$0xf]
      %v2556 = vld [vmem:[%s2 + $0xd0] sm:$0xf]
      %v2557 = vld [vmem:[%s2 + $0xd4] sm:$0xf]
      %v2558 = vld [vmem:[%s3] sm:$0x1]
      %v2560 = vlaneseq
      %v2561 = vshrl.u32 %v2560, 7
      %v2562 = vsub.s32 0, %v2561
      %v2563 = vrot.slane %v2558, %v2562
      %v2619 = vunpack.c.l.b16 %v2504
      %v2620 = vunpack.c.l.b16 %v2505
      %v2621 = vunpack.c.l.b16 %v2506
      %v2622 = vunpack.c.l.b16 %v2507
      %v2623 = vunpack.c.l.b16 %v2508
      %v2624 = vunpack.c.l.b16 %v2509
      %v2625 = vunpack.c.l.b16 %v2510
      %v2626 = vunpack.c.l.b16 %v2511
      %v2627 = vunpack.c.l.b16 %v2512
      %v2628 = vunpack.c.l.b16 %v2513
      %v2629 = vunpack.c.l.b16 %v2514
      %v2630 = vunpack.c.l.b16 %v2515
      %v2631 = vunpack.c.l.b16 %v2516
      %v2632 = vunpack.c.l.b16 %v2517
      %v2633 = vunpack.c.l.b16 %v2518
      %v2634 = vunpack.c.l.b16 %v2519
      %v2635 = vunpack.c.l.b16 %v2520
      %v2636 = vunpack.c.l.b16 %v2521
      %v2637 = vunpack.c.l.b16 %v2522
      %v2638 = vunpack.c.l.b16 %v2523
      %v2639 = vunpack.c.l.b16 %v2524
      %v2640 = vunpack.c.l.b16 %v2525
      %v2641 = vunpack.c.l.b16 %v2526
      %v2642 = vunpack.c.l.b16 %v2527
      %v2643 = vunpack.c.l.b16 %v2528
      %v2644 = vunpack.c.l.b16 %v2529
      %v2645 = vunpack.c.l.b16 %v2530
      %v2646 = vunpack.c.l.b16 %v2531
      %v2647 = vunpack.c.l.b16 %v2532
      %v2648 = vunpack.c.l.b16 %v2533
      %v2649 = vunpack.c.l.b16 %v2534
      %v2650 = vunpack.c.l.b16 %v2535
      %v2651 = vunpack.c.l.b16 %v2536
      %v2652 = vunpack.c.l.b16 %v2537
      %v2653 = vunpack.c.l.b16 %v2538
      %v2654 = vunpack.c.l.b16 %v2539
      %v2655 = vunpack.c.l.b16 %v2540
      %v2656 = vunpack.c.l.b16 %v2541
      %v2657 = vunpack.c.l.b16 %v2542
      %v2658 = vunpack.c.l.b16 %v2543
      %v2659 = vunpack.c.l.b16 %v2544
      %v2660 = vunpack.c.l.b16 %v2545
      %v2661 = vunpack.c.l.b16 %v2546
      %v2662 = vunpack.c.l.b16 %v2547
      %v2663 = vunpack.c.l.b16 %v2548
      %v2664 = vunpack.c.l.b16 %v2549
      %v2665 = vunpack.c.l.b16 %v2550
      %v2666 = vunpack.c.l.b16 %v2551
      %v2667 = vunpack.c.l.b16 %v2552
      %v2668 = vunpack.c.l.b16 %v2553
      %v2669 = vunpack.c.l.b16 %v2554
      %v2670 = vunpack.c.l.b16 %v2555
      %v2671 = vunpack.c.l.b16 %v2556
      %v2672 = vunpack.c.l.b16 %v2557
      %v2673 = vpack.c.b16 %v2620, %v2619
      %v2674 = vpack.c.b16 %v2622, %v2621
      %v2675 = vpack.c.b16 %v2624, %v2623
      %v2676 = vpack.c.b16 %v2626, %v2625
      %v2677 = vpack.c.b16 %v2628, %v2627
      %v2678 = vpack.c.b16 %v2630, %v2629
      %v2679 = vpack.c.b16 %v2632, %v2631
      %v2680 = vpack.c.b16 %v2634, %v2633
      %v2681 = vpack.c.b16 %v2636, %v2635
      %v2682 = vpack.c.b16 %v2638, %v2637
      %v2683 = vpack.c.b16 %v2640, %v2639
      %v2684 = vpack.c.b16 %v2642, %v2641
      %v2685 = vpack.c.b16 %v2644, %v2643
      %v2686 = vpack.c.b16 %v2646, %v2645
      %v2687 = vpack.c.b16 %v2648, %v2647
      %v2688 = vpack.c.b16 %v2650, %v2649
      %v2689 = vpack.c.b16 %v2652, %v2651
      %v2690 = vpack.c.b16 %v2654, %v2653
      %v2691 = vpack.c.b16 %v2656, %v2655
      %v2692 = vpack.c.b16 %v2658, %v2657
      %v2693 = vpack.c.b16 %v2660, %v2659
      %v2694 = vpack.c.b16 %v2662, %v2661
      %v2695 = vpack.c.b16 %v2664, %v2663
      %v2696 = vpack.c.b16 %v2666, %v2665
      %v2697 = vpack.c.b16 %v2668, %v2667
      %v2698 = vpack.c.b16 %v2670, %v2669
      %v2699 = vpack.c.b16 %v2672, %v2671
      %v2728 = vsel %vm2210, %v2179, 0
      %v2731 = vsel %vm2210, %v2181, 0
      %v2734 = vsel %vm2210, %v2183, 0
      %v2737 = vsel %vm2210, %v2185, 0
      %v2740 = vsel %vm2210, %v2187, 0
      %v2743 = vsel %vm2210, %v2189, 0
      %v2746 = vsel %vm2210, %v2191, 0
      %v2749 = vsel %vm2210, %v2193, 0
      %v2752 = vsel %vm2210, %v2195, 0
      %v2755 = vsel %vm2210, %v2197, 0
      %v2758 = vsel %vm2210, %v2199, 0
      %v2761 = vsel %vm2210, %v2201, 0
      %v2764 = vsel %vm2210, %v2203, 0
      %v2767 = vsel %vm2210, %v2205, 0
      %v2770 = vsel %vm2210, %v2207, 0
      %v2773 = vsel %vm2210, %v2209, 0
      %2775 = vmatprep.subr.bf16.mxu0 0
      %2776 = vmatpush1.bf16.msra.mxu0 %v2673
      %2777 = vmatprep.subr.bf16.mxu0 0
      %2778 = vmatpush1.bf16.msra.mxu0 %v2674
      %2779 = vmatprep.subr.bf16.mxu0 0
      %2780 = vmatpush1.bf16.msra.mxu0 %v2675
      %2781 = vmatprep.subr.bf16.mxu0 0
      %2782 = vmatpush1.bf16.msra.mxu0 %v2676
      %2783 = vmatprep.subr.bf16.mxu0 0
      %2784 = vmatpush1.bf16.msra.mxu0 %v2677
      %2785 = vmatprep.subr.bf16.mxu0 0
      %2786 = vmatpush1.bf16.msra.mxu0 %v2678
      %2787 = vmatprep.subr.bf16.mxu0 0
      %2788 = vmatpush1.bf16.msra.mxu0 %v2679
      %2789 = vmatprep.subr.bf16.mxu0 0
      %2790 = vmatpush1.bf16.msra.mxu0 %v2680
      %2791 = vmatprep.subr.bf16.mxu0 0
      %2792 = vmatpush1.bf16.msra.mxu0 %v2681
      %2793 = vmatprep.subr.bf16.mxu0 0
      %2794 = vmatpush1.bf16.msra.mxu0 %v2682
      %2795 = vmatprep.subr.bf16.mxu0 0
      %2796 = vmatpush1.bf16.msra.mxu0 %v2683
      %2797 = vmatprep.subr.bf16.mxu0 0
      %2798 = vmatpush1.bf16.msra.mxu0 %v2684
      %2799 = vmatprep.subr.bf16.mxu0 0
      %2800 = vmatpush1.bf16.msra.mxu0 %v2685
      %2801 = vmatprep.subr.bf16.mxu0 0
      %2802 = vmatpush1.bf16.msra.mxu0 %v2686
      %2803 = vmatprep.subr.bf16.mxu0 0
      %2804 = vmatpush1.bf16.msra.mxu0 %v2687
      %2805 = vmatprep.subr.bf16.mxu0 0
      %2806 = vmatpush1.bf16.msra.mxu0 %v2688
      %2807 = vmatprep.mubr.bf16.mxu0 %v2376
      %2808 = vmatmul.mubr.bf16.gmra.mrb[0].mxu0 %v2261
      %v2809 = vpop.f32.mrb[0].mxu0
      %v2810 = vadd.f32 %v2563, %v2809
      %v2811 = vpop.f32.mrb[0].mxu0
      %v2812 = vpop.f32.mrb[0].mxu0
      %v2813 = vadd.f32 %v2563, %v2812
      %v2814 = vpop.f32.mrb[0].mxu0
      %2815 = vmatprep.mubr.bf16.mxu0 %v2379
      %2816 = vmatmul.mubr.bf16.gmra.mrb[0].mxu0 %v2264
      %v2817 = vpop.f32.mrb[0].mxu0
      %v2818 = vadd.f32 %v2563, %v2817
      %v2819 = vpop.f32.mrb[0].mxu0
      %v2820 = vpop.f32.mrb[0].mxu0
      %v2821 = vadd.f32 %v2563, %v2820
      %v2822 = vpop.f32.mrb[0].mxu0
      %2823 = vmatprep.mubr.bf16.mxu0 %v2382
      %2824 = vmatmul.mubr.bf16.gmra.mrb[0].mxu0 %v2267
      %v2825 = vpop.f32.mrb[0].mxu0
      %v2826 = vadd.f32 %v2563, %v2825
      %v2827 = vpop.f32.mrb[0].mxu0
      %v2828 = vpop.f32.mrb[0].mxu0
      %v2829 = vadd.f32 %v2563, %v2828
      %v2830 = vpop.f32.mrb[0].mxu0
      %2831 = vmatprep.mubr.bf16.mxu0 %v2385
      %2832 = vmatmul.mubr.bf16.gmra.mrb[0].mxu0 %v2270
      %v2833 = vpop.f32.mrb[0].mxu0
      %v2834 = vadd.f32 %v2563, %v2833
      %v2835 = vpop.f32.mrb[0].mxu0
      %v2836 = vpop.f32.mrb[0].mxu0
      %v2837 = vadd.f32 %v2563, %v2836
      %v2838 = vpop.f32.mrb[0].mxu0
      %2839 = vmatprep.mubr.bf16.mxu0 %v2388
      %2840 = vmatmul.mubr.bf16.gmra.mrb[0].mxu0 %v2273
      %v2841 = vpop.f32.mrb[0].mxu0
      %v2842 = vadd.f32 %v2563, %v2841
      %v2843 = vpop.f32.mrb[0].mxu0
      %v2844 = vpop.f32.mrb[0].mxu0
      %v2845 = vadd.f32 %v2563, %v2844
      %v2846 = vpop.f32.mrb[0].mxu0
      %2847 = vmatprep.mubr.bf16.mxu0 %v2391
      %2848 = vmatmul.mubr.bf16.gmra.mrb[0].mxu0 %v2276
      %v2849 = vpop.f32.mrb[0].mxu0
      %v2850 = vadd.f32 %v2563, %v2849
      %v2851 = vpop.f32.mrb[0].mxu0
      %v2852 = vpop.f32.mrb[0].mxu0
      %v2853 = vadd.f32 %v2563, %v2852
      %v2854 = vpop.f32.mrb[0].mxu0
      %2855 = vmatprep.mubr.bf16.mxu0 %v2394
      %2856 = vmatmul.mubr.bf16.gmra.mrb[0].mxu0 %v2279
      %v2857 = vpop.f32.mrb[0].mxu0
      %v2858 = vadd.f32 %v2563, %v2857
      %v2859 = vpop.f32.mrb[0].mxu0
      %v2860 = vpop.f32.mrb[0].mxu0
      %v2861 = vadd.f32 %v2563, %v2860
      %v2862 = vpop.f32.mrb[0].mxu0
      %2863 = vmatprep.mubr.bf16.mxu0 %v2397
      %2864 = vmatmul.mubr.bf16.gmra.mrb[0].mxu0 %v2282
      %v2865 = vpop.f32.mrb[0].mxu0
      %v2866 = vadd.f32 %v2563, %v2865
      %v2867 = vpop.f32.mrb[0].mxu0
      %v2868 = vpop.f32.mrb[0].mxu0
      %v2869 = vadd.f32 %v2563, %v2868
      %v2870 = vpop.f32.mrb[0].mxu0
      %2871 = vmatprep.mubr.bf16.mxu0 %v2400
      %2872 = vmatmul.mubr.bf16.gmra.mrb[0].mxu0 %v2285
      %v2873 = vpop.f32.mrb[0].mxu0
      %v2874 = vadd.f32 %v2563, %v2873
      %v2875 = vpop.f32.mrb[0].mxu0
      %v2876 = vpop.f32.mrb[0].mxu0
      %v2877 = vadd.f32 %v2563, %v2876
      %v2878 = vpop.f32.mrb[0].mxu0
      %2879 = vmatprep.mubr.bf16.mxu0 %v2403
      %2880 = vmatmul.mubr.bf16.gmra.mrb[0].mxu0 %v2288
      %v2881 = vpop.f32.mrb[0].mxu0
      %v2882 = vadd.f32 %v2563, %v2881
      %v2883 = vpop.f32.mrb[0].mxu0
      %v2884 = vpop.f32.mrb[0].mxu0
      %v2885 = vadd.f32 %v2563, %v2884
      %v2886 = vpop.f32.mrb[0].mxu0
      %2887 = vmatprep.mubr.bf16.mxu0 %v2406
      %2888 = vmatmul.mubr.bf16.gmra.mrb[0].mxu0 %v2291
      %v2889 = vpop.f32.mrb[0].mxu0
      %v2890 = vadd.f32 %v2563, %v2889
      %v2891 = vpop.f32.mrb[0].mxu0
      %v2892 = vpop.f32.mrb[0].mxu0
      %v2893 = vadd.f32 %v2563, %v2892
      %v2894 = vpop.f32.mrb[0].mxu0
      %2895 = vmatprep.mubr.bf16.mxu0 %v2409
      %2896 = vmatmul.mubr.bf16.gmra.mrb[0].mxu0 %v2294
      %v2897 = vpop.f32.mrb[0].mxu0
      %v2898 = vadd.f32 %v2563, %v2897
      %v2899 = vpop.f32.mrb[0].mxu0
      %v2900 = vpop.f32.mrb[0].mxu0
      %v2901 = vadd.f32 %v2563, %v2900
      %v2902 = vpop.f32.mrb[0].mxu0
      %2903 = vmatprep.mubr.bf16.mxu0 %v2412
      %2904 = vmatmul.mubr.bf16.gmra.mrb[0].mxu0 %v2297
      %v2905 = vpop.f32.mrb[0].mxu0
      %v2906 = vadd.f32 %v2563, %v2905
      %v2907 = vpop.f32.mrb[0].mxu0
      %v2908 = vpop.f32.mrb[0].mxu0
      %v2909 = vadd.f32 %v2563, %v2908
      %v2910 = vpop.f32.mrb[0].mxu0
      %2911 = vmatprep.mubr.bf16.mxu0 %v2415
      %2912 = vmatmul.mubr.bf16.gmra.mrb[0].mxu0 %v2300
      %v2913 = vpop.f32.mrb[0].mxu0
      %v2914 = vadd.f32 %v2563, %v2913
      %v2915 = vpop.f32.mrb[0].mxu0
      %v2916 = vpop.f32.mrb[0].mxu0
      %v2917 = vadd.f32 %v2563, %v2916
      %v2918 = vpop.f32.mrb[0].mxu0
      %2919 = vmatprep.mubr.bf16.mxu0 %v2418
      %2920 = vmatmul.mubr.bf16.gmra.mrb[0].mxu0 %v2303
      %v2921 = vpop.f32.mrb[0].mxu0
      %v2922 = vadd.f32 %v2563, %v2921
      %v2923 = vpop.f32.mrb[0].mxu0
      %v2924 = vpop.f32.mrb[0].mxu0
      %v2925 = vadd.f32 %v2563, %v2924
      %v2926 = vpop.f32.mrb[0].mxu0
      %2927 = vmatprep.mubr.bf16.mxu0 %v2421
      %2928 = vmatmul.mubr.bf16.gmra.mrb[0].mxu0 %v2306
      %v2929 = vpop.f32.mrb[0].mxu0
      %v2930 = vadd.f32 %v2563, %v2929
      %v2931 = vpop.f32.mrb[0].mxu0
      %v2932 = vpop.f32.mrb[0].mxu0
      %v2933 = vadd.f32 %v2563, %v2932
      %v2934 = vpop.f32.mrb[0].mxu0
      %2935 = vdwg.mxu0
      %2936 = vmatprep.subr.bf16.mxu0 0
      %2937 = vmatpush1.bf16.msra.mxu0 %v2689
      %2938 = vmatprep.subr.bf16.mxu0 0
      %2939 = vmatpush1.bf16.msra.mxu0 %v2690
      %2940 = vmatprep.subr.bf16.mxu0 0
      %2941 = vmatpush1.bf16.msra.mxu0 %v2691
      %2942 = vmatprep.subr.bf16.mxu0 0
      %2943 = vmatpush1.bf16.msra.mxu0 %v2692
      %2944 = vmatprep.subr.bf16.mxu0 0
      %2945 = vmatpush1.bf16.msra.mxu0 %v2693
      %2946 = vmatprep.subr.bf16.mxu0 0
      %2947 = vmatpush1.bf16.msra.mxu0 %v2694
      %2948 = vmatprep.subr.bf16.mxu0 0
      %2949 = vmatpush1.bf16.msra.mxu0 %v2695
      %2950 = vmatprep.subr.bf16.mxu0 0
      %2951 = vmatpush1.bf16.msra.mxu0 %v2696
      %2952 = vmatprep.subr.bf16.mxu0 0
      %2953 = vmatpush1.bf16.msra.mxu0 %v2697
      %2954 = vmatprep.subr.bf16.mxu0 0
      %2955 = vmatpush1.bf16.msra.mxu0 %v2698
      %2956 = vmatprep.subr.bf16.mxu0 0
      %2957 = vmatpush1.bf16.msra.mxu0 %v2699
      %2958 = vmatprep.subr.bf16.mxu0 0
      %2959 = vmatpush1.bf16.msra.mxu0 0
      %2960 = vmatprep.subr.bf16.mxu0 0
      %2961 = vmatpush1.bf16.msra.mxu0 0
      %2962 = vmatprep.subr.bf16.mxu0 0
      %2963 = vmatpush1.bf16.msra.mxu0 0
      %2964 = vmatprep.subr.bf16.mxu0 0
      %2965 = vmatpush1.bf16.msra.mxu0 0
      %2966 = vmatprep.subr.bf16.mxu0 0
      %2967 = vmatpush1.bf16.msra.mxu0 0
      %2968 = vmatprep.mubr.bf16.mxu0 %v2728
      %2969 = vmatmul.mubr.bf16.gmra.mrb[0].mxu0 %v2457
      %v2970 = vpop.f32.mrb[0].mxu0
      %v2971 = vadd.f32 %v2810, %v2970
      %v2972 = vpop.f32.mrb[0].mxu0
      %v2973 = vpop.f32.mrb[0].mxu0
      %v2974 = vadd.f32 %v2813, %v2973
      %v2975 = vpop.f32.mrb[0].mxu0
      %2976 = vmatprep.mubr.bf16.mxu0 %v2731
      %2977 = vmatmul.mubr.bf16.gmra.mrb[0].mxu0 %v2460
      %v2978 = vpop.f32.mrb[0].mxu0
      %v2979 = vadd.f32 %v2818, %v2978
      %v2980 = vpop.f32.mrb[0].mxu0
      %v2981 = vpop.f32.mrb[0].mxu0
      %v2982 = vadd.f32 %v2821, %v2981
      %v2983 = vpop.f32.mrb[0].mxu0
      %2984 = vmatprep.mubr.bf16.mxu0 %v2734
      %2985 = vmatmul.mubr.bf16.gmra.mrb[0].mxu0 %v2463
      %v2986 = vpop.f32.mrb[0].mxu0
      %v2987 = vadd.f32 %v2826, %v2986
      %v2988 = vpop.f32.mrb[0].mxu0
      %v2989 = vpop.f32.mrb[0].mxu0
      %v2990 = vadd.f32 %v2829, %v2989
      %v2991 = vpop.f32.mrb[0].mxu0
      %2992 = vmatprep.mubr.bf16.mxu0 %v2737
      %2993 = vmatmul.mubr.bf16.gmra.mrb[0].mxu0 %v2466
      %v2994 = vpop.f32.mrb[0].mxu0
      %v2995 = vadd.f32 %v2834, %v2994
      %v2996 = vpop.f32.mrb[0].mxu0
      %v2997 = vpop.f32.mrb[0].mxu0
      %v2998 = vadd.f32 %v2837, %v2997
      %v2999 = vpop.f32.mrb[0].mxu0
      %3000 = vmatprep.mubr.bf16.mxu0 %v2740
      %3001 = vmatmul.mubr.bf16.gmra.mrb[0].mxu0 %v2469
      %v3002 = vpop.f32.mrb[0].mxu0
      %v3003 = vadd.f32 %v2842, %v3002
      %v3004 = vpop.f32.mrb[0].mxu0
      %v3005 = vpop.f32.mrb[0].mxu0
      %v3006 = vadd.f32 %v2845, %v3005
      %v3007 = vpop.f32.mrb[0].mxu0
      %3008 = vmatprep.mubr.bf16.mxu0 %v2743
      %3009 = vmatmul.mubr.bf16.gmra.mrb[0].mxu0 %v2472
      %v3010 = vpop.f32.mrb[0].mxu0
      %v3011 = vadd.f32 %v2850, %v3010
      %v3012 = vpop.f32.mrb[0].mxu0
      %v3013 = vpop.f32.mrb[0].mxu0
      %v3014 = vadd.f32 %v2853, %v3013
      %v3015 = vpop.f32.mrb[0].mxu0
      %3016 = vmatprep.mubr.bf16.mxu0 %v2746
      %3017 = vmatmul.mubr.bf16.gmra.mrb[0].mxu0 %v2475
      %v3018 = vpop.f32.mrb[0].mxu0
      %v3019 = vadd.f32 %v2858, %v3018
      %v3020 = vpop.f32.mrb[0].mxu0
      %v3021 = vpop.f32.mrb[0].mxu0
      %v3022 = vadd.f32 %v2861, %v3021
      %v3023 = vpop.f32.mrb[0].mxu0
      %3024 = vmatprep.mubr.bf16.mxu0 %v2749
      %3025 = vmatmul.mubr.bf16.gmra.mrb[0].mxu0 %v2478
      %v3026 = vpop.f32.mrb[0].mxu0
      %v3027 = vadd.f32 %v2866, %v3026
      %v3028 = vpop.f32.mrb[0].mxu0
      %v3029 = vpop.f32.mrb[0].mxu0
      %v3030 = vadd.f32 %v2869, %v3029
      %v3031 = vpop.f32.mrb[0].mxu0
      %3032 = vmatprep.mubr.bf16.mxu0 %v2752
      %3033 = vmatmul.mubr.bf16.gmra.mrb[0].mxu0 %v2481
      %v3034 = vpop.f32.mrb[0].mxu0
      %v3035 = vadd.f32 %v2874, %v3034
      %v3036 = vpop.f32.mrb[0].mxu0
      %v3037 = vpop.f32.mrb[0].mxu0
      %v3038 = vadd.f32 %v2877, %v3037
      %v3039 = vpop.f32.mrb[0].mxu0
      %3040 = vmatprep.mubr.bf16.mxu0 %v2755
      %3041 = vmatmul.mubr.bf16.gmra.mrb[0].mxu0 %v2484
      %v3042 = vpop.f32.mrb[0].mxu0
      %v3043 = vadd.f32 %v2882, %v3042
      %v3044 = vpop.f32.mrb[0].mxu0
      %v3045 = vpop.f32.mrb[0].mxu0
      %v3046 = vadd.f32 %v2885, %v3045
      %v3047 = vpop.f32.mrb[0].mxu0
      %3048 = vmatprep.mubr.bf16.mxu0 %v2758
      %3049 = vmatmul.mubr.bf16.gmra.mrb[0].mxu0 %v2487
      %v3050 = vpop.f32.mrb[0].mxu0
      %v3051 = vadd.f32 %v2890, %v3050
      %v3052 = vpop.f32.mrb[0].mxu0
      %v3053 = vpop.f32.mrb[0].mxu0
      %v3054 = vadd.f32 %v2893, %v3053
      %v3055 = vpop.f32.mrb[0].mxu0
      %3056 = vmatprep.mubr.bf16.mxu0 %v2761
      %3057 = vmatmul.mubr.bf16.gmra.mrb[0].mxu0 %v2490
      %v3058 = vpop.f32.mrb[0].mxu0
      %v3059 = vadd.f32 %v2898, %v3058
      %v3060 = vpop.f32.mrb[0].mxu0
      %v3061 = vpop.f32.mrb[0].mxu0
      %v3062 = vadd.f32 %v2901, %v3061
      %v3063 = vpop.f32.mrb[0].mxu0
      %3064 = vmatprep.mubr.bf16.mxu0 %v2764
      %3065 = vmatmul.mubr.bf16.gmra.mrb[0].mxu0 %v2493
      %v3066 = vpop.f32.mrb[0].mxu0
      %v3067 = vadd.f32 %v2906, %v3066
      %v3068 = vpop.f32.mrb[0].mxu0
      %v3069 = vpop.f32.mrb[0].mxu0
      %v3070 = vadd.f32 %v2909, %v3069
      %v3071 = vpop.f32.mrb[0].mxu0
      %3072 = vmatprep.mubr.bf16.mxu0 %v2767
      %3073 = vmatmul.mubr.bf16.gmra.mrb[0].mxu0 %v2496
      %v3074 = vpop.f32.mrb[0].mxu0
      %v3075 = vadd.f32 %v2914, %v3074
      %v3076 = vpop.f32.mrb[0].mxu0
      %v3077 = vpop.f32.mrb[0].mxu0
      %v3078 = vadd.f32 %v2917, %v3077
      %v3079 = vpop.f32.mrb[0].mxu0
      %3080 = vmatprep.mubr.bf16.mxu0 %v2770
      %3081 = vmatmul.mubr.bf16.gmra.mrb[0].mxu0 %v2499
      %v3082 = vpop.f32.mrb[0].mxu0
      %v3083 = vadd.f32 %v2922, %v3082
      %v3084 = vpop.f32.mrb[0].mxu0
      %v3085 = vpop.f32.mrb[0].mxu0
      %v3086 = vadd.f32 %v2925, %v3085
      %v3087 = vpop.f32.mrb[0].mxu0
      %3088 = vmatprep.mubr.bf16.mxu0 %v2773
      %3089 = vmatmul.mubr.bf16.gmra.mrb[0].mxu0 %v2502
      %v3090 = vpop.f32.mrb[0].mxu0
      %v3091 = vadd.f32 %v2930, %v3090
      %v3092 = vpop.f32.mrb[0].mxu0
      %v3093 = vpop.f32.mrb[0].mxu0
      %v3094 = vadd.f32 %v2933, %v3093
      %v3095 = vpop.f32.mrb[0].mxu0
      %3096 = vdwg.mxu0
      %v3097 = vmax.f32 %v2971, 0.0
      %v3098 = vmax.f32 %v2974, 0.0
      %v3099 = vmax.f32 %v2979, 0.0
      %v3100 = vmax.f32 %v2982, 0.0
      %v3101 = vmax.f32 %v2987, 0.0
      %v3102 = vmax.f32 %v2990, 0.0
      %v3103 = vmax.f32 %v2995, 0.0
      %v3104 = vmax.f32 %v2998, 0.0
      %v3105 = vmax.f32 %v3003, 0.0
      %v3106 = vmax.f32 %v3006, 0.0
      %v3107 = vmax.f32 %v3011, 0.0
      %v3108 = vmax.f32 %v3014, 0.0
      %v3109 = vmax.f32 %v3019, 0.0
      %v3110 = vmax.f32 %v3022, 0.0
      %v3111 = vmax.f32 %v3027, 0.0
      %v3112 = vmax.f32 %v3030, 0.0
      %v3113 = vmax.f32 %v3035, 0.0
      %v3114 = vmax.f32 %v3038, 0.0
      %v3115 = vmax.f32 %v3043, 0.0
      %v3116 = vmax.f32 %v3046, 0.0
      %v3117 = vmax.f32 %v3051, 0.0
      %v3118 = vmax.f32 %v3054, 0.0
      %v3119 = vmax.f32 %v3059, 0.0
      %v3120 = vmax.f32 %v3062, 0.0
      %v3121 = vmax.f32 %v3067, 0.0
      %v3122 = vmax.f32 %v3070, 0.0
      %v3123 = vmax.f32 %v3075, 0.0
      %v3124 = vmax.f32 %v3078, 0.0
      %v3125 = vmax.f32 %v3083, 0.0
      %v3126 = vmax.f32 %v3086, 0.0
      %v3127 = vmax.f32 %v3091, 0.0
      %v3128 = vmax.f32 %v3094, 0.0
      %v3129 = vld [vmem:[%s4] sm:$0x1]
      %v3131 = vlaneseq
      %v3132 = vshrl.u32 %v3131, 7
      %v3133 = vsub.s32 0, %v3132
      %v3134 = vrot.slane %v3129, %v3133
      %v3136 = vmul.f32 %v3097, %v3134
      %v3137 = vmul.f32 %v3098, %v3134
      %v3138 = vmul.f32 %v3099, %v3134
      %v3139 = vmul.f32 %v3100, %v3134
      %v3140 = vmul.f32 %v3101, %v3134
      %v3141 = vmul.f32 %v3102, %v3134
      %v3142 = vmul.f32 %v3103, %v3134
      %v3143 = vmul.f32 %v3104, %v3134
      %v3144 = vmul.f32 %v3105, %v3134
      %v3145 = vmul.f32 %v3106, %v3134
      %v3146 = vmul.f32 %v3107, %v3134
      %v3147 = vmul.f32 %v3108, %v3134
      %v3148 = vmul.f32 %v3109, %v3134
      %v3149 = vmul.f32 %v3110, %v3134
      %v3150 = vmul.f32 %v3111, %v3134
      %v3151 = vmul.f32 %v3112, %v3134
      %v3152 = vmul.f32 %v3113, %v3134
      %v3153 = vmul.f32 %v3114, %v3134
      %v3154 = vmul.f32 %v3115, %v3134
      %v3155 = vmul.f32 %v3116, %v3134
      %v3156 = vmul.f32 %v3117, %v3134
      %v3157 = vmul.f32 %v3118, %v3134
      %v3158 = vmul.f32 %v3119, %v3134
      %v3159 = vmul.f32 %v3120, %v3134
      %v3160 = vmul.f32 %v3121, %v3134
      %v3161 = vmul.f32 %v3122, %v3134
      %v3162 = vmul.f32 %v3123, %v3134
      %v3163 = vmul.f32 %v3124, %v3134
      %v3164 = vmul.f32 %v3125, %v3134
      %v3165 = vmul.f32 %v3126, %v3134
      %v3166 = vmul.f32 %v3127, %v3134
      %v3167 = vmul.f32 %v3128, %v3134
      %v3168 = vsel %vm2308, %v3136, 0.0
      %3169 = vadd.xlane.f32.xlu0 %v3168
      %v3170 = vpop.xlane.xlu0 %3169
      %v3171 = vsel %vm2308, %v3137, 0.0
      %3172 = vadd.xlane.f32.xlu0 %v3171
      %v3173 = vpop.xlane.xlu0 %3172
      %v3174 = vsel %vm2308, %v3138, 0.0
      %3175 = vadd.xlane.f32.xlu0 %v3174
      %v3176 = vpop.xlane.xlu0 %3175
      %v3177 = vsel %vm2308, %v3139, 0.0
      %3178 = vadd.xlane.f32.xlu0 %v3177
      %v3179 = vpop.xlane.xlu0 %3178
      %v3180 = vsel %vm2308, %v3140, 0.0
      %3181 = vadd.xlane.f32.xlu0 %v3180
      %v3182 = vpop.xlane.xlu0 %3181
      %v3183 = vsel %vm2308, %v3141, 0.0
      %3184 = vadd.xlane.f32.xlu0 %v3183
      %v3185 = vpop.xlane.xlu0 %3184
      %v3186 = vsel %vm2308, %v3142, 0.0
      %3187 = vadd.xlane.f32.xlu0 %v3186
      %v3188 = vpop.xlane.xlu0 %3187
      %v3189 = vsel %vm2308, %v3143, 0.0
      %3190 = vadd.xlane.f32.xlu0 %v3189
      %v3191 = vpop.xlane.xlu0 %3190
      %v3192 = vsel %vm2308, %v3144, 0.0
      %3193 = vadd.xlane.f32.xlu0 %v3192
      %v3194 = vpop.xlane.xlu0 %3193
      %v3195 = vsel %vm2308, %v3145, 0.0
      %3196 = vadd.xlane.f32.xlu0 %v3195
      %v3197 = vpop.xlane.xlu0 %3196
      %v3198 = vsel %vm2308, %v3146, 0.0
      %3199 = vadd.xlane.f32.xlu0 %v3198
      %v3200 = vpop.xlane.xlu0 %3199
      %v3201 = vsel %vm2308, %v3147, 0.0
      %3202 = vadd.xlane.f32.xlu0 %v3201
      %v3203 = vpop.xlane.xlu0 %3202
      %v3204 = vsel %vm2308, %v3148, 0.0
      %3205 = vadd.xlane.f32.xlu0 %v3204
      %v3206 = vpop.xlane.xlu0 %3205
      %v3207 = vsel %vm2308, %v3149, 0.0
      %3208 = vadd.xlane.f32.xlu0 %v3207
      %v3209 = vpop.xlane.xlu0 %3208
      %v3210 = vsel %vm2308, %v3150, 0.0
      %3211 = vadd.xlane.f32.xlu0 %v3210
      %v3212 = vpop.xlane.xlu0 %3211
      %v3213 = vsel %vm2308, %v3151, 0.0
      %3214 = vadd.xlane.f32.xlu0 %v3213
      %v3215 = vpop.xlane.xlu0 %3214
      %v3216 = vsel %vm2308, %v3152, 0.0
      %3217 = vadd.xlane.f32.xlu0 %v3216
      %v3218 = vpop.xlane.xlu0 %3217
      %v3219 = vsel %vm2308, %v3153, 0.0
      %3220 = vadd.xlane.f32.xlu0 %v3219
      %v3221 = vpop.xlane.xlu0 %3220
      %v3222 = vsel %vm2308, %v3154, 0.0
      %3223 = vadd.xlane.f32.xlu0 %v3222
      %v3224 = vpop.xlane.xlu0 %3223
      %v3225 = vsel %vm2308, %v3155, 0.0
      %3226 = vadd.xlane.f32.xlu0 %v3225
      %v3227 = vpop.xlane.xlu0 %3226
      %v3228 = vsel %vm2308, %v3156, 0.0
      %3229 = vadd.xlane.f32.xlu0 %v3228
      %v3230 = vpop.xlane.xlu0 %3229
      %v3231 = vsel %vm2308, %v3157, 0.0
      %3232 = vadd.xlane.f32.xlu0 %v3231
      %v3233 = vpop.xlane.xlu0 %3232
      %v3234 = vsel %vm2308, %v3158, 0.0
      %3235 = vadd.xlane.f32.xlu0 %v3234
      %v3236 = vpop.xlane.xlu0 %3235
      %v3237 = vsel %vm2308, %v3159, 0.0
      %3238 = vadd.xlane.f32.xlu0 %v3237
      %v3239 = vpop.xlane.xlu0 %3238
      %v3240 = vsel %vm2308, %v3160, 0.0
      %3241 = vadd.xlane.f32.xlu0 %v3240
      %v3242 = vpop.xlane.xlu0 %3241
      %v3243 = vsel %vm2308, %v3161, 0.0
      %3244 = vadd.xlane.f32.xlu0 %v3243
      %v3245 = vpop.xlane.xlu0 %3244
      %v3246 = vsel %vm2308, %v3162, 0.0
      %3247 = vadd.xlane.f32.xlu0 %v3246
      %v3248 = vpop.xlane.xlu0 %3247
      %v3249 = vsel %vm2308, %v3163, 0.0
      %3250 = vadd.xlane.f32.xlu0 %v3249
      %v3251 = vpop.xlane.xlu0 %3250
      %v3252 = vsel %vm2308, %v3164, 0.0
      %3253 = vadd.xlane.f32.xlu0 %v3252
      %v3254 = vpop.xlane.xlu0 %3253
      %v3255 = vsel %vm2308, %v3165, 0.0
      %3256 = vadd.xlane.f32.xlu0 %v3255
      %v3257 = vpop.xlane.xlu0 %3256
      %v3258 = vsel %vm2308, %v3166, 0.0
      %3259 = vadd.xlane.f32.xlu0 %v3258
      %v3260 = vpop.xlane.xlu0 %3259
      %v3261 = vsel %vm2308, %v3167, 0.0
      %3262 = vadd.xlane.f32.xlu0 %v3261
      %v3263 = vpop.xlane.xlu0 %3262
      %v3264 = vld [vmem:[#allocation2] sm:$0x1]
      %v3266 = vlaneseq
      %v3267 = vshrl.u32 %v3266, 7
      %v3268 = vsub.s32 0, %v3267
      %v3269 = vrot.slane %v3264, %v3268
      %v3271 = vadd.f32 %v3170, %v3269
      %v3272 = vadd.f32 %v3173, %v3269
      %v3273 = vadd.f32 %v3176, %v3269
      %v3274 = vadd.f32 %v3179, %v3269
      %v3275 = vadd.f32 %v3182, %v3269
      %v3276 = vadd.f32 %v3185, %v3269
      %v3277 = vadd.f32 %v3188, %v3269
      %v3278 = vadd.f32 %v3191, %v3269
      %v3279 = vadd.f32 %v3194, %v3269
      %v3280 = vadd.f32 %v3197, %v3269
      %v3281 = vadd.f32 %v3200, %v3269
      %v3282 = vadd.f32 %v3203, %v3269
      %v3283 = vadd.f32 %v3206, %v3269
      %v3284 = vadd.f32 %v3209, %v3269
      %v3285 = vadd.f32 %v3212, %v3269
      %v3286 = vadd.f32 %v3215, %v3269
      %v3287 = vadd.f32 %v3218, %v3269
      %v3288 = vadd.f32 %v3221, %v3269
      %v3289 = vadd.f32 %v3224, %v3269
      %v3290 = vadd.f32 %v3227, %v3269
      %v3291 = vadd.f32 %v3230, %v3269
      %v3292 = vadd.f32 %v3233, %v3269
      %v3293 = vadd.f32 %v3236, %v3269
      %v3294 = vadd.f32 %v3239, %v3269
      %v3295 = vadd.f32 %v3242, %v3269
      %v3296 = vadd.f32 %v3245, %v3269
      %v3297 = vadd.f32 %v3248, %v3269
      %v3298 = vadd.f32 %v3251, %v3269
      %v3299 = vadd.f32 %v3254, %v3269
      %v3300 = vadd.f32 %v3257, %v3269
      %v3301 = vadd.f32 %v3260, %v3269
      %v3302 = vadd.f32 %v3263, %v3269
      %vm3303 = vcmask 7168
      %3304 = vst.msk [vmem:[%s273] sm:$0xff] %vm3303, %v3271
      %3305 = vst.msk [vmem:[%s273 + $0x8] sm:$0xff] %vm3303, %v3272
      %3306 = vst.msk [vmem:[%s273 + $0x10] sm:$0xff] %vm3303, %v3273
      %3307 = vst.msk [vmem:[%s273 + $0x18] sm:$0xff] %vm3303, %v3274
      %3308 = vst.msk [vmem:[%s273 + $0x20] sm:$0xff] %vm3303, %v3275
      %3309 = vst.msk [vmem:[%s273 + $0x28] sm:$0xff] %vm3303, %v3276
      %3310 = vst.msk [vmem:[%s273 + $0x30] sm:$0xff] %vm3303, %v3277
      %3311 = vst.msk [vmem:[%s273 + $0x38] sm:$0xff] %vm3303, %v3278
      %3312 = vst.msk [vmem:[%s273 + $0x40] sm:$0xff] %vm3303, %v3279
      %3313 = vst.msk [vmem:[%s273 + $0x48] sm:$0xff] %vm3303, %v3280
      %3314 = vst.msk [vmem:[%s273 + $0x50] sm:$0xff] %vm3303, %v3281
      %3315 = vst.msk [vmem:[%s273 + $0x58] sm:$0xff] %vm3303, %v3282
      %3316 = vst.msk [vmem:[%s273 + $0x60] sm:$0xff] %vm3303, %v3283
      %3317 = vst.msk [vmem:[%s273 + $0x68] sm:$0xff] %vm3303, %v3284
      %3318 = vst.msk [vmem:[%s273 + $0x70] sm:$0xff] %vm3303, %v3285
      %3319 = vst.msk [vmem:[%s273 + $0x78] sm:$0xff] %vm3303, %v3286
      %3320 = vst.msk [vmem:[%s273 + $0x80] sm:$0xff] %vm3303, %v3287
      %3321 = vst.msk [vmem:[%s273 + $0x88] sm:$0xff] %vm3303, %v3288
      %3322 = vst.msk [vmem:[%s273 + $0x90] sm:$0xff] %vm3303, %v3289
      %3323 = vst.msk [vmem:[%s273 + $0x98] sm:$0xff] %vm3303, %v3290
      %3324 = vst.msk [vmem:[%s273 + $0xa0] sm:$0xff] %vm3303, %v3291
      %3325 = vst.msk [vmem:[%s273 + $0xa8] sm:$0xff] %vm3303, %v3292
      %3326 = vst.msk [vmem:[%s273 + $0xb0] sm:$0xff] %vm3303, %v3293
      %3327 = vst.msk [vmem:[%s273 + $0xb8] sm:$0xff] %vm3303, %v3294
      %3328 = vst.msk [vmem:[%s273 + $0xc0] sm:$0xff] %vm3303, %v3295
      %3329 = vst.msk [vmem:[%s273 + $0xc8] sm:$0xff] %vm3303, %v3296
      %3330 = vst.msk [vmem:[%s273 + $0xd0] sm:$0xff] %vm3303, %v3297
      %3331 = vst.msk [vmem:[%s273 + $0xd8] sm:$0xff] %vm3303, %v3298
      %3332 = vst.msk [vmem:[%s273 + $0xe0] sm:$0xff] %vm3303, %v3299
      %3333 = vst.msk [vmem:[%s273 + $0xe8] sm:$0xff] %vm3303, %v3300
      %3334 = vst.msk [vmem:[%s273 + $0xf0] sm:$0xff] %vm3303, %v3301
      %3335 = vst.msk [vmem:[%s273 + $0xf8] sm:$0xff] %vm3303, %v3302
      %p3336 = scmp.lt.s32.totalorder %s19, 1
      %s3337 = scalar_select %p3336, %s19, 1
      %s3338 = smul.addr %s3337, 32
      %s3339 = smul.addr %s3338, 8
      %s3340 = scalar_lea.vmem %s6, %s3339
      // Predicated region
      $region45: #{segmentation_forward.9} parent=43 // pred_check
        %p3341 = pneg %p173
      $region46: #{segmentation_forward.9} parent=43 // pred_check_branch
        %3343 = sbr.rel (%p3341) target = $region48
      $region47: #{segmentation_forward.9} parent=43 // pred_region
        _
      $region48: #{segmentation_forward.9} parent=43 // pred_fallthru
        _
    $region44: #{segmentation_forward.9} parent=5 // pred_fallthru
      _
    %p3344 = scmp.le.s32.totalorder 2, %s14
    // Predicated region
    $region49: #{segmentation_forward.9} parent=5 // pred_check
      %p3345 = pneg %p3344
    $region50: #{segmentation_forward.9} parent=5 // pred_check_branch
      %3347 = sbr.rel (%p3345) target = $region52
    $region51: #{segmentation_forward.9} parent=5 // pred_region
      %s3348 = ssub.s32 %s14, 2
      // Predicated region
      $region53: #{segmentation_forward.9} parent=51 // pred_check
        %p3349 = pneg %p179
      $region54: #{segmentation_forward.9} parent=51 // pred_check_branch
        %3351 = sbr.rel (%p3349) target = $region56
      $region55: #{segmentation_forward.9} parent=51 // pred_region
        %p3352 = scmp.lt.s32.totalorder %s20, 1
        %s3353 = scalar_select %p3352, %s20, 1
        %s3354 = smul.addr %s3353, 32
        %s3355 = smul.addr %s3354, 8
        %s3356 = scalar_lea.vmem %s6, %s3355
      $region56: #{segmentation_forward.9} parent=51 // pred_fallthru
        _
    $region52: #{segmentation_forward.9} parent=5 // pred_fallthru
      _
  $region6: #{segmentation_forward.9} parent=0 // loop_footer
    %s18 = sadd.s32 1, %s14
  $region7: #{segmentation_forward.9} parent=0 // loop_footer_branch
    %13 = sbr.rel target = $region3
  $region8: #{segmentation_forward.9} parent=0 // loop_exit
    _

</llo_original>
